<compile_context>
chip_gen: v7x
topology: tpu7x:2x2x1
jax: 0.10.0
libtpu: 0.0.40
codegen_flags: <defaults>
</compile_context>

<pallas_src>
import functools

import jax
import jax.numpy as jnp
from jax import lax
from jax.experimental import pallas as pl
from jax.experimental.pallas import tpu as pltpu

# ----------------------------- config (synthetic) -----------------------------
POOLING_SIZE = 4          # cfg.POOLING_SIZE (small for the synthetic test)
POOLING_MODE = "align"    # cfg.POOLING_MODE
FEAT_STRIDE = 16          # spatial_scale = 1/16
NUM_ANCHORS = 3
NUM_CLASSES = 3           # ('__background__', 'benign', 'malignant')
DOUT_BASE = 16            # self.dout_base_model
FC_DIM = 32               # hidden size of _head_to_tail
NUM_ROIS = 8              # proposals kept per image (post "NMS")
CLASS_AGNOSTIC = False

_VMEM_LIMIT = 32 * 1024 * 1024
_PARAMS_PAR = pltpu.CompilerParams(dimension_semantics=("parallel",),
                                   vmem_limit_bytes=_VMEM_LIMIT)
_PARAMS_SEQ = pltpu.CompilerParams(dimension_semantics=("arbitrary",),
                                   vmem_limit_bytes=_VMEM_LIMIT)


# ------------------------------ Pallas kernels --------------------------------
def _conv3x3_acc(x3_ref, w_ref, H, W):
    """9 shifted bf16 matmuls accumulated in fp32 -> (H*W, Cout) fp32.

    x3_ref : (H+2, W+2, Cin) fp32   halo-padded feature map (ref or scratch)
    w_ref  : (9, Cin, Cout)  bf16   taps ordered dy-major, dx-minor

    Each tap's (H*W, Cin) patch is assembled by sublane concatenation of
    per-row 2-D window loads (no in-kernel im2col materialization in HBM).
    """
    cout = w_ref.shape[-1]
    acc = jnp.zeros((H * W, cout), jnp.float32)
    for t in range(9):
        dy, dx = divmod(t, 3)
        rows = [x3_ref[dy + h, pl.ds(dx, W), :] for h in range(H)]
        patch = jnp.concatenate(rows, axis=0).astype(jnp.bfloat16)   # (H*W, Cin)
        acc = acc + jnp.dot(patch, w_ref[t],
                            preferred_element_type=jnp.float32)
    return acc


def _backbone_rpn_kernel(x_ref, bw_ref, bb_ref, rw_ref, rb_ref, hw_ref, hb_ref,
                         base_ref, rpn_ref, pad_ref, *, H, W, A):
    """Fused: RCNN_base conv+ReLU -> RPN conv+ReLU -> (cls|bbox) GEMM -> sigmoid.

    One image per grid step.  Outputs:
      base_ref : (H*W, C)     base feature (for ROIAlign later)
      rpn_ref  : (H*W, 5*A)   cols [0:A] fg prob, [A:5A] bbox deltas
    hw_ref columns: [0:A] bg logits, [A:2A] fg logits, [2A:6A] bbox deltas
    (matches the PyTorch .view(B, 2, A*H, W) channel convention).
    """
    # --- RCNN_base: 3x3 conv + bias + ReLU ---
    feat = jnp.maximum(_conv3x3_acc(x_ref, bw_ref, H, W) + bb_ref[...], 0.0)
    base_ref[...] = feat.astype(base_ref.dtype)

    # --- re-pad base feature inside VMEM (halo for the RPN 3x3 conv).
    # Zeroed every grid step so the kernel stays correct under megacore
    # splitting of the (parallel) batch axis.
    pad_ref[...] = jnp.zeros_like(pad_ref)
    for h in range(H):
        pad_ref[h + 1, 1:W + 1, :] = feat[h * W:(h + 1) * W, :]

    # --- RPN_Conv: 3x3 conv + bias + ReLU ---
    rfeat = jnp.maximum(_conv3x3_acc(pad_ref, rw_ref, H, W) + rb_ref[...], 0.0)

    # --- fused 1x1 heads (cls + bbox weights concatenated into ONE GEMM) ---
    head = jnp.dot(rfeat.astype(jnp.bfloat16), hw_ref[...],
                   preferred_element_type=jnp.float32) + hb_ref[...]   # (HW, 6A)
    bg = head[:, 0:A]
    fg_logit = head[:, A:2 * A]
    # softmax over the (bg, fg) pair == sigmoid(fg - bg); EUP exp, no XLU reduce.
    fg = 1.0 / (1.0 + jnp.exp(bg - fg_logit))
    rpn_ref[...] = jnp.concatenate([fg, head[:, 2 * A:]],
                                   axis=1).astype(rpn_ref.dtype)


def _head_fused_kernel(x_ref, w1_ref, b1_ref, w2_ref, b2_ref, wcb_ref, bcb_ref,
                       out_ref, *, n_cls):
    """_head_to_tail + RCNN_cls_score/RCNN_bbox_pred + softmax, fully in VMEM.

    out_ref cols: [0:n_cls] class probs (softmaxed), [n_cls:] bbox predictions.
    """
    h = jnp.maximum(jnp.dot(x_ref[...], w1_ref[...],
                            preferred_element_type=jnp.float32) + b1_ref[...], 0.0)
    h = jnp.maximum(jnp.dot(h.astype(jnp.bfloat16), w2_ref[...],
                            preferred_element_type=jnp.float32) + b2_ref[...], 0.0)
    out = jnp.dot(h.astype(jnp.bfloat16), wcb_ref[...],
                  preferred_element_type=jnp.float32) + bcb_ref[...]
    logits = out[:, :n_cls]
    m = jnp.max(logits, axis=-1, keepdims=True)
    e = jnp.exp(logits - m)
    probs = e / jnp.sum(e, axis=-1, keepdims=True)
    out_ref[...] = jnp.concatenate([probs, out[:, n_cls:]],
                                   axis=1).astype(out_ref.dtype)


# ------------------------------ kernel wrappers --------------------------------
def backbone_rpn(x_nhwc, params):
    """Fused backbone + RPN.  x:(B,H,W,3) fp32 -> base_feat, fg prob, deltas."""
    B, H, W, Cin = x_nhwc.shape
    C = DOUT_BASE
    A = NUM_ANCHORS
    xp = jnp.pad(x_nhwc.astype(jnp.float32), ((0, 0), (1, 1), (1, 1), (0, 0)))
    head_w = jnp.concatenate([params["rpn_cls_w"], params["rpn_bbox_w"]],
                             axis=1).astype(jnp.bfloat16)               # (C, 6A)
    head_b = jnp.concatenate([params["rpn_cls_b"], params["rpn_bbox_b"]],
                             axis=0).reshape(1, 6 * A).astype(jnp.float32)
    base_feat, rpn_out = pl.pallas_call(
        functools.partial(_backbone_rpn_kernel, H=H, W=W, A=A),
        grid=(B,),
        in_specs=[
            pl.BlockSpec((None, H + 2, W + 2, Cin), lambda b_: (b_, 0, 0, 0)),
            pl.BlockSpec((9, Cin, C), lambda b_: (0, 0, 0)),
            pl.BlockSpec((1, C), lambda b_: (0, 0)),
            pl.BlockSpec((9, C, C), lambda b_: (0, 0, 0)),
            pl.BlockSpec((1, C), lambda b_: (0, 0)),
            pl.BlockSpec((C, 6 * A), lambda b_: (0, 0)),
            pl.BlockSpec((1, 6 * A), lambda b_: (0, 0)),
        ],
        out_specs=(
            pl.BlockSpec((None, H * W, C), lambda b_: (b_, 0, 0)),
            pl.BlockSpec((None, H * W, 5 * A), lambda b_: (b_, 0, 0)),
        ),
        out_shape=(
            jax.ShapeDtypeStruct((B, H * W, C), jnp.float32),
            jax.ShapeDtypeStruct((B, H * W, 5 * A), jnp.float32),
        ),
        scratch_shapes=[pltpu.VMEM((H + 2, W + 2, C), jnp.float32)],
        compiler_params=_PARAMS_PAR,
    )(xp,
      params["base_w"].astype(jnp.bfloat16),
      params["base_b"].reshape(1, C).astype(jnp.float32),
      params["rpn_conv_w"].astype(jnp.bfloat16),
      params["rpn_conv_b"].reshape(1, C).astype(jnp.float32),
      head_w, head_b)
    base_feat = base_feat.reshape(B, H, W, C)
    fg = rpn_out[..., :A]             # (B, H*W, A)
    deltas = rpn_out[..., A:]         # (B, H*W, 4A)
    return base_feat, fg, deltas


def rcnn_head(pooled_flat, fc1_w, fc1_b, fc2_w, fc2_b, cls_w, cls_b, bbox_w, bbox_b):
    """One VMEM-resident kernel: fc1 -> fc2 -> (cls|bbox) GEMM -> softmax."""
    M, K = pooled_flat.shape
    n_cls = cls_w.shape[1]
    n_box = bbox_w.shape[1]
    wcb = jnp.concatenate([cls_w, bbox_w], axis=1).astype(jnp.bfloat16)
    bcb = jnp.concatenate([cls_b, bbox_b], axis=0).reshape(1, n_cls + n_box)
    bcb = bcb.astype(jnp.float32)
    out = pl.pallas_call(
        functools.partial(_head_fused_kernel, n_cls=n_cls),
        grid=(1,),
        in_specs=[
            pl.BlockSpec((M, K), lambda i: (0, 0)),
            pl.BlockSpec((K, FC_DIM), lambda i: (0, 0)),
            pl.BlockSpec((1, FC_DIM), lambda i: (0, 0)),
            pl.BlockSpec((FC_DIM, FC_DIM), lambda i: (0, 0)),
            pl.BlockSpec((1, FC_DIM), lambda i: (0, 0)),
            pl.BlockSpec((FC_DIM, n_cls + n_box), lambda i: (0, 0)),
            pl.BlockSpec((1, n_cls + n_box), lambda i: (0, 0)),
        ],
        out_specs=pl.BlockSpec((M, n_cls + n_box), lambda i: (0, 0)),
        out_shape=jax.ShapeDtypeStruct((M, n_cls + n_box), jnp.float32),
        compiler_params=_PARAMS_SEQ,
    )(pooled_flat.astype(jnp.bfloat16),
      fc1_w.astype(jnp.bfloat16), fc1_b.reshape(1, -1).astype(jnp.float32),
      fc2_w.astype(jnp.bfloat16), fc2_b.reshape(1, -1).astype(jnp.float32),
      wcb, bcb)
    return out[:, :n_cls], out[:, n_cls:]


# ------------------------------- JAX glue --------------------------------------
def make_anchors(H, W, stride=FEAT_STRIDE, sizes=(32.0, 64.0, 128.0)):
    ys, xs = jnp.meshgrid(jnp.arange(H, dtype=jnp.float32),
                          jnp.arange(W, dtype=jnp.float32), indexing="ij")
    cx = (xs.reshape(-1) + 0.5) * stride
    cy = (ys.reshape(-1) + 0.5) * stride
    per_size = []
    for s in sizes:
        h = s / 2.0
        per_size.append(jnp.stack([cx - h, cy - h, cx + h, cy + h], axis=-1))
    a = jnp.stack(per_size, axis=1)                  # (H*W, A, 4)
    return a.reshape(-1, 4)                          # (H*W*A, 4)


def bbox_transform_inv(boxes, deltas):
    widths = boxes[..., 2] - boxes[..., 0] + 1.0
    heights = boxes[..., 3] - boxes[..., 1] + 1.0
    ctr_x = boxes[..., 0] + 0.5 * widths
    ctr_y = boxes[..., 1] + 0.5 * heights
    dx, dy, dw, dh = deltas[..., 0], deltas[..., 1], deltas[..., 2], deltas[..., 3]
    pcx = dx * widths + ctr_x
    pcy = dy * heights + ctr_y
    pw = jnp.exp(dw) * widths
    ph = jnp.exp(dh) * heights
    return jnp.stack([pcx - 0.5 * pw, pcy - 0.5 * ph,
                      pcx + 0.5 * pw, pcy + 0.5 * ph], axis=-1)


def roi_align(feat_nhwc, rois, pooled=POOLING_SIZE, scale=1.0 / FEAT_STRIDE):
    """Simplified ROIAlign (one bilinear sample per bin center), NHWC output."""
    B, H, W, C = feat_nhwc.shape
    n = rois.shape[0]
    bidx = rois[:, 0].astype(jnp.int32)
    x1 = rois[:, 1] * scale
    y1 = rois[:, 2] * scale
    x2 = rois[:, 3] * scale
    y2 = rois[:, 4] * scale
    roi_w = jnp.maximum(x2 - x1, 1.0)
    roi_h = jnp.maximum(y2 - y1, 1.0)
    centers = (jnp.arange(pooled, dtype=jnp.float32) + 0.5) / pooled
    gx = x1[:, None] + centers[None, :] * roi_w[:, None]      # (N,P)
    gy = y1[:, None] + centers[None, :] * roi_h[:, None]      # (N,P)
    gx = jnp.broadcast_to(gx[:, None, :], (n, pooled, pooled))
    gy = jnp.broadcast_to(gy[:, :, None], (n, pooled, pooled))
    x = jnp.clip(gx, 0.0, W - 1.0)
    y = jnp.clip(gy, 0.0, H - 1.0)
    x0 = jnp.floor(x).astype(jnp.int32)
    y0 = jnp.floor(y).astype(jnp.int32)
    x1i = jnp.minimum(x0 + 1, W - 1)
    y1i = jnp.minimum(y0 + 1, H - 1)
    lx = x - x0.astype(jnp.float32)
    ly = y - y0.astype(jnp.float32)
    bi = bidx[:, None, None]
    v00 = feat_nhwc[bi, y0, x0]
    v01 = feat_nhwc[bi, y0, x1i]
    v10 = feat_nhwc[bi, y1i, x0]
    v11 = feat_nhwc[bi, y1i, x1i]
    w00 = ((1 - ly) * (1 - lx))[..., None]
    w01 = ((1 - ly) * lx)[..., None]
    w10 = (ly * (1 - lx))[..., None]
    w11 = (ly * lx)[..., None]
    out = w00 * v00 + w01 * v01 + w10 * v10 + w11 * v11       # (N,P,P,C) NHWC
    return out


# ------------------------------ parameter init ---------------------------------
def init_params(key):
    def kaiming(k, shape, fan_in):
        return jax.random.normal(k, shape, jnp.float32) * jnp.sqrt(2.0 / fan_in)

    ks = jax.random.split(key, 16)
    p = {}
    # RCNN_base: 3x3 conv 3 -> DOUT_BASE (+ReLU), taps stored as (9, Cin, Cout)
    p["base_w"] = kaiming(ks[0], (9, 3, DOUT_BASE), 9 * 3)
    p["base_b"] = jnp.zeros((DOUT_BASE,), jnp.float32)
    # RPN_Conv: 3x3 conv DOUT_BASE -> DOUT_BASE (+ReLU)
    p["rpn_conv_w"] = kaiming(ks[1], (9, DOUT_BASE, DOUT_BASE), 9 * DOUT_BASE)
    p["rpn_conv_b"] = jnp.zeros((DOUT_BASE,), jnp.float32)
    # RPN_cls_score (columns: [0:A]=bg, [A:2A]=fg) ; RPN_bbox_pred (4A, anchor-major)
    p["rpn_cls_w"] = 0.01 * jax.random.normal(ks[2], (DOUT_BASE, 2 * NUM_ANCHORS), jnp.float32)
    p["rpn_cls_b"] = jnp.zeros((2 * NUM_ANCHORS,), jnp.float32)
    p["rpn_bbox_w"] = 0.01 * jax.random.normal(ks[3], (DOUT_BASE, 4 * NUM_ANCHORS), jnp.float32)
    p["rpn_bbox_b"] = jnp.zeros((4 * NUM_ANCHORS,), jnp.float32)
    # _head_to_tail: two FC layers with ReLU.  fc1 rows are generated in the
    # PyTorch NCHW .view() order (c, py, px) and pre-permuted once to NHWC
    # order (py, px, c) so the kernel consumes the NHWC-flattened ROI features
    # directly (removes the post-ROIAlign layout transpose).
    fc_in = DOUT_BASE * POOLING_SIZE * POOLING_SIZE
    fc1_nchw = kaiming(ks[4], (fc_in, FC_DIM), fc_in)
    perm = (jnp.arange(fc_in, dtype=jnp.int32)
            .reshape(DOUT_BASE, POOLING_SIZE, POOLING_SIZE)
            .transpose(1, 2, 0).reshape(-1))
    p["fc1_w"] = fc1_nchw[perm]
    p["fc1_b"] = jnp.zeros((FC_DIM,), jnp.float32)
    p["fc2_w"] = kaiming(ks[5], (FC_DIM, FC_DIM), FC_DIM)
    p["fc2_b"] = jnp.zeros((FC_DIM,), jnp.float32)
    # RCNN_cls_score / RCNN_bbox_pred
    p["cls_w"] = 0.01 * jax.random.normal(ks[6], (FC_DIM, NUM_CLASSES), jnp.float32)
    p["cls_b"] = jnp.zeros((NUM_CLASSES,), jnp.float32)
    bbox_out = 4 if CLASS_AGNOSTIC else 4 * NUM_CLASSES
    p["bbox_w"] = 0.001 * jax.random.normal(ks[7], (FC_DIM, bbox_out), jnp.float32)
    p["bbox_b"] = jnp.zeros((bbox_out,), jnp.float32)
    return p


# ------------------------------- forward pass -----------------------------------
def faster_rcnn_forward(params, im_data, im_info, gt_boxes, num_boxes, im_label,
                        is_ws=False):
    """Eval-mode forward of _fasterRCNN (training / WS branches disabled)."""
    del gt_boxes, num_boxes, im_label, is_ws  # only used in training branches
    B = im_data.shape[0]

    # ---- RCNN_base + RCNN_rpn fused into one Pallas kernel (NHWC internal) ----
    x = jnp.transpose(im_data, (0, 2, 3, 1))                        # NHWC
    base_feat, fg, rpn_deltas = backbone_rpn(x, params)
    _, Hf, Wf, _ = base_feat.shape
    fg_prob = fg.reshape(B, Hf * Wf * NUM_ANCHORS)                  # (B, HWA)
    deltas = rpn_deltas.reshape(B, Hf * Wf * NUM_ANCHORS, 4)        # (B, HWA, 4)

    # proposals = anchors decoded by predicted deltas, clipped to image
    anchors = make_anchors(Hf, Wf)                                  # (HWA, 4)
    proposals = bbox_transform_inv(anchors[None, :, :], deltas)     # (B, HWA, 4)
    im_h = im_info[:, 0][:, None]
    im_w = im_info[:, 1][:, None]
    proposals = jnp.stack(
        [jnp.clip(proposals[..., 0], 0.0, im_w - 1.0),
         jnp.clip(proposals[..., 1], 0.0, im_h - 1.0),
         jnp.clip(proposals[..., 2], 0.0, im_w - 1.0),
         jnp.clip(proposals[..., 3], 0.0, im_h - 1.0)], axis=-1)

    # TODO(synk): proposal layer uses NMS; here we keep plain top-K by fg score.
    _, top_idx = lax.top_k(fg_prob, NUM_ROIS)                       # (B, R)
    roi_boxes = jnp.take_along_axis(proposals, top_idx[..., None], axis=1)
    batch_col = jnp.broadcast_to(
        jnp.arange(B, dtype=jnp.float32)[:, None, None], (B, NUM_ROIS, 1))
    rois = jnp.concatenate([batch_col, roi_boxes], axis=-1)         # (B, R, 5)
    rpn_loss_cls = 0.0
    rpn_loss_bbox = 0.0

    # ---- ROI Align (POOLING_MODE == 'align'), NHWC output ----
    pooled = roi_align(base_feat, rois.reshape(-1, 5))              # (B*R, P, P, C)
    pooled_flat = pooled.reshape(pooled.shape[0], -1)               # NHWC flatten

    # ---- fused detection head (fc1 -> fc2 -> cls/bbox -> softmax) ----
    cls_prob, bbox_pred = rcnn_head(pooled_flat,
                                    params["fc1_w"], params["fc1_b"],
                                    params["fc2_w"], params["fc2_b"],
                                    params["cls_w"], params["cls_b"],
                                    params["bbox_w"], params["bbox_b"])

    RCNN_loss_cls = 0.0
    RCNN_loss_bbox = 0.0
    rois_label = None

    cls_prob = cls_prob.reshape(B, NUM_ROIS, -1)
    bbox_pred = bbox_pred.reshape(B, NUM_ROIS, -1)
    return (rois, cls_prob, bbox_pred, rpn_loss_cls, rpn_loss_bbox,
            RCNN_loss_cls, RCNN_loss_bbox, rois_label)


# ----------------------------------- main ---------------------------------------
if __name__ == "__main__":
    key = jax.random.PRNGKey(0)
    k_param, k_img, k_gt = jax.random.split(key, 3)

    params = init_params(k_param)

    B, C, H, W = 2, 3, 16, 16
    im_data = jax.random.normal(k_img, (B, C, H, W), jnp.float32)
    # im_info is in "original image" coordinates (feature stride 16 -> 256x256)
    im_info = jnp.tile(jnp.array([[H * FEAT_STRIDE, W * FEAT_STRIDE, 1.0]],
                                 jnp.float32), (B, 1))
    gt_boxes = jnp.zeros((B, 5, 5), jnp.float32)
    num_boxes = jnp.zeros((B,), jnp.int32)
    im_label = jnp.zeros((B,), jnp.float32)

    fwd = jax.jit(faster_rcnn_forward, static_argnames=("is_ws",))
    outs = fwd(params, im_data, im_info, gt_boxes, num_boxes, im_label,
               is_ws=False)
    rois, cls_prob, bbox_pred = outs[0], outs[1], outs[2]
    jax.block_until_ready((rois, cls_prob, bbox_pred))

    assert rois.shape == (B, NUM_ROIS, 5)
    assert cls_prob.shape == (B, NUM_ROIS, NUM_CLASSES)
    assert bbox_pred.shape == (B, NUM_ROIS, 4 * NUM_CLASSES)
    assert bool(jnp.isfinite(cls_prob).all())
    assert bool(jnp.allclose(cls_prob.sum(-1), 1.0, atol=1e-3))
    print("KERNEL_OK")
</pallas_src>

<mosaic_0001>
module attributes {stable_mosaic.version = 11 : i64} {
  func.func @_backbone_rpn_kernel(%arg0: i32, %arg1: memref<1x18x18x3xf32, #tpu.memory_space<vmem>>, %arg2: memref<9x3x16xbf16, #tpu.memory_space<vmem>>, %arg3: memref<1x16xf32, #tpu.memory_space<vmem>>, %arg4: memref<9x16x16xbf16, #tpu.memory_space<vmem>>, %arg5: memref<1x16xf32, #tpu.memory_space<vmem>>, %arg6: memref<16x18xbf16, #tpu.memory_space<vmem>>, %arg7: memref<1x18xf32, #tpu.memory_space<vmem>>, %arg8: memref<1x256x16xf32, #tpu.memory_space<vmem>>, %arg9: memref<1x256x15xf32, #tpu.memory_space<vmem>>, %arg10: memref<18x18x16xf32, #tpu.memory_space<vmem>>) attributes {dimension_semantics = [#tpu.dimension_semantics<parallel>], iteration_bounds = array<i64: 2>, scalar_prefetch = 0 : i64, scratch_operands = 1 : i64, tpu.core_type = #tpu.core_type<tc>, window_params = [{transform_indices = @transform_0, window_bounds = array<i64: 1, 18, 18, 3>}, {pipeline_mode = #tpu.pipeline_mode<synchronous>, transform_indices = @transform_1, window_bounds = array<i64: 9, 3, 16>}, {pipeline_mode = #tpu.pipeline_mode<synchronous>, transform_indices = @transform_2, window_bounds = array<i64: 1, 16>}, {pipeline_mode = #tpu.pipeline_mode<synchronous>, transform_indices = @transform_3, window_bounds = array<i64: 9, 16, 16>}, {pipeline_mode = #tpu.pipeline_mode<synchronous>, transform_indices = @transform_4, window_bounds = array<i64: 1, 16>}, {pipeline_mode = #tpu.pipeline_mode<synchronous>, transform_indices = @transform_5, window_bounds = array<i64: 16, 18>}, {pipeline_mode = #tpu.pipeline_mode<synchronous>, transform_indices = @transform_6, window_bounds = array<i64: 1, 18>}, {transform_indices = @transform_7, window_bounds = array<i64: 1, 256, 16>}, {transform_indices = @transform_8, window_bounds = array<i64: 1, 256, 15>}]} {
    %cst = arith.constant 0.000000e+00 : f32
    %0 = vector.broadcast %cst : f32 to vector<256x16xf32>
    %c0 = arith.constant 0 : index
    %c0_0 = arith.constant 0 : index
    %c0_1 = arith.constant 0 : index
    %c0_2 = arith.constant 0 : index
    %1 = vector.load %arg1[%c0, %c0_0, %c0_1, %c0_2] : memref<1x18x18x3xf32, #tpu.memory_space<vmem>>, vector<1x1x16x3xf32>
    %2 = vector.shape_cast %1 : vector<1x1x16x3xf32> to vector<16x3xf32>
    %c0_3 = arith.constant 0 : index
    %c1 = arith.constant 1 : index
    %c0_4 = arith.constant 0 : index
    %c0_5 = arith.constant 0 : index
    %3 = vector.load %arg1[%c0_3, %c1, %c0_4, %c0_5] : memref<1x18x18x3xf32, #tpu.memory_space<vmem>>, vector<1x1x16x3xf32>
    %4 = vector.shape_cast %3 : vector<1x1x16x3xf32> to vector<16x3xf32>
    %c0_6 = arith.constant 0 : index
    %c2 = arith.constant 2 : index
    %c0_7 = arith.constant 0 : index
    %c0_8 = arith.constant 0 : index
    %5 = vector.load %arg1[%c0_6, %c2, %c0_7, %c0_8] : memref<1x18x18x3xf32, #tpu.memory_space<vmem>>, vector<1x1x16x3xf32>
    %6 = vector.shape_cast %5 : vector<1x1x16x3xf32> to vector<16x3xf32>
    %c0_9 = arith.constant 0 : index
    %c3 = arith.constant 3 : index
    %c0_10 = arith.constant 0 : index
    %c0_11 = arith.constant 0 : index
    %7 = vector.load %arg1[%c0_9, %c3, %c0_10, %c0_11] : memref<1x18x18x3xf32, #tpu.memory_space<vmem>>, vector<1x1x16x3xf32>
    %8 = vector.shape_cast %7 : vector<1x1x16x3xf32> to vector<16x3xf32>
    %c0_12 = arith.constant 0 : index
    %c4 = arith.constant 4 : index
    %c0_13 = arith.constant 0 : index
    %c0_14 = arith.constant 0 : index
    %9 = vector.load %arg1[%c0_12, %c4, %c0_13, %c0_14] : memref<1x18x18x3xf32, #tpu.memory_space<vmem>>, vector<1x1x16x3xf32>
    %10 = vector.shape_cast %9 : vector<1x1x16x3xf32> to vector<16x3xf32>
    %c0_15 = arith.constant 0 : index
    %c5 = arith.constant 5 : index
    %c0_16 = arith.constant 0 : index
    %c0_17 = arith.constant 0 : index
    %11 = vector.load %arg1[%c0_15, %c5, %c0_16, %c0_17] : memref<1x18x18x3xf32, #tpu.memory_space<vmem>>, vector<1x1x16x3xf32>
    %12 = vector.shape_cast %11 : vector<1x1x16x3xf32> to vector<16x3xf32>
    %c0_18 = arith.constant 0 : index
    %c6 = arith.constant 6 : index
    %c0_19 = arith.constant 0 : index
    %c0_20 = arith.constant 0 : index
    %13 = vector.load %arg1[%c0_18, %c6, %c0_19, %c0_20] : memref<1x18x18x3xf32, #tpu.memory_space<vmem>>, vector<1x1x16x3xf32>
    %14 = vector.shape_cast %13 : vector<1x1x16x3xf32> to vector<16x3xf32>
    %c0_21 = arith.constant 0 : index
    %c7 = arith.constant 7 : index
    %c0_22 = arith.constant 0 : index
    %c0_23 = arith.constant 0 : index
    %15 = vector.load %arg1[%c0_21, %c7, %c0_22, %c0_23] : memref<1x18x18x3xf32, #tpu.memory_space<vmem>>, vector<1x1x16x3xf32>
    %16 = vector.shape_cast %15 : vector<1x1x16x3xf32> to vector<16x3xf32>
    %c0_24 = arith.constant 0 : index
    %c8 = arith.constant 8 : index
    %c0_25 = arith.constant 0 : index
    %c0_26 = arith.constant 0 : index
    %17 = vector.load %arg1[%c0_24, %c8, %c0_25, %c0_26] : memref<1x18x18x3xf32, #tpu.memory_space<vmem>>, vector<1x1x16x3xf32>
    %18 = vector.shape_cast %17 : vector<1x1x16x3xf32> to vector<16x3xf32>
    %c0_27 = arith.constant 0 : index
    %c9 = arith.constant 9 : index
    %c0_28 = arith.constant 0 : index
    %c0_29 = arith.constant 0 : index
    %19 = vector.load %arg1[%c0_27, %c9, %c0_28, %c0_29] : memref<1x18x18x3xf32, #tpu.memory_space<vmem>>, vector<1x1x16x3xf32>
    %20 = vector.shape_cast %19 : vector<1x1x16x3xf32> to vector<16x3xf32>
    %c0_30 = arith.constant 0 : index
    %c10 = arith.constant 10 : index
    %c0_31 = arith.constant 0 : index
    %c0_32 = arith.constant 0 : index
    %21 = vector.load %arg1[%c0_30, %c10, %c0_31, %c0_32] : memref<1x18x18x3xf32, #tpu.memory_space<vmem>>, vector<1x1x16x3xf32>
    %22 = vector.shape_cast %21 : vector<1x1x16x3xf32> to vector<16x3xf32>
    %c0_33 = arith.constant 0 : index
    %c11 = arith.constant 11 : index
    %c0_34 = arith.constant 0 : index
    %c0_35 = arith.constant 0 : index
    %23 = vector.load %arg1[%c0_33, %c11, %c0_34, %c0_35] : memref<1x18x18x3xf32, #tpu.memory_space<vmem>>, vector<1x1x16x3xf32>
    %24 = vector.shape_cast %23 : vector<1x1x16x3xf32> to vector<16x3xf32>
    %c0_36 = arith.constant 0 : index
    %c12 = arith.constant 12 : index
    %c0_37 = arith.constant 0 : index
    %c0_38 = arith.constant 0 : index
    %25 = vector.load %arg1[%c0_36, %c12, %c0_37, %c0_38] : memref<1x18x18x3xf32, #tpu.memory_space<vmem>>, vector<1x1x16x3xf32>
    %26 = vector.shape_cast %25 : vector<1x1x16x3xf32> to vector<16x3xf32>
    %c0_39 = arith.constant 0 : index
    %c13 = arith.constant 13 : index
    %c0_40 = arith.constant 0 : index
    %c0_41 = arith.constant 0 : index
    %27 = vector.load %arg1[%c0_39, %c13, %c0_40, %c0_41] : memref<1x18x18x3xf32, #tpu.memory_space<vmem>>, vector<1x1x16x3xf32>
    %28 = vector.shape_cast %27 : vector<1x1x16x3xf32> to vector<16x3xf32>
    %c0_42 = arith.constant 0 : index
    %c14 = arith.constant 14 : index
    %c0_43 = arith.constant 0 : index
    %c0_44 = arith.constant 0 : index
    %29 = vector.load %arg1[%c0_42, %c14, %c0_43, %c0_44] : memref<1x18x18x3xf32, #tpu.memory_space<vmem>>, vector<1x1x16x3xf32>
    %30 = vector.shape_cast %29 : vector<1x1x16x3xf32> to vector<16x3xf32>
    %c0_45 = arith.constant 0 : index
    %c15 = arith.constant 15 : index
    %c0_46 = arith.constant 0 : index
    %c0_47 = arith.constant 0 : index
    %31 = vector.load %arg1[%c0_45, %c15, %c0_46, %c0_47] : memref<1x18x18x3xf32, #tpu.memory_space<vmem>>, vector<1x1x16x3xf32>
    %32 = vector.shape_cast %31 : vector<1x1x16x3xf32> to vector<16x3xf32>
    %33 = tpu.concatenate %2, %4, %6, %8, %10, %12, %14, %16, %18, %20, %22, %24, %26, %28, %30, %32 in 0 : vector<16x3xf32>, vector<16x3xf32>, vector<16x3xf32>, vector<16x3xf32>, vector<16x3xf32>, vector<16x3xf32>, vector<16x3xf32>, vector<16x3xf32>, vector<16x3xf32>, vector<16x3xf32>, vector<16x3xf32>, vector<16x3xf32>, vector<16x3xf32>, vector<16x3xf32>, vector<16x3xf32>, vector<16x3xf32> -> vector<256x3xf32>
    %34 = arith.truncf %33 : vector<256x3xf32> to vector<256x3xbf16>
    %c0_48 = arith.constant 0 : index
    %c0_49 = arith.constant 0 : index
    %c0_50 = arith.constant 0 : index
    %35 = vector.load %arg2[%c0_48, %c0_49, %c0_50] : memref<9x3x16xbf16, #tpu.memory_space<vmem>>, vector<1x3x16xbf16>
    %36 = vector.shape_cast %35 : vector<1x3x16xbf16> to vector<3x16xbf16>
    %cst_51 = arith.constant dense<0.000000e+00> : vector<256x16xf32>
    %37 = tpu.matmul %34, %36, %cst_51 {dimension_numbers = #tpu.dot_dimension_numbers<[1], [0], [0], [1], [0, 0, 1, 1], [], []>} : vector<256x3xbf16>, vector<3x16xbf16>, vector<256x16xf32> -> vector<256x16xf32>
    %38 = arith.addf %0, %37 : vector<256x16xf32>
    %c0_52 = arith.constant 0 : index
    %c0_53 = arith.constant 0 : index
    %c1_54 = arith.constant 1 : index
    %c0_55 = arith.constant 0 : index
    %39 = vector.load %arg1[%c0_52, %c0_53, %c1_54, %c0_55] : memref<1x18x18x3xf32, #tpu.memory_space<vmem>>, vector<1x1x16x3xf32>
    %40 = vector.shape_cast %39 : vector<1x1x16x3xf32> to vector<16x3xf32>
    %c0_56 = arith.constant 0 : index
    %c1_57 = arith.constant 1 : index
    %c1_58 = arith.constant 1 : index
    %c0_59 = arith.constant 0 : index
    %41 = vector.load %arg1[%c0_56, %c1_57, %c1_58, %c0_59] : memref<1x18x18x3xf32, #tpu.memory_space<vmem>>, vector<1x1x16x3xf32>
    %42 = vector.shape_cast %41 : vector<1x1x16x3xf32> to vector<16x3xf32>
    %c0_60 = arith.constant 0 : index
    %c2_61 = arith.constant 2 : index
    %c1_62 = arith.constant 1 : index
    %c0_63 = arith.constant 0 : index
    %43 = vector.load %arg1[%c0_60, %c2_61, %c1_62, %c0_63] : memref<1x18x18x3xf32, #tpu.memory_space<vmem>>, vector<1x1x16x3xf32>
    %44 = vector.shape_cast %43 : vector<1x1x16x3xf32> to vector<16x3xf32>
    %c0_64 = arith.constant 0 : index
    %c3_65 = arith.constant 3 : index
    %c1_66 = arith.constant 1 : index
    %c0_67 = arith.constant 0 : index
    %45 = vector.load %arg1[%c0_64, %c3_65, %c1_66, %c0_67] : memref<1x18x18x3xf32, #tpu.memory_space<vmem>>, vector<1x1x16x3xf32>
    %46 = vector.shape_cast %45 : vector<1x1x16x3xf32> to vector<16x3xf32>
    %c0_68 = arith.constant 0 : index
    %c4_69 = arith.constant 4 : index
    %c1_70 = arith.constant 1 : index
    %c0_71 = arith.constant 0 : index
    %47 = vector.load %arg1[%c0_68, %c4_69, %c1_70, %c0_71] : memref<1x18x18x3xf32, #tpu.memory_space<vmem>>, vector<1x1x16x3xf32>
    %48 = vector.shape_cast %47 : vector<1x1x16x3xf32> to vector<16x3xf32>
    %c0_72 = arith.constant 0 : index
    %c5_73 = arith.constant 5 : index
    %c1_74 = arith.constant 1 : index
    %c0_75 = arith.constant 0 : index
    %49 = vector.load %arg1[%c0_72, %c5_73, %c1_74, %c0_75] : memref<1x18x18x3xf32, #tpu.memory_space<vmem>>, vector<1x1x16x3xf32>
    %50 = vector.shape_cast %49 : vector<1x1x16x3xf32> to vector<16x3xf32>
    %c0_76 = arith.constant 0 : index
    %c6_77 = arith.constant 6 : index
    %c1_78 = arith.constant 1 : index
    %c0_79 = arith.constant 0 : index
    %51 = vector.load %arg1[%c0_76, %c6_77, %c1_78, %c0_79] : memref<1x18x18x3xf32, #tpu.memory_space<vmem>>, vector<1x1x16x3xf32>
    %52 = vector.shape_cast %51 : vector<1x1x16x3xf32> to vector<16x3xf32>
    %c0_80 = arith.constant 0 : index
    %c7_81 = arith.constant 7 : index
    %c1_82 = arith.constant 1 : index
    %c0_83 = arith.constant 0 : index
    %53 = vector.load %arg1[%c0_80, %c7_81, %c1_82, %c0_83] : memref<1x18x18x3xf32, #tpu.memory_space<vmem>>, vector<1x1x16x3xf32>
    %54 = vector.shape_cast %53 : vector<1x1x16x3xf32> to vector<16x3xf32>
    %c0_84 = arith.constant 0 : index
    %c8_85 = arith.constant 8 : index
    %c1_86 = arith.constant 1 : index
    %c0_87 = arith.constant 0 : index
    %55 = vector.load %arg1[%c0_84, %c8_85, %c1_86, %c0_87] : memref<1x18x18x3xf32, #tpu.memory_space<vmem>>, vector<1x1x16x3xf32>
    %56 = vector.shape_cast %55 : vector<1x1x16x3xf32> to vector<16x3xf32>
    %c0_88 = arith.constant 0 : index
    %c9_89 = arith.constant 9 : index
    %c1_90 = arith.constant 1 : index
    %c0_91 = arith.constant 0 : index
    %57 = vector.load %arg1[%c0_88, %c9_89, %c1_90, %c0_91] : memref<1x18x18x3xf32, #tpu.memory_space<vmem>>, vector<1x1x16x3xf32>
    %58 = vector.shape_cast %57 : vector<1x1x16x3xf32> to vector<16x3xf32>
    %c0_92 = arith.constant 0 : index
    %c10_93 = arith.constant 10 : index
    %c1_94 = arith.constant 1 : index
    %c0_95 = arith.constant 0 : index
    %59 = vector.load %arg1[%c0_92, %c10_93, %c1_94, %c0_95] : memref<1x18x18x3xf32, #tpu.memory_space<vmem>>, vector<1x1x16x3xf32>
    %60 = vector.shape_cast %59 : vector<1x1x16x3xf32> to vector<16x3xf32>
    %c0_96 = arith.constant 0 : index
    %c11_97 = arith.constant 11 : index
    %c1_98 = arith.constant 1 : index
    %c0_99 = arith.constant 0 : index
    %61 = vector.load %arg1[%c0_96, %c11_97, %c1_98, %c0_99] : memref<1x18x18x3xf32, #tpu.memory_space<vmem>>, vector<1x1x16x3xf32>
    %62 = vector.shape_cast %61 : vector<1x1x16x3xf32> to vector<16x3xf32>
    %c0_100 = arith.constant 0 : index
    %c12_101 = arith.constant 12 : index
    %c1_102 = arith.constant 1 : index
    %c0_103 = arith.constant 0 : index
    %63 = vector.load %arg1[%c0_100, %c12_101, %c1_102, %c0_103] : memref<1x18x18x3xf32, #tpu.memory_space<vmem>>, vector<1x1x16x3xf32>
    %64 = vector.shape_cast %63 : vector<1x1x16x3xf32> to vector<16x3xf32>
    %c0_104 = arith.constant 0 : index
    %c13_105 = arith.constant 13 : index
    %c1_106 = arith.constant 1 : index
    %c0_107 = arith.constant 0 : index
    %65 = vector.load %arg1[%c0_104, %c13_105, %c1_106, %c0_107] : memref<1x18x18x3xf32, #tpu.memory_space<vmem>>, vector<1x1x16x3xf32>
    %66 = vector.shape_cast %65 : vector<1x1x16x3xf32> to vector<16x3xf32>
    %c0_108 = arith.constant 0 : index
    %c14_109 = arith.constant 14 : index
    %c1_110 = arith.constant 1 : index
    %c0_111 = arith.constant 0 : index
    %67 = vector.load %arg1[%c0_108, %c14_109, %c1_110, %c0_111] : memref<1x18x18x3xf32, #tpu.memory_space<vmem>>, vector<1x1x16x3xf32>
    %68 = vector.shape_cast %67 : vector<1x1x16x3xf32> to vector<16x3xf32>
    %c0_112 = arith.constant 0 : index
    %c15_113 = arith.constant 15 : index
    %c1_114 = arith.constant 1 : index
    %c0_115 = arith.constant 0 : index
    %69 = vector.load %arg1[%c0_112, %c15_113, %c1_114, %c0_115] : memref<1x18x18x3xf32, #tpu.memory_space<vmem>>, vector<1x1x16x3xf32>
    %70 = vector.shape_cast %69 : vector<1x1x16x3xf32> to vector<16x3xf32>
    %71 = tpu.concatenate %40, %42, %44, %46, %48, %50, %52, %54, %56, %58, %60, %62, %64, %66, %68, %70 in 0 : vector<16x3xf32>, vector<16x3xf32>, vector<16x3xf32>, vector<16x3xf32>, vector<16x3xf32>, vector<16x3xf32>, vector<16x3xf32>, vector<16x3xf32>, vector<16x3xf32>, vector<16x3xf32>, vector<16x3xf32>, vector<16x3xf32>, vector<16x3xf32>, vector<16x3xf32>, vector<16x3xf32>, vector<16x3xf32> -> vector<256x3xf32>
    %72 = arith.truncf %71 : vector<256x3xf32> to vector<256x3xbf16>
    %c1_116 = arith.constant 1 : index
    %c0_117 = arith.constant 0 : index
    %c0_118 = arith.constant 0 : index
    %73 = vector.load %arg2[%c1_116, %c0_117, %c0_118] : memref<9x3x16xbf16, #tpu.memory_space<vmem>>, vector<1x3x16xbf16>
    %74 = vector.shape_cast %73 : vector<1x3x16xbf16> to vector<3x16xbf16>
    %cst_119 = arith.constant dense<0.000000e+00> : vector<256x16xf32>
    %75 = tpu.matmul %72, %74, %cst_119 {dimension_numbers = #tpu.dot_dimension_numbers<[1], [0], [0], [1], [0, 0, 1, 1], [], []>} : vector<256x3xbf16>, vector<3x16xbf16>, vector<256x16xf32> -> vector<256x16xf32>
    %76 = arith.addf %38, %75 : vector<256x16xf32>
    %c0_120 = arith.constant 0 : index
    %c0_121 = arith.constant 0 : index
    %c2_122 = arith.constant 2 : index
    %c0_123 = arith.constant 0 : index
    %77 = vector.load %arg1[%c0_120, %c0_121, %c2_122, %c0_123] : memref<1x18x18x3xf32, #tpu.memory_space<vmem>>, vector<1x1x16x3xf32>
    %78 = vector.shape_cast %77 : vector<1x1x16x3xf32> to vector<16x3xf32>
    %c0_124 = arith.constant 0 : index
    %c1_125 = arith.constant 1 : index
    %c2_126 = arith.constant 2 : index
    %c0_127 = arith.constant 0 : index
    %79 = vector.load %arg1[%c0_124, %c1_125, %c2_126, %c0_127] : memref<1x18x18x3xf32, #tpu.memory_space<vmem>>, vector<1x1x16x3xf32>
    %80 = vector.shape_cast %79 : vector<1x1x16x3xf32> to vector<16x3xf32>
    %c0_128 = arith.constant 0 : index
    %c2_129 = arith.constant 2 : index
    %c2_130 = arith.constant 2 : index
    %c0_131 = arith.constant 0 : index
    %81 = vector.load %arg1[%c0_128, %c2_129, %c2_130, %c0_131] : memref<1x18x18x3xf32, #tpu.memory_space<vmem>>, vector<1x1x16x3xf32>
    %82 = vector.shape_cast %81 : vector<1x1x16x3xf32> to vector<16x3xf32>
    %c0_132 = arith.constant 0 : index
    %c3_133 = arith.constant 3 : index
    %c2_134 = arith.constant 2 : index
    %c0_135 = arith.constant 0 : index
    %83 = vector.load %arg1[%c0_132, %c3_133, %c2_134, %c0_135] : memref<1x18x18x3xf32, #tpu.memory_space<vmem>>, vector<1x1x16x3xf32>
    %84 = vector.shape_cast %83 : vector<1x1x16x3xf32> to vector<16x3xf32>
    %c0_136 = arith.constant 0 : index
    %c4_137 = arith.constant 4 : index
    %c2_138 = arith.constant 2 : index
    %c0_139 = arith.constant 0 : index
    %85 = vector.load %arg1[%c0_136, %c4_137, %c2_138, %c0_139] : memref<1x18x18x3xf32, #tpu.memory_space<vmem>>, vector<1x1x16x3xf32>
    %86 = vector.shape_cast %85 : vector<1x1x16x3xf32> to vector<16x3xf32>
    %c0_140 = arith.constant 0 : index
    %c5_141 = arith.constant 5 : index
    %c2_142 = arith.constant 2 : index
    %c0_143 = arith.constant 0 : index
    %87 = vector.load %arg1[%c0_140, %c5_141, %c2_142, %c0_143] : memref<1x18x18x3xf32, #tpu.memory_space<vmem>>, vector<1x1x16x3xf32>
    %88 = vector.shape_cast %87 : vector<1x1x16x3xf32> to vector<16x3xf32>
    %c0_144 = arith.constant 0 : index
    %c6_145 = arith.constant 6 : index
    %c2_146 = arith.constant 2 : index
    %c0_147 = arith.constant 0 : index
    %89 = vector.load %arg1[%c0_144, %c6_145, %c2_146, %c0_147] : memref<1x18x18x3xf32, #tpu.memory_space<vmem>>, vector<1x1x16x3xf32>
    %90 = vector.shape_cast %89 : vector<1x1x16x3xf32> to vector<16x3xf32>
    %c0_148 = arith.constant 0 : index
    %c7_149 = arith.constant 7 : index
    %c2_150 = arith.constant 2 : index
    %c0_151 = arith.constant 0 : index
    %91 = vector.load %arg1[%c0_148, %c7_149, %c2_150, %c0_151] : memref<1x18x18x3xf32, #tpu.memory_space<vmem>>, vector<1x1x16x3xf32>
    %92 = vector.shape_cast %91 : vector<1x1x16x3xf32> to vector<16x3xf32>
    %c0_152 = arith.constant 0 : index
    %c8_153 = arith.constant 8 : index
    %c2_154 = arith.constant 2 : index
    %c0_155 = arith.constant 0 : index
    %93 = vector.load %arg1[%c0_152, %c8_153, %c2_154, %c0_155] : memref<1x18x18x3xf32, #tpu.memory_space<vmem>>, vector<1x1x16x3xf32>
    %94 = vector.shape_cast %93 : vector<1x1x16x3xf32> to vector<16x3xf32>
    %c0_156 = arith.constant 0 : index
    %c9_157 = arith.constant 9 : index
    %c2_158 = arith.constant 2 : index
    %c0_159 = arith.constant 0 : index
    %95 = vector.load %arg1[%c0_156, %c9_157, %c2_158, %c0_159] : memref<1x18x18x3xf32, #tpu.memory_space<vmem>>, vector<1x1x16x3xf32>
    %96 = vector.shape_cast %95 : vector<1x1x16x3xf32> to vector<16x3xf32>
    %c0_160 = arith.constant 0 : index
    %c10_161 = arith.constant 10 : index
    %c2_162 = arith.constant 2 : index
    %c0_163 = arith.constant 0 : index
    %97 = vector.load %arg1[%c0_160, %c10_161, %c2_162, %c0_163] : memref<1x18x18x3xf32, #tpu.memory_space<vmem>>, vector<1x1x16x3xf32>
    %98 = vector.shape_cast %97 : vector<1x1x16x3xf32> to vector<16x3xf32>
    %c0_164 = arith.constant 0 : index
    %c11_165 = arith.constant 11 : index
    %c2_166 = arith.constant 2 : index
    %c0_167 = arith.constant 0 : index
    %99 = vector.load %arg1[%c0_164, %c11_165, %c2_166, %c0_167] : memref<1x18x18x3xf32, #tpu.memory_space<vmem>>, vector<1x1x16x3xf32>
    %100 = vector.shape_cast %99 : vector<1x1x16x3xf32> to vector<16x3xf32>
    %c0_168 = arith.constant 0 : index
    %c12_169 = arith.constant 12 : index
    %c2_170 = arith.constant 2 : index
    %c0_171 = arith.constant 0 : index
    %101 = vector.load %arg1[%c0_168, %c12_169, %c2_170, %c0_171] : memref<1x18x18x3xf32, #tpu.memory_space<vmem>>, vector<1x1x16x3xf32>
    %102 = vector.shape_cast %101 : vector<1x1x16x3xf32> to vector<16x3xf32>
    %c0_172 = arith.constant 0 : index
    %c13_173 = arith.constant 13 : index
    %c2_174 = arith.constant 2 : index
    %c0_175 = arith.constant 0 : index
    %103 = vector.load %arg1[%c0_172, %c13_173, %c2_174, %c0_175] : memref<1x18x18x3xf32, #tpu.memory_space<vmem>>, vector<1x1x16x3xf32>
    %104 = vector.shape_cast %103 : vector<1x1x16x3xf32> to vector<16x3xf32>
    %c0_176 = arith.constant 0 : index
    %c14_177 = arith.constant 14 : index
    %c2_178 = arith.constant 2 : index
    %c0_179 = arith.constant 0 : index
    %105 = vector.load %arg1[%c0_176, %c14_177, %c2_178, %c0_179] : memref<1x18x18x3xf32, #tpu.memory_space<vmem>>, vector<1x1x16x3xf32>
    %106 = vector.shape_cast %105 : vector<1x1x16x3xf32> to vector<16x3xf32>
    %c0_180 = arith.constant 0 : index
    %c15_181 = arith.constant 15 : index
    %c2_182 = arith.constant 2 : index
    %c0_183 = arith.constant 0 : index
    %107 = vector.load %arg1[%c0_180, %c15_181, %c2_182, %c0_183] : memref<1x18x18x3xf32, #tpu.memory_space<vmem>>, vector<1x1x16x3xf32>
    %108 = vector.shape_cast %107 : vector<1x1x16x3xf32> to vector<16x3xf32>
    %109 = tpu.concatenate %78, %80, %82, %84, %86, %88, %90, %92, %94, %96, %98, %100, %102, %104, %106, %108 in 0 : vector<16x3xf32>, vector<16x3xf32>, vector<16x3xf32>, vector<16x3xf32>, vector<16x3xf32>, vector<16x3xf32>, vector<16x3xf32>, vector<16x3xf32>, vector<16x3xf32>, vector<16x3xf32>, vector<16x3xf32>, vector<16x3xf32>, vector<16x3xf32>, vector<16x3xf32>, vector<16x3xf32>, vector<16x3xf32> -> vector<256x3xf32>
    %110 = arith.truncf %109 : vector<256x3xf32> to vector<256x3xbf16>
    %c2_184 = arith.constant 2 : index
    %c0_185 = arith.constant 0 : index
    %c0_186 = arith.constant 0 : index
    %111 = vector.load %arg2[%c2_184, %c0_185, %c0_186] : memref<9x3x16xbf16, #tpu.memory_space<vmem>>, vector<1x3x16xbf16>
    %112 = vector.shape_cast %111 : vector<1x3x16xbf16> to vector<3x16xbf16>
    %cst_187 = arith.constant dense<0.000000e+00> : vector<256x16xf32>
    %113 = tpu.matmul %110, %112, %cst_187 {dimension_numbers = #tpu.dot_dimension_numbers<[1], [0], [0], [1], [0, 0, 1, 1], [], []>} : vector<256x3xbf16>, vector<3x16xbf16>, vector<256x16xf32> -> vector<256x16xf32>
    %114 = arith.addf %76, %113 : vector<256x16xf32>
    %c0_188 = arith.constant 0 : index
    %c1_189 = arith.constant 1 : index
    %c0_190 = arith.constant 0 : index
    %c0_191 = arith.constant 0 : index
    %115 = vector.load %arg1[%c0_188, %c1_189, %c0_190, %c0_191] : memref<1x18x18x3xf32, #tpu.memory_space<vmem>>, vector<1x1x16x3xf32>
    %116 = vector.shape_cast %115 : vector<1x1x16x3xf32> to vector<16x3xf32>
    %c0_192 = arith.constant 0 : index
    %c2_193 = arith.constant 2 : index
    %c0_194 = arith.constant 0 : index
    %c0_195 = arith.constant 0 : index
    %117 = vector.load %arg1[%c0_192, %c2_193, %c0_194, %c0_195] : memref<1x18x18x3xf32, #tpu.memory_space<vmem>>, vector<1x1x16x3xf32>
    %118 = vector.shape_cast %117 : vector<1x1x16x3xf32> to vector<16x3xf32>
    %c0_196 = arith.constant 0 : index
    %c3_197 = arith.constant 3 : index
    %c0_198 = arith.constant 0 : index
    %c0_199 = arith.constant 0 : index
    %119 = vector.load %arg1[%c0_196, %c3_197, %c0_198, %c0_199] : memref<1x18x18x3xf32, #tpu.memory_space<vmem>>, vector<1x1x16x3xf32>
    %120 = vector.shape_cast %119 : vector<1x1x16x3xf32> to vector<16x3xf32>
    %c0_200 = arith.constant 0 : index
    %c4_201 = arith.constant 4 : index
    %c0_202 = arith.constant 0 : index
    %c0_203 = arith.constant 0 : index
    %121 = vector.load %arg1[%c0_200, %c4_201, %c0_202, %c0_203] : memref<1x18x18x3xf32, #tpu.memory_space<vmem>>, vector<1x1x16x3xf32>
    %122 = vector.shape_cast %121 : vector<1x1x16x3xf32> to vector<16x3xf32>
    %c0_204 = arith.constant 0 : index
    %c5_205 = arith.constant 5 : index
    %c0_206 = arith.constant 0 : index
    %c0_207 = arith.constant 0 : index
    %123 = vector.load %arg1[%c0_204, %c5_205, %c0_206, %c0_207] : memref<1x18x18x3xf32, #tpu.memory_space<vmem>>, vector<1x1x16x3xf32>
    %124 = vector.shape_cast %123 : vector<1x1x16x3xf32> to vector<16x3xf32>
    %c0_208 = arith.constant 0 : index
    %c6_209 = arith.constant 6 : index
    %c0_210 = arith.constant 0 : index
    %c0_211 = arith.constant 0 : index
    %125 = vector.load %arg1[%c0_208, %c6_209, %c0_210, %c0_211] : memref<1x18x18x3xf32, #tpu.memory_space<vmem>>, vector<1x1x16x3xf32>
    %126 = vector.shape_cast %125 : vector<1x1x16x3xf32> to vector<16x3xf32>
    %c0_212 = arith.constant 0 : index
    %c7_213 = arith.constant 7 : index
    %c0_214 = arith.constant 0 : index
    %c0_215 = arith.constant 0 : index
    %127 = vector.load %arg1[%c0_212, %c7_213, %c0_214, %c0_215] : memref<1x18x18x3xf32, #tpu.memory_space<vmem>>, vector<1x1x16x3xf32>
    %128 = vector.shape_cast %127 : vector<1x1x16x3xf32> to vector<16x3xf32>
    %c0_216 = arith.constant 0 : index
    %c8_217 = arith.constant 8 : index
    %c0_218 = arith.constant 0 : index
    %c0_219 = arith.constant 0 : index
    %129 = vector.load %arg1[%c0_216, %c8_217, %c0_218, %c0_219] : memref<1x18x18x3xf32, #tpu.memory_space<vmem>>, vector<1x1x16x3xf32>
    %130 = vector.shape_cast %129 : vector<1x1x16x3xf32> to vector<16x3xf32>
    %c0_220 = arith.constant 0 : index
    %c9_221 = arith.constant 9 : index
    %c0_222 = arith.constant 0 : index
    %c0_223 = arith.constant 0 : index
    %131 = vector.load %arg1[%c0_220, %c9_221, %c0_222, %c0_223] : memref<1x18x18x3xf32, #tpu.memory_space<vmem>>, vector<1x1x16x3xf32>
    %132 = vector.shape_cast %131 : vector<1x1x16x3xf32> to vector<16x3xf32>
    %c0_224 = arith.constant 0 : index
    %c10_225 = arith.constant 10 : index
    %c0_226 = arith.constant 0 : index
    %c0_227 = arith.constant 0 : index
    %133 = vector.load %arg1[%c0_224, %c10_225, %c0_226, %c0_227] : memref<1x18x18x3xf32, #tpu.memory_space<vmem>>, vector<1x1x16x3xf32>
    %134 = vector.shape_cast %133 : vector<1x1x16x3xf32> to vector<16x3xf32>
    %c0_228 = arith.constant 0 : index
    %c11_229 = arith.constant 11 : index
    %c0_230 = arith.constant 0 : index
    %c0_231 = arith.constant 0 : index
    %135 = vector.load %arg1[%c0_228, %c11_229, %c0_230, %c0_231] : memref<1x18x18x3xf32, #tpu.memory_space<vmem>>, vector<1x1x16x3xf32>
    %136 = vector.shape_cast %135 : vector<1x1x16x3xf32> to vector<16x3xf32>
    %c0_232 = arith.constant 0 : index
    %c12_233 = arith.constant 12 : index
    %c0_234 = arith.constant 0 : index
    %c0_235 = arith.constant 0 : index
    %137 = vector.load %arg1[%c0_232, %c12_233, %c0_234, %c0_235] : memref<1x18x18x3xf32, #tpu.memory_space<vmem>>, vector<1x1x16x3xf32>
    %138 = vector.shape_cast %137 : vector<1x1x16x3xf32> to vector<16x3xf32>
    %c0_236 = arith.constant 0 : index
    %c13_237 = arith.constant 13 : index
    %c0_238 = arith.constant 0 : index
    %c0_239 = arith.constant 0 : index
    %139 = vector.load %arg1[%c0_236, %c13_237, %c0_238, %c0_239] : memref<1x18x18x3xf32, #tpu.memory_space<vmem>>, vector<1x1x16x3xf32>
    %140 = vector.shape_cast %139 : vector<1x1x16x3xf32> to vector<16x3xf32>
    %c0_240 = arith.constant 0 : index
    %c14_241 = arith.constant 14 : index
    %c0_242 = arith.constant 0 : index
    %c0_243 = arith.constant 0 : index
    %141 = vector.load %arg1[%c0_240, %c14_241, %c0_242, %c0_243] : memref<1x18x18x3xf32, #tpu.memory_space<vmem>>, vector<1x1x16x3xf32>
    %142 = vector.shape_cast %141 : vector<1x1x16x3xf32> to vector<16x3xf32>
    %c0_244 = arith.constant 0 : index
    %c15_245 = arith.constant 15 : index
    %c0_246 = arith.constant 0 : index
    %c0_247 = arith.constant 0 : index
    %143 = vector.load %arg1[%c0_244, %c15_245, %c0_246, %c0_247] : memref<1x18x18x3xf32, #tpu.memory_space<vmem>>, vector<1x1x16x3xf32>
    %144 = vector.shape_cast %143 : vector<1x1x16x3xf32> to vector<16x3xf32>
    %c0_248 = arith.constant 0 : index
    %c16 = arith.constant 16 : index
    %c0_249 = arith.constant 0 : index
    %c0_250 = arith.constant 0 : index
    %145 = vector.load %arg1[%c0_248, %c16, %c0_249, %c0_250] : memref<1x18x18x3xf32, #tpu.memory_space<vmem>>, vector<1x1x16x3xf32>
    %146 = vector.shape_cast %145 : vector<1x1x16x3xf32> to vector<16x3xf32>
    %147 = tpu.concatenate %116, %118, %120, %122, %124, %126, %128, %130, %132, %134, %136, %138, %140, %142, %144, %146 in 0 : vector<16x3xf32>, vector<16x3xf32>, vector<16x3xf32>, vector<16x3xf32>, vector<16x3xf32>, vector<16x3xf32>, vector<16x3xf32>, vector<16x3xf32>, vector<16x3xf32>, vector<16x3xf32>, vector<16x3xf32>, vector<16x3xf32>, vector<16x3xf32>, vector<16x3xf32>, vector<16x3xf32>, vector<16x3xf32> -> vector<256x3xf32>
    %148 = arith.truncf %147 : vector<256x3xf32> to vector<256x3xbf16>
    %c3_251 = arith.constant 3 : index
    %c0_252 = arith.constant 0 : index
    %c0_253 = arith.constant 0 : index
    %149 = vector.load %arg2[%c3_251, %c0_252, %c0_253] : memref<9x3x16xbf16, #tpu.memory_space<vmem>>, vector<1x3x16xbf16>
    %150 = vector.shape_cast %149 : vector<1x3x16xbf16> to vector<3x16xbf16>
    %cst_254 = arith.constant dense<0.000000e+00> : vector<256x16xf32>
    %151 = tpu.matmul %148, %150, %cst_254 {dimension_numbers = #tpu.dot_dimension_numbers<[1], [0], [0], [1], [0, 0, 1, 1], [], []>} : vector<256x3xbf16>, vector<3x16xbf16>, vector<256x16xf32> -> vector<256x16xf32>
    %152 = arith.addf %114, %151 : vector<256x16xf32>
    %c0_255 = arith.constant 0 : index
    %c1_256 = arith.constant 1 : index
    %c1_257 = arith.constant 1 : index
    %c0_258 = arith.constant 0 : index
    %153 = vector.load %arg1[%c0_255, %c1_256, %c1_257, %c0_258] : memref<1x18x18x3xf32, #tpu.memory_space<vmem>>, vector<1x1x16x3xf32>
    %154 = vector.shape_cast %153 : vector<1x1x16x3xf32> to vector<16x3xf32>
    %c0_259 = arith.constant 0 : index
    %c2_260 = arith.constant 2 : index
    %c1_261 = arith.constant 1 : index
    %c0_262 = arith.constant 0 : index
    %155 = vector.load %arg1[%c0_259, %c2_260, %c1_261, %c0_262] : memref<1x18x18x3xf32, #tpu.memory_space<vmem>>, vector<1x1x16x3xf32>
    %156 = vector.shape_cast %155 : vector<1x1x16x3xf32> to vector<16x3xf32>
    %c0_263 = arith.constant 0 : index
    %c3_264 = arith.constant 3 : index
    %c1_265 = arith.constant 1 : index
    %c0_266 = arith.constant 0 : index
    %157 = vector.load %arg1[%c0_263, %c3_264, %c1_265, %c0_266] : memref<1x18x18x3xf32, #tpu.memory_space<vmem>>, vector<1x1x16x3xf32>
    %158 = vector.shape_cast %157 : vector<1x1x16x3xf32> to vector<16x3xf32>
    %c0_267 = arith.constant 0 : index
    %c4_268 = arith.constant 4 : index
    %c1_269 = arith.constant 1 : index
    %c0_270 = arith.constant 0 : index
    %159 = vector.load %arg1[%c0_267, %c4_268, %c1_269, %c0_270] : memref<1x18x18x3xf32, #tpu.memory_space<vmem>>, vector<1x1x16x3xf32>
    %160 = vector.shape_cast %159 : vector<1x1x16x3xf32> to vector<16x3xf32>
    %c0_271 = arith.constant 0 : index
    %c5_272 = arith.constant 5 : index
    %c1_273 = arith.constant 1 : index
    %c0_274 = arith.constant 0 : index
    %161 = vector.load %arg1[%c0_271, %c5_272, %c1_273, %c0_274] : memref<1x18x18x3xf32, #tpu.memory_space<vmem>>, vector<1x1x16x3xf32>
    %162 = vector.shape_cast %161 : vector<1x1x16x3xf32> to vector<16x3xf32>
    %c0_275 = arith.constant 0 : index
    %c6_276 = arith.constant 6 : index
    %c1_277 = arith.constant 1 : index
    %c0_278 = arith.constant 0 : index
    %163 = vector.load %arg1[%c0_275, %c6_276, %c1_277, %c0_278] : memref<1x18x18x3xf32, #tpu.memory_space<vmem>>, vector<1x1x16x3xf32>
    %164 = vector.shape_cast %163 : vector<1x1x16x3xf32> to vector<16x3xf32>
    %c0_279 = arith.constant 0 : index
    %c7_280 = arith.constant 7 : index
    %c1_281 = arith.constant 1 : index
    %c0_282 = arith.constant 0 : index
    %165 = vector.load %arg1[%c0_279, %c7_280, %c1_281, %c0_282] : memref<1x18x18x3xf32, #tpu.memory_space<vmem>>, vector<1x1x16x3xf32>
    %166 = vector.shape_cast %165 : vector<1x1x16x3xf32> to vector<16x3xf32>
    %c0_283 = arith.constant 0 : index
    %c8_284 = arith.constant 8 : index
    %c1_285 = arith.constant 1 : index
    %c0_286 = arith.constant 0 : index
    %167 = vector.load %arg1[%c0_283, %c8_284, %c1_285, %c0_286] : memref<1x18x18x3xf32, #tpu.memory_space<vmem>>, vector<1x1x16x3xf32>
    %168 = vector.shape_cast %167 : vector<1x1x16x3xf32> to vector<16x3xf32>
    %c0_287 = arith.constant 0 : index
    %c9_288 = arith.constant 9 : index
    %c1_289 = arith.constant 1 : index
    %c0_290 = arith.constant 0 : index
    %169 = vector.load %arg1[%c0_287, %c9_288, %c1_289, %c0_290] : memref<1x18x18x3xf32, #tpu.memory_space<vmem>>, vector<1x1x16x3xf32>
    %170 = vector.shape_cast %169 : vector<1x1x16x3xf32> to vector<16x3xf32>
    %c0_291 = arith.constant 0 : index
    %c10_292 = arith.constant 10 : index
    %c1_293 = arith.constant 1 : index
    %c0_294 = arith.constant 0 : index
    %171 = vector.load %arg1[%c0_291, %c10_292, %c1_293, %c0_294] : memref<1x18x18x3xf32, #tpu.memory_space<vmem>>, vector<1x1x16x3xf32>
    %172 = vector.shape_cast %171 : vector<1x1x16x3xf32> to vector<16x3xf32>
    %c0_295 = arith.constant 0 : index
    %c11_296 = arith.constant 11 : index
    %c1_297 = arith.constant 1 : index
    %c0_298 = arith.constant 0 : index
    %173 = vector.load %arg1[%c0_295, %c11_296, %c1_297, %c0_298] : memref<1x18x18x3xf32, #tpu.memory_space<vmem>>, vector<1x1x16x3xf32>
    %174 = vector.shape_cast %173 : vector<1x1x16x3xf32> to vector<16x3xf32>
    %c0_299 = arith.constant 0 : index
    %c12_300 = arith.constant 12 : index
    %c1_301 = arith.constant 1 : index
    %c0_302 = arith.constant 0 : index
    %175 = vector.load %arg1[%c0_299, %c12_300, %c1_301, %c0_302] : memref<1x18x18x3xf32, #tpu.memory_space<vmem>>, vector<1x1x16x3xf32>
    %176 = vector.shape_cast %175 : vector<1x1x16x3xf32> to vector<16x3xf32>
    %c0_303 = arith.constant 0 : index
    %c13_304 = arith.constant 13 : index
    %c1_305 = arith.constant 1 : index
    %c0_306 = arith.constant 0 : index
    %177 = vector.load %arg1[%c0_303, %c13_304, %c1_305, %c0_306] : memref<1x18x18x3xf32, #tpu.memory_space<vmem>>, vector<1x1x16x3xf32>
    %178 = vector.shape_cast %177 : vector<1x1x16x3xf32> to vector<16x3xf32>
    %c0_307 = arith.constant 0 : index
    %c14_308 = arith.constant 14 : index
    %c1_309 = arith.constant 1 : index
    %c0_310 = arith.constant 0 : index
    %179 = vector.load %arg1[%c0_307, %c14_308, %c1_309, %c0_310] : memref<1x18x18x3xf32, #tpu.memory_space<vmem>>, vector<1x1x16x3xf32>
    %180 = vector.shape_cast %179 : vector<1x1x16x3xf32> to vector<16x3xf32>
    %c0_311 = arith.constant 0 : index
    %c15_312 = arith.constant 15 : index
    %c1_313 = arith.constant 1 : index
    %c0_314 = arith.constant 0 : index
    %181 = vector.load %arg1[%c0_311, %c15_312, %c1_313, %c0_314] : memref<1x18x18x3xf32, #tpu.memory_space<vmem>>, vector<1x1x16x3xf32>
    %182 = vector.shape_cast %181 : vector<1x1x16x3xf32> to vector<16x3xf32>
    %c0_315 = arith.constant 0 : index
    %c16_316 = arith.constant 16 : index
    %c1_317 = arith.constant 1 : index
    %c0_318 = arith.constant 0 : index
    %183 = vector.load %arg1[%c0_315, %c16_316, %c1_317, %c0_318] : memref<1x18x18x3xf32, #tpu.memory_space<vmem>>, vector<1x1x16x3xf32>
    %184 = vector.shape_cast %183 : vector<1x1x16x3xf32> to vector<16x3xf32>
    %185 = tpu.concatenate %154, %156, %158, %160, %162, %164, %166, %168, %170, %172, %174, %176, %178, %180, %182, %184 in 0 : vector<16x3xf32>, vector<16x3xf32>, vector<16x3xf32>, vector<16x3xf32>, vector<16x3xf32>, vector<16x3xf32>, vector<16x3xf32>, vector<16x3xf32>, vector<16x3xf32>, vector<16x3xf32>, vector<16x3xf32>, vector<16x3xf32>, vector<16x3xf32>, vector<16x3xf32>, vector<16x3xf32>, vector<16x3xf32> -> vector<256x3xf32>
    %186 = arith.truncf %185 : vector<256x3xf32> to vector<256x3xbf16>
    %c4_319 = arith.constant 4 : index
    %c0_320 = arith.constant 0 : index
    %c0_321 = arith.constant 0 : index
    %187 = vector.load %arg2[%c4_319, %c0_320, %c0_321] : memref<9x3x16xbf16, #tpu.memory_space<vmem>>, vector<1x3x16xbf16>
    %188 = vector.shape_cast %187 : vector<1x3x16xbf16> to vector<3x16xbf16>
    %cst_322 = arith.constant dense<0.000000e+00> : vector<256x16xf32>
    %189 = tpu.matmul %186, %188, %cst_322 {dimension_numbers = #tpu.dot_dimension_numbers<[1], [0], [0], [1], [0, 0, 1, 1], [], []>} : vector<256x3xbf16>, vector<3x16xbf16>, vector<256x16xf32> -> vector<256x16xf32>
    %190 = arith.addf %152, %189 : vector<256x16xf32>
    %c0_323 = arith.constant 0 : index
    %c1_324 = arith.constant 1 : index
    %c2_325 = arith.constant 2 : index
    %c0_326 = arith.constant 0 : index
    %191 = vector.load %arg1[%c0_323, %c1_324, %c2_325, %c0_326] : memref<1x18x18x3xf32, #tpu.memory_space<vmem>>, vector<1x1x16x3xf32>
    %192 = vector.shape_cast %191 : vector<1x1x16x3xf32> to vector<16x3xf32>
    %c0_327 = arith.constant 0 : index
    %c2_328 = arith.constant 2 : index
    %c2_329 = arith.constant 2 : index
    %c0_330 = arith.constant 0 : index
    %193 = vector.load %arg1[%c0_327, %c2_328, %c2_329, %c0_330] : memref<1x18x18x3xf32, #tpu.memory_space<vmem>>, vector<1x1x16x3xf32>
    %194 = vector.shape_cast %193 : vector<1x1x16x3xf32> to vector<16x3xf32>
    %c0_331 = arith.constant 0 : index
    %c3_332 = arith.constant 3 : index
    %c2_333 = arith.constant 2 : index
    %c0_334 = arith.constant 0 : index
    %195 = vector.load %arg1[%c0_331, %c3_332, %c2_333, %c0_334] : memref<1x18x18x3xf32, #tpu.memory_space<vmem>>, vector<1x1x16x3xf32>
    %196 = vector.shape_cast %195 : vector<1x1x16x3xf32> to vector<16x3xf32>
    %c0_335 = arith.constant 0 : index
    %c4_336 = arith.constant 4 : index
    %c2_337 = arith.constant 2 : index
    %c0_338 = arith.constant 0 : index
    %197 = vector.load %arg1[%c0_335, %c4_336, %c2_337, %c0_338] : memref<1x18x18x3xf32, #tpu.memory_space<vmem>>, vector<1x1x16x3xf32>
    %198 = vector.shape_cast %197 : vector<1x1x16x3xf32> to vector<16x3xf32>
    %c0_339 = arith.constant 0 : index
    %c5_340 = arith.constant 5 : index
    %c2_341 = arith.constant 2 : index
    %c0_342 = arith.constant 0 : index
    %199 = vector.load %arg1[%c0_339, %c5_340, %c2_341, %c0_342] : memref<1x18x18x3xf32, #tpu.memory_space<vmem>>, vector<1x1x16x3xf32>
    %200 = vector.shape_cast %199 : vector<1x1x16x3xf32> to vector<16x3xf32>
    %c0_343 = arith.constant 0 : index
    %c6_344 = arith.constant 6 : index
    %c2_345 = arith.constant 2 : index
    %c0_346 = arith.constant 0 : index
    %201 = vector.load %arg1[%c0_343, %c6_344, %c2_345, %c0_346] : memref<1x18x18x3xf32, #tpu.memory_space<vmem>>, vector<1x1x16x3xf32>
    %202 = vector.shape_cast %201 : vector<1x1x16x3xf32> to vector<16x3xf32>
    %c0_347 = arith.constant 0 : index
    %c7_348 = arith.constant 7 : index
    %c2_349 = arith.constant 2 : index
    %c0_350 = arith.constant 0 : index
    %203 = vector.load %arg1[%c0_347, %c7_348, %c2_349, %c0_350] : memref<1x18x18x3xf32, #tpu.memory_space<vmem>>, vector<1x1x16x3xf32>
    %204 = vector.shape_cast %203 : vector<1x1x16x3xf32> to vector<16x3xf32>
    %c0_351 = arith.constant 0 : index
    %c8_352 = arith.constant 8 : index
    %c2_353 = arith.constant 2 : index
    %c0_354 = arith.constant 0 : index
    %205 = vector.load %arg1[%c0_351, %c8_352, %c2_353, %c0_354] : memref<1x18x18x3xf32, #tpu.memory_space<vmem>>, vector<1x1x16x3xf32>
    %206 = vector.shape_cast %205 : vector<1x1x16x3xf32> to vector<16x3xf32>
    %c0_355 = arith.constant 0 : index
    %c9_356 = arith.constant 9 : index
    %c2_357 = arith.constant 2 : index
    %c0_358 = arith.constant 0 : index
    %207 = vector.load %arg1[%c0_355, %c9_356, %c2_357, %c0_358] : memref<1x18x18x3xf32, #tpu.memory_space<vmem>>, vector<1x1x16x3xf32>
    %208 = vector.shape_cast %207 : vector<1x1x16x3xf32> to vector<16x3xf32>
    %c0_359 = arith.constant 0 : index
    %c10_360 = arith.constant 10 : index
    %c2_361 = arith.constant 2 : index
    %c0_362 = arith.constant 0 : index
    %209 = vector.load %arg1[%c0_359, %c10_360, %c2_361, %c0_362] : memref<1x18x18x3xf32, #tpu.memory_space<vmem>>, vector<1x1x16x3xf32>
    %210 = vector.shape_cast %209 : vector<1x1x16x3xf32> to vector<16x3xf32>
    %c0_363 = arith.constant 0 : index
    %c11_364 = arith.constant 11 : index
    %c2_365 = arith.constant 2 : index
    %c0_366 = arith.constant 0 : index
    %211 = vector.load %arg1[%c0_363, %c11_364, %c2_365, %c0_366] : memref<1x18x18x3xf32, #tpu.memory_space<vmem>>, vector<1x1x16x3xf32>
    %212 = vector.shape_cast %211 : vector<1x1x16x3xf32> to vector<16x3xf32>
    %c0_367 = arith.constant 0 : index
    %c12_368 = arith.constant 12 : index
    %c2_369 = arith.constant 2 : index
    %c0_370 = arith.constant 0 : index
    %213 = vector.load %arg1[%c0_367, %c12_368, %c2_369, %c0_370] : memref<1x18x18x3xf32, #tpu.memory_space<vmem>>, vector<1x1x16x3xf32>
    %214 = vector.shape_cast %213 : vector<1x1x16x3xf32> to vector<16x3xf32>
    %c0_371 = arith.constant 0 : index
    %c13_372 = arith.constant 13 : index
    %c2_373 = arith.constant 2 : index
    %c0_374 = arith.constant 0 : index
    %215 = vector.load %arg1[%c0_371, %c13_372, %c2_373, %c0_374] : memref<1x18x18x3xf32, #tpu.memory_space<vmem>>, vector<1x1x16x3xf32>
    %216 = vector.shape_cast %215 : vector<1x1x16x3xf32> to vector<16x3xf32>
    %c0_375 = arith.constant 0 : index
    %c14_376 = arith.constant 14 : index
    %c2_377 = arith.constant 2 : index
    %c0_378 = arith.constant 0 : index
    %217 = vector.load %arg1[%c0_375, %c14_376, %c2_377, %c0_378] : memref<1x18x18x3xf32, #tpu.memory_space<vmem>>, vector<1x1x16x3xf32>
    %218 = vector.shape_cast %217 : vector<1x1x16x3xf32> to vector<16x3xf32>
    %c0_379 = arith.constant 0 : index
    %c15_380 = arith.constant 15 : index
    %c2_381 = arith.constant 2 : index
    %c0_382 = arith.constant 0 : index
    %219 = vector.load %arg1[%c0_379, %c15_380, %c2_381, %c0_382] : memref<1x18x18x3xf32, #tpu.memory_space<vmem>>, vector<1x1x16x3xf32>
    %220 = vector.shape_cast %219 : vector<1x1x16x3xf32> to vector<16x3xf32>
    %c0_383 = arith.constant 0 : index
    %c16_384 = arith.constant 16 : index
    %c2_385 = arith.constant 2 : index
    %c0_386 = arith.constant 0 : index
    %221 = vector.load %arg1[%c0_383, %c16_384, %c2_385, %c0_386] : memref<1x18x18x3xf32, #tpu.memory_space<vmem>>, vector<1x1x16x3xf32>
    %222 = vector.shape_cast %221 : vector<1x1x16x3xf32> to vector<16x3xf32>
    %223 = tpu.concatenate %192, %194, %196, %198, %200, %202, %204, %206, %208, %210, %212, %214, %216, %218, %220, %222 in 0 : vector<16x3xf32>, vector<16x3xf32>, vector<16x3xf32>, vector<16x3xf32>, vector<16x3xf32>, vector<16x3xf32>, vector<16x3xf32>, vector<16x3xf32>, vector<16x3xf32>, vector<16x3xf32>, vector<16x3xf32>, vector<16x3xf32>, vector<16x3xf32>, vector<16x3xf32>, vector<16x3xf32>, vector<16x3xf32> -> vector<256x3xf32>
    %224 = arith.truncf %223 : vector<256x3xf32> to vector<256x3xbf16>
    %c5_387 = arith.constant 5 : index
    %c0_388 = arith.constant 0 : index
    %c0_389 = arith.constant 0 : index
    %225 = vector.load %arg2[%c5_387, %c0_388, %c0_389] : memref<9x3x16xbf16, #tpu.memory_space<vmem>>, vector<1x3x16xbf16>
    %226 = vector.shape_cast %225 : vector<1x3x16xbf16> to vector<3x16xbf16>
    %cst_390 = arith.constant dense<0.000000e+00> : vector<256x16xf32>
    %227 = tpu.matmul %224, %226, %cst_390 {dimension_numbers = #tpu.dot_dimension_numbers<[1], [0], [0], [1], [0, 0, 1, 1], [], []>} : vector<256x3xbf16>, vector<3x16xbf16>, vector<256x16xf32> -> vector<256x16xf32>
    %228 = arith.addf %190, %227 : vector<256x16xf32>
    %c0_391 = arith.constant 0 : index
    %c2_392 = arith.constant 2 : index
    %c0_393 = arith.constant 0 : index
    %c0_394 = arith.constant 0 : index
    %229 = vector.load %arg1[%c0_391, %c2_392, %c0_393, %c0_394] : memref<1x18x18x3xf32, #tpu.memory_space<vmem>>, vector<1x1x16x3xf32>
    %230 = vector.shape_cast %229 : vector<1x1x16x3xf32> to vector<16x3xf32>
    %c0_395 = arith.constant 0 : index
    %c3_396 = arith.constant 3 : index
    %c0_397 = arith.constant 0 : index
    %c0_398 = arith.constant 0 : index
    %231 = vector.load %arg1[%c0_395, %c3_396, %c0_397, %c0_398] : memref<1x18x18x3xf32, #tpu.memory_space<vmem>>, vector<1x1x16x3xf32>
    %232 = vector.shape_cast %231 : vector<1x1x16x3xf32> to vector<16x3xf32>
    %c0_399 = arith.constant 0 : index
    %c4_400 = arith.constant 4 : index
    %c0_401 = arith.constant 0 : index
    %c0_402 = arith.constant 0 : index
    %233 = vector.load %arg1[%c0_399, %c4_400, %c0_401, %c0_402] : memref<1x18x18x3xf32, #tpu.memory_space<vmem>>, vector<1x1x16x3xf32>
    %234 = vector.shape_cast %233 : vector<1x1x16x3xf32> to vector<16x3xf32>
    %c0_403 = arith.constant 0 : index
    %c5_404 = arith.constant 5 : index
    %c0_405 = arith.constant 0 : index
    %c0_406 = arith.constant 0 : index
    %235 = vector.load %arg1[%c0_403, %c5_404, %c0_405, %c0_406] : memref<1x18x18x3xf32, #tpu.memory_space<vmem>>, vector<1x1x16x3xf32>
    %236 = vector.shape_cast %235 : vector<1x1x16x3xf32> to vector<16x3xf32>
    %c0_407 = arith.constant 0 : index
    %c6_408 = arith.constant 6 : index
    %c0_409 = arith.constant 0 : index
    %c0_410 = arith.constant 0 : index
    %237 = vector.load %arg1[%c0_407, %c6_408, %c0_409, %c0_410] : memref<1x18x18x3xf32, #tpu.memory_space<vmem>>, vector<1x1x16x3xf32>
    %238 = vector.shape_cast %237 : vector<1x1x16x3xf32> to vector<16x3xf32>
    %c0_411 = arith.constant 0 : index
    %c7_412 = arith.constant 7 : index
    %c0_413 = arith.constant 0 : index
    %c0_414 = arith.constant 0 : index
    %239 = vector.load %arg1[%c0_411, %c7_412, %c0_413, %c0_414] : memref<1x18x18x3xf32, #tpu.memory_space<vmem>>, vector<1x1x16x3xf32>
    %240 = vector.shape_cast %239 : vector<1x1x16x3xf32> to vector<16x3xf32>
    %c0_415 = arith.constant 0 : index
    %c8_416 = arith.constant 8 : index
    %c0_417 = arith.constant 0 : index
    %c0_418 = arith.constant 0 : index
    %241 = vector.load %arg1[%c0_415, %c8_416, %c0_417, %c0_418] : memref<1x18x18x3xf32, #tpu.memory_space<vmem>>, vector<1x1x16x3xf32>
    %242 = vector.shape_cast %241 : vector<1x1x16x3xf32> to vector<16x3xf32>
    %c0_419 = arith.constant 0 : index
    %c9_420 = arith.constant 9 : index
    %c0_421 = arith.constant 0 : index
    %c0_422 = arith.constant 0 : index
    %243 = vector.load %arg1[%c0_419, %c9_420, %c0_421, %c0_422] : memref<1x18x18x3xf32, #tpu.memory_space<vmem>>, vector<1x1x16x3xf32>
    %244 = vector.shape_cast %243 : vector<1x1x16x3xf32> to vector<16x3xf32>
    %c0_423 = arith.constant 0 : index
    %c10_424 = arith.constant 10 : index
    %c0_425 = arith.constant 0 : index
    %c0_426 = arith.constant 0 : index
    %245 = vector.load %arg1[%c0_423, %c10_424, %c0_425, %c0_426] : memref<1x18x18x3xf32, #tpu.memory_space<vmem>>, vector<1x1x16x3xf32>
    %246 = vector.shape_cast %245 : vector<1x1x16x3xf32> to vector<16x3xf32>
    %c0_427 = arith.constant 0 : index
    %c11_428 = arith.constant 11 : index
    %c0_429 = arith.constant 0 : index
    %c0_430 = arith.constant 0 : index
    %247 = vector.load %arg1[%c0_427, %c11_428, %c0_429, %c0_430] : memref<1x18x18x3xf32, #tpu.memory_space<vmem>>, vector<1x1x16x3xf32>
    %248 = vector.shape_cast %247 : vector<1x1x16x3xf32> to vector<16x3xf32>
    %c0_431 = arith.constant 0 : index
    %c12_432 = arith.constant 12 : index
    %c0_433 = arith.constant 0 : index
    %c0_434 = arith.constant 0 : index
    %249 = vector.load %arg1[%c0_431, %c12_432, %c0_433, %c0_434] : memref<1x18x18x3xf32, #tpu.memory_space<vmem>>, vector<1x1x16x3xf32>
    %250 = vector.shape_cast %249 : vector<1x1x16x3xf32> to vector<16x3xf32>
    %c0_435 = arith.constant 0 : index
    %c13_436 = arith.constant 13 : index
    %c0_437 = arith.constant 0 : index
    %c0_438 = arith.constant 0 : index
    %251 = vector.load %arg1[%c0_435, %c13_436, %c0_437, %c0_438] : memref<1x18x18x3xf32, #tpu.memory_space<vmem>>, vector<1x1x16x3xf32>
    %252 = vector.shape_cast %251 : vector<1x1x16x3xf32> to vector<16x3xf32>
    %c0_439 = arith.constant 0 : index
    %c14_440 = arith.constant 14 : index
    %c0_441 = arith.constant 0 : index
    %c0_442 = arith.constant 0 : index
    %253 = vector.load %arg1[%c0_439, %c14_440, %c0_441, %c0_442] : memref<1x18x18x3xf32, #tpu.memory_space<vmem>>, vector<1x1x16x3xf32>
    %254 = vector.shape_cast %253 : vector<1x1x16x3xf32> to vector<16x3xf32>
    %c0_443 = arith.constant 0 : index
    %c15_444 = arith.constant 15 : index
    %c0_445 = arith.constant 0 : index
    %c0_446 = arith.constant 0 : index
    %255 = vector.load %arg1[%c0_443, %c15_444, %c0_445, %c0_446] : memref<1x18x18x3xf32, #tpu.memory_space<vmem>>, vector<1x1x16x3xf32>
    %256 = vector.shape_cast %255 : vector<1x1x16x3xf32> to vector<16x3xf32>
    %c0_447 = arith.constant 0 : index
    %c16_448 = arith.constant 16 : index
    %c0_449 = arith.constant 0 : index
    %c0_450 = arith.constant 0 : index
    %257 = vector.load %arg1[%c0_447, %c16_448, %c0_449, %c0_450] : memref<1x18x18x3xf32, #tpu.memory_space<vmem>>, vector<1x1x16x3xf32>
    %258 = vector.shape_cast %257 : vector<1x1x16x3xf32> to vector<16x3xf32>
    %c0_451 = arith.constant 0 : index
    %c17 = arith.constant 17 : index
    %c0_452 = arith.constant 0 : index
    %c0_453 = arith.constant 0 : index
    %259 = vector.load %arg1[%c0_451, %c17, %c0_452, %c0_453] : memref<1x18x18x3xf32, #tpu.memory_space<vmem>>, vector<1x1x16x3xf32>
    %260 = vector.shape_cast %259 : vector<1x1x16x3xf32> to vector<16x3xf32>
    %261 = tpu.concatenate %230, %232, %234, %236, %238, %240, %242, %244, %246, %248, %250, %252, %254, %256, %258, %260 in 0 : vector<16x3xf32>, vector<16x3xf32>, vector<16x3xf32>, vector<16x3xf32>, vector<16x3xf32>, vector<16x3xf32>, vector<16x3xf32>, vector<16x3xf32>, vector<16x3xf32>, vector<16x3xf32>, vector<16x3xf32>, vector<16x3xf32>, vector<16x3xf32>, vector<16x3xf32>, vector<16x3xf32>, vector<16x3xf32> -> vector<256x3xf32>
    %262 = arith.truncf %261 : vector<256x3xf32> to vector<256x3xbf16>
    %c6_454 = arith.constant 6 : index
    %c0_455 = arith.constant 0 : index
    %c0_456 = arith.constant 0 : index
    %263 = vector.load %arg2[%c6_454, %c0_455, %c0_456] : memref<9x3x16xbf16, #tpu.memory_space<vmem>>, vector<1x3x16xbf16>
    %264 = vector.shape_cast %263 : vector<1x3x16xbf16> to vector<3x16xbf16>
    %cst_457 = arith.constant dense<0.000000e+00> : vector<256x16xf32>
    %265 = tpu.matmul %262, %264, %cst_457 {dimension_numbers = #tpu.dot_dimension_numbers<[1], [0], [0], [1], [0, 0, 1, 1], [], []>} : vector<256x3xbf16>, vector<3x16xbf16>, vector<256x16xf32> -> vector<256x16xf32>
    %266 = arith.addf %228, %265 : vector<256x16xf32>
    %c0_458 = arith.constant 0 : index
    %c2_459 = arith.constant 2 : index
    %c1_460 = arith.constant 1 : index
    %c0_461 = arith.constant 0 : index
    %267 = vector.load %arg1[%c0_458, %c2_459, %c1_460, %c0_461] : memref<1x18x18x3xf32, #tpu.memory_space<vmem>>, vector<1x1x16x3xf32>
    %268 = vector.shape_cast %267 : vector<1x1x16x3xf32> to vector<16x3xf32>
    %c0_462 = arith.constant 0 : index
    %c3_463 = arith.constant 3 : index
    %c1_464 = arith.constant 1 : index
    %c0_465 = arith.constant 0 : index
    %269 = vector.load %arg1[%c0_462, %c3_463, %c1_464, %c0_465] : memref<1x18x18x3xf32, #tpu.memory_space<vmem>>, vector<1x1x16x3xf32>
    %270 = vector.shape_cast %269 : vector<1x1x16x3xf32> to vector<16x3xf32>
    %c0_466 = arith.constant 0 : index
    %c4_467 = arith.constant 4 : index
    %c1_468 = arith.constant 1 : index
    %c0_469 = arith.constant 0 : index
    %271 = vector.load %arg1[%c0_466, %c4_467, %c1_468, %c0_469] : memref<1x18x18x3xf32, #tpu.memory_space<vmem>>, vector<1x1x16x3xf32>
    %272 = vector.shape_cast %271 : vector<1x1x16x3xf32> to vector<16x3xf32>
    %c0_470 = arith.constant 0 : index
    %c5_471 = arith.constant 5 : index
    %c1_472 = arith.constant 1 : index
    %c0_473 = arith.constant 0 : index
    %273 = vector.load %arg1[%c0_470, %c5_471, %c1_472, %c0_473] : memref<1x18x18x3xf32, #tpu.memory_space<vmem>>, vector<1x1x16x3xf32>
    %274 = vector.shape_cast %273 : vector<1x1x16x3xf32> to vector<16x3xf32>
    %c0_474 = arith.constant 0 : index
    %c6_475 = arith.constant 6 : index
    %c1_476 = arith.constant 1 : index
    %c0_477 = arith.constant 0 : index
    %275 = vector.load %arg1[%c0_474, %c6_475, %c1_476, %c0_477] : memref<1x18x18x3xf32, #tpu.memory_space<vmem>>, vector<1x1x16x3xf32>
    %276 = vector.shape_cast %275 : vector<1x1x16x3xf32> to vector<16x3xf32>
    %c0_478 = arith.constant 0 : index
    %c7_479 = arith.constant 7 : index
    %c1_480 = arith.constant 1 : index
    %c0_481 = arith.constant 0 : index
    %277 = vector.load %arg1[%c0_478, %c7_479, %c1_480, %c0_481] : memref<1x18x18x3xf32, #tpu.memory_space<vmem>>, vector<1x1x16x3xf32>
    %278 = vector.shape_cast %277 : vector<1x1x16x3xf32> to vector<16x3xf32>
    %c0_482 = arith.constant 0 : index
    %c8_483 = arith.constant 8 : index
    %c1_484 = arith.constant 1 : index
    %c0_485 = arith.constant 0 : index
    %279 = vector.load %arg1[%c0_482, %c8_483, %c1_484, %c0_485] : memref<1x18x18x3xf32, #tpu.memory_space<vmem>>, vector<1x1x16x3xf32>
    %280 = vector.shape_cast %279 : vector<1x1x16x3xf32> to vector<16x3xf32>
    %c0_486 = arith.constant 0 : index
    %c9_487 = arith.constant 9 : index
    %c1_488 = arith.constant 1 : index
    %c0_489 = arith.constant 0 : index
    %281 = vector.load %arg1[%c0_486, %c9_487, %c1_488, %c0_489] : memref<1x18x18x3xf32, #tpu.memory_space<vmem>>, vector<1x1x16x3xf32>
    %282 = vector.shape_cast %281 : vector<1x1x16x3xf32> to vector<16x3xf32>
    %c0_490 = arith.constant 0 : index
    %c10_491 = arith.constant 10 : index
    %c1_492 = arith.constant 1 : index
    %c0_493 = arith.constant 0 : index
    %283 = vector.load %arg1[%c0_490, %c10_491, %c1_492, %c0_493] : memref<1x18x18x3xf32, #tpu.memory_space<vmem>>, vector<1x1x16x3xf32>
    %284 = vector.shape_cast %283 : vector<1x1x16x3xf32> to vector<16x3xf32>
    %c0_494 = arith.constant 0 : index
    %c11_495 = arith.constant 11 : index
    %c1_496 = arith.constant 1 : index
    %c0_497 = arith.constant 0 : index
    %285 = vector.load %arg1[%c0_494, %c11_495, %c1_496, %c0_497] : memref<1x18x18x3xf32, #tpu.memory_space<vmem>>, vector<1x1x16x3xf32>
    %286 = vector.shape_cast %285 : vector<1x1x16x3xf32> to vector<16x3xf32>
    %c0_498 = arith.constant 0 : index
    %c12_499 = arith.constant 12 : index
    %c1_500 = arith.constant 1 : index
    %c0_501 = arith.constant 0 : index
    %287 = vector.load %arg1[%c0_498, %c12_499, %c1_500, %c0_501] : memref<1x18x18x3xf32, #tpu.memory_space<vmem>>, vector<1x1x16x3xf32>
    %288 = vector.shape_cast %287 : vector<1x1x16x3xf32> to vector<16x3xf32>
    %c0_502 = arith.constant 0 : index
    %c13_503 = arith.constant 13 : index
    %c1_504 = arith.constant 1 : index
    %c0_505 = arith.constant 0 : index
    %289 = vector.load %arg1[%c0_502, %c13_503, %c1_504, %c0_505] : memref<1x18x18x3xf32, #tpu.memory_space<vmem>>, vector<1x1x16x3xf32>
    %290 = vector.shape_cast %289 : vector<1x1x16x3xf32> to vector<16x3xf32>
    %c0_506 = arith.constant 0 : index
    %c14_507 = arith.constant 14 : index
    %c1_508 = arith.constant 1 : index
    %c0_509 = arith.constant 0 : index
    %291 = vector.load %arg1[%c0_506, %c14_507, %c1_508, %c0_509] : memref<1x18x18x3xf32, #tpu.memory_space<vmem>>, vector<1x1x16x3xf32>
    %292 = vector.shape_cast %291 : vector<1x1x16x3xf32> to vector<16x3xf32>
    %c0_510 = arith.constant 0 : index
    %c15_511 = arith.constant 15 : index
    %c1_512 = arith.constant 1 : index
    %c0_513 = arith.constant 0 : index
    %293 = vector.load %arg1[%c0_510, %c15_511, %c1_512, %c0_513] : memref<1x18x18x3xf32, #tpu.memory_space<vmem>>, vector<1x1x16x3xf32>
    %294 = vector.shape_cast %293 : vector<1x1x16x3xf32> to vector<16x3xf32>
    %c0_514 = arith.constant 0 : index
    %c16_515 = arith.constant 16 : index
    %c1_516 = arith.constant 1 : index
    %c0_517 = arith.constant 0 : index
    %295 = vector.load %arg1[%c0_514, %c16_515, %c1_516, %c0_517] : memref<1x18x18x3xf32, #tpu.memory_space<vmem>>, vector<1x1x16x3xf32>
    %296 = vector.shape_cast %295 : vector<1x1x16x3xf32> to vector<16x3xf32>
    %c0_518 = arith.constant 0 : index
    %c17_519 = arith.constant 17 : index
    %c1_520 = arith.constant 1 : index
    %c0_521 = arith.constant 0 : index
    %297 = vector.load %arg1[%c0_518, %c17_519, %c1_520, %c0_521] : memref<1x18x18x3xf32, #tpu.memory_space<vmem>>, vector<1x1x16x3xf32>
    %298 = vector.shape_cast %297 : vector<1x1x16x3xf32> to vector<16x3xf32>
    %299 = tpu.concatenate %268, %270, %272, %274, %276, %278, %280, %282, %284, %286, %288, %290, %292, %294, %296, %298 in 0 : vector<16x3xf32>, vector<16x3xf32>, vector<16x3xf32>, vector<16x3xf32>, vector<16x3xf32>, vector<16x3xf32>, vector<16x3xf32>, vector<16x3xf32>, vector<16x3xf32>, vector<16x3xf32>, vector<16x3xf32>, vector<16x3xf32>, vector<16x3xf32>, vector<16x3xf32>, vector<16x3xf32>, vector<16x3xf32> -> vector<256x3xf32>
    %300 = arith.truncf %299 : vector<256x3xf32> to vector<256x3xbf16>
    %c7_522 = arith.constant 7 : index
    %c0_523 = arith.constant 0 : index
    %c0_524 = arith.constant 0 : index
    %301 = vector.load %arg2[%c7_522, %c0_523, %c0_524] : memref<9x3x16xbf16, #tpu.memory_space<vmem>>, vector<1x3x16xbf16>
    %302 = vector.shape_cast %301 : vector<1x3x16xbf16> to vector<3x16xbf16>
    %cst_525 = arith.constant dense<0.000000e+00> : vector<256x16xf32>
    %303 = tpu.matmul %300, %302, %cst_525 {dimension_numbers = #tpu.dot_dimension_numbers<[1], [0], [0], [1], [0, 0, 1, 1], [], []>} : vector<256x3xbf16>, vector<3x16xbf16>, vector<256x16xf32> -> vector<256x16xf32>
    %304 = arith.addf %266, %303 : vector<256x16xf32>
    %c0_526 = arith.constant 0 : index
    %c2_527 = arith.constant 2 : index
    %c2_528 = arith.constant 2 : index
    %c0_529 = arith.constant 0 : index
    %305 = vector.load %arg1[%c0_526, %c2_527, %c2_528, %c0_529] : memref<1x18x18x3xf32, #tpu.memory_space<vmem>>, vector<1x1x16x3xf32>
    %306 = vector.shape_cast %305 : vector<1x1x16x3xf32> to vector<16x3xf32>
    %c0_530 = arith.constant 0 : index
    %c3_531 = arith.constant 3 : index
    %c2_532 = arith.constant 2 : index
    %c0_533 = arith.constant 0 : index
    %307 = vector.load %arg1[%c0_530, %c3_531, %c2_532, %c0_533] : memref<1x18x18x3xf32, #tpu.memory_space<vmem>>, vector<1x1x16x3xf32>
    %308 = vector.shape_cast %307 : vector<1x1x16x3xf32> to vector<16x3xf32>
    %c0_534 = arith.constant 0 : index
    %c4_535 = arith.constant 4 : index
    %c2_536 = arith.constant 2 : index
    %c0_537 = arith.constant 0 : index
    %309 = vector.load %arg1[%c0_534, %c4_535, %c2_536, %c0_537] : memref<1x18x18x3xf32, #tpu.memory_space<vmem>>, vector<1x1x16x3xf32>
    %310 = vector.shape_cast %309 : vector<1x1x16x3xf32> to vector<16x3xf32>
    %c0_538 = arith.constant 0 : index
    %c5_539 = arith.constant 5 : index
    %c2_540 = arith.constant 2 : index
    %c0_541 = arith.constant 0 : index
    %311 = vector.load %arg1[%c0_538, %c5_539, %c2_540, %c0_541] : memref<1x18x18x3xf32, #tpu.memory_space<vmem>>, vector<1x1x16x3xf32>
    %312 = vector.shape_cast %311 : vector<1x1x16x3xf32> to vector<16x3xf32>
    %c0_542 = arith.constant 0 : index
    %c6_543 = arith.constant 6 : index
    %c2_544 = arith.constant 2 : index
    %c0_545 = arith.constant 0 : index
    %313 = vector.load %arg1[%c0_542, %c6_543, %c2_544, %c0_545] : memref<1x18x18x3xf32, #tpu.memory_space<vmem>>, vector<1x1x16x3xf32>
    %314 = vector.shape_cast %313 : vector<1x1x16x3xf32> to vector<16x3xf32>
    %c0_546 = arith.constant 0 : index
    %c7_547 = arith.constant 7 : index
    %c2_548 = arith.constant 2 : index
    %c0_549 = arith.constant 0 : index
    %315 = vector.load %arg1[%c0_546, %c7_547, %c2_548, %c0_549] : memref<1x18x18x3xf32, #tpu.memory_space<vmem>>, vector<1x1x16x3xf32>
    %316 = vector.shape_cast %315 : vector<1x1x16x3xf32> to vector<16x3xf32>
    %c0_550 = arith.constant 0 : index
    %c8_551 = arith.constant 8 : index
    %c2_552 = arith.constant 2 : index
    %c0_553 = arith.constant 0 : index
    %317 = vector.load %arg1[%c0_550, %c8_551, %c2_552, %c0_553] : memref<1x18x18x3xf32, #tpu.memory_space<vmem>>, vector<1x1x16x3xf32>
    %318 = vector.shape_cast %317 : vector<1x1x16x3xf32> to vector<16x3xf32>
    %c0_554 = arith.constant 0 : index
    %c9_555 = arith.constant 9 : index
    %c2_556 = arith.constant 2 : index
    %c0_557 = arith.constant 0 : index
    %319 = vector.load %arg1[%c0_554, %c9_555, %c2_556, %c0_557] : memref<1x18x18x3xf32, #tpu.memory_space<vmem>>, vector<1x1x16x3xf32>
    %320 = vector.shape_cast %319 : vector<1x1x16x3xf32> to vector<16x3xf32>
    %c0_558 = arith.constant 0 : index
    %c10_559 = arith.constant 10 : index
    %c2_560 = arith.constant 2 : index
    %c0_561 = arith.constant 0 : index
    %321 = vector.load %arg1[%c0_558, %c10_559, %c2_560, %c0_561] : memref<1x18x18x3xf32, #tpu.memory_space<vmem>>, vector<1x1x16x3xf32>
    %322 = vector.shape_cast %321 : vector<1x1x16x3xf32> to vector<16x3xf32>
    %c0_562 = arith.constant 0 : index
    %c11_563 = arith.constant 11 : index
    %c2_564 = arith.constant 2 : index
    %c0_565 = arith.constant 0 : index
    %323 = vector.load %arg1[%c0_562, %c11_563, %c2_564, %c0_565] : memref<1x18x18x3xf32, #tpu.memory_space<vmem>>, vector<1x1x16x3xf32>
    %324 = vector.shape_cast %323 : vector<1x1x16x3xf32> to vector<16x3xf32>
    %c0_566 = arith.constant 0 : index
    %c12_567 = arith.constant 12 : index
    %c2_568 = arith.constant 2 : index
    %c0_569 = arith.constant 0 : index
    %325 = vector.load %arg1[%c0_566, %c12_567, %c2_568, %c0_569] : memref<1x18x18x3xf32, #tpu.memory_space<vmem>>, vector<1x1x16x3xf32>
    %326 = vector.shape_cast %325 : vector<1x1x16x3xf32> to vector<16x3xf32>
    %c0_570 = arith.constant 0 : index
    %c13_571 = arith.constant 13 : index
    %c2_572 = arith.constant 2 : index
    %c0_573 = arith.constant 0 : index
    %327 = vector.load %arg1[%c0_570, %c13_571, %c2_572, %c0_573] : memref<1x18x18x3xf32, #tpu.memory_space<vmem>>, vector<1x1x16x3xf32>
    %328 = vector.shape_cast %327 : vector<1x1x16x3xf32> to vector<16x3xf32>
    %c0_574 = arith.constant 0 : index
    %c14_575 = arith.constant 14 : index
    %c2_576 = arith.constant 2 : index
    %c0_577 = arith.constant 0 : index
    %329 = vector.load %arg1[%c0_574, %c14_575, %c2_576, %c0_577] : memref<1x18x18x3xf32, #tpu.memory_space<vmem>>, vector<1x1x16x3xf32>
    %330 = vector.shape_cast %329 : vector<1x1x16x3xf32> to vector<16x3xf32>
    %c0_578 = arith.constant 0 : index
    %c15_579 = arith.constant 15 : index
    %c2_580 = arith.constant 2 : index
    %c0_581 = arith.constant 0 : index
    %331 = vector.load %arg1[%c0_578, %c15_579, %c2_580, %c0_581] : memref<1x18x18x3xf32, #tpu.memory_space<vmem>>, vector<1x1x16x3xf32>
    %332 = vector.shape_cast %331 : vector<1x1x16x3xf32> to vector<16x3xf32>
    %c0_582 = arith.constant 0 : index
    %c16_583 = arith.constant 16 : index
    %c2_584 = arith.constant 2 : index
    %c0_585 = arith.constant 0 : index
    %333 = vector.load %arg1[%c0_582, %c16_583, %c2_584, %c0_585] : memref<1x18x18x3xf32, #tpu.memory_space<vmem>>, vector<1x1x16x3xf32>
    %334 = vector.shape_cast %333 : vector<1x1x16x3xf32> to vector<16x3xf32>
    %c0_586 = arith.constant 0 : index
    %c17_587 = arith.constant 17 : index
    %c2_588 = arith.constant 2 : index
    %c0_589 = arith.constant 0 : index
    %335 = vector.load %arg1[%c0_586, %c17_587, %c2_588, %c0_589] : memref<1x18x18x3xf32, #tpu.memory_space<vmem>>, vector<1x1x16x3xf32>
    %336 = vector.shape_cast %335 : vector<1x1x16x3xf32> to vector<16x3xf32>
    %337 = tpu.concatenate %306, %308, %310, %312, %314, %316, %318, %320, %322, %324, %326, %328, %330, %332, %334, %336 in 0 : vector<16x3xf32>, vector<16x3xf32>, vector<16x3xf32>, vector<16x3xf32>, vector<16x3xf32>, vector<16x3xf32>, vector<16x3xf32>, vector<16x3xf32>, vector<16x3xf32>, vector<16x3xf32>, vector<16x3xf32>, vector<16x3xf32>, vector<16x3xf32>, vector<16x3xf32>, vector<16x3xf32>, vector<16x3xf32> -> vector<256x3xf32>
    %338 = arith.truncf %337 : vector<256x3xf32> to vector<256x3xbf16>
    %c8_590 = arith.constant 8 : index
    %c0_591 = arith.constant 0 : index
    %c0_592 = arith.constant 0 : index
    %339 = vector.load %arg2[%c8_590, %c0_591, %c0_592] : memref<9x3x16xbf16, #tpu.memory_space<vmem>>, vector<1x3x16xbf16>
    %340 = vector.shape_cast %339 : vector<1x3x16xbf16> to vector<3x16xbf16>
    %cst_593 = arith.constant dense<0.000000e+00> : vector<256x16xf32>
    %341 = tpu.matmul %338, %340, %cst_593 {dimension_numbers = #tpu.dot_dimension_numbers<[1], [0], [0], [1], [0, 0, 1, 1], [], []>} : vector<256x3xbf16>, vector<3x16xbf16>, vector<256x16xf32> -> vector<256x16xf32>
    %342 = arith.addf %304, %341 : vector<256x16xf32>
    %c0_594 = arith.constant 0 : index
    %c0_595 = arith.constant 0 : index
    %343 = vector.load %arg3[%c0_594, %c0_595] : memref<1x16xf32, #tpu.memory_space<vmem>>, vector<1x16xf32>
    %344 = vector.broadcast %343 : vector<1x16xf32> to vector<256x16xf32>
    %345 = arith.addf %342, %344 : vector<256x16xf32>
    %cst_596 = arith.constant 0.000000e+00 : f32
    %346 = vector.broadcast %cst_596 : f32 to vector<256x16xf32>
    %347 = arith.maximumf %345, %346 : vector<256x16xf32>
    %c0_597 = arith.constant 0 : index
    %c0_598 = arith.constant 0 : index
    %c0_599 = arith.constant 0 : index
    %348 = vector.load %arg8[%c0_597, %c0_598, %c0_599] : memref<1x256x16xf32, #tpu.memory_space<vmem>>, vector<1x256x16xf32>
    %349 = vector.shape_cast %348 : vector<1x256x16xf32> to vector<256x16xf32>
    %350 = vector.shape_cast %347 : vector<256x16xf32> to vector<1x256x16xf32>
    tpu.vector_store %arg8[%c0_597, %c0_598, %c0_599], %350 {strides = array<i32>} : memref<1x256x16xf32, #tpu.memory_space<vmem>>, vector<1x256x16xf32>,
    %cst_600 = arith.constant 0.000000e+00 : f32
    %351 = vector.broadcast %cst_600 : f32 to vector<18x18x16xf32>
    %c0_601 = arith.constant 0 : index
    %c0_602 = arith.constant 0 : index
    %c0_603 = arith.constant 0 : index
    %352 = vector.load %arg10[%c0_601, %c0_602, %c0_603] : memref<18x18x16xf32, #tpu.memory_space<vmem>>, vector<18x18x16xf32>
    tpu.vector_store %arg10[%c0_601, %c0_602, %c0_603], %351 {strides = array<i32>} : memref<18x18x16xf32, #tpu.memory_space<vmem>>, vector<18x18x16xf32>,
    %353 = vector.extract_strided_slice %347 {offsets = [0, 0], sizes = [16, 16], strides = [1, 1]} : vector<256x16xf32> to vector<16x16xf32>
    %c1_604 = arith.constant 1 : index
    %c1_605 = arith.constant 1 : index
    %c0_606 = arith.constant 0 : index
    %354 = vector.load %arg10[%c1_604, %c1_605, %c0_606] : memref<18x18x16xf32, #tpu.memory_space<vmem>>, vector<1x16x16xf32>
    %355 = vector.shape_cast %354 : vector<1x16x16xf32> to vector<16x16xf32>
    %356 = vector.shape_cast %353 : vector<16x16xf32> to vector<1x16x16xf32>
    tpu.vector_store %arg10[%c1_604, %c1_605, %c0_606], %356 {strides = array<i32>} : memref<18x18x16xf32, #tpu.memory_space<vmem>>, vector<1x16x16xf32>,
    %357 = vector.extract_strided_slice %347 {offsets = [16, 0], sizes = [16, 16], strides = [1, 1]} : vector<256x16xf32> to vector<16x16xf32>
    %c2_607 = arith.constant 2 : index
    %c1_608 = arith.constant 1 : index
    %c0_609 = arith.constant 0 : index
    %358 = vector.load %arg10[%c2_607, %c1_608, %c0_609] : memref<18x18x16xf32, #tpu.memory_space<vmem>>, vector<1x16x16xf32>
    %359 = vector.shape_cast %358 : vector<1x16x16xf32> to vector<16x16xf32>
    %360 = vector.shape_cast %357 : vector<16x16xf32> to vector<1x16x16xf32>
    tpu.vector_store %arg10[%c2_607, %c1_608, %c0_609], %360 {strides = array<i32>} : memref<18x18x16xf32, #tpu.memory_space<vmem>>, vector<1x16x16xf32>,
    %361 = vector.extract_strided_slice %347 {offsets = [32, 0], sizes = [16, 16], strides = [1, 1]} : vector<256x16xf32> to vector<16x16xf32>
    %c3_610 = arith.constant 3 : index
    %c1_611 = arith.constant 1 : index
    %c0_612 = arith.constant 0 : index
    %362 = vector.load %arg10[%c3_610, %c1_611, %c0_612] : memref<18x18x16xf32, #tpu.memory_space<vmem>>, vector<1x16x16xf32>
    %363 = vector.shape_cast %362 : vector<1x16x16xf32> to vector<16x16xf32>
    %364 = vector.shape_cast %361 : vector<16x16xf32> to vector<1x16x16xf32>
    tpu.vector_store %arg10[%c3_610, %c1_611, %c0_612], %364 {strides = array<i32>} : memref<18x18x16xf32, #tpu.memory_space<vmem>>, vector<1x16x16xf32>,
    %365 = vector.extract_strided_slice %347 {offsets = [48, 0], sizes = [16, 16], strides = [1, 1]} : vector<256x16xf32> to vector<16x16xf32>
    %c4_613 = arith.constant 4 : index
    %c1_614 = arith.constant 1 : index
    %c0_615 = arith.constant 0 : index
    %366 = vector.load %arg10[%c4_613, %c1_614, %c0_615] : memref<18x18x16xf32, #tpu.memory_space<vmem>>, vector<1x16x16xf32>
    %367 = vector.shape_cast %366 : vector<1x16x16xf32> to vector<16x16xf32>
    %368 = vector.shape_cast %365 : vector<16x16xf32> to vector<1x16x16xf32>
    tpu.vector_store %arg10[%c4_613, %c1_614, %c0_615], %368 {strides = array<i32>} : memref<18x18x16xf32, #tpu.memory_space<vmem>>, vector<1x16x16xf32>,
    %369 = vector.extract_strided_slice %347 {offsets = [64, 0], sizes = [16, 16], strides = [1, 1]} : vector<256x16xf32> to vector<16x16xf32>
    %c5_616 = arith.constant 5 : index
    %c1_617 = arith.constant 1 : index
    %c0_618 = arith.constant 0 : index
    %370 = vector.load %arg10[%c5_616, %c1_617, %c0_618] : memref<18x18x16xf32, #tpu.memory_space<vmem>>, vector<1x16x16xf32>
    %371 = vector.shape_cast %370 : vector<1x16x16xf32> to vector<16x16xf32>
    %372 = vector.shape_cast %369 : vector<16x16xf32> to vector<1x16x16xf32>
    tpu.vector_store %arg10[%c5_616, %c1_617, %c0_618], %372 {strides = array<i32>} : memref<18x18x16xf32, #tpu.memory_space<vmem>>, vector<1x16x16xf32>,
    %373 = vector.extract_strided_slice %347 {offsets = [80, 0], sizes = [16, 16], strides = [1, 1]} : vector<256x16xf32> to vector<16x16xf32>
    %c6_619 = arith.constant 6 : index
    %c1_620 = arith.constant 1 : index
    %c0_621 = arith.constant 0 : index
    %374 = vector.load %arg10[%c6_619, %c1_620, %c0_621] : memref<18x18x16xf32, #tpu.memory_space<vmem>>, vector<1x16x16xf32>
    %375 = vector.shape_cast %374 : vector<1x16x16xf32> to vector<16x16xf32>
    %376 = vector.shape_cast %373 : vector<16x16xf32> to vector<1x16x16xf32>
    tpu.vector_store %arg10[%c6_619, %c1_620, %c0_621], %376 {strides = array<i32>} : memref<18x18x16xf32, #tpu.memory_space<vmem>>, vector<1x16x16xf32>,
    %377 = vector.extract_strided_slice %347 {offsets = [96, 0], sizes = [16, 16], strides = [1, 1]} : vector<256x16xf32> to vector<16x16xf32>
    %c7_622 = arith.constant 7 : index
    %c1_623 = arith.constant 1 : index
    %c0_624 = arith.constant 0 : index
    %378 = vector.load %arg10[%c7_622, %c1_623, %c0_624] : memref<18x18x16xf32, #tpu.memory_space<vmem>>, vector<1x16x16xf32>
    %379 = vector.shape_cast %378 : vector<1x16x16xf32> to vector<16x16xf32>
    %380 = vector.shape_cast %377 : vector<16x16xf32> to vector<1x16x16xf32>
    tpu.vector_store %arg10[%c7_622, %c1_623, %c0_624], %380 {strides = array<i32>} : memref<18x18x16xf32, #tpu.memory_space<vmem>>, vector<1x16x16xf32>,
    %381 = vector.extract_strided_slice %347 {offsets = [112, 0], sizes = [16, 16], strides = [1, 1]} : vector<256x16xf32> to vector<16x16xf32>
    %c8_625 = arith.constant 8 : index
    %c1_626 = arith.constant 1 : index
    %c0_627 = arith.constant 0 : index
    %382 = vector.load %arg10[%c8_625, %c1_626, %c0_627] : memref<18x18x16xf32, #tpu.memory_space<vmem>>, vector<1x16x16xf32>
    %383 = vector.shape_cast %382 : vector<1x16x16xf32> to vector<16x16xf32>
    %384 = vector.shape_cast %381 : vector<16x16xf32> to vector<1x16x16xf32>
    tpu.vector_store %arg10[%c8_625, %c1_626, %c0_627], %384 {strides = array<i32>} : memref<18x18x16xf32, #tpu.memory_space<vmem>>, vector<1x16x16xf32>,
    %385 = vector.extract_strided_slice %347 {offsets = [128, 0], sizes = [16, 16], strides = [1, 1]} : vector<256x16xf32> to vector<16x16xf32>
    %c9_628 = arith.constant 9 : index
    %c1_629 = arith.constant 1 : index
    %c0_630 = arith.constant 0 : index
    %386 = vector.load %arg10[%c9_628, %c1_629, %c0_630] : memref<18x18x16xf32, #tpu.memory_space<vmem>>, vector<1x16x16xf32>
    %387 = vector.shape_cast %386 : vector<1x16x16xf32> to vector<16x16xf32>
    %388 = vector.shape_cast %385 : vector<16x16xf32> to vector<1x16x16xf32>
    tpu.vector_store %arg10[%c9_628, %c1_629, %c0_630], %388 {strides = array<i32>} : memref<18x18x16xf32, #tpu.memory_space<vmem>>, vector<1x16x16xf32>,
    %389 = vector.extract_strided_slice %347 {offsets = [144, 0], sizes = [16, 16], strides = [1, 1]} : vector<256x16xf32> to vector<16x16xf32>
    %c10_631 = arith.constant 10 : index
    %c1_632 = arith.constant 1 : index
    %c0_633 = arith.constant 0 : index
    %390 = vector.load %arg10[%c10_631, %c1_632, %c0_633] : memref<18x18x16xf32, #tpu.memory_space<vmem>>, vector<1x16x16xf32>
    %391 = vector.shape_cast %390 : vector<1x16x16xf32> to vector<16x16xf32>
    %392 = vector.shape_cast %389 : vector<16x16xf32> to vector<1x16x16xf32>
    tpu.vector_store %arg10[%c10_631, %c1_632, %c0_633], %392 {strides = array<i32>} : memref<18x18x16xf32, #tpu.memory_space<vmem>>, vector<1x16x16xf32>,
    %393 = vector.extract_strided_slice %347 {offsets = [160, 0], sizes = [16, 16], strides = [1, 1]} : vector<256x16xf32> to vector<16x16xf32>
    %c11_634 = arith.constant 11 : index
    %c1_635 = arith.constant 1 : index
    %c0_636 = arith.constant 0 : index
    %394 = vector.load %arg10[%c11_634, %c1_635, %c0_636] : memref<18x18x16xf32, #tpu.memory_space<vmem>>, vector<1x16x16xf32>
    %395 = vector.shape_cast %394 : vector<1x16x16xf32> to vector<16x16xf32>
    %396 = vector.shape_cast %393 : vector<16x16xf32> to vector<1x16x16xf32>
    tpu.vector_store %arg10[%c11_634, %c1_635, %c0_636], %396 {strides = array<i32>} : memref<18x18x16xf32, #tpu.memory_space<vmem>>, vector<1x16x16xf32>,
    %397 = vector.extract_strided_slice %347 {offsets = [176, 0], sizes = [16, 16], strides = [1, 1]} : vector<256x16xf32> to vector<16x16xf32>
    %c12_637 = arith.constant 12 : index
    %c1_638 = arith.constant 1 : index
    %c0_639 = arith.constant 0 : index
    %398 = vector.load %arg10[%c12_637, %c1_638, %c0_639] : memref<18x18x16xf32, #tpu.memory_space<vmem>>, vector<1x16x16xf32>
    %399 = vector.shape_cast %398 : vector<1x16x16xf32> to vector<16x16xf32>
    %400 = vector.shape_cast %397 : vector<16x16xf32> to vector<1x16x16xf32>
    tpu.vector_store %arg10[%c12_637, %c1_638, %c0_639], %400 {strides = array<i32>} : memref<18x18x16xf32, #tpu.memory_space<vmem>>, vector<1x16x16xf32>,
    %401 = vector.extract_strided_slice %347 {offsets = [192, 0], sizes = [16, 16], strides = [1, 1]} : vector<256x16xf32> to vector<16x16xf32>
    %c13_640 = arith.constant 13 : index
    %c1_641 = arith.constant 1 : index
    %c0_642 = arith.constant 0 : index
    %402 = vector.load %arg10[%c13_640, %c1_641, %c0_642] : memref<18x18x16xf32, #tpu.memory_space<vmem>>, vector<1x16x16xf32>
    %403 = vector.shape_cast %402 : vector<1x16x16xf32> to vector<16x16xf32>
    %404 = vector.shape_cast %401 : vector<16x16xf32> to vector<1x16x16xf32>
    tpu.vector_store %arg10[%c13_640, %c1_641, %c0_642], %404 {strides = array<i32>} : memref<18x18x16xf32, #tpu.memory_space<vmem>>, vector<1x16x16xf32>,
    %405 = vector.extract_strided_slice %347 {offsets = [208, 0], sizes = [16, 16], strides = [1, 1]} : vector<256x16xf32> to vector<16x16xf32>
    %c14_643 = arith.constant 14 : index
    %c1_644 = arith.constant 1 : index
    %c0_645 = arith.constant 0 : index
    %406 = vector.load %arg10[%c14_643, %c1_644, %c0_645] : memref<18x18x16xf32, #tpu.memory_space<vmem>>, vector<1x16x16xf32>
    %407 = vector.shape_cast %406 : vector<1x16x16xf32> to vector<16x16xf32>
    %408 = vector.shape_cast %405 : vector<16x16xf32> to vector<1x16x16xf32>
    tpu.vector_store %arg10[%c14_643, %c1_644, %c0_645], %408 {strides = array<i32>} : memref<18x18x16xf32, #tpu.memory_space<vmem>>, vector<1x16x16xf32>,
    %409 = vector.extract_strided_slice %347 {offsets = [224, 0], sizes = [16, 16], strides = [1, 1]} : vector<256x16xf32> to vector<16x16xf32>
    %c15_646 = arith.constant 15 : index
    %c1_647 = arith.constant 1 : index
    %c0_648 = arith.constant 0 : index
    %410 = vector.load %arg10[%c15_646, %c1_647, %c0_648] : memref<18x18x16xf32, #tpu.memory_space<vmem>>, vector<1x16x16xf32>
    %411 = vector.shape_cast %410 : vector<1x16x16xf32> to vector<16x16xf32>
    %412 = vector.shape_cast %409 : vector<16x16xf32> to vector<1x16x16xf32>
    tpu.vector_store %arg10[%c15_646, %c1_647, %c0_648], %412 {strides = array<i32>} : memref<18x18x16xf32, #tpu.memory_space<vmem>>, vector<1x16x16xf32>,
    %413 = vector.extract_strided_slice %347 {offsets = [240, 0], sizes = [16, 16], strides = [1, 1]} : vector<256x16xf32> to vector<16x16xf32>
    %c16_649 = arith.constant 16 : index
    %c1_650 = arith.constant 1 : index
    %c0_651 = arith.constant 0 : index
    %414 = vector.load %arg10[%c16_649, %c1_650, %c0_651] : memref<18x18x16xf32, #tpu.memory_space<vmem>>, vector<1x16x16xf32>
    %415 = vector.shape_cast %414 : vector<1x16x16xf32> to vector<16x16xf32>
    %416 = vector.shape_cast %413 : vector<16x16xf32> to vector<1x16x16xf32>
    tpu.vector_store %arg10[%c16_649, %c1_650, %c0_651], %416 {strides = array<i32>} : memref<18x18x16xf32, #tpu.memory_space<vmem>>, vector<1x16x16xf32>,
    %cst_652 = arith.constant 0.000000e+00 : f32
    %417 = vector.broadcast %cst_652 : f32 to vector<256x16xf32>
    %c0_653 = arith.constant 0 : index
    %c0_654 = arith.constant 0 : index
    %c0_655 = arith.constant 0 : index
    %418 = vector.load %arg10[%c0_653, %c0_654, %c0_655] : memref<18x18x16xf32, #tpu.memory_space<vmem>>, vector<1x16x16xf32>
    %419 = vector.shape_cast %418 : vector<1x16x16xf32> to vector<16x16xf32>
    %c1_656 = arith.constant 1 : index
    %c0_657 = arith.constant 0 : index
    %c0_658 = arith.constant 0 : index
    %420 = vector.load %arg10[%c1_656, %c0_657, %c0_658] : memref<18x18x16xf32, #tpu.memory_space<vmem>>, vector<1x16x16xf32>
    %421 = vector.shape_cast %420 : vector<1x16x16xf32> to vector<16x16xf32>
    %c2_659 = arith.constant 2 : index
    %c0_660 = arith.constant 0 : index
    %c0_661 = arith.constant 0 : index
    %422 = vector.load %arg10[%c2_659, %c0_660, %c0_661] : memref<18x18x16xf32, #tpu.memory_space<vmem>>, vector<1x16x16xf32>
    %423 = vector.shape_cast %422 : vector<1x16x16xf32> to vector<16x16xf32>
    %c3_662 = arith.constant 3 : index
    %c0_663 = arith.constant 0 : index
    %c0_664 = arith.constant 0 : index
    %424 = vector.load %arg10[%c3_662, %c0_663, %c0_664] : memref<18x18x16xf32, #tpu.memory_space<vmem>>, vector<1x16x16xf32>
    %425 = vector.shape_cast %424 : vector<1x16x16xf32> to vector<16x16xf32>
    %c4_665 = arith.constant 4 : index
    %c0_666 = arith.constant 0 : index
    %c0_667 = arith.constant 0 : index
    %426 = vector.load %arg10[%c4_665, %c0_666, %c0_667] : memref<18x18x16xf32, #tpu.memory_space<vmem>>, vector<1x16x16xf32>
    %427 = vector.shape_cast %426 : vector<1x16x16xf32> to vector<16x16xf32>
    %c5_668 = arith.constant 5 : index
    %c0_669 = arith.constant 0 : index
    %c0_670 = arith.constant 0 : index
    %428 = vector.load %arg10[%c5_668, %c0_669, %c0_670] : memref<18x18x16xf32, #tpu.memory_space<vmem>>, vector<1x16x16xf32>
    %429 = vector.shape_cast %428 : vector<1x16x16xf32> to vector<16x16xf32>
    %c6_671 = arith.constant 6 : index
    %c0_672 = arith.constant 0 : index
    %c0_673 = arith.constant 0 : index
    %430 = vector.load %arg10[%c6_671, %c0_672, %c0_673] : memref<18x18x16xf32, #tpu.memory_space<vmem>>, vector<1x16x16xf32>
    %431 = vector.shape_cast %430 : vector<1x16x16xf32> to vector<16x16xf32>
    %c7_674 = arith.constant 7 : index
    %c0_675 = arith.constant 0 : index
    %c0_676 = arith.constant 0 : index
    %432 = vector.load %arg10[%c7_674, %c0_675, %c0_676] : memref<18x18x16xf32, #tpu.memory_space<vmem>>, vector<1x16x16xf32>
    %433 = vector.shape_cast %432 : vector<1x16x16xf32> to vector<16x16xf32>
    %c8_677 = arith.constant 8 : index
    %c0_678 = arith.constant 0 : index
    %c0_679 = arith.constant 0 : index
    %434 = vector.load %arg10[%c8_677, %c0_678, %c0_679] : memref<18x18x16xf32, #tpu.memory_space<vmem>>, vector<1x16x16xf32>
    %435 = vector.shape_cast %434 : vector<1x16x16xf32> to vector<16x16xf32>
    %c9_680 = arith.constant 9 : index
    %c0_681 = arith.constant 0 : index
    %c0_682 = arith.constant 0 : index
    %436 = vector.load %arg10[%c9_680, %c0_681, %c0_682] : memref<18x18x16xf32, #tpu.memory_space<vmem>>, vector<1x16x16xf32>
    %437 = vector.shape_cast %436 : vector<1x16x16xf32> to vector<16x16xf32>
    %c10_683 = arith.constant 10 : index
    %c0_684 = arith.constant 0 : index
    %c0_685 = arith.constant 0 : index
    %438 = vector.load %arg10[%c10_683, %c0_684, %c0_685] : memref<18x18x16xf32, #tpu.memory_space<vmem>>, vector<1x16x16xf32>
    %439 = vector.shape_cast %438 : vector<1x16x16xf32> to vector<16x16xf32>
    %c11_686 = arith.constant 11 : index
    %c0_687 = arith.constant 0 : index
    %c0_688 = arith.constant 0 : index
    %440 = vector.load %arg10[%c11_686, %c0_687, %c0_688] : memref<18x18x16xf32, #tpu.memory_space<vmem>>, vector<1x16x16xf32>
    %441 = vector.shape_cast %440 : vector<1x16x16xf32> to vector<16x16xf32>
    %c12_689 = arith.constant 12 : index
    %c0_690 = arith.constant 0 : index
    %c0_691 = arith.constant 0 : index
    %442 = vector.load %arg10[%c12_689, %c0_690, %c0_691] : memref<18x18x16xf32, #tpu.memory_space<vmem>>, vector<1x16x16xf32>
    %443 = vector.shape_cast %442 : vector<1x16x16xf32> to vector<16x16xf32>
    %c13_692 = arith.constant 13 : index
    %c0_693 = arith.constant 0 : index
    %c0_694 = arith.constant 0 : index
    %444 = vector.load %arg10[%c13_692, %c0_693, %c0_694] : memref<18x18x16xf32, #tpu.memory_space<vmem>>, vector<1x16x16xf32>
    %445 = vector.shape_cast %444 : vector<1x16x16xf32> to vector<16x16xf32>
    %c14_695 = arith.constant 14 : index
    %c0_696 = arith.constant 0 : index
    %c0_697 = arith.constant 0 : index
    %446 = vector.load %arg10[%c14_695, %c0_696, %c0_697] : memref<18x18x16xf32, #tpu.memory_space<vmem>>, vector<1x16x16xf32>
    %447 = vector.shape_cast %446 : vector<1x16x16xf32> to vector<16x16xf32>
    %c15_698 = arith.constant 15 : index
    %c0_699 = arith.constant 0 : index
    %c0_700 = arith.constant 0 : index
    %448 = vector.load %arg10[%c15_698, %c0_699, %c0_700] : memref<18x18x16xf32, #tpu.memory_space<vmem>>, vector<1x16x16xf32>
    %449 = vector.shape_cast %448 : vector<1x16x16xf32> to vector<16x16xf32>
    %450 = tpu.concatenate %419, %421, %423, %425, %427, %429, %431, %433, %435, %437, %439, %441, %443, %445, %447, %449 in 0 : vector<16x16xf32>, vector<16x16xf32>, vector<16x16xf32>, vector<16x16xf32>, vector<16x16xf32>, vector<16x16xf32>, vector<16x16xf32>, vector<16x16xf32>, vector<16x16xf32>, vector<16x16xf32>, vector<16x16xf32>, vector<16x16xf32>, vector<16x16xf32>, vector<16x16xf32>, vector<16x16xf32>, vector<16x16xf32> -> vector<256x16xf32>
    %451 = arith.truncf %450 : vector<256x16xf32> to vector<256x16xbf16>
    %c0_701 = arith.constant 0 : index
    %c0_702 = arith.constant 0 : index
    %c0_703 = arith.constant 0 : index
    %452 = vector.load %arg4[%c0_701, %c0_702, %c0_703] : memref<9x16x16xbf16, #tpu.memory_space<vmem>>, vector<1x16x16xbf16>
    %453 = vector.shape_cast %452 : vector<1x16x16xbf16> to vector<16x16xbf16>
    %cst_704 = arith.constant dense<0.000000e+00> : vector<256x16xf32>
    %454 = tpu.matmul %451, %453, %cst_704 {dimension_numbers = #tpu.dot_dimension_numbers<[1], [0], [0], [1], [0, 0, 1, 1], [], []>} : vector<256x16xbf16>, vector<16x16xbf16>, vector<256x16xf32> -> vector<256x16xf32>
    %455 = arith.addf %417, %454 : vector<256x16xf32>
    %c0_705 = arith.constant 0 : index
    %c1_706 = arith.constant 1 : index
    %c0_707 = arith.constant 0 : index
    %456 = vector.load %arg10[%c0_705, %c1_706, %c0_707] : memref<18x18x16xf32, #tpu.memory_space<vmem>>, vector<1x16x16xf32>
    %457 = vector.shape_cast %456 : vector<1x16x16xf32> to vector<16x16xf32>
    %c1_708 = arith.constant 1 : index
    %c1_709 = arith.constant 1 : index
    %c0_710 = arith.constant 0 : index
    %458 = vector.load %arg10[%c1_708, %c1_709, %c0_710] : memref<18x18x16xf32, #tpu.memory_space<vmem>>, vector<1x16x16xf32>
    %459 = vector.shape_cast %458 : vector<1x16x16xf32> to vector<16x16xf32>
    %c2_711 = arith.constant 2 : index
    %c1_712 = arith.constant 1 : index
    %c0_713 = arith.constant 0 : index
    %460 = vector.load %arg10[%c2_711, %c1_712, %c0_713] : memref<18x18x16xf32, #tpu.memory_space<vmem>>, vector<1x16x16xf32>
    %461 = vector.shape_cast %460 : vector<1x16x16xf32> to vector<16x16xf32>
    %c3_714 = arith.constant 3 : index
    %c1_715 = arith.constant 1 : index
    %c0_716 = arith.constant 0 : index
    %462 = vector.load %arg10[%c3_714, %c1_715, %c0_716] : memref<18x18x16xf32, #tpu.memory_space<vmem>>, vector<1x16x16xf32>
    %463 = vector.shape_cast %462 : vector<1x16x16xf32> to vector<16x16xf32>
    %c4_717 = arith.constant 4 : index
    %c1_718 = arith.constant 1 : index
    %c0_719 = arith.constant 0 : index
    %464 = vector.load %arg10[%c4_717, %c1_718, %c0_719] : memref<18x18x16xf32, #tpu.memory_space<vmem>>, vector<1x16x16xf32>
    %465 = vector.shape_cast %464 : vector<1x16x16xf32> to vector<16x16xf32>
    %c5_720 = arith.constant 5 : index
    %c1_721 = arith.constant 1 : index
    %c0_722 = arith.constant 0 : index
    %466 = vector.load %arg10[%c5_720, %c1_721, %c0_722] : memref<18x18x16xf32, #tpu.memory_space<vmem>>, vector<1x16x16xf32>
    %467 = vector.shape_cast %466 : vector<1x16x16xf32> to vector<16x16xf32>
    %c6_723 = arith.constant 6 : index
    %c1_724 = arith.constant 1 : index
    %c0_725 = arith.constant 0 : index
    %468 = vector.load %arg10[%c6_723, %c1_724, %c0_725] : memref<18x18x16xf32, #tpu.memory_space<vmem>>, vector<1x16x16xf32>
    %469 = vector.shape_cast %468 : vector<1x16x16xf32> to vector<16x16xf32>
    %c7_726 = arith.constant 7 : index
    %c1_727 = arith.constant 1 : index
    %c0_728 = arith.constant 0 : index
    %470 = vector.load %arg10[%c7_726, %c1_727, %c0_728] : memref<18x18x16xf32, #tpu.memory_space<vmem>>, vector<1x16x16xf32>
    %471 = vector.shape_cast %470 : vector<1x16x16xf32> to vector<16x16xf32>
    %c8_729 = arith.constant 8 : index
    %c1_730 = arith.constant 1 : index
    %c0_731 = arith.constant 0 : index
    %472 = vector.load %arg10[%c8_729, %c1_730, %c0_731] : memref<18x18x16xf32, #tpu.memory_space<vmem>>, vector<1x16x16xf32>
    %473 = vector.shape_cast %472 : vector<1x16x16xf32> to vector<16x16xf32>
    %c9_732 = arith.constant 9 : index
    %c1_733 = arith.constant 1 : index
    %c0_734 = arith.constant 0 : index
    %474 = vector.load %arg10[%c9_732, %c1_733, %c0_734] : memref<18x18x16xf32, #tpu.memory_space<vmem>>, vector<1x16x16xf32>
    %475 = vector.shape_cast %474 : vector<1x16x16xf32> to vector<16x16xf32>
    %c10_735 = arith.constant 10 : index
    %c1_736 = arith.constant 1 : index
    %c0_737 = arith.constant 0 : index
    %476 = vector.load %arg10[%c10_735, %c1_736, %c0_737] : memref<18x18x16xf32, #tpu.memory_space<vmem>>, vector<1x16x16xf32>
    %477 = vector.shape_cast %476 : vector<1x16x16xf32> to vector<16x16xf32>
    %c11_738 = arith.constant 11 : index
    %c1_739 = arith.constant 1 : index
    %c0_740 = arith.constant 0 : index
    %478 = vector.load %arg10[%c11_738, %c1_739, %c0_740] : memref<18x18x16xf32, #tpu.memory_space<vmem>>, vector<1x16x16xf32>
    %479 = vector.shape_cast %478 : vector<1x16x16xf32> to vector<16x16xf32>
    %c12_741 = arith.constant 12 : index
    %c1_742 = arith.constant 1 : index
    %c0_743 = arith.constant 0 : index
    %480 = vector.load %arg10[%c12_741, %c1_742, %c0_743] : memref<18x18x16xf32, #tpu.memory_space<vmem>>, vector<1x16x16xf32>
    %481 = vector.shape_cast %480 : vector<1x16x16xf32> to vector<16x16xf32>
    %c13_744 = arith.constant 13 : index
    %c1_745 = arith.constant 1 : index
    %c0_746 = arith.constant 0 : index
    %482 = vector.load %arg10[%c13_744, %c1_745, %c0_746] : memref<18x18x16xf32, #tpu.memory_space<vmem>>, vector<1x16x16xf32>
    %483 = vector.shape_cast %482 : vector<1x16x16xf32> to vector<16x16xf32>
    %c14_747 = arith.constant 14 : index
    %c1_748 = arith.constant 1 : index
    %c0_749 = arith.constant 0 : index
    %484 = vector.load %arg10[%c14_747, %c1_748, %c0_749] : memref<18x18x16xf32, #tpu.memory_space<vmem>>, vector<1x16x16xf32>
    %485 = vector.shape_cast %484 : vector<1x16x16xf32> to vector<16x16xf32>
    %c15_750 = arith.constant 15 : index
    %c1_751 = arith.constant 1 : index
    %c0_752 = arith.constant 0 : index
    %486 = vector.load %arg10[%c15_750, %c1_751, %c0_752] : memref<18x18x16xf32, #tpu.memory_space<vmem>>, vector<1x16x16xf32>
    %487 = vector.shape_cast %486 : vector<1x16x16xf32> to vector<16x16xf32>
    %488 = tpu.concatenate %457, %459, %461, %463, %465, %467, %469, %471, %473, %475, %477, %479, %481, %483, %485, %487 in 0 : vector<16x16xf32>, vector<16x16xf32>, vector<16x16xf32>, vector<16x16xf32>, vector<16x16xf32>, vector<16x16xf32>, vector<16x16xf32>, vector<16x16xf32>, vector<16x16xf32>, vector<16x16xf32>, vector<16x16xf32>, vector<16x16xf32>, vector<16x16xf32>, vector<16x16xf32>, vector<16x16xf32>, vector<16x16xf32> -> vector<256x16xf32>
    %489 = arith.truncf %488 : vector<256x16xf32> to vector<256x16xbf16>
    %c1_753 = arith.constant 1 : index
    %c0_754 = arith.constant 0 : index
    %c0_755 = arith.constant 0 : index
    %490 = vector.load %arg4[%c1_753, %c0_754, %c0_755] : memref<9x16x16xbf16, #tpu.memory_space<vmem>>, vector<1x16x16xbf16>
    %491 = vector.shape_cast %490 : vector<1x16x16xbf16> to vector<16x16xbf16>
    %cst_756 = arith.constant dense<0.000000e+00> : vector<256x16xf32>
    %492 = tpu.matmul %489, %491, %cst_756 {dimension_numbers = #tpu.dot_dimension_numbers<[1], [0], [0], [1], [0, 0, 1, 1], [], []>} : vector<256x16xbf16>, vector<16x16xbf16>, vector<256x16xf32> -> vector<256x16xf32>
    %493 = arith.addf %455, %492 : vector<256x16xf32>
    %c0_757 = arith.constant 0 : index
    %c2_758 = arith.constant 2 : index
    %c0_759 = arith.constant 0 : index
    %494 = vector.load %arg10[%c0_757, %c2_758, %c0_759] : memref<18x18x16xf32, #tpu.memory_space<vmem>>, vector<1x16x16xf32>
    %495 = vector.shape_cast %494 : vector<1x16x16xf32> to vector<16x16xf32>
    %c1_760 = arith.constant 1 : index
    %c2_761 = arith.constant 2 : index
    %c0_762 = arith.constant 0 : index
    %496 = vector.load %arg10[%c1_760, %c2_761, %c0_762] : memref<18x18x16xf32, #tpu.memory_space<vmem>>, vector<1x16x16xf32>
    %497 = vector.shape_cast %496 : vector<1x16x16xf32> to vector<16x16xf32>
    %c2_763 = arith.constant 2 : index
    %c2_764 = arith.constant 2 : index
    %c0_765 = arith.constant 0 : index
    %498 = vector.load %arg10[%c2_763, %c2_764, %c0_765] : memref<18x18x16xf32, #tpu.memory_space<vmem>>, vector<1x16x16xf32>
    %499 = vector.shape_cast %498 : vector<1x16x16xf32> to vector<16x16xf32>
    %c3_766 = arith.constant 3 : index
    %c2_767 = arith.constant 2 : index
    %c0_768 = arith.constant 0 : index
    %500 = vector.load %arg10[%c3_766, %c2_767, %c0_768] : memref<18x18x16xf32, #tpu.memory_space<vmem>>, vector<1x16x16xf32>
    %501 = vector.shape_cast %500 : vector<1x16x16xf32> to vector<16x16xf32>
    %c4_769 = arith.constant 4 : index
    %c2_770 = arith.constant 2 : index
    %c0_771 = arith.constant 0 : index
    %502 = vector.load %arg10[%c4_769, %c2_770, %c0_771] : memref<18x18x16xf32, #tpu.memory_space<vmem>>, vector<1x16x16xf32>
    %503 = vector.shape_cast %502 : vector<1x16x16xf32> to vector<16x16xf32>
    %c5_772 = arith.constant 5 : index
    %c2_773 = arith.constant 2 : index
    %c0_774 = arith.constant 0 : index
    %504 = vector.load %arg10[%c5_772, %c2_773, %c0_774] : memref<18x18x16xf32, #tpu.memory_space<vmem>>, vector<1x16x16xf32>
    %505 = vector.shape_cast %504 : vector<1x16x16xf32> to vector<16x16xf32>
    %c6_775 = arith.constant 6 : index
    %c2_776 = arith.constant 2 : index
    %c0_777 = arith.constant 0 : index
    %506 = vector.load %arg10[%c6_775, %c2_776, %c0_777] : memref<18x18x16xf32, #tpu.memory_space<vmem>>, vector<1x16x16xf32>
    %507 = vector.shape_cast %506 : vector<1x16x16xf32> to vector<16x16xf32>
    %c7_778 = arith.constant 7 : index
    %c2_779 = arith.constant 2 : index
    %c0_780 = arith.constant 0 : index
    %508 = vector.load %arg10[%c7_778, %c2_779, %c0_780] : memref<18x18x16xf32, #tpu.memory_space<vmem>>, vector<1x16x16xf32>
    %509 = vector.shape_cast %508 : vector<1x16x16xf32> to vector<16x16xf32>
    %c8_781 = arith.constant 8 : index
    %c2_782 = arith.constant 2 : index
    %c0_783 = arith.constant 0 : index
    %510 = vector.load %arg10[%c8_781, %c2_782, %c0_783] : memref<18x18x16xf32, #tpu.memory_space<vmem>>, vector<1x16x16xf32>
    %511 = vector.shape_cast %510 : vector<1x16x16xf32> to vector<16x16xf32>
    %c9_784 = arith.constant 9 : index
    %c2_785 = arith.constant 2 : index
    %c0_786 = arith.constant 0 : index
    %512 = vector.load %arg10[%c9_784, %c2_785, %c0_786] : memref<18x18x16xf32, #tpu.memory_space<vmem>>, vector<1x16x16xf32>
    %513 = vector.shape_cast %512 : vector<1x16x16xf32> to vector<16x16xf32>
    %c10_787 = arith.constant 10 : index
    %c2_788 = arith.constant 2 : index
    %c0_789 = arith.constant 0 : index
    %514 = vector.load %arg10[%c10_787, %c2_788, %c0_789] : memref<18x18x16xf32, #tpu.memory_space<vmem>>, vector<1x16x16xf32>
    %515 = vector.shape_cast %514 : vector<1x16x16xf32> to vector<16x16xf32>
    %c11_790 = arith.constant 11 : index
    %c2_791 = arith.constant 2 : index
    %c0_792 = arith.constant 0 : index
    %516 = vector.load %arg10[%c11_790, %c2_791, %c0_792] : memref<18x18x16xf32, #tpu.memory_space<vmem>>, vector<1x16x16xf32>
    %517 = vector.shape_cast %516 : vector<1x16x16xf32> to vector<16x16xf32>
    %c12_793 = arith.constant 12 : index
    %c2_794 = arith.constant 2 : index
    %c0_795 = arith.constant 0 : index
    %518 = vector.load %arg10[%c12_793, %c2_794, %c0_795] : memref<18x18x16xf32, #tpu.memory_space<vmem>>, vector<1x16x16xf32>
    %519 = vector.shape_cast %518 : vector<1x16x16xf32> to vector<16x16xf32>
    %c13_796 = arith.constant 13 : index
    %c2_797 = arith.constant 2 : index
    %c0_798 = arith.constant 0 : index
    %520 = vector.load %arg10[%c13_796, %c2_797, %c0_798] : memref<18x18x16xf32, #tpu.memory_space<vmem>>, vector<1x16x16xf32>
    %521 = vector.shape_cast %520 : vector<1x16x16xf32> to vector<16x16xf32>
    %c14_799 = arith.constant 14 : index
    %c2_800 = arith.constant 2 : index
    %c0_801 = arith.constant 0 : index
    %522 = vector.load %arg10[%c14_799, %c2_800, %c0_801] : memref<18x18x16xf32, #tpu.memory_space<vmem>>, vector<1x16x16xf32>
    %523 = vector.shape_cast %522 : vector<1x16x16xf32> to vector<16x16xf32>
    %c15_802 = arith.constant 15 : index
    %c2_803 = arith.constant 2 : index
    %c0_804 = arith.constant 0 : index
    %524 = vector.load %arg10[%c15_802, %c2_803, %c0_804] : memref<18x18x16xf32, #tpu.memory_space<vmem>>, vector<1x16x16xf32>
    %525 = vector.shape_cast %524 : vector<1x16x16xf32> to vector<16x16xf32>
    %526 = tpu.concatenate %495, %497, %499, %501, %503, %505, %507, %509, %511, %513, %515, %517, %519, %521, %523, %525 in 0 : vector<16x16xf32>, vector<16x16xf32>, vector<16x16xf32>, vector<16x16xf32>, vector<16x16xf32>, vector<16x16xf32>, vector<16x16xf32>, vector<16x16xf32>, vector<16x16xf32>, vector<16x16xf32>, vector<16x16xf32>, vector<16x16xf32>, vector<16x16xf32>, vector<16x16xf32>, vector<16x16xf32>, vector<16x16xf32> -> vector<256x16xf32>
    %527 = arith.truncf %526 : vector<256x16xf32> to vector<256x16xbf16>
    %c2_805 = arith.constant 2 : index
    %c0_806 = arith.constant 0 : index
    %c0_807 = arith.constant 0 : index
    %528 = vector.load %arg4[%c2_805, %c0_806, %c0_807] : memref<9x16x16xbf16, #tpu.memory_space<vmem>>, vector<1x16x16xbf16>
    %529 = vector.shape_cast %528 : vector<1x16x16xbf16> to vector<16x16xbf16>
    %cst_808 = arith.constant dense<0.000000e+00> : vector<256x16xf32>
    %530 = tpu.matmul %527, %529, %cst_808 {dimension_numbers = #tpu.dot_dimension_numbers<[1], [0], [0], [1], [0, 0, 1, 1], [], []>} : vector<256x16xbf16>, vector<16x16xbf16>, vector<256x16xf32> -> vector<256x16xf32>
    %531 = arith.addf %493, %530 : vector<256x16xf32>
    %c1_809 = arith.constant 1 : index
    %c0_810 = arith.constant 0 : index
    %c0_811 = arith.constant 0 : index
    %532 = vector.load %arg10[%c1_809, %c0_810, %c0_811] : memref<18x18x16xf32, #tpu.memory_space<vmem>>, vector<1x16x16xf32>
    %533 = vector.shape_cast %532 : vector<1x16x16xf32> to vector<16x16xf32>
    %c2_812 = arith.constant 2 : index
    %c0_813 = arith.constant 0 : index
    %c0_814 = arith.constant 0 : index
    %534 = vector.load %arg10[%c2_812, %c0_813, %c0_814] : memref<18x18x16xf32, #tpu.memory_space<vmem>>, vector<1x16x16xf32>
    %535 = vector.shape_cast %534 : vector<1x16x16xf32> to vector<16x16xf32>
    %c3_815 = arith.constant 3 : index
    %c0_816 = arith.constant 0 : index
    %c0_817 = arith.constant 0 : index
    %536 = vector.load %arg10[%c3_815, %c0_816, %c0_817] : memref<18x18x16xf32, #tpu.memory_space<vmem>>, vector<1x16x16xf32>
    %537 = vector.shape_cast %536 : vector<1x16x16xf32> to vector<16x16xf32>
    %c4_818 = arith.constant 4 : index
    %c0_819 = arith.constant 0 : index
    %c0_820 = arith.constant 0 : index
    %538 = vector.load %arg10[%c4_818, %c0_819, %c0_820] : memref<18x18x16xf32, #tpu.memory_space<vmem>>, vector<1x16x16xf32>
    %539 = vector.shape_cast %538 : vector<1x16x16xf32> to vector<16x16xf32>
    %c5_821 = arith.constant 5 : index
    %c0_822 = arith.constant 0 : index
    %c0_823 = arith.constant 0 : index
    %540 = vector.load %arg10[%c5_821, %c0_822, %c0_823] : memref<18x18x16xf32, #tpu.memory_space<vmem>>, vector<1x16x16xf32>
    %541 = vector.shape_cast %540 : vector<1x16x16xf32> to vector<16x16xf32>
    %c6_824 = arith.constant 6 : index
    %c0_825 = arith.constant 0 : index
    %c0_826 = arith.constant 0 : index
    %542 = vector.load %arg10[%c6_824, %c0_825, %c0_826] : memref<18x18x16xf32, #tpu.memory_space<vmem>>, vector<1x16x16xf32>
    %543 = vector.shape_cast %542 : vector<1x16x16xf32> to vector<16x16xf32>
    %c7_827 = arith.constant 7 : index
    %c0_828 = arith.constant 0 : index
    %c0_829 = arith.constant 0 : index
    %544 = vector.load %arg10[%c7_827, %c0_828, %c0_829] : memref<18x18x16xf32, #tpu.memory_space<vmem>>, vector<1x16x16xf32>
    %545 = vector.shape_cast %544 : vector<1x16x16xf32> to vector<16x16xf32>
    %c8_830 = arith.constant 8 : index
    %c0_831 = arith.constant 0 : index
    %c0_832 = arith.constant 0 : index
    %546 = vector.load %arg10[%c8_830, %c0_831, %c0_832] : memref<18x18x16xf32, #tpu.memory_space<vmem>>, vector<1x16x16xf32>
    %547 = vector.shape_cast %546 : vector<1x16x16xf32> to vector<16x16xf32>
    %c9_833 = arith.constant 9 : index
    %c0_834 = arith.constant 0 : index
    %c0_835 = arith.constant 0 : index
    %548 = vector.load %arg10[%c9_833, %c0_834, %c0_835] : memref<18x18x16xf32, #tpu.memory_space<vmem>>, vector<1x16x16xf32>
    %549 = vector.shape_cast %548 : vector<1x16x16xf32> to vector<16x16xf32>
    %c10_836 = arith.constant 10 : index
    %c0_837 = arith.constant 0 : index
    %c0_838 = arith.constant 0 : index
    %550 = vector.load %arg10[%c10_836, %c0_837, %c0_838] : memref<18x18x16xf32, #tpu.memory_space<vmem>>, vector<1x16x16xf32>
    %551 = vector.shape_cast %550 : vector<1x16x16xf32> to vector<16x16xf32>
    %c11_839 = arith.constant 11 : index
    %c0_840 = arith.constant 0 : index
    %c0_841 = arith.constant 0 : index
    %552 = vector.load %arg10[%c11_839, %c0_840, %c0_841] : memref<18x18x16xf32, #tpu.memory_space<vmem>>, vector<1x16x16xf32>
    %553 = vector.shape_cast %552 : vector<1x16x16xf32> to vector<16x16xf32>
    %c12_842 = arith.constant 12 : index
    %c0_843 = arith.constant 0 : index
    %c0_844 = arith.constant 0 : index
    %554 = vector.load %arg10[%c12_842, %c0_843, %c0_844] : memref<18x18x16xf32, #tpu.memory_space<vmem>>, vector<1x16x16xf32>
    %555 = vector.shape_cast %554 : vector<1x16x16xf32> to vector<16x16xf32>
    %c13_845 = arith.constant 13 : index
    %c0_846 = arith.constant 0 : index
    %c0_847 = arith.constant 0 : index
    %556 = vector.load %arg10[%c13_845, %c0_846, %c0_847] : memref<18x18x16xf32, #tpu.memory_space<vmem>>, vector<1x16x16xf32>
    %557 = vector.shape_cast %556 : vector<1x16x16xf32> to vector<16x16xf32>
    %c14_848 = arith.constant 14 : index
    %c0_849 = arith.constant 0 : index
    %c0_850 = arith.constant 0 : index
    %558 = vector.load %arg10[%c14_848, %c0_849, %c0_850] : memref<18x18x16xf32, #tpu.memory_space<vmem>>, vector<1x16x16xf32>
    %559 = vector.shape_cast %558 : vector<1x16x16xf32> to vector<16x16xf32>
    %c15_851 = arith.constant 15 : index
    %c0_852 = arith.constant 0 : index
    %c0_853 = arith.constant 0 : index
    %560 = vector.load %arg10[%c15_851, %c0_852, %c0_853] : memref<18x18x16xf32, #tpu.memory_space<vmem>>, vector<1x16x16xf32>
    %561 = vector.shape_cast %560 : vector<1x16x16xf32> to vector<16x16xf32>
    %c16_854 = arith.constant 16 : index
    %c0_855 = arith.constant 0 : index
    %c0_856 = arith.constant 0 : index
    %562 = vector.load %arg10[%c16_854, %c0_855, %c0_856] : memref<18x18x16xf32, #tpu.memory_space<vmem>>, vector<1x16x16xf32>
    %563 = vector.shape_cast %562 : vector<1x16x16xf32> to vector<16x16xf32>
    %564 = tpu.concatenate %533, %535, %537, %539, %541, %543, %545, %547, %549, %551, %553, %555, %557, %559, %561, %563 in 0 : vector<16x16xf32>, vector<16x16xf32>, vector<16x16xf32>, vector<16x16xf32>, vector<16x16xf32>, vector<16x16xf32>, vector<16x16xf32>, vector<16x16xf32>, vector<16x16xf32>, vector<16x16xf32>, vector<16x16xf32>, vector<16x16xf32>, vector<16x16xf32>, vector<16x16xf32>, vector<16x16xf32>, vector<16x16xf32> -> vector<256x16xf32>
    %565 = arith.truncf %564 : vector<256x16xf32> to vector<256x16xbf16>
    %c3_857 = arith.constant 3 : index
    %c0_858 = arith.constant 0 : index
    %c0_859 = arith.constant 0 : index
    %566 = vector.load %arg4[%c3_857, %c0_858, %c0_859] : memref<9x16x16xbf16, #tpu.memory_space<vmem>>, vector<1x16x16xbf16>
    %567 = vector.shape_cast %566 : vector<1x16x16xbf16> to vector<16x16xbf16>
    %cst_860 = arith.constant dense<0.000000e+00> : vector<256x16xf32>
    %568 = tpu.matmul %565, %567, %cst_860 {dimension_numbers = #tpu.dot_dimension_numbers<[1], [0], [0], [1], [0, 0, 1, 1], [], []>} : vector<256x16xbf16>, vector<16x16xbf16>, vector<256x16xf32> -> vector<256x16xf32>
    %569 = arith.addf %531, %568 : vector<256x16xf32>
    %c1_861 = arith.constant 1 : index
    %c1_862 = arith.constant 1 : index
    %c0_863 = arith.constant 0 : index
    %570 = vector.load %arg10[%c1_861, %c1_862, %c0_863] : memref<18x18x16xf32, #tpu.memory_space<vmem>>, vector<1x16x16xf32>
    %571 = vector.shape_cast %570 : vector<1x16x16xf32> to vector<16x16xf32>
    %c2_864 = arith.constant 2 : index
    %c1_865 = arith.constant 1 : index
    %c0_866 = arith.constant 0 : index
    %572 = vector.load %arg10[%c2_864, %c1_865, %c0_866] : memref<18x18x16xf32, #tpu.memory_space<vmem>>, vector<1x16x16xf32>
    %573 = vector.shape_cast %572 : vector<1x16x16xf32> to vector<16x16xf32>
    %c3_867 = arith.constant 3 : index
    %c1_868 = arith.constant 1 : index
    %c0_869 = arith.constant 0 : index
    %574 = vector.load %arg10[%c3_867, %c1_868, %c0_869] : memref<18x18x16xf32, #tpu.memory_space<vmem>>, vector<1x16x16xf32>
    %575 = vector.shape_cast %574 : vector<1x16x16xf32> to vector<16x16xf32>
    %c4_870 = arith.constant 4 : index
    %c1_871 = arith.constant 1 : index
    %c0_872 = arith.constant 0 : index
    %576 = vector.load %arg10[%c4_870, %c1_871, %c0_872] : memref<18x18x16xf32, #tpu.memory_space<vmem>>, vector<1x16x16xf32>
    %577 = vector.shape_cast %576 : vector<1x16x16xf32> to vector<16x16xf32>
    %c5_873 = arith.constant 5 : index
    %c1_874 = arith.constant 1 : index
    %c0_875 = arith.constant 0 : index
    %578 = vector.load %arg10[%c5_873, %c1_874, %c0_875] : memref<18x18x16xf32, #tpu.memory_space<vmem>>, vector<1x16x16xf32>
    %579 = vector.shape_cast %578 : vector<1x16x16xf32> to vector<16x16xf32>
    %c6_876 = arith.constant 6 : index
    %c1_877 = arith.constant 1 : index
    %c0_878 = arith.constant 0 : index
    %580 = vector.load %arg10[%c6_876, %c1_877, %c0_878] : memref<18x18x16xf32, #tpu.memory_space<vmem>>, vector<1x16x16xf32>
    %581 = vector.shape_cast %580 : vector<1x16x16xf32> to vector<16x16xf32>
    %c7_879 = arith.constant 7 : index
    %c1_880 = arith.constant 1 : index
    %c0_881 = arith.constant 0 : index
    %582 = vector.load %arg10[%c7_879, %c1_880, %c0_881] : memref<18x18x16xf32, #tpu.memory_space<vmem>>, vector<1x16x16xf32>
    %583 = vector.shape_cast %582 : vector<1x16x16xf32> to vector<16x16xf32>
    %c8_882 = arith.constant 8 : index
    %c1_883 = arith.constant 1 : index
    %c0_884 = arith.constant 0 : index
    %584 = vector.load %arg10[%c8_882, %c1_883, %c0_884] : memref<18x18x16xf32, #tpu.memory_space<vmem>>, vector<1x16x16xf32>
    %585 = vector.shape_cast %584 : vector<1x16x16xf32> to vector<16x16xf32>
    %c9_885 = arith.constant 9 : index
    %c1_886 = arith.constant 1 : index
    %c0_887 = arith.constant 0 : index
    %586 = vector.load %arg10[%c9_885, %c1_886, %c0_887] : memref<18x18x16xf32, #tpu.memory_space<vmem>>, vector<1x16x16xf32>
    %587 = vector.shape_cast %586 : vector<1x16x16xf32> to vector<16x16xf32>
    %c10_888 = arith.constant 10 : index
    %c1_889 = arith.constant 1 : index
    %c0_890 = arith.constant 0 : index
    %588 = vector.load %arg10[%c10_888, %c1_889, %c0_890] : memref<18x18x16xf32, #tpu.memory_space<vmem>>, vector<1x16x16xf32>
    %589 = vector.shape_cast %588 : vector<1x16x16xf32> to vector<16x16xf32>
    %c11_891 = arith.constant 11 : index
    %c1_892 = arith.constant 1 : index
    %c0_893 = arith.constant 0 : index
    %590 = vector.load %arg10[%c11_891, %c1_892, %c0_893] : memref<18x18x16xf32, #tpu.memory_space<vmem>>, vector<1x16x16xf32>
    %591 = vector.shape_cast %590 : vector<1x16x16xf32> to vector<16x16xf32>
    %c12_894 = arith.constant 12 : index
    %c1_895 = arith.constant 1 : index
    %c0_896 = arith.constant 0 : index
    %592 = vector.load %arg10[%c12_894, %c1_895, %c0_896] : memref<18x18x16xf32, #tpu.memory_space<vmem>>, vector<1x16x16xf32>
    %593 = vector.shape_cast %592 : vector<1x16x16xf32> to vector<16x16xf32>
    %c13_897 = arith.constant 13 : index
    %c1_898 = arith.constant 1 : index
    %c0_899 = arith.constant 0 : index
    %594 = vector.load %arg10[%c13_897, %c1_898, %c0_899] : memref<18x18x16xf32, #tpu.memory_space<vmem>>, vector<1x16x16xf32>
    %595 = vector.shape_cast %594 : vector<1x16x16xf32> to vector<16x16xf32>
    %c14_900 = arith.constant 14 : index
    %c1_901 = arith.constant 1 : index
    %c0_902 = arith.constant 0 : index
    %596 = vector.load %arg10[%c14_900, %c1_901, %c0_902] : memref<18x18x16xf32, #tpu.memory_space<vmem>>, vector<1x16x16xf32>
    %597 = vector.shape_cast %596 : vector<1x16x16xf32> to vector<16x16xf32>
    %c15_903 = arith.constant 15 : index
    %c1_904 = arith.constant 1 : index
    %c0_905 = arith.constant 0 : index
    %598 = vector.load %arg10[%c15_903, %c1_904, %c0_905] : memref<18x18x16xf32, #tpu.memory_space<vmem>>, vector<1x16x16xf32>
    %599 = vector.shape_cast %598 : vector<1x16x16xf32> to vector<16x16xf32>
    %c16_906 = arith.constant 16 : index
    %c1_907 = arith.constant 1 : index
    %c0_908 = arith.constant 0 : index
    %600 = vector.load %arg10[%c16_906, %c1_907, %c0_908] : memref<18x18x16xf32, #tpu.memory_space<vmem>>, vector<1x16x16xf32>
    %601 = vector.shape_cast %600 : vector<1x16x16xf32> to vector<16x16xf32>
    %602 = tpu.concatenate %571, %573, %575, %577, %579, %581, %583, %585, %587, %589, %591, %593, %595, %597, %599, %601 in 0 : vector<16x16xf32>, vector<16x16xf32>, vector<16x16xf32>, vector<16x16xf32>, vector<16x16xf32>, vector<16x16xf32>, vector<16x16xf32>, vector<16x16xf32>, vector<16x16xf32>, vector<16x16xf32>, vector<16x16xf32>, vector<16x16xf32>, vector<16x16xf32>, vector<16x16xf32>, vector<16x16xf32>, vector<16x16xf32> -> vector<256x16xf32>
    %603 = arith.truncf %602 : vector<256x16xf32> to vector<256x16xbf16>
    %c4_909 = arith.constant 4 : index
    %c0_910 = arith.constant 0 : index
    %c0_911 = arith.constant 0 : index
    %604 = vector.load %arg4[%c4_909, %c0_910, %c0_911] : memref<9x16x16xbf16, #tpu.memory_space<vmem>>, vector<1x16x16xbf16>
    %605 = vector.shape_cast %604 : vector<1x16x16xbf16> to vector<16x16xbf16>
    %cst_912 = arith.constant dense<0.000000e+00> : vector<256x16xf32>
    %606 = tpu.matmul %603, %605, %cst_912 {dimension_numbers = #tpu.dot_dimension_numbers<[1], [0], [0], [1], [0, 0, 1, 1], [], []>} : vector<256x16xbf16>, vector<16x16xbf16>, vector<256x16xf32> -> vector<256x16xf32>
    %607 = arith.addf %569, %606 : vector<256x16xf32>
    %c1_913 = arith.constant 1 : index
    %c2_914 = arith.constant 2 : index
    %c0_915 = arith.constant 0 : index
    %608 = vector.load %arg10[%c1_913, %c2_914, %c0_915] : memref<18x18x16xf32, #tpu.memory_space<vmem>>, vector<1x16x16xf32>
    %609 = vector.shape_cast %608 : vector<1x16x16xf32> to vector<16x16xf32>
    %c2_916 = arith.constant 2 : index
    %c2_917 = arith.constant 2 : index
    %c0_918 = arith.constant 0 : index
    %610 = vector.load %arg10[%c2_916, %c2_917, %c0_918] : memref<18x18x16xf32, #tpu.memory_space<vmem>>, vector<1x16x16xf32>
    %611 = vector.shape_cast %610 : vector<1x16x16xf32> to vector<16x16xf32>
    %c3_919 = arith.constant 3 : index
    %c2_920 = arith.constant 2 : index
    %c0_921 = arith.constant 0 : index
    %612 = vector.load %arg10[%c3_919, %c2_920, %c0_921] : memref<18x18x16xf32, #tpu.memory_space<vmem>>, vector<1x16x16xf32>
    %613 = vector.shape_cast %612 : vector<1x16x16xf32> to vector<16x16xf32>
    %c4_922 = arith.constant 4 : index
    %c2_923 = arith.constant 2 : index
    %c0_924 = arith.constant 0 : index
    %614 = vector.load %arg10[%c4_922, %c2_923, %c0_924] : memref<18x18x16xf32, #tpu.memory_space<vmem>>, vector<1x16x16xf32>
    %615 = vector.shape_cast %614 : vector<1x16x16xf32> to vector<16x16xf32>
    %c5_925 = arith.constant 5 : index
    %c2_926 = arith.constant 2 : index
    %c0_927 = arith.constant 0 : index
    %616 = vector.load %arg10[%c5_925, %c2_926, %c0_927] : memref<18x18x16xf32, #tpu.memory_space<vmem>>, vector<1x16x16xf32>
    %617 = vector.shape_cast %616 : vector<1x16x16xf32> to vector<16x16xf32>
    %c6_928 = arith.constant 6 : index
    %c2_929 = arith.constant 2 : index
    %c0_930 = arith.constant 0 : index
    %618 = vector.load %arg10[%c6_928, %c2_929, %c0_930] : memref<18x18x16xf32, #tpu.memory_space<vmem>>, vector<1x16x16xf32>
    %619 = vector.shape_cast %618 : vector<1x16x16xf32> to vector<16x16xf32>
    %c7_931 = arith.constant 7 : index
    %c2_932 = arith.constant 2 : index
    %c0_933 = arith.constant 0 : index
    %620 = vector.load %arg10[%c7_931, %c2_932, %c0_933] : memref<18x18x16xf32, #tpu.memory_space<vmem>>, vector<1x16x16xf32>
    %621 = vector.shape_cast %620 : vector<1x16x16xf32> to vector<16x16xf32>
    %c8_934 = arith.constant 8 : index
    %c2_935 = arith.constant 2 : index
    %c0_936 = arith.constant 0 : index
    %622 = vector.load %arg10[%c8_934, %c2_935, %c0_936] : memref<18x18x16xf32, #tpu.memory_space<vmem>>, vector<1x16x16xf32>
    %623 = vector.shape_cast %622 : vector<1x16x16xf32> to vector<16x16xf32>
    %c9_937 = arith.constant 9 : index
    %c2_938 = arith.constant 2 : index
    %c0_939 = arith.constant 0 : index
    %624 = vector.load %arg10[%c9_937, %c2_938, %c0_939] : memref<18x18x16xf32, #tpu.memory_space<vmem>>, vector<1x16x16xf32>
    %625 = vector.shape_cast %624 : vector<1x16x16xf32> to vector<16x16xf32>
    %c10_940 = arith.constant 10 : index
    %c2_941 = arith.constant 2 : index
    %c0_942 = arith.constant 0 : index
    %626 = vector.load %arg10[%c10_940, %c2_941, %c0_942] : memref<18x18x16xf32, #tpu.memory_space<vmem>>, vector<1x16x16xf32>
    %627 = vector.shape_cast %626 : vector<1x16x16xf32> to vector<16x16xf32>
    %c11_943 = arith.constant 11 : index
    %c2_944 = arith.constant 2 : index
    %c0_945 = arith.constant 0 : index
    %628 = vector.load %arg10[%c11_943, %c2_944, %c0_945] : memref<18x18x16xf32, #tpu.memory_space<vmem>>, vector<1x16x16xf32>
    %629 = vector.shape_cast %628 : vector<1x16x16xf32> to vector<16x16xf32>
    %c12_946 = arith.constant 12 : index
    %c2_947 = arith.constant 2 : index
    %c0_948 = arith.constant 0 : index
    %630 = vector.load %arg10[%c12_946, %c2_947, %c0_948] : memref<18x18x16xf32, #tpu.memory_space<vmem>>, vector<1x16x16xf32>
    %631 = vector.shape_cast %630 : vector<1x16x16xf32> to vector<16x16xf32>
    %c13_949 = arith.constant 13 : index
    %c2_950 = arith.constant 2 : index
    %c0_951 = arith.constant 0 : index
    %632 = vector.load %arg10[%c13_949, %c2_950, %c0_951] : memref<18x18x16xf32, #tpu.memory_space<vmem>>, vector<1x16x16xf32>
    %633 = vector.shape_cast %632 : vector<1x16x16xf32> to vector<16x16xf32>
    %c14_952 = arith.constant 14 : index
    %c2_953 = arith.constant 2 : index
    %c0_954 = arith.constant 0 : index
    %634 = vector.load %arg10[%c14_952, %c2_953, %c0_954] : memref<18x18x16xf32, #tpu.memory_space<vmem>>, vector<1x16x16xf32>
    %635 = vector.shape_cast %634 : vector<1x16x16xf32> to vector<16x16xf32>
    %c15_955 = arith.constant 15 : index
    %c2_956 = arith.constant 2 : index
    %c0_957 = arith.constant 0 : index
    %636 = vector.load %arg10[%c15_955, %c2_956, %c0_957] : memref<18x18x16xf32, #tpu.memory_space<vmem>>, vector<1x16x16xf32>
    %637 = vector.shape_cast %636 : vector<1x16x16xf32> to vector<16x16xf32>
    %c16_958 = arith.constant 16 : index
    %c2_959 = arith.constant 2 : index
    %c0_960 = arith.constant 0 : index
    %638 = vector.load %arg10[%c16_958, %c2_959, %c0_960] : memref<18x18x16xf32, #tpu.memory_space<vmem>>, vector<1x16x16xf32>
    %639 = vector.shape_cast %638 : vector<1x16x16xf32> to vector<16x16xf32>
    %640 = tpu.concatenate %609, %611, %613, %615, %617, %619, %621, %623, %625, %627, %629, %631, %633, %635, %637, %639 in 0 : vector<16x16xf32>, vector<16x16xf32>, vector<16x16xf32>, vector<16x16xf32>, vector<16x16xf32>, vector<16x16xf32>, vector<16x16xf32>, vector<16x16xf32>, vector<16x16xf32>, vector<16x16xf32>, vector<16x16xf32>, vector<16x16xf32>, vector<16x16xf32>, vector<16x16xf32>, vector<16x16xf32>, vector<16x16xf32> -> vector<256x16xf32>
    %641 = arith.truncf %640 : vector<256x16xf32> to vector<256x16xbf16>
    %c5_961 = arith.constant 5 : index
    %c0_962 = arith.constant 0 : index
    %c0_963 = arith.constant 0 : index
    %642 = vector.load %arg4[%c5_961, %c0_962, %c0_963] : memref<9x16x16xbf16, #tpu.memory_space<vmem>>, vector<1x16x16xbf16>
    %643 = vector.shape_cast %642 : vector<1x16x16xbf16> to vector<16x16xbf16>
    %cst_964 = arith.constant dense<0.000000e+00> : vector<256x16xf32>
    %644 = tpu.matmul %641, %643, %cst_964 {dimension_numbers = #tpu.dot_dimension_numbers<[1], [0], [0], [1], [0, 0, 1, 1], [], []>} : vector<256x16xbf16>, vector<16x16xbf16>, vector<256x16xf32> -> vector<256x16xf32>
    %645 = arith.addf %607, %644 : vector<256x16xf32>
    %c2_965 = arith.constant 2 : index
    %c0_966 = arith.constant 0 : index
    %c0_967 = arith.constant 0 : index
    %646 = vector.load %arg10[%c2_965, %c0_966, %c0_967] : memref<18x18x16xf32, #tpu.memory_space<vmem>>, vector<1x16x16xf32>
    %647 = vector.shape_cast %646 : vector<1x16x16xf32> to vector<16x16xf32>
    %c3_968 = arith.constant 3 : index
    %c0_969 = arith.constant 0 : index
    %c0_970 = arith.constant 0 : index
    %648 = vector.load %arg10[%c3_968, %c0_969, %c0_970] : memref<18x18x16xf32, #tpu.memory_space<vmem>>, vector<1x16x16xf32>
    %649 = vector.shape_cast %648 : vector<1x16x16xf32> to vector<16x16xf32>
    %c4_971 = arith.constant 4 : index
    %c0_972 = arith.constant 0 : index
    %c0_973 = arith.constant 0 : index
    %650 = vector.load %arg10[%c4_971, %c0_972, %c0_973] : memref<18x18x16xf32, #tpu.memory_space<vmem>>, vector<1x16x16xf32>
    %651 = vector.shape_cast %650 : vector<1x16x16xf32> to vector<16x16xf32>
    %c5_974 = arith.constant 5 : index
    %c0_975 = arith.constant 0 : index
    %c0_976 = arith.constant 0 : index
    %652 = vector.load %arg10[%c5_974, %c0_975, %c0_976] : memref<18x18x16xf32, #tpu.memory_space<vmem>>, vector<1x16x16xf32>
    %653 = vector.shape_cast %652 : vector<1x16x16xf32> to vector<16x16xf32>
    %c6_977 = arith.constant 6 : index
    %c0_978 = arith.constant 0 : index
    %c0_979 = arith.constant 0 : index
    %654 = vector.load %arg10[%c6_977, %c0_978, %c0_979] : memref<18x18x16xf32, #tpu.memory_space<vmem>>, vector<1x16x16xf32>
    %655 = vector.shape_cast %654 : vector<1x16x16xf32> to vector<16x16xf32>
    %c7_980 = arith.constant 7 : index
    %c0_981 = arith.constant 0 : index
    %c0_982 = arith.constant 0 : index
    %656 = vector.load %arg10[%c7_980, %c0_981, %c0_982] : memref<18x18x16xf32, #tpu.memory_space<vmem>>, vector<1x16x16xf32>
    %657 = vector.shape_cast %656 : vector<1x16x16xf32> to vector<16x16xf32>
    %c8_983 = arith.constant 8 : index
    %c0_984 = arith.constant 0 : index
    %c0_985 = arith.constant 0 : index
    %658 = vector.load %arg10[%c8_983, %c0_984, %c0_985] : memref<18x18x16xf32, #tpu.memory_space<vmem>>, vector<1x16x16xf32>
    %659 = vector.shape_cast %658 : vector<1x16x16xf32> to vector<16x16xf32>
    %c9_986 = arith.constant 9 : index
    %c0_987 = arith.constant 0 : index
    %c0_988 = arith.constant 0 : index
    %660 = vector.load %arg10[%c9_986, %c0_987, %c0_988] : memref<18x18x16xf32, #tpu.memory_space<vmem>>, vector<1x16x16xf32>
    %661 = vector.shape_cast %660 : vector<1x16x16xf32> to vector<16x16xf32>
    %c10_989 = arith.constant 10 : index
    %c0_990 = arith.constant 0 : index
    %c0_991 = arith.constant 0 : index
    %662 = vector.load %arg10[%c10_989, %c0_990, %c0_991] : memref<18x18x16xf32, #tpu.memory_space<vmem>>, vector<1x16x16xf32>
    %663 = vector.shape_cast %662 : vector<1x16x16xf32> to vector<16x16xf32>
    %c11_992 = arith.constant 11 : index
    %c0_993 = arith.constant 0 : index
    %c0_994 = arith.constant 0 : index
    %664 = vector.load %arg10[%c11_992, %c0_993, %c0_994] : memref<18x18x16xf32, #tpu.memory_space<vmem>>, vector<1x16x16xf32>
    %665 = vector.shape_cast %664 : vector<1x16x16xf32> to vector<16x16xf32>
    %c12_995 = arith.constant 12 : index
    %c0_996 = arith.constant 0 : index
    %c0_997 = arith.constant 0 : index
    %666 = vector.load %arg10[%c12_995, %c0_996, %c0_997] : memref<18x18x16xf32, #tpu.memory_space<vmem>>, vector<1x16x16xf32>
    %667 = vector.shape_cast %666 : vector<1x16x16xf32> to vector<16x16xf32>
    %c13_998 = arith.constant 13 : index
    %c0_999 = arith.constant 0 : index
    %c0_1000 = arith.constant 0 : index
    %668 = vector.load %arg10[%c13_998, %c0_999, %c0_1000] : memref<18x18x16xf32, #tpu.memory_space<vmem>>, vector<1x16x16xf32>
    %669 = vector.shape_cast %668 : vector<1x16x16xf32> to vector<16x16xf32>
    %c14_1001 = arith.constant 14 : index
    %c0_1002 = arith.constant 0 : index
    %c0_1003 = arith.constant 0 : index
    %670 = vector.load %arg10[%c14_1001, %c0_1002, %c0_1003] : memref<18x18x16xf32, #tpu.memory_space<vmem>>, vector<1x16x16xf32>
    %671 = vector.shape_cast %670 : vector<1x16x16xf32> to vector<16x16xf32>
    %c15_1004 = arith.constant 15 : index
    %c0_1005 = arith.constant 0 : index
    %c0_1006 = arith.constant 0 : index
    %672 = vector.load %arg10[%c15_1004, %c0_1005, %c0_1006] : memref<18x18x16xf32, #tpu.memory_space<vmem>>, vector<1x16x16xf32>
    %673 = vector.shape_cast %672 : vector<1x16x16xf32> to vector<16x16xf32>
    %c16_1007 = arith.constant 16 : index
    %c0_1008 = arith.constant 0 : index
    %c0_1009 = arith.constant 0 : index
    %674 = vector.load %arg10[%c16_1007, %c0_1008, %c0_1009] : memref<18x18x16xf32, #tpu.memory_space<vmem>>, vector<1x16x16xf32>
    %675 = vector.shape_cast %674 : vector<1x16x16xf32> to vector<16x16xf32>
    %c17_1010 = arith.constant 17 : index
    %c0_1011 = arith.constant 0 : index
    %c0_1012 = arith.constant 0 : index
    %676 = vector.load %arg10[%c17_1010, %c0_1011, %c0_1012] : memref<18x18x16xf32, #tpu.memory_space<vmem>>, vector<1x16x16xf32>
    %677 = vector.shape_cast %676 : vector<1x16x16xf32> to vector<16x16xf32>
    %678 = tpu.concatenate %647, %649, %651, %653, %655, %657, %659, %661, %663, %665, %667, %669, %671, %673, %675, %677 in 0 : vector<16x16xf32>, vector<16x16xf32>, vector<16x16xf32>, vector<16x16xf32>, vector<16x16xf32>, vector<16x16xf32>, vector<16x16xf32>, vector<16x16xf32>, vector<16x16xf32>, vector<16x16xf32>, vector<16x16xf32>, vector<16x16xf32>, vector<16x16xf32>, vector<16x16xf32>, vector<16x16xf32>, vector<16x16xf32> -> vector<256x16xf32>
    %679 = arith.truncf %678 : vector<256x16xf32> to vector<256x16xbf16>
    %c6_1013 = arith.constant 6 : index
    %c0_1014 = arith.constant 0 : index
    %c0_1015 = arith.constant 0 : index
    %680 = vector.load %arg4[%c6_1013, %c0_1014, %c0_1015] : memref<9x16x16xbf16, #tpu.memory_space<vmem>>, vector<1x16x16xbf16>
    %681 = vector.shape_cast %680 : vector<1x16x16xbf16> to vector<16x16xbf16>
    %cst_1016 = arith.constant dense<0.000000e+00> : vector<256x16xf32>
    %682 = tpu.matmul %679, %681, %cst_1016 {dimension_numbers = #tpu.dot_dimension_numbers<[1], [0], [0], [1], [0, 0, 1, 1], [], []>} : vector<256x16xbf16>, vector<16x16xbf16>, vector<256x16xf32> -> vector<256x16xf32>
    %683 = arith.addf %645, %682 : vector<256x16xf32>
    %c2_1017 = arith.constant 2 : index
    %c1_1018 = arith.constant 1 : index
    %c0_1019 = arith.constant 0 : index
    %684 = vector.load %arg10[%c2_1017, %c1_1018, %c0_1019] : memref<18x18x16xf32, #tpu.memory_space<vmem>>, vector<1x16x16xf32>
    %685 = vector.shape_cast %684 : vector<1x16x16xf32> to vector<16x16xf32>
    %c3_1020 = arith.constant 3 : index
    %c1_1021 = arith.constant 1 : index
    %c0_1022 = arith.constant 0 : index
    %686 = vector.load %arg10[%c3_1020, %c1_1021, %c0_1022] : memref<18x18x16xf32, #tpu.memory_space<vmem>>, vector<1x16x16xf32>
    %687 = vector.shape_cast %686 : vector<1x16x16xf32> to vector<16x16xf32>
    %c4_1023 = arith.constant 4 : index
    %c1_1024 = arith.constant 1 : index
    %c0_1025 = arith.constant 0 : index
    %688 = vector.load %arg10[%c4_1023, %c1_1024, %c0_1025] : memref<18x18x16xf32, #tpu.memory_space<vmem>>, vector<1x16x16xf32>
    %689 = vector.shape_cast %688 : vector<1x16x16xf32> to vector<16x16xf32>
    %c5_1026 = arith.constant 5 : index
    %c1_1027 = arith.constant 1 : index
    %c0_1028 = arith.constant 0 : index
    %690 = vector.load %arg10[%c5_1026, %c1_1027, %c0_1028] : memref<18x18x16xf32, #tpu.memory_space<vmem>>, vector<1x16x16xf32>
    %691 = vector.shape_cast %690 : vector<1x16x16xf32> to vector<16x16xf32>
    %c6_1029 = arith.constant 6 : index
    %c1_1030 = arith.constant 1 : index
    %c0_1031 = arith.constant 0 : index
    %692 = vector.load %arg10[%c6_1029, %c1_1030, %c0_1031] : memref<18x18x16xf32, #tpu.memory_space<vmem>>, vector<1x16x16xf32>
    %693 = vector.shape_cast %692 : vector<1x16x16xf32> to vector<16x16xf32>
    %c7_1032 = arith.constant 7 : index
    %c1_1033 = arith.constant 1 : index
    %c0_1034 = arith.constant 0 : index
    %694 = vector.load %arg10[%c7_1032, %c1_1033, %c0_1034] : memref<18x18x16xf32, #tpu.memory_space<vmem>>, vector<1x16x16xf32>
    %695 = vector.shape_cast %694 : vector<1x16x16xf32> to vector<16x16xf32>
    %c8_1035 = arith.constant 8 : index
    %c1_1036 = arith.constant 1 : index
    %c0_1037 = arith.constant 0 : index
    %696 = vector.load %arg10[%c8_1035, %c1_1036, %c0_1037] : memref<18x18x16xf32, #tpu.memory_space<vmem>>, vector<1x16x16xf32>
    %697 = vector.shape_cast %696 : vector<1x16x16xf32> to vector<16x16xf32>
    %c9_1038 = arith.constant 9 : index
    %c1_1039 = arith.constant 1 : index
    %c0_1040 = arith.constant 0 : index
    %698 = vector.load %arg10[%c9_1038, %c1_1039, %c0_1040] : memref<18x18x16xf32, #tpu.memory_space<vmem>>, vector<1x16x16xf32>
    %699 = vector.shape_cast %698 : vector<1x16x16xf32> to vector<16x16xf32>
    %c10_1041 = arith.constant 10 : index
    %c1_1042 = arith.constant 1 : index
    %c0_1043 = arith.constant 0 : index
    %700 = vector.load %arg10[%c10_1041, %c1_1042, %c0_1043] : memref<18x18x16xf32, #tpu.memory_space<vmem>>, vector<1x16x16xf32>
    %701 = vector.shape_cast %700 : vector<1x16x16xf32> to vector<16x16xf32>
    %c11_1044 = arith.constant 11 : index
    %c1_1045 = arith.constant 1 : index
    %c0_1046 = arith.constant 0 : index
    %702 = vector.load %arg10[%c11_1044, %c1_1045, %c0_1046] : memref<18x18x16xf32, #tpu.memory_space<vmem>>, vector<1x16x16xf32>
    %703 = vector.shape_cast %702 : vector<1x16x16xf32> to vector<16x16xf32>
    %c12_1047 = arith.constant 12 : index
    %c1_1048 = arith.constant 1 : index
    %c0_1049 = arith.constant 0 : index
    %704 = vector.load %arg10[%c12_1047, %c1_1048, %c0_1049] : memref<18x18x16xf32, #tpu.memory_space<vmem>>, vector<1x16x16xf32>
    %705 = vector.shape_cast %704 : vector<1x16x16xf32> to vector<16x16xf32>
    %c13_1050 = arith.constant 13 : index
    %c1_1051 = arith.constant 1 : index
    %c0_1052 = arith.constant 0 : index
    %706 = vector.load %arg10[%c13_1050, %c1_1051, %c0_1052] : memref<18x18x16xf32, #tpu.memory_space<vmem>>, vector<1x16x16xf32>
    %707 = vector.shape_cast %706 : vector<1x16x16xf32> to vector<16x16xf32>
    %c14_1053 = arith.constant 14 : index
    %c1_1054 = arith.constant 1 : index
    %c0_1055 = arith.constant 0 : index
    %708 = vector.load %arg10[%c14_1053, %c1_1054, %c0_1055] : memref<18x18x16xf32, #tpu.memory_space<vmem>>, vector<1x16x16xf32>
    %709 = vector.shape_cast %708 : vector<1x16x16xf32> to vector<16x16xf32>
    %c15_1056 = arith.constant 15 : index
    %c1_1057 = arith.constant 1 : index
    %c0_1058 = arith.constant 0 : index
    %710 = vector.load %arg10[%c15_1056, %c1_1057, %c0_1058] : memref<18x18x16xf32, #tpu.memory_space<vmem>>, vector<1x16x16xf32>
    %711 = vector.shape_cast %710 : vector<1x16x16xf32> to vector<16x16xf32>
    %c16_1059 = arith.constant 16 : index
    %c1_1060 = arith.constant 1 : index
    %c0_1061 = arith.constant 0 : index
    %712 = vector.load %arg10[%c16_1059, %c1_1060, %c0_1061] : memref<18x18x16xf32, #tpu.memory_space<vmem>>, vector<1x16x16xf32>
    %713 = vector.shape_cast %712 : vector<1x16x16xf32> to vector<16x16xf32>
    %c17_1062 = arith.constant 17 : index
    %c1_1063 = arith.constant 1 : index
    %c0_1064 = arith.constant 0 : index
    %714 = vector.load %arg10[%c17_1062, %c1_1063, %c0_1064] : memref<18x18x16xf32, #tpu.memory_space<vmem>>, vector<1x16x16xf32>
    %715 = vector.shape_cast %714 : vector<1x16x16xf32> to vector<16x16xf32>
    %716 = tpu.concatenate %685, %687, %689, %691, %693, %695, %697, %699, %701, %703, %705, %707, %709, %711, %713, %715 in 0 : vector<16x16xf32>, vector<16x16xf32>, vector<16x16xf32>, vector<16x16xf32>, vector<16x16xf32>, vector<16x16xf32>, vector<16x16xf32>, vector<16x16xf32>, vector<16x16xf32>, vector<16x16xf32>, vector<16x16xf32>, vector<16x16xf32>, vector<16x16xf32>, vector<16x16xf32>, vector<16x16xf32>, vector<16x16xf32> -> vector<256x16xf32>
    %717 = arith.truncf %716 : vector<256x16xf32> to vector<256x16xbf16>
    %c7_1065 = arith.constant 7 : index
    %c0_1066 = arith.constant 0 : index
    %c0_1067 = arith.constant 0 : index
    %718 = vector.load %arg4[%c7_1065, %c0_1066, %c0_1067] : memref<9x16x16xbf16, #tpu.memory_space<vmem>>, vector<1x16x16xbf16>
    %719 = vector.shape_cast %718 : vector<1x16x16xbf16> to vector<16x16xbf16>
    %cst_1068 = arith.constant dense<0.000000e+00> : vector<256x16xf32>
    %720 = tpu.matmul %717, %719, %cst_1068 {dimension_numbers = #tpu.dot_dimension_numbers<[1], [0], [0], [1], [0, 0, 1, 1], [], []>} : vector<256x16xbf16>, vector<16x16xbf16>, vector<256x16xf32> -> vector<256x16xf32>
    %721 = arith.addf %683, %720 : vector<256x16xf32>
    %c2_1069 = arith.constant 2 : index
    %c2_1070 = arith.constant 2 : index
    %c0_1071 = arith.constant 0 : index
    %722 = vector.load %arg10[%c2_1069, %c2_1070, %c0_1071] : memref<18x18x16xf32, #tpu.memory_space<vmem>>, vector<1x16x16xf32>
    %723 = vector.shape_cast %722 : vector<1x16x16xf32> to vector<16x16xf32>
    %c3_1072 = arith.constant 3 : index
    %c2_1073 = arith.constant 2 : index
    %c0_1074 = arith.constant 0 : index
    %724 = vector.load %arg10[%c3_1072, %c2_1073, %c0_1074] : memref<18x18x16xf32, #tpu.memory_space<vmem>>, vector<1x16x16xf32>
    %725 = vector.shape_cast %724 : vector<1x16x16xf32> to vector<16x16xf32>
    %c4_1075 = arith.constant 4 : index
    %c2_1076 = arith.constant 2 : index
    %c0_1077 = arith.constant 0 : index
    %726 = vector.load %arg10[%c4_1075, %c2_1076, %c0_1077] : memref<18x18x16xf32, #tpu.memory_space<vmem>>, vector<1x16x16xf32>
    %727 = vector.shape_cast %726 : vector<1x16x16xf32> to vector<16x16xf32>
    %c5_1078 = arith.constant 5 : index
    %c2_1079 = arith.constant 2 : index
    %c0_1080 = arith.constant 0 : index
    %728 = vector.load %arg10[%c5_1078, %c2_1079, %c0_1080] : memref<18x18x16xf32, #tpu.memory_space<vmem>>, vector<1x16x16xf32>
    %729 = vector.shape_cast %728 : vector<1x16x16xf32> to vector<16x16xf32>
    %c6_1081 = arith.constant 6 : index
    %c2_1082 = arith.constant 2 : index
    %c0_1083 = arith.constant 0 : index
    %730 = vector.load %arg10[%c6_1081, %c2_1082, %c0_1083] : memref<18x18x16xf32, #tpu.memory_space<vmem>>, vector<1x16x16xf32>
    %731 = vector.shape_cast %730 : vector<1x16x16xf32> to vector<16x16xf32>
    %c7_1084 = arith.constant 7 : index
    %c2_1085 = arith.constant 2 : index
    %c0_1086 = arith.constant 0 : index
    %732 = vector.load %arg10[%c7_1084, %c2_1085, %c0_1086] : memref<18x18x16xf32, #tpu.memory_space<vmem>>, vector<1x16x16xf32>
    %733 = vector.shape_cast %732 : vector<1x16x16xf32> to vector<16x16xf32>
    %c8_1087 = arith.constant 8 : index
    %c2_1088 = arith.constant 2 : index
    %c0_1089 = arith.constant 0 : index
    %734 = vector.load %arg10[%c8_1087, %c2_1088, %c0_1089] : memref<18x18x16xf32, #tpu.memory_space<vmem>>, vector<1x16x16xf32>
    %735 = vector.shape_cast %734 : vector<1x16x16xf32> to vector<16x16xf32>
    %c9_1090 = arith.constant 9 : index
    %c2_1091 = arith.constant 2 : index
    %c0_1092 = arith.constant 0 : index
    %736 = vector.load %arg10[%c9_1090, %c2_1091, %c0_1092] : memref<18x18x16xf32, #tpu.memory_space<vmem>>, vector<1x16x16xf32>
    %737 = vector.shape_cast %736 : vector<1x16x16xf32> to vector<16x16xf32>
    %c10_1093 = arith.constant 10 : index
    %c2_1094 = arith.constant 2 : index
    %c0_1095 = arith.constant 0 : index
    %738 = vector.load %arg10[%c10_1093, %c2_1094, %c0_1095] : memref<18x18x16xf32, #tpu.memory_space<vmem>>, vector<1x16x16xf32>
    %739 = vector.shape_cast %738 : vector<1x16x16xf32> to vector<16x16xf32>
    %c11_1096 = arith.constant 11 : index
    %c2_1097 = arith.constant 2 : index
    %c0_1098 = arith.constant 0 : index
    %740 = vector.load %arg10[%c11_1096, %c2_1097, %c0_1098] : memref<18x18x16xf32, #tpu.memory_space<vmem>>, vector<1x16x16xf32>
    %741 = vector.shape_cast %740 : vector<1x16x16xf32> to vector<16x16xf32>
    %c12_1099 = arith.constant 12 : index
    %c2_1100 = arith.constant 2 : index
    %c0_1101 = arith.constant 0 : index
    %742 = vector.load %arg10[%c12_1099, %c2_1100, %c0_1101] : memref<18x18x16xf32, #tpu.memory_space<vmem>>, vector<1x16x16xf32>
    %743 = vector.shape_cast %742 : vector<1x16x16xf32> to vector<16x16xf32>
    %c13_1102 = arith.constant 13 : index
    %c2_1103 = arith.constant 2 : index
    %c0_1104 = arith.constant 0 : index
    %744 = vector.load %arg10[%c13_1102, %c2_1103, %c0_1104] : memref<18x18x16xf32, #tpu.memory_space<vmem>>, vector<1x16x16xf32>
    %745 = vector.shape_cast %744 : vector<1x16x16xf32> to vector<16x16xf32>
    %c14_1105 = arith.constant 14 : index
    %c2_1106 = arith.constant 2 : index
    %c0_1107 = arith.constant 0 : index
    %746 = vector.load %arg10[%c14_1105, %c2_1106, %c0_1107] : memref<18x18x16xf32, #tpu.memory_space<vmem>>, vector<1x16x16xf32>
    %747 = vector.shape_cast %746 : vector<1x16x16xf32> to vector<16x16xf32>
    %c15_1108 = arith.constant 15 : index
    %c2_1109 = arith.constant 2 : index
    %c0_1110 = arith.constant 0 : index
    %748 = vector.load %arg10[%c15_1108, %c2_1109, %c0_1110] : memref<18x18x16xf32, #tpu.memory_space<vmem>>, vector<1x16x16xf32>
    %749 = vector.shape_cast %748 : vector<1x16x16xf32> to vector<16x16xf32>
    %c16_1111 = arith.constant 16 : index
    %c2_1112 = arith.constant 2 : index
    %c0_1113 = arith.constant 0 : index
    %750 = vector.load %arg10[%c16_1111, %c2_1112, %c0_1113] : memref<18x18x16xf32, #tpu.memory_space<vmem>>, vector<1x16x16xf32>
    %751 = vector.shape_cast %750 : vector<1x16x16xf32> to vector<16x16xf32>
    %c17_1114 = arith.constant 17 : index
    %c2_1115 = arith.constant 2 : index
    %c0_1116 = arith.constant 0 : index
    %752 = vector.load %arg10[%c17_1114, %c2_1115, %c0_1116] : memref<18x18x16xf32, #tpu.memory_space<vmem>>, vector<1x16x16xf32>
    %753 = vector.shape_cast %752 : vector<1x16x16xf32> to vector<16x16xf32>
    %754 = tpu.concatenate %723, %725, %727, %729, %731, %733, %735, %737, %739, %741, %743, %745, %747, %749, %751, %753 in 0 : vector<16x16xf32>, vector<16x16xf32>, vector<16x16xf32>, vector<16x16xf32>, vector<16x16xf32>, vector<16x16xf32>, vector<16x16xf32>, vector<16x16xf32>, vector<16x16xf32>, vector<16x16xf32>, vector<16x16xf32>, vector<16x16xf32>, vector<16x16xf32>, vector<16x16xf32>, vector<16x16xf32>, vector<16x16xf32> -> vector<256x16xf32>
    %755 = arith.truncf %754 : vector<256x16xf32> to vector<256x16xbf16>
    %c8_1117 = arith.constant 8 : index
    %c0_1118 = arith.constant 0 : index
    %c0_1119 = arith.constant 0 : index
    %756 = vector.load %arg4[%c8_1117, %c0_1118, %c0_1119] : memref<9x16x16xbf16, #tpu.memory_space<vmem>>, vector<1x16x16xbf16>
    %757 = vector.shape_cast %756 : vector<1x16x16xbf16> to vector<16x16xbf16>
    %cst_1120 = arith.constant dense<0.000000e+00> : vector<256x16xf32>
    %758 = tpu.matmul %755, %757, %cst_1120 {dimension_numbers = #tpu.dot_dimension_numbers<[1], [0], [0], [1], [0, 0, 1, 1], [], []>} : vector<256x16xbf16>, vector<16x16xbf16>, vector<256x16xf32> -> vector<256x16xf32>
    %759 = arith.addf %721, %758 : vector<256x16xf32>
    %c0_1121 = arith.constant 0 : index
    %c0_1122 = arith.constant 0 : index
    %760 = vector.load %arg5[%c0_1121, %c0_1122] : memref<1x16xf32, #tpu.memory_space<vmem>>, vector<1x16xf32>
    %761 = vector.broadcast %760 : vector<1x16xf32> to vector<256x16xf32>
    %762 = arith.addf %759, %761 : vector<256x16xf32>
    %cst_1123 = arith.constant 0.000000e+00 : f32
    %763 = vector.broadcast %cst_1123 : f32 to vector<256x16xf32>
    %764 = arith.maximumf %762, %763 : vector<256x16xf32>
    %765 = arith.truncf %764 : vector<256x16xf32> to vector<256x16xbf16>
    %c0_1124 = arith.constant 0 : index
    %c0_1125 = arith.constant 0 : index
    %766 = vector.load %arg6[%c0_1124, %c0_1125] : memref<16x18xbf16, #tpu.memory_space<vmem>>, vector<16x18xbf16>
    %cst_1126 = arith.constant dense<0.000000e+00> : vector<256x18xf32>
    %767 = tpu.matmul %765, %766, %cst_1126 {dimension_numbers = #tpu.dot_dimension_numbers<[1], [0], [0], [1], [0, 0, 1, 1], [], []>} : vector<256x16xbf16>, vector<16x18xbf16>, vector<256x18xf32> -> vector<256x18xf32>
    %c0_1127 = arith.constant 0 : index
    %c0_1128 = arith.constant 0 : index
    %768 = vector.load %arg7[%c0_1127, %c0_1128] : memref<1x18xf32, #tpu.memory_space<vmem>>, vector<1x18xf32>
    %769 = vector.broadcast %768 : vector<1x18xf32> to vector<256x18xf32>
    %770 = arith.addf %767, %769 : vector<256x18xf32>
    %771 = vector.extract_strided_slice %770 {offsets = [0, 0], sizes = [256, 3], strides = [1, 1]} : vector<256x18xf32> to vector<256x3xf32>
    %772 = vector.extract_strided_slice %770 {offsets = [0, 3], sizes = [256, 3], strides = [1, 1]} : vector<256x18xf32> to vector<256x3xf32>
    %773 = arith.subf %771, %772 : vector<256x3xf32>
    %774 = math.exp %773 : vector<256x3xf32>
    %cst_1129 = arith.constant 1.000000e+00 : f32
    %775 = vector.broadcast %cst_1129 : f32 to vector<256x3xf32>
    %776 = arith.addf %775, %774 : vector<256x3xf32>
    %cst_1130 = arith.constant 1.000000e+00 : f32
    %777 = vector.broadcast %cst_1130 : f32 to vector<256x3xf32>
    %778 = arith.divf %777, %776 : vector<256x3xf32>
    %779 = vector.extract_strided_slice %770 {offsets = [0, 6], sizes = [256, 12], strides = [1, 1]} : vector<256x18xf32> to vector<256x12xf32>
    %780 = tpu.concatenate %778, %779 in 1 : vector<256x3xf32>, vector<256x12xf32> -> vector<256x15xf32>
    %c0_1131 = arith.constant 0 : index
    %c0_1132 = arith.constant 0 : index
    %c0_1133 = arith.constant 0 : index
    %781 = vector.load %arg9[%c0_1131, %c0_1132, %c0_1133] : memref<1x256x15xf32, #tpu.memory_space<vmem>>, vector<1x256x15xf32>
    %782 = vector.shape_cast %781 : vector<1x256x15xf32> to vector<256x15xf32>
    %783 = vector.shape_cast %780 : vector<256x15xf32> to vector<1x256x15xf32>
    tpu.vector_store %arg9[%c0_1131, %c0_1132, %c0_1133], %783 {strides = array<i32>} : memref<1x256x15xf32, #tpu.memory_space<vmem>>, vector<1x256x15xf32>,
    return
  }
  func.func @transform_0(%arg0: i32) -> (i32, i32, i32, i32) {
    %c0_i32 = arith.constant 0 : i32
    %c0_i32_0 = arith.constant 0 : i32
    %c0_i32_1 = arith.constant 0 : i32
    %c0_i32_2 = arith.constant 0 : i32
    return %arg0, %c0_i32, %c0_i32_0, %c0_i32_1 : i32, i32, i32, i32
  }
  func.func @transform_1(%arg0: i32) -> (i32, i32, i32) {
    %c0_i32 = arith.constant 0 : i32
    %c0_i32_0 = arith.constant 0 : i32
    %c0_i32_1 = arith.constant 0 : i32
    %c0_i32_2 = arith.constant 0 : i32
    return %c0_i32, %c0_i32_0, %c0_i32_1 : i32, i32, i32
  }
  func.func @transform_2(%arg0: i32) -> (i32, i32) {
    %c0_i32 = arith.constant 0 : i32
    %c0_i32_0 = arith.constant 0 : i32
    %c0_i32_1 = arith.constant 0 : i32
    return %c0_i32, %c0_i32_0 : i32, i32
  }
  func.func @transform_3(%arg0: i32) -> (i32, i32, i32) {
    %c0_i32 = arith.constant 0 : i32
    %c0_i32_0 = arith.constant 0 : i32
    %c0_i32_1 = arith.constant 0 : i32
    %c0_i32_2 = arith.constant 0 : i32
    return %c0_i32, %c0_i32_0, %c0_i32_1 : i32, i32, i32
  }
  func.func @transform_4(%arg0: i32) -> (i32, i32) {
    %c0_i32 = arith.constant 0 : i32
    %c0_i32_0 = arith.constant 0 : i32
    %c0_i32_1 = arith.constant 0 : i32
    return %c0_i32, %c0_i32_0 : i32, i32
  }
  func.func @transform_5(%arg0: i32) -> (i32, i32) {
    %c0_i32 = arith.constant 0 : i32
    %c0_i32_0 = arith.constant 0 : i32
    %c0_i32_1 = arith.constant 0 : i32
    return %c0_i32, %c0_i32_0 : i32, i32
  }
  func.func @transform_6(%arg0: i32) -> (i32, i32) {
    %c0_i32 = arith.constant 0 : i32
    %c0_i32_0 = arith.constant 0 : i32
    %c0_i32_1 = arith.constant 0 : i32
    return %c0_i32, %c0_i32_0 : i32, i32
  }
  func.func @transform_7(%arg0: i32) -> (i32, i32, i32) {
    %c0_i32 = arith.constant 0 : i32
    %c0_i32_0 = arith.constant 0 : i32
    %c0_i32_1 = arith.constant 0 : i32
    return %arg0, %c0_i32, %c0_i32_0 : i32, i32, i32
  }
  func.func @transform_8(%arg0: i32) -> (i32, i32, i32) {
    %c0_i32 = arith.constant 0 : i32
    %c0_i32_0 = arith.constant 0 : i32
    %c0_i32_1 = arith.constant 0 : i32
    return %arg0, %c0_i32, %c0_i32_0 : i32, i32, i32
  }
}

module attributes {stable_mosaic.version = 11 : i64} {
  func.func @_head_fused_kernel(%arg0: i32, %arg1: memref<16x256xbf16, #tpu.memory_space<vmem>>, %arg2: memref<256x32xbf16, #tpu.memory_space<vmem>>, %arg3: memref<1x32xf32, #tpu.memory_space<vmem>>, %arg4: memref<32x32xbf16, #tpu.memory_space<vmem>>, %arg5: memref<1x32xf32, #tpu.memory_space<vmem>>, %arg6: memref<32x15xbf16, #tpu.memory_space<vmem>>, %arg7: memref<1x15xf32, #tpu.memory_space<vmem>>, %arg8: memref<16x15xf32, #tpu.memory_space<vmem>>) attributes {dimension_semantics = [#tpu.dimension_semantics<arbitrary>], iteration_bounds = array<i64: 1>, scalar_prefetch = 0 : i64, scratch_operands = 0 : i64, tpu.core_type = #tpu.core_type<tc>, window_params = [{pipeline_mode = #tpu.pipeline_mode<synchronous>, transform_indices = @transform_0, window_bounds = array<i64: 16, 256>}, {pipeline_mode = #tpu.pipeline_mode<synchronous>, transform_indices = @transform_1, window_bounds = array<i64: 256, 32>}, {pipeline_mode = #tpu.pipeline_mode<synchronous>, transform_indices = @transform_2, window_bounds = array<i64: 1, 32>}, {pipeline_mode = #tpu.pipeline_mode<synchronous>, transform_indices = @transform_3, window_bounds = array<i64: 32, 32>}, {pipeline_mode = #tpu.pipeline_mode<synchronous>, transform_indices = @transform_4, window_bounds = array<i64: 1, 32>}, {pipeline_mode = #tpu.pipeline_mode<synchronous>, transform_indices = @transform_5, window_bounds = array<i64: 32, 15>}, {pipeline_mode = #tpu.pipeline_mode<synchronous>, transform_indices = @transform_6, window_bounds = array<i64: 1, 15>}, {pipeline_mode = #tpu.pipeline_mode<synchronous>, transform_indices = @transform_7, window_bounds = array<i64: 16, 15>}]} {
    %c0 = arith.constant 0 : index
    %c0_0 = arith.constant 0 : index
    %0 = vector.load %arg1[%c0, %c0_0] : memref<16x256xbf16, #tpu.memory_space<vmem>>, vector<16x256xbf16>
    %c0_1 = arith.constant 0 : index
    %c0_2 = arith.constant 0 : index
    %1 = vector.load %arg2[%c0_1, %c0_2] : memref<256x32xbf16, #tpu.memory_space<vmem>>, vector<256x32xbf16>
    %cst = arith.constant dense<0.000000e+00> : vector<16x32xf32>
    %2 = tpu.matmul %0, %1, %cst {dimension_numbers = #tpu.dot_dimension_numbers<[1], [0], [0], [1], [0, 0, 1, 1], [], []>} : vector<16x256xbf16>, vector<256x32xbf16>, vector<16x32xf32> -> vector<16x32xf32>
    %c0_3 = arith.constant 0 : index
    %c0_4 = arith.constant 0 : index
    %3 = vector.load %arg3[%c0_3, %c0_4] : memref<1x32xf32, #tpu.memory_space<vmem>>, vector<1x32xf32>
    %4 = vector.broadcast %3 : vector<1x32xf32> to vector<16x32xf32>
    %5 = arith.addf %2, %4 : vector<16x32xf32>
    %cst_5 = arith.constant 0.000000e+00 : f32
    %6 = vector.broadcast %cst_5 : f32 to vector<16x32xf32>
    %7 = arith.maximumf %5, %6 : vector<16x32xf32>
    %8 = arith.truncf %7 : vector<16x32xf32> to vector<16x32xbf16>
    %c0_6 = arith.constant 0 : index
    %c0_7 = arith.constant 0 : index
    %9 = vector.load %arg4[%c0_6, %c0_7] : memref<32x32xbf16, #tpu.memory_space<vmem>>, vector<32x32xbf16>
    %cst_8 = arith.constant dense<0.000000e+00> : vector<16x32xf32>
    %10 = tpu.matmul %8, %9, %cst_8 {dimension_numbers = #tpu.dot_dimension_numbers<[1], [0], [0], [1], [0, 0, 1, 1], [], []>} : vector<16x32xbf16>, vector<32x32xbf16>, vector<16x32xf32> -> vector<16x32xf32>
    %c0_9 = arith.constant 0 : index
    %c0_10 = arith.constant 0 : index
    %11 = vector.load %arg5[%c0_9, %c0_10] : memref<1x32xf32, #tpu.memory_space<vmem>>, vector<1x32xf32>
    %12 = vector.broadcast %11 : vector<1x32xf32> to vector<16x32xf32>
    %13 = arith.addf %10, %12 : vector<16x32xf32>
    %cst_11 = arith.constant 0.000000e+00 : f32
    %14 = vector.broadcast %cst_11 : f32 to vector<16x32xf32>
    %15 = arith.maximumf %13, %14 : vector<16x32xf32>
    %16 = arith.truncf %15 : vector<16x32xf32> to vector<16x32xbf16>
    %c0_12 = arith.constant 0 : index
    %c0_13 = arith.constant 0 : index
    %17 = vector.load %arg6[%c0_12, %c0_13] : memref<32x15xbf16, #tpu.memory_space<vmem>>, vector<32x15xbf16>
    %cst_14 = arith.constant dense<0.000000e+00> : vector<16x15xf32>
    %18 = tpu.matmul %16, %17, %cst_14 {dimension_numbers = #tpu.dot_dimension_numbers<[1], [0], [0], [1], [0, 0, 1, 1], [], []>} : vector<16x32xbf16>, vector<32x15xbf16>, vector<16x15xf32> -> vector<16x15xf32>
    %c0_15 = arith.constant 0 : index
    %c0_16 = arith.constant 0 : index
    %19 = vector.load %arg7[%c0_15, %c0_16] : memref<1x15xf32, #tpu.memory_space<vmem>>, vector<1x15xf32>
    %20 = vector.broadcast %19 : vector<1x15xf32> to vector<16x15xf32>
    %21 = arith.addf %18, %20 : vector<16x15xf32>
    %22 = vector.extract_strided_slice %21 {offsets = [0, 0], sizes = [16, 3], strides = [1, 1]} : vector<16x15xf32> to vector<16x3xf32>
    %cst_17 = arith.constant dense<0xFF800000> : vector<16xf32>
    %23 = vector.multi_reduction <maximumf>, %22, %cst_17 [1] : vector<16x3xf32> to vector<16xf32>
    %24 = vector.shape_cast %23 : vector<16xf32> to vector<16x1xf32>
    %25 = vector.broadcast %24 : vector<16x1xf32> to vector<16x3xf32>
    %26 = arith.subf %22, %25 : vector<16x3xf32>
    %27 = math.exp %26 : vector<16x3xf32>
    %cst_18 = arith.constant dense<0.000000e+00> : vector<16xf32>
    %28 = vector.multi_reduction <add>, %27, %cst_18 [1] : vector<16x3xf32> to vector<16xf32>
    %29 = vector.shape_cast %28 : vector<16xf32> to vector<16x1xf32>
    %30 = vector.broadcast %29 : vector<16x1xf32> to vector<16x3xf32>
    %31 = arith.divf %27, %30 : vector<16x3xf32>
    %32 = vector.extract_strided_slice %21 {offsets = [0, 3], sizes = [16, 12], strides = [1, 1]} : vector<16x15xf32> to vector<16x12xf32>
    %33 = tpu.concatenate %31, %32 in 1 : vector<16x3xf32>, vector<16x12xf32> -> vector<16x15xf32>
    %c0_19 = arith.constant 0 : index
    %c0_20 = arith.constant 0 : index
    %34 = vector.load %arg8[%c0_19, %c0_20] : memref<16x15xf32, #tpu.memory_space<vmem>>, vector<16x15xf32>
    tpu.vector_store %arg8[%c0_19, %c0_20], %33 {strides = array<i32>} : memref<16x15xf32, #tpu.memory_space<vmem>>, vector<16x15xf32>,
    return
  }
  func.func @transform_0(%arg0: i32) -> (i32, i32) {
    %c0_i32 = arith.constant 0 : i32
    %c0_i32_0 = arith.constant 0 : i32
    %c0_i32_1 = arith.constant 0 : i32
    return %c0_i32, %c0_i32_0 : i32, i32
  }
  func.func @transform_1(%arg0: i32) -> (i32, i32) {
    %c0_i32 = arith.constant 0 : i32
    %c0_i32_0 = arith.constant 0 : i32
    %c0_i32_1 = arith.constant 0 : i32
    return %c0_i32, %c0_i32_0 : i32, i32
  }
  func.func @transform_2(%arg0: i32) -> (i32, i32) {
    %c0_i32 = arith.constant 0 : i32
    %c0_i32_0 = arith.constant 0 : i32
    %c0_i32_1 = arith.constant 0 : i32
    return %c0_i32, %c0_i32_0 : i32, i32
  }
  func.func @transform_3(%arg0: i32) -> (i32, i32) {
    %c0_i32 = arith.constant 0 : i32
    %c0_i32_0 = arith.constant 0 : i32
    %c0_i32_1 = arith.constant 0 : i32
    return %c0_i32, %c0_i32_0 : i32, i32
  }
  func.func @transform_4(%arg0: i32) -> (i32, i32) {
    %c0_i32 = arith.constant 0 : i32
    %c0_i32_0 = arith.constant 0 : i32
    %c0_i32_1 = arith.constant 0 : i32
    return %c0_i32, %c0_i32_0 : i32, i32
  }
  func.func @transform_5(%arg0: i32) -> (i32, i32) {
    %c0_i32 = arith.constant 0 : i32
    %c0_i32_0 = arith.constant 0 : i32
    %c0_i32_1 = arith.constant 0 : i32
    return %c0_i32, %c0_i32_0 : i32, i32
  }
  func.func @transform_6(%arg0: i32) -> (i32, i32) {
    %c0_i32 = arith.constant 0 : i32
    %c0_i32_0 = arith.constant 0 : i32
    %c0_i32_1 = arith.constant 0 : i32
    return %c0_i32, %c0_i32_0 : i32, i32
  }
  func.func @transform_7(%arg0: i32) -> (i32, i32) {
    %c0_i32 = arith.constant 0 : i32
    %c0_i32_0 = arith.constant 0 : i32
    %c0_i32_1 = arith.constant 0 : i32
    return %c0_i32, %c0_i32_0 : i32, i32
  }
}

</mosaic_0001>

<llo_original>
// kernel: custom-call
$region0: #{custom-call}
  #allocation0 [shape = 'u32[8,128]{1,0}', space=vmem, size = 0x1000, scoped, tag = 'scratch']
  #allocation1 [shape = 'u32[8,128]{1,0}', space=vmem, size = 0x1000, scoped, tag = 'scratch']
  #allocation2 [shape = 'u32[8,128]{1,0}', space=vmem, size = 0x1000, scoped, tag = 'scratch']
  #allocation3 [shape = 'u32[8,128]{1,0}', space=vmem, size = 0x1000, scoped, tag = 'scratch']
  #allocation4 [shape = 'u32[8,128]{1,0}', space=vmem, size = 0x1000, scoped, tag = 'scratch']
  #allocation5 [shape = 'u32[8,128]{1,0}', space=vmem, size = 0x1000, scoped, tag = 'scratch']
  #allocation6 [shape = 'u32[8,128]{1,0}', space=vmem, size = 0x1000, scoped, tag = 'scratch']
  %s0 = inlined_call_operand.vmem [shape: f32[2,768], index: 0, kind: input, shape index: {}]
  %s1 = inlined_call_operand.hbm [shape: f32[2,8], index: 1, kind: output, shape index: {0}]
  %s2 = inlined_call_operand.vmem [shape: s32[2,8], index: 2, kind: output, shape index: {1}]
  %3 = xla_tuple %s1, %s2
  %4 = xla_tuple 2147483648, 2147483647
  $region1: #{custom-call} parent=0
    #allocation7 [shape = 'u8[4096]{0}', space=vmem, size = 0x1000, scoped, tag = 'operand span for operand 1']
    #allocation8 [shape = 'u8[1024]{0}', space=vmem, size = 0x400, scoped, tag = 'packed  for operand 1']
    #allocation9 [shape = 's32[1]{0}', space=sflag, size = 0x4, scoped, tag = 'scoped memory for custom-call']
    #allocation10 [shape = 'u8[4096]{0}', space=vmem, size = 0x1000, scoped, tag = 'operand span for operand 2']
    #allocation11 [shape = 'u8[1024]{0}', space=vmem, size = 0x400, scoped, tag = 'packed  for operand 2']
    #allocation12 [shape = 'f32[8,2]{1,0:T(8,128)}', space=vmem, size = 0x1000, scoped, tag = 'scoped memory for custom-call']
    #allocation13 [shape = 'f32[8,2]{1,0:T(8,128)}', space=vmem, size = 0x1000, scoped, tag = 'scoped memory for custom-call']
    #allocation14 [shape = 's32[8,2]{1,0:T(8,128)}', space=vmem, size = 0x1000, scoped, tag = 'scoped memory for custom-call']
    #allocation15 [shape = 's32[8,2]{1,0:T(8,128)}', space=vmem, size = 0x1000, scoped, tag = 'scoped memory for custom-call']
    %5 = vsyncpa [#allocation9], 0
    %6 = xla_tuple [#allocation7], [#allocation10]
    %7 = vst [vmem:[#allocation12] sm:$0xff] 2147483648
    %8 = vst [vmem:[#allocation14] sm:$0xff] 2147483647
    %9 = xla_tuple [#allocation12], [#allocation14]
    %10 = xla_tuple [#allocation13], [#allocation15]
    $region2: #{custom-call} parent=1
      #allocation16 [shape = 'u8[8192]{0}', space=vmem, size = 0x2000, scoped, tag = 'operand span for operand 0']
      #allocation17 [shape = 's32[2048]{0}', space=vmem, size = 0x2000, scoped, tag = 'scoped memory for custom-call']
      // Predicated region
      $region3: #{custom-call} parent=2 // pred_check
        _
      $region4: #{custom-call} parent=2 // pred_check_branch
        %12 = sbr.rel (0) target = $region6
      $region5: #{custom-call} parent=2 // pred_region
        // Predicated region
        $region7: #{custom-call} parent=5 // pred_check
          _
        $region8: #{custom-call} parent=5 // pred_check_branch
          %14 = sbr.rel (0) target = $region10
        $region9: #{custom-call} parent=5 // pred_region
          // Predicated region
          $region11: #{custom-call} parent=9 // pred_check
            _
          $region12: #{custom-call} parent=9 // pred_check_branch
            %16 = sbr.rel (0) target = $region14
          $region13: #{custom-call} parent=9 // pred_region
            %s17 = scalar_lea.vmem %s0, 8
            %s18 = scalar_lea.vmem [#allocation16], 8
            loop: start=0, step=1, limit=1
            $region15: #{custom-call} parent=13 // loop_pre_header
              _
            $region16: #{custom-call} parent=13 // loop_header
              %s20 = sphi 0, %s24
              %p21 = scmp.ge.s32.totalorder %s20, 1
              %s25 = sphi %s0, %s0
              %s26 = sphi [#allocation16], [#allocation16]
            $region17: #{custom-call} parent=13 // loop_header_branch
              %23 = sbr.rel (%p21) target = $region21
            $region18: #{custom-call} parent=13 // loop_body
              %v27 = vld [vmem:[%s25] sm:$0xff]
              %28 = vst [vmem:[%s26] sm:$0xff] %v27
            $region19: #{custom-call} parent=13 // loop_footer
              %s24 = sadd.s32 1, %s20
            $region20: #{custom-call} parent=13 // loop_footer_branch
              %19 = sbr.rel target = $region16
            $region21: #{custom-call} parent=13 // loop_exit
              _
            loop: start=0, step=1, limit=1
            $region22: #{custom-call} parent=13 // loop_pre_header
              _
            $region23: #{custom-call} parent=13 // loop_header
              %s31 = sphi 0, %s35
              %p32 = scmp.ge.s32.totalorder %s31, 1
              %s36 = sphi %s17, %s17
              %s37 = sphi %s18, %s18
            $region24: #{custom-call} parent=13 // loop_header_branch
              %34 = sbr.rel (%p32) target = $region28
            $region25: #{custom-call} parent=13 // loop_body
              %v38 = vld [vmem:[%s36] sm:$0xf]
              %39 = vst [vmem:[%s37] sm:$0xf] %v38
            $region26: #{custom-call} parent=13 // loop_footer
              %s35 = sadd.s32 1, %s31
            $region27: #{custom-call} parent=13 // loop_footer_branch
              %30 = sbr.rel target = $region23
            $region28: #{custom-call} parent=13 // loop_exit
              _
          $region14: #{custom-call} parent=9 // pred_fallthru
            _
        $region10: #{custom-call} parent=5 // pred_fallthru
          _
        %40 = vnop
      $region6: #{custom-call} parent=2 // pred_fallthru
        _
      // Predicated region
      $region29: #{custom-call} parent=2 // pred_check
        _
      $region30: #{custom-call} parent=2 // pred_check_branch
        %42 = sbr.rel (0) target = $region32
      $region31: #{custom-call} parent=2 // pred_region
        _
      $region32: #{custom-call} parent=2 // pred_fallthru
        _
      %v43 = vlaneseq
      %v44 = vand.u32 %v43, 127
      %v45 = vlaneseq
      %v46 = vshrl.u32 %v45, 7
      %v47 = vshrl.u32 %v46, 1
      %v48 = vand.u32 %v46, 1
      %v49 = vmul.u32 %v47, 128
      %v50 = vadd.s32 %v44, %v49
      %v52 = vld [vmem:[#allocation16] sm:$0xff]
      %vm53 = vcmp.lt.s32.totalorder %v52, 0
      %v54 = vsub.s32 2147483647, %v52
      %v55 = vsel %vm53, %v54, %v52
      %vm57 = vcmp.lt.s32.totalorder %v50, 768
      %v58 = vsel %vm57, %v55, 2147483648
      %59 = vst [vmem:[#allocation16] sm:$0xff] %v58
      %s60 = scalar_lea.vmem [#allocation16], 8
      %v61 = vld [vmem:[%s60] sm:$0xff]
      %vm62 = vcmp.lt.s32.totalorder %v61, 0
      %v63 = vsub.s32 2147483647, %v61
      %v64 = vsel %vm62, %v63, %v61
      %v65 = vadd.s32 %v50, 512
      %vm66 = vcmp.lt.s32.totalorder %v65, 768
      %v67 = vsel %vm66, %v64, 2147483648
      %68 = vst [vmem:[%s60] sm:$0xff] %v67
      %v69 = vlaneseq
      %v70 = vand.u32 %v69, 127
      %v71 = vlaneseq
      %v72 = vshrl.u32 %v71, 7
      %v73 = vshrl.u32 %v72, 1
      %v74 = vand.u32 %v72, 1
      %v75 = vmul.u32 %v73, 128
      %v76 = vadd.s32 %v70, %v75
      %79 = vst [vmem:[#allocation17] sm:$0xff] %v76
      %v80 = vadd.s32 %v76, 512
      %s81 = scalar_lea.vmem [#allocation17], 8
      %82 = vst [vmem:[%s81] sm:$0xff] %v80
      %83 = xla_tuple [#allocation16], [#allocation17]
      %84 = vst [vmem:[#allocation13] sm:$0xff] 2147483648
      %85 = vst [vmem:[#allocation15] sm:$0xff] 2147483647
      %86 = xla_tuple [#allocation13], [#allocation15]
      loop: start=0, step=1, limit=8
      $region33: #{custom-call} parent=2 // loop_pre_header
        _
      $region34: #{custom-call} parent=2 // loop_header
        %s88 = sphi 0, %s92
        %p89 = scmp.ge.s32.totalorder %s88, 8
      $region35: #{custom-call} parent=2 // loop_header_branch
        %91 = sbr.rel (%p89) target = $region39
      $region36: #{custom-call} parent=2 // loop_body
        %v93 = vld [vmem:[#allocation16] sm:$0xff]
        %v94 = vld [vmem:[#allocation17] sm:$0xff]
        %95 = xla_tuple %v93, %v94
        %s96 = scalar_lea.vmem [#allocation16], 8
        %v97 = vld [vmem:[%s96] sm:$0xff]
        %s98 = scalar_lea.vmem [#allocation17], 8
        %v99 = vld [vmem:[%s98] sm:$0xff]
        %100 = xla_tuple %v97, %v99
        %vm101 = vcmp.gt.s32.totalorder %v97, %v93
        %vm102 = vcmp.eq.s32.totalorder %v97, %v93
        %vm103 = vcmp.lt.s32.totalorder %v99, %v94
        %vm104 = vmand %vm102, %vm103
        %vm105 = vmor %vm101, %vm104
        %v106 = vsel %vm105, %v97, %v93
        %v107 = vsel %vm105, %v99, %v94
        %108 = xla_tuple %v106, %v107
        %v109 = vrot.slane %v106, 2
        %v110 = vrot.slane %v107, 2
        %111 = xla_tuple %v109, %v110
        %vm112 = vcmp.gt.s32.totalorder %v109, %v106
        %vm113 = vcmp.eq.s32.totalorder %v109, %v106
        %vm114 = vcmp.lt.s32.totalorder %v110, %v107
        %vm115 = vmand %vm113, %vm114
        %vm116 = vmor %vm112, %vm115
        %v117 = vsel %vm116, %v109, %v106
        %v118 = vsel %vm116, %v110, %v107
        %119 = xla_tuple %v117, %v118
        %v120 = vrot.slane %v117, 2
        %v121 = vrot.slane %v118, 2
        %122 = xla_tuple %v120, %v121
        %vm123 = vcmp.gt.s32.totalorder %v120, %v117
        %vm124 = vcmp.eq.s32.totalorder %v120, %v117
        %vm125 = vcmp.lt.s32.totalorder %v121, %v118
        %vm126 = vmand %vm124, %vm125
        %vm127 = vmor %vm123, %vm126
        %v128 = vsel %vm127, %v120, %v117
        %v129 = vsel %vm127, %v121, %v118
        %130 = xla_tuple %v128, %v129
        %v131 = vrot.slane %v128, 2
        %v132 = vrot.slane %v129, 2
        %133 = xla_tuple %v131, %v132
        %vm134 = vcmp.gt.s32.totalorder %v131, %v128
        %vm135 = vcmp.eq.s32.totalorder %v131, %v128
        %vm136 = vcmp.lt.s32.totalorder %v132, %v129
        %vm137 = vmand %vm135, %vm136
        %vm138 = vmor %vm134, %vm137
        %v139 = vsel %vm138, %v131, %v128
        %v140 = vsel %vm138, %v132, %v129
        %141 = xla_tuple %v139, %v140
        %142 = vxpose.xlu0.b32.start [1/16] %v139, 128
        %143 = vxpose.xlu0.b32.cont [2/16] %v139, 128
        %144 = vxpose.xlu0.b32.cont [3/16] %v139, 128
        %145 = vxpose.xlu0.b32.cont [4/16] %v139, 128
        %146 = vxpose.xlu0.b32.cont [5/16] %v139, 128
        %147 = vxpose.xlu0.b32.cont [6/16] %v139, 128
        %148 = vxpose.xlu0.b32.cont [7/16] %v139, 128
        %149 = vxpose.xlu0.b32.cont [8/16] %v139, 128
        %150 = vxpose.xlu0.b32.cont [9/16] %v139, 128
        %151 = vxpose.xlu0.b32.cont [10/16] %v139, 128
        %152 = vxpose.xlu0.b32.cont [11/16] %v139, 128
        %153 = vxpose.xlu0.b32.cont [12/16] %v139, 128
        %154 = vxpose.xlu0.b32.cont [13/16] %v139, 128
        %155 = vxpose.xlu0.b32.cont [14/16] %v139, 128
        %156 = vxpose.xlu0.b32.cont [15/16] %v139, 128
        %157 = vxpose.xlu0.b32.end [16/16] %v139, 128
        %v158 = vpop.trf.xlu0
        %v159 = vpop.trf.xlu0
        %v160 = vpop.trf.xlu0
        %v161 = vpop.trf.xlu0
        %v162 = vpop.trf.xlu0
        %v163 = vpop.trf.xlu0
        %v164 = vpop.trf.xlu0
        %v165 = vpop.trf.xlu0
        %v166 = vpop.trf.xlu0
        %v167 = vpop.trf.xlu0
        %v168 = vpop.trf.xlu0
        %v169 = vpop.trf.xlu0
        %v170 = vpop.trf.xlu0
        %v171 = vpop.trf.xlu0
        %v172 = vpop.trf.xlu0
        %v173 = vpop.trf.xlu0
        %174 = vxpose.xlu0.b32.start [1/16] %v140, 128
        %175 = vxpose.xlu0.b32.cont [2/16] %v140, 128
        %176 = vxpose.xlu0.b32.cont [3/16] %v140, 128
        %177 = vxpose.xlu0.b32.cont [4/16] %v140, 128
        %178 = vxpose.xlu0.b32.cont [5/16] %v140, 128
        %179 = vxpose.xlu0.b32.cont [6/16] %v140, 128
        %180 = vxpose.xlu0.b32.cont [7/16] %v140, 128
        %181 = vxpose.xlu0.b32.cont [8/16] %v140, 128
        %182 = vxpose.xlu0.b32.cont [9/16] %v140, 128
        %183 = vxpose.xlu0.b32.cont [10/16] %v140, 128
        %184 = vxpose.xlu0.b32.cont [11/16] %v140, 128
        %185 = vxpose.xlu0.b32.cont [12/16] %v140, 128
        %186 = vxpose.xlu0.b32.cont [13/16] %v140, 128
        %187 = vxpose.xlu0.b32.cont [14/16] %v140, 128
        %188 = vxpose.xlu0.b32.cont [15/16] %v140, 128
        %189 = vxpose.xlu0.b32.end [16/16] %v140, 128
        %v190 = vpop.trf.xlu0
        %v191 = vpop.trf.xlu0
        %v192 = vpop.trf.xlu0
        %v193 = vpop.trf.xlu0
        %v194 = vpop.trf.xlu0
        %v195 = vpop.trf.xlu0
        %v196 = vpop.trf.xlu0
        %v197 = vpop.trf.xlu0
        %v198 = vpop.trf.xlu0
        %v199 = vpop.trf.xlu0
        %v200 = vpop.trf.xlu0
        %v201 = vpop.trf.xlu0
        %v202 = vpop.trf.xlu0
        %v203 = vpop.trf.xlu0
        %v204 = vpop.trf.xlu0
        %v205 = vpop.trf.xlu0
        %206 = xla_tuple %v158, %v190
        %207 = xla_tuple %v159, %v191
        %vm208 = vcmp.gt.s32.totalorder %v159, %v158
        %vm209 = vcmp.eq.s32.totalorder %v159, %v158
        %vm210 = vcmp.lt.s32.totalorder %v191, %v190
        %vm211 = vmand %vm209, %vm210
        %vm212 = vmor %vm208, %vm211
        %v213 = vsel %vm212, %v159, %v158
        %v214 = vsel %vm212, %v191, %v190
        %215 = xla_tuple %v213, %v214
        %216 = xla_tuple %v160, %v192
        %vm217 = vcmp.gt.s32.totalorder %v160, %v213
        %vm218 = vcmp.eq.s32.totalorder %v160, %v213
        %vm219 = vcmp.lt.s32.totalorder %v192, %v214
        %vm220 = vmand %vm218, %vm219
        %vm221 = vmor %vm217, %vm220
        %v222 = vsel %vm221, %v160, %v213
        %v223 = vsel %vm221, %v192, %v214
        %224 = xla_tuple %v222, %v223
        %225 = xla_tuple %v161, %v193
        %vm226 = vcmp.gt.s32.totalorder %v161, %v222
        %vm227 = vcmp.eq.s32.totalorder %v161, %v222
        %vm228 = vcmp.lt.s32.totalorder %v193, %v223
        %vm229 = vmand %vm227, %vm228
        %vm230 = vmor %vm226, %vm229
        %v231 = vsel %vm230, %v161, %v222
        %v232 = vsel %vm230, %v193, %v223
        %233 = xla_tuple %v231, %v232
        %234 = xla_tuple %v162, %v194
        %vm235 = vcmp.gt.s32.totalorder %v162, %v231
        %vm236 = vcmp.eq.s32.totalorder %v162, %v231
        %vm237 = vcmp.lt.s32.totalorder %v194, %v232
        %vm238 = vmand %vm236, %vm237
        %vm239 = vmor %vm235, %vm238
        %v240 = vsel %vm239, %v162, %v231
        %v241 = vsel %vm239, %v194, %v232
        %242 = xla_tuple %v240, %v241
        %243 = xla_tuple %v163, %v195
        %vm244 = vcmp.gt.s32.totalorder %v163, %v240
        %vm245 = vcmp.eq.s32.totalorder %v163, %v240
        %vm246 = vcmp.lt.s32.totalorder %v195, %v241
        %vm247 = vmand %vm245, %vm246
        %vm248 = vmor %vm244, %vm247
        %v249 = vsel %vm248, %v163, %v240
        %v250 = vsel %vm248, %v195, %v241
        %251 = xla_tuple %v249, %v250
        %252 = xla_tuple %v164, %v196
        %vm253 = vcmp.gt.s32.totalorder %v164, %v249
        %vm254 = vcmp.eq.s32.totalorder %v164, %v249
        %vm255 = vcmp.lt.s32.totalorder %v196, %v250
        %vm256 = vmand %vm254, %vm255
        %vm257 = vmor %vm253, %vm256
        %v258 = vsel %vm257, %v164, %v249
        %v259 = vsel %vm257, %v196, %v250
        %260 = xla_tuple %v258, %v259
        %261 = xla_tuple %v165, %v197
        %vm262 = vcmp.gt.s32.totalorder %v165, %v258
        %vm263 = vcmp.eq.s32.totalorder %v165, %v258
        %vm264 = vcmp.lt.s32.totalorder %v197, %v259
        %vm265 = vmand %vm263, %vm264
        %vm266 = vmor %vm262, %vm265
        %v267 = vsel %vm266, %v165, %v258
        %v268 = vsel %vm266, %v197, %v259
        %269 = xla_tuple %v267, %v268
        %270 = xla_tuple %v166, %v198
        %vm271 = vcmp.gt.s32.totalorder %v166, %v267
        %vm272 = vcmp.eq.s32.totalorder %v166, %v267
        %vm273 = vcmp.lt.s32.totalorder %v198, %v268
        %vm274 = vmand %vm272, %vm273
        %vm275 = vmor %vm271, %vm274
        %v276 = vsel %vm275, %v166, %v267
        %v277 = vsel %vm275, %v198, %v268
        %278 = xla_tuple %v276, %v277
        %279 = xla_tuple %v167, %v199
        %vm280 = vcmp.gt.s32.totalorder %v167, %v276
        %vm281 = vcmp.eq.s32.totalorder %v167, %v276
        %vm282 = vcmp.lt.s32.totalorder %v199, %v277
        %vm283 = vmand %vm281, %vm282
        %vm284 = vmor %vm280, %vm283
        %v285 = vsel %vm284, %v167, %v276
        %v286 = vsel %vm284, %v199, %v277
        %287 = xla_tuple %v285, %v286
        %288 = xla_tuple %v168, %v200
        %vm289 = vcmp.gt.s32.totalorder %v168, %v285
        %vm290 = vcmp.eq.s32.totalorder %v168, %v285
        %vm291 = vcmp.lt.s32.totalorder %v200, %v286
        %vm292 = vmand %vm290, %vm291
        %vm293 = vmor %vm289, %vm292
        %v294 = vsel %vm293, %v168, %v285
        %v295 = vsel %vm293, %v200, %v286
        %296 = xla_tuple %v294, %v295
        %297 = xla_tuple %v169, %v201
        %vm298 = vcmp.gt.s32.totalorder %v169, %v294
        %vm299 = vcmp.eq.s32.totalorder %v169, %v294
        %vm300 = vcmp.lt.s32.totalorder %v201, %v295
        %vm301 = vmand %vm299, %vm300
        %vm302 = vmor %vm298, %vm301
        %v303 = vsel %vm302, %v169, %v294
        %v304 = vsel %vm302, %v201, %v295
        %305 = xla_tuple %v303, %v304
        %306 = xla_tuple %v170, %v202
        %vm307 = vcmp.gt.s32.totalorder %v170, %v303
        %vm308 = vcmp.eq.s32.totalorder %v170, %v303
        %vm309 = vcmp.lt.s32.totalorder %v202, %v304
        %vm310 = vmand %vm308, %vm309
        %vm311 = vmor %vm307, %vm310
        %v312 = vsel %vm311, %v170, %v303
        %v313 = vsel %vm311, %v202, %v304
        %314 = xla_tuple %v312, %v313
        %315 = xla_tuple %v171, %v203
        %vm316 = vcmp.gt.s32.totalorder %v171, %v312
        %vm317 = vcmp.eq.s32.totalorder %v171, %v312
        %vm318 = vcmp.lt.s32.totalorder %v203, %v313
        %vm319 = vmand %vm317, %vm318
        %vm320 = vmor %vm316, %vm319
        %v321 = vsel %vm320, %v171, %v312
        %v322 = vsel %vm320, %v203, %v313
        %323 = xla_tuple %v321, %v322
        %324 = xla_tuple %v172, %v204
        %vm325 = vcmp.gt.s32.totalorder %v172, %v321
        %vm326 = vcmp.eq.s32.totalorder %v172, %v321
        %vm327 = vcmp.lt.s32.totalorder %v204, %v322
        %vm328 = vmand %vm326, %vm327
        %vm329 = vmor %vm325, %vm328
        %v330 = vsel %vm329, %v172, %v321
        %v331 = vsel %vm329, %v204, %v322
        %332 = xla_tuple %v330, %v331
        %333 = xla_tuple %v173, %v205
        %vm334 = vcmp.gt.s32.totalorder %v173, %v330
        %vm335 = vcmp.eq.s32.totalorder %v173, %v330
        %vm336 = vcmp.lt.s32.totalorder %v205, %v331
        %vm337 = vmand %vm335, %vm336
        %vm338 = vmor %vm334, %vm337
        %v339 = vsel %vm338, %v173, %v330
        %v340 = vsel %vm338, %v205, %v331
        %341 = xla_tuple %v339, %v340
        %v342 = vrot.slane %v339, 1
        %v343 = vrot.slane %v340, 1
        %344 = xla_tuple %v342, %v343
        %vm345 = vcmp.gt.s32.totalorder %v342, %v339
        %vm346 = vcmp.eq.s32.totalorder %v342, %v339
        %vm347 = vcmp.lt.s32.totalorder %v343, %v340
        %vm348 = vmand %vm346, %vm347
        %vm349 = vmor %vm345, %vm348
        %v350 = vsel %vm349, %v342, %v339
        %v351 = vsel %vm349, %v343, %v340
        %352 = xla_tuple %v350, %v351
        %v353 = vrot.slane %v350, 1
        %v354 = vrot.slane %v351, 1
        %355 = xla_tuple %v353, %v354
        %vm356 = vcmp.gt.s32.totalorder %v353, %v350
        %vm357 = vcmp.eq.s32.totalorder %v353, %v350
        %vm358 = vcmp.lt.s32.totalorder %v354, %v351
        %vm359 = vmand %vm357, %vm358
        %vm360 = vmor %vm356, %vm359
        %v361 = vsel %vm360, %v353, %v350
        %v362 = vsel %vm360, %v354, %v351
        %363 = xla_tuple %v361, %v362
        %v364 = vrot.slane %v361, 1
        %v365 = vrot.slane %v362, 1
        %366 = xla_tuple %v364, %v365
        %vm367 = vcmp.gt.s32.totalorder %v364, %v361
        %vm368 = vcmp.eq.s32.totalorder %v364, %v361
        %vm369 = vcmp.lt.s32.totalorder %v365, %v362
        %vm370 = vmand %vm368, %vm369
        %vm371 = vmor %vm367, %vm370
        %v372 = vsel %vm371, %v364, %v361
        %v373 = vsel %vm371, %v365, %v362
        %374 = xla_tuple %v372, %v373
        %v375 = vrot.slane %v372, 1
        %v376 = vrot.slane %v373, 1
        %377 = xla_tuple %v375, %v376
        %vm378 = vcmp.gt.s32.totalorder %v375, %v372
        %vm379 = vcmp.eq.s32.totalorder %v375, %v372
        %vm380 = vcmp.lt.s32.totalorder %v376, %v373
        %vm381 = vmand %vm379, %vm380
        %vm382 = vmor %vm378, %vm381
        %v383 = vsel %vm382, %v375, %v372
        %v384 = vsel %vm382, %v376, %v373
        %385 = xla_tuple %v383, %v384
        %v386 = vrot.slane %v383, 1
        %v387 = vrot.slane %v384, 1
        %388 = xla_tuple %v386, %v387
        %vm389 = vcmp.gt.s32.totalorder %v386, %v383
        %vm390 = vcmp.eq.s32.totalorder %v386, %v383
        %vm391 = vcmp.lt.s32.totalorder %v387, %v384
        %vm392 = vmand %vm390, %vm391
        %vm393 = vmor %vm389, %vm392
        %v394 = vsel %vm393, %v386, %v383
        %v395 = vsel %vm393, %v387, %v384
        %396 = xla_tuple %v394, %v395
        %v397 = vrot.slane %v394, 1
        %v398 = vrot.slane %v395, 1
        %399 = xla_tuple %v397, %v398
        %vm400 = vcmp.gt.s32.totalorder %v397, %v394
        %vm401 = vcmp.eq.s32.totalorder %v397, %v394
        %vm402 = vcmp.lt.s32.totalorder %v398, %v395
        %vm403 = vmand %vm401, %vm402
        %vm404 = vmor %vm400, %vm403
        %v405 = vsel %vm404, %v397, %v394
        %v406 = vsel %vm404, %v398, %v395
        %407 = xla_tuple %v405, %v406
        %v408 = vrot.slane %v405, 1
        %v409 = vrot.slane %v406, 1
        %410 = xla_tuple %v408, %v409
        %vm411 = vcmp.gt.s32.totalorder %v408, %v405
        %vm412 = vcmp.eq.s32.totalorder %v408, %v405
        %vm413 = vcmp.lt.s32.totalorder %v409, %v406
        %vm414 = vmand %vm412, %vm413
        %vm415 = vmor %vm411, %vm414
        %v416 = vsel %vm415, %v408, %v405
        %v417 = vsel %vm415, %v409, %v406
        %418 = xla_tuple %v416, %v417
        %s419 = scalar_lea.vmem [#allocation13], %s88
        %420 = vst [vmem:[%s419] sm:$0x1] %v416
        %s421 = scalar_lea.vmem [#allocation15], %s88
        %422 = vst [vmem:[%s421] sm:$0x1] %v417
        %423 = xla_tuple %420, %422
        %424 = vxpose.xlu0.b32.start [1/16] %v417, 128
        %425 = vxpose.xlu0.b32.cont [2/16] 0.0, 128
        %426 = vxpose.xlu0.b32.cont [3/16] 0.0, 128
        %427 = vxpose.xlu0.b32.cont [4/16] 0.0, 128
        %428 = vxpose.xlu0.b32.cont [5/16] 0.0, 128
        %429 = vxpose.xlu0.b32.cont [6/16] 0.0, 128
        %430 = vxpose.xlu0.b32.cont [7/16] 0.0, 128
        %431 = vxpose.xlu0.b32.cont [8/16] 0.0, 128
        %432 = vxpose.xlu0.b32.cont [9/16] 0.0, 128
        %433 = vxpose.xlu0.b32.cont [10/16] 0.0, 128
        %434 = vxpose.xlu0.b32.cont [11/16] 0.0, 128
        %435 = vxpose.xlu0.b32.cont [12/16] 0.0, 128
        %436 = vxpose.xlu0.b32.cont [13/16] 0.0, 128
        %437 = vxpose.xlu0.b32.cont [14/16] 0.0, 128
        %438 = vxpose.xlu0.b32.cont [15/16] 0.0, 128
        %439 = vxpose.xlu0.b32.end [16/16] 0.0, 128
        %v440 = vpop.trf.xlu0
        %v441 = vpop.trf.xlu0
        %v442 = vpop.trf.xlu0
        %v443 = vpop.trf.xlu0
        %v444 = vpop.trf.xlu0
        %v445 = vpop.trf.xlu0
        %v446 = vpop.trf.xlu0
        %v447 = vpop.trf.xlu0
        %v448 = vpop.trf.xlu0
        %v449 = vpop.trf.xlu0
        %v450 = vpop.trf.xlu0
        %v451 = vpop.trf.xlu0
        %v452 = vpop.trf.xlu0
        %v453 = vpop.trf.xlu0
        %v454 = vpop.trf.xlu0
        %v455 = vpop.trf.xlu0
        %s456 = vtos %v440
        %s457 = sshrl.u32 %s456, 9
        %p458 = scmp.lt.s32.totalorder %s456, 0
        %s459 = ssub.s32 0, %s456
        %s460 = scalar_select %p458, %s459, %s456
        %s461 = sand.u32 %s460, 511
        %s462 = ssub.s32 0, %s461
        %s463 = scalar_select %p458, %s462, %s461
        %s464 = sshrl.u32 %s463, 7
        %s465 = smul.u32 %s464, 256
        %s466 = sand.u32 %s463, 127
        %s467 = sadd.s32 %s465, %s466
        %v468 = vlaneseq
        %v469 = vstv %s467
        %vm471 = vcmp.eq.s32.totalorder %v468, %v469
        %s472 = smul.addr %s457, 8
        %s473 = scalar_lea.vmem [#allocation16], %s472
        %474 = vst.msk [vmem:[%s473] sm:$0xff] %vm471, 2147483648
        %s475 = smul.addr %s457, 8
        %s476 = scalar_lea.vmem [#allocation17], %s475
        %477 = vst.msk [vmem:[%s476] sm:$0xff] %vm471, 2147483647
        %478 = xla_tuple %474, %477
        %v479 = vrot.slane %v440, 1
        %s480 = vtos %v479
        %s481 = sshrl.u32 %s480, 9
        %p482 = scmp.lt.s32.totalorder %s480, 0
        %s483 = ssub.s32 0, %s480
        %s484 = scalar_select %p482, %s483, %s480
        %s485 = sand.u32 %s484, 511
        %s486 = ssub.s32 0, %s485
        %s487 = scalar_select %p482, %s486, %s485
        %s488 = sshrl.u32 %s487, 7
        %s489 = smul.u32 %s488, 256
        %s490 = sand.u32 %s487, 127
        %s491 = sadd.s32 %s489, %s490
        %v492 = vlaneseq
        %v493 = vstv %s491
        %v494 = vadd.s32 %v493, 128
        %vm495 = vcmp.eq.s32.totalorder %v492, %v494
        %s496 = smul.addr %s481, 8
        %s497 = scalar_lea.vmem [#allocation16], %s496
        %498 = vst.msk [vmem:[%s497] sm:$0xff] %vm495, 2147483648
        %s499 = smul.addr %s481, 8
        %s500 = scalar_lea.vmem [#allocation17], %s499
        %501 = vst.msk [vmem:[%s500] sm:$0xff] %vm495, 2147483647
        %502 = xla_tuple %498, %501
        %v503 = vrot.slane %v479, 1
      $region37: #{custom-call} parent=2 // loop_footer
        %s92 = sadd.s32 1, %s88
      $region38: #{custom-call} parent=2 // loop_footer_branch
        %87 = sbr.rel target = $region34
      $region39: #{custom-call} parent=2 // loop_exit
        _
      %s504 = scalar_lea.vmem [#allocation13], 7
      %v505 = vld [vmem:[%s504] ss:$-1 sm:$0xff]
      %s506 = scalar_lea.vmem [#allocation13], 7
      %v507 = vld [vmem:[%s506] ss:$-1 sm:$0xff]
      %508 = vst [vmem:[#allocation13] sm:$0xff] %v507
      %509 = vst [vmem:[#allocation13] sm:$0xff] %v505
      %s510 = scalar_lea.vmem [#allocation15], 7
      %v511 = vld [vmem:[%s510] ss:$-1 sm:$0xff]
      %s512 = scalar_lea.vmem [#allocation15], 7
      %v513 = vld [vmem:[%s512] ss:$-1 sm:$0xff]
      %514 = vst [vmem:[#allocation15] sm:$0xff] %v513
      %515 = vst [vmem:[#allocation15] sm:$0xff] %v511
      %516 = xla_tuple %509, %515
      %v517 = vld [vmem:[#allocation12] sm:$0xff]
      %v518 = vld [vmem:[#allocation14] sm:$0xff]
      %519 = xla_tuple %v517, %v518
      %v520 = vld [vmem:[#allocation13] sm:$0xff]
      %v521 = vld [vmem:[#allocation15] sm:$0xff]
      %522 = xla_tuple %v520, %v521
      %vm523 = vcmp.gt.s32.totalorder %v517, %v520
      %vm524 = vcmp.eq.s32.totalorder %v517, %v520
      %vm525 = vcmp.lt.s32.totalorder %v518, %v521
      %vm526 = vmand %vm524, %vm525
      %vm527 = vmor %vm523, %vm526
      %v528 = vsel %vm527, %v517, %v520
      %529 = vst [vmem:[#allocation12] sm:$0xff] %v528
      %v530 = vsel %vm527, %v520, %v517
      %531 = vst [vmem:[#allocation13] sm:$0xff] %v530
      %v532 = vsel %vm527, %v518, %v521
      %533 = vst [vmem:[#allocation14] sm:$0xff] %v532
      %v534 = vsel %vm527, %v521, %v518
      %535 = vst [vmem:[#allocation15] sm:$0xff] %v534
      %536 = xla_tuple %531, %535
      %537 = xla_tuple [#allocation12], [#allocation14]
      %v538 = vld [vmem:[#allocation12] sm:$0xff]
      %v539 = vld [vmem:[#allocation14] sm:$0xff]
      %540 = xla_tuple %v538, %v539
      %v542 = vunpack.c.l.s4 839939668
      %v543 = vunpack.c.0.s8 %v542
      %v544 = vlaneseq
      %v545 = vshrl.u32 %v544, 7
      %v546 = vsub.s32 %v543, %v545
      %v547 = vrot.slane %v538, %v546
      %v549 = vunpack.c.l.s4 839939668
      %v550 = vunpack.c.0.s8 %v549
      %v551 = vlaneseq
      %v552 = vshrl.u32 %v551, 7
      %v553 = vsub.s32 %v550, %v552
      %v554 = vrot.slane %v539, %v553
      %555 = xla_tuple %v547, %v554
      %vm556 = vcmp.gt.s32.totalorder %v538, %v547
      %vm557 = vcmp.eq.s32.totalorder %v538, %v547
      %vm558 = vcmp.lt.s32.totalorder %v539, %v554
      %vm559 = vmand %vm557, %vm558
      %vm560 = vmor %vm556, %vm559
      %v561 = vlaneseq
      %v562 = vshrl.u32 %v561, 7
      %v563 = vand.u32 %v562, 4
      %vm564 = vcmp.ne.s32.totalorder %v563, 0
      %vm565 = vmxor %vm560, %vm564
      %v566 = vsel %vm565, %v538, %v547
      %v567 = vsel %vm565, %v539, %v554
      %568 = xla_tuple %v566, %v567
      %v570 = vunpack.c.l.s4 1417023538
      %v571 = vunpack.c.0.s8 %v570
      %v572 = vlaneseq
      %v573 = vshrl.u32 %v572, 7
      %v574 = vsub.s32 %v571, %v573
      %v575 = vrot.slane %v566, %v574
      %v577 = vunpack.c.l.s4 1417023538
      %v578 = vunpack.c.0.s8 %v577
      %v579 = vlaneseq
      %v580 = vshrl.u32 %v579, 7
      %v581 = vsub.s32 %v578, %v580
      %v582 = vrot.slane %v567, %v581
      %583 = xla_tuple %v575, %v582
      %vm584 = vcmp.gt.s32.totalorder %v566, %v575
      %vm585 = vcmp.eq.s32.totalorder %v566, %v575
      %vm586 = vcmp.lt.s32.totalorder %v567, %v582
      %vm587 = vmand %vm585, %vm586
      %vm588 = vmor %vm584, %vm587
      %v589 = vlaneseq
      %v590 = vshrl.u32 %v589, 7
      %v591 = vand.u32 %v590, 2
      %vm592 = vcmp.ne.s32.totalorder %v591, 0
      %vm593 = vmxor %vm588, %vm592
      %v594 = vsel %vm593, %v566, %v575
      %v595 = vsel %vm593, %v567, %v582
      %596 = xla_tuple %v594, %v595
      %v598 = vunpack.c.l.s4 1732584193
      %v599 = vunpack.c.0.s8 %v598
      %v600 = vlaneseq
      %v601 = vshrl.u32 %v600, 7
      %v602 = vsub.s32 %v599, %v601
      %v603 = vrot.slane %v594, %v602
      %v605 = vunpack.c.l.s4 1732584193
      %v606 = vunpack.c.0.s8 %v605
      %v607 = vlaneseq
      %v608 = vshrl.u32 %v607, 7
      %v609 = vsub.s32 %v606, %v608
      %v610 = vrot.slane %v595, %v609
      %611 = xla_tuple %v603, %v610
      %vm612 = vcmp.gt.s32.totalorder %v594, %v603
      %vm613 = vcmp.eq.s32.totalorder %v594, %v603
      %vm614 = vcmp.lt.s32.totalorder %v595, %v610
      %vm615 = vmand %vm613, %vm614
      %vm616 = vmor %vm612, %vm615
      %v617 = vlaneseq
      %v618 = vshrl.u32 %v617, 7
      %v619 = vand.u32 %v618, 1
      %vm620 = vcmp.ne.s32.totalorder %v619, 0
      %vm621 = vmxor %vm616, %vm620
      %v622 = vsel %vm621, %v594, %v603
      %v623 = vsel %vm621, %v595, %v610
      %624 = xla_tuple %v622, %v623
      %625 = vst [vmem:[#allocation12] sm:$0xff] %v622
      %626 = vst [vmem:[#allocation14] sm:$0xff] %v623
      %627 = xla_tuple %625, %626
      %v628 = vld [vmem:[#allocation12] sm:$0xff]
      %v629 = vld [vmem:[#allocation14] sm:$0xff]
      %630 = xla_tuple %v628, %v629
      %v632 = vunpack.c.l.s4 839939668
      %v633 = vunpack.c.0.s8 %v632
      %v634 = vlaneseq
      %v635 = vshrl.u32 %v634, 7
      %v636 = vsub.s32 %v633, %v635
      %v637 = vrot.slane %v628, %v636
      %v639 = vunpack.c.l.s4 839939668
      %v640 = vunpack.c.0.s8 %v639
      %v641 = vlaneseq
      %v642 = vshrl.u32 %v641, 7
      %v643 = vsub.s32 %v640, %v642
      %v644 = vrot.slane %v629, %v643
      %645 = xla_tuple %v637, %v644
      %vm646 = vcmp.gt.s32.totalorder %v628, %v637
      %vm647 = vcmp.eq.s32.totalorder %v628, %v637
      %vm648 = vcmp.lt.s32.totalorder %v629, %v644
      %vm649 = vmand %vm647, %vm648
      %vm650 = vmor %vm646, %vm649
      %v651 = vlaneseq
      %v652 = vshrl.u32 %v651, 7
      %v653 = vand.u32 %v652, 4
      %vm654 = vcmp.ne.s32.totalorder %v653, 0
      %vm655 = vmxor %vm650, %vm654
      %v656 = vsel %vm655, %v628, %v637
      %v657 = vsel %vm655, %v629, %v644
      %658 = xla_tuple %v656, %v657
      %v660 = vunpack.c.l.s4 1417023538
      %v661 = vunpack.c.0.s8 %v660
      %v662 = vlaneseq
      %v663 = vshrl.u32 %v662, 7
      %v664 = vsub.s32 %v661, %v663
      %v665 = vrot.slane %v656, %v664
      %v667 = vunpack.c.l.s4 1417023538
      %v668 = vunpack.c.0.s8 %v667
      %v669 = vlaneseq
      %v670 = vshrl.u32 %v669, 7
      %v671 = vsub.s32 %v668, %v670
      %v672 = vrot.slane %v657, %v671
      %673 = xla_tuple %v665, %v672
      %vm674 = vcmp.gt.s32.totalorder %v656, %v665
      %vm675 = vcmp.eq.s32.totalorder %v656, %v665
      %vm676 = vcmp.lt.s32.totalorder %v657, %v672
      %vm677 = vmand %vm675, %vm676
      %vm678 = vmor %vm674, %vm677
      %v679 = vlaneseq
      %v680 = vshrl.u32 %v679, 7
      %v681 = vand.u32 %v680, 2
      %vm682 = vcmp.ne.s32.totalorder %v681, 0
      %vm683 = vmxor %vm678, %vm682
      %v684 = vsel %vm683, %v656, %v665
      %v685 = vsel %vm683, %v657, %v672
      %686 = xla_tuple %v684, %v685
      %v688 = vunpack.c.l.s4 1732584193
      %v689 = vunpack.c.0.s8 %v688
      %v690 = vlaneseq
      %v691 = vshrl.u32 %v690, 7
      %v692 = vsub.s32 %v689, %v691
      %v693 = vrot.slane %v684, %v692
      %v695 = vunpack.c.l.s4 1732584193
      %v696 = vunpack.c.0.s8 %v695
      %v697 = vlaneseq
      %v698 = vshrl.u32 %v697, 7
      %v699 = vsub.s32 %v696, %v698
      %v700 = vrot.slane %v685, %v699
      %701 = xla_tuple %v693, %v700
      %vm702 = vcmp.gt.s32.totalorder %v684, %v693
      %vm703 = vcmp.eq.s32.totalorder %v684, %v693
      %vm704 = vcmp.lt.s32.totalorder %v685, %v700
      %vm705 = vmand %vm703, %vm704
      %vm706 = vmor %vm702, %vm705
      %v707 = vlaneseq
      %v708 = vshrl.u32 %v707, 7
      %v709 = vand.u32 %v708, 1
      %vm710 = vcmp.ne.s32.totalorder %v709, 0
      %vm711 = vmxor %vm706, %vm710
      %v712 = vsel %vm711, %v684, %v693
      %v713 = vsel %vm711, %v685, %v700
      %714 = xla_tuple %v712, %v713
      %715 = vst [vmem:[#allocation12] sm:$0xff] %v712
      %716 = vst [vmem:[#allocation14] sm:$0xff] %v713
      %717 = xla_tuple %715, %716
      %718 = xla_tuple [#allocation13], [#allocation15]
      %v719 = vld [vmem:[#allocation13] sm:$0xff]
      %v720 = vld [vmem:[#allocation15] sm:$0xff]
      %721 = xla_tuple %v719, %v720
      %v723 = vunpack.c.l.s4 839939668
      %v724 = vunpack.c.0.s8 %v723
      %v725 = vlaneseq
      %v726 = vshrl.u32 %v725, 7
      %v727 = vsub.s32 %v724, %v726
      %v728 = vrot.slane %v719, %v727
      %v730 = vunpack.c.l.s4 839939668
      %v731 = vunpack.c.0.s8 %v730
      %v732 = vlaneseq
      %v733 = vshrl.u32 %v732, 7
      %v734 = vsub.s32 %v731, %v733
      %v735 = vrot.slane %v720, %v734
      %736 = xla_tuple %v728, %v735
      %vm737 = vcmp.gt.s32.totalorder %v719, %v728
      %vm738 = vcmp.eq.s32.totalorder %v719, %v728
      %vm739 = vcmp.lt.s32.totalorder %v720, %v735
      %vm740 = vmand %vm738, %vm739
      %vm741 = vmor %vm737, %vm740
      %v742 = vlaneseq
      %v743 = vshrl.u32 %v742, 7
      %v744 = vand.u32 %v743, 4
      %vm745 = vcmp.ne.s32.totalorder %v744, 0
      %vm746 = vmxor %vm741, %vm745
      %v747 = vsel %vm746, %v719, %v728
      %v748 = vsel %vm746, %v720, %v735
      %749 = xla_tuple %v747, %v748
      %v751 = vunpack.c.l.s4 1417023538
      %v752 = vunpack.c.0.s8 %v751
      %v753 = vlaneseq
      %v754 = vshrl.u32 %v753, 7
      %v755 = vsub.s32 %v752, %v754
      %v756 = vrot.slane %v747, %v755
      %v758 = vunpack.c.l.s4 1417023538
      %v759 = vunpack.c.0.s8 %v758
      %v760 = vlaneseq
      %v761 = vshrl.u32 %v760, 7
      %v762 = vsub.s32 %v759, %v761
      %v763 = vrot.slane %v748, %v762
      %764 = xla_tuple %v756, %v763
      %vm765 = vcmp.gt.s32.totalorder %v747, %v756
      %vm766 = vcmp.eq.s32.totalorder %v747, %v756
      %vm767 = vcmp.lt.s32.totalorder %v748, %v763
      %vm768 = vmand %vm766, %vm767
      %vm769 = vmor %vm765, %vm768
      %v770 = vlaneseq
      %v771 = vshrl.u32 %v770, 7
      %v772 = vand.u32 %v771, 2
      %vm773 = vcmp.ne.s32.totalorder %v772, 0
      %vm774 = vmxor %vm769, %vm773
      %v775 = vsel %vm774, %v747, %v756
      %v776 = vsel %vm774, %v748, %v763
      %777 = xla_tuple %v775, %v776
      %v779 = vunpack.c.l.s4 1732584193
      %v780 = vunpack.c.0.s8 %v779
      %v781 = vlaneseq
      %v782 = vshrl.u32 %v781, 7
      %v783 = vsub.s32 %v780, %v782
      %v784 = vrot.slane %v775, %v783
      %v786 = vunpack.c.l.s4 1732584193
      %v787 = vunpack.c.0.s8 %v786
      %v788 = vlaneseq
      %v789 = vshrl.u32 %v788, 7
      %v790 = vsub.s32 %v787, %v789
      %v791 = vrot.slane %v776, %v790
      %792 = xla_tuple %v784, %v791
      %vm793 = vcmp.gt.s32.totalorder %v775, %v784
      %vm794 = vcmp.eq.s32.totalorder %v775, %v784
      %vm795 = vcmp.lt.s32.totalorder %v776, %v791
      %vm796 = vmand %vm794, %vm795
      %vm797 = vmor %vm793, %vm796
      %v798 = vlaneseq
      %v799 = vshrl.u32 %v798, 7
      %v800 = vand.u32 %v799, 1
      %vm801 = vcmp.ne.s32.totalorder %v800, 0
      %vm802 = vmxor %vm797, %vm801
      %v803 = vsel %vm802, %v775, %v784
      %v804 = vsel %vm802, %v776, %v791
      %805 = xla_tuple %v803, %v804
      %806 = vst [vmem:[#allocation13] sm:$0xff] %v803
      %807 = vst [vmem:[#allocation15] sm:$0xff] %v804
      %808 = xla_tuple %806, %807
      %v809 = vld [vmem:[#allocation13] sm:$0xff]
      %v810 = vld [vmem:[#allocation15] sm:$0xff]
      %811 = xla_tuple %v809, %v810
      %v813 = vunpack.c.l.s4 839939668
      %v814 = vunpack.c.0.s8 %v813
      %v815 = vlaneseq
      %v816 = vshrl.u32 %v815, 7
      %v817 = vsub.s32 %v814, %v816
      %v818 = vrot.slane %v809, %v817
      %v820 = vunpack.c.l.s4 839939668
      %v821 = vunpack.c.0.s8 %v820
      %v822 = vlaneseq
      %v823 = vshrl.u32 %v822, 7
      %v824 = vsub.s32 %v821, %v823
      %v825 = vrot.slane %v810, %v824
      %826 = xla_tuple %v818, %v825
      %vm827 = vcmp.gt.s32.totalorder %v809, %v818
      %vm828 = vcmp.eq.s32.totalorder %v809, %v818
      %vm829 = vcmp.lt.s32.totalorder %v810, %v825
      %vm830 = vmand %vm828, %vm829
      %vm831 = vmor %vm827, %vm830
      %v832 = vlaneseq
      %v833 = vshrl.u32 %v832, 7
      %v834 = vand.u32 %v833, 4
      %vm835 = vcmp.ne.s32.totalorder %v834, 0
      %vm836 = vmxor %vm831, %vm835
      %v837 = vsel %vm836, %v809, %v818
      %v838 = vsel %vm836, %v810, %v825
      %839 = xla_tuple %v837, %v838
      %v841 = vunpack.c.l.s4 1417023538
      %v842 = vunpack.c.0.s8 %v841
      %v843 = vlaneseq
      %v844 = vshrl.u32 %v843, 7
      %v845 = vsub.s32 %v842, %v844
      %v846 = vrot.slane %v837, %v845
      %v848 = vunpack.c.l.s4 1417023538
      %v849 = vunpack.c.0.s8 %v848
      %v850 = vlaneseq
      %v851 = vshrl.u32 %v850, 7
      %v852 = vsub.s32 %v849, %v851
      %v853 = vrot.slane %v838, %v852
      %854 = xla_tuple %v846, %v853
      %vm855 = vcmp.gt.s32.totalorder %v837, %v846
      %vm856 = vcmp.eq.s32.totalorder %v837, %v846
      %vm857 = vcmp.lt.s32.totalorder %v838, %v853
      %vm858 = vmand %vm856, %vm857
      %vm859 = vmor %vm855, %vm858
      %v860 = vlaneseq
      %v861 = vshrl.u32 %v860, 7
      %v862 = vand.u32 %v861, 2
      %vm863 = vcmp.ne.s32.totalorder %v862, 0
      %vm864 = vmxor %vm859, %vm863
      %v865 = vsel %vm864, %v837, %v846
      %v866 = vsel %vm864, %v838, %v853
      %867 = xla_tuple %v865, %v866
      %v869 = vunpack.c.l.s4 1732584193
      %v870 = vunpack.c.0.s8 %v869
      %v871 = vlaneseq
      %v872 = vshrl.u32 %v871, 7
      %v873 = vsub.s32 %v870, %v872
      %v874 = vrot.slane %v865, %v873
      %v876 = vunpack.c.l.s4 1732584193
      %v877 = vunpack.c.0.s8 %v876
      %v878 = vlaneseq
      %v879 = vshrl.u32 %v878, 7
      %v880 = vsub.s32 %v877, %v879
      %v881 = vrot.slane %v866, %v880
      %882 = xla_tuple %v874, %v881
      %vm883 = vcmp.gt.s32.totalorder %v865, %v874
      %vm884 = vcmp.eq.s32.totalorder %v865, %v874
      %vm885 = vcmp.lt.s32.totalorder %v866, %v881
      %vm886 = vmand %vm884, %vm885
      %vm887 = vmor %vm883, %vm886
      %v888 = vlaneseq
      %v889 = vshrl.u32 %v888, 7
      %v890 = vand.u32 %v889, 1
      %vm891 = vcmp.ne.s32.totalorder %v890, 0
      %vm892 = vmxor %vm887, %vm891
      %v893 = vsel %vm892, %v865, %v874
      %v894 = vsel %vm892, %v866, %v881
      %895 = xla_tuple %v893, %v894
      %896 = vst [vmem:[#allocation13] sm:$0xff] %v893
      %897 = vst [vmem:[#allocation15] sm:$0xff] %v894
      %898 = xla_tuple %896, %897
    %v899 = vld [vmem:[#allocation12] sm:$0xff]
    %vm900 = vcmp.lt.s32.totalorder %v899, 0
    %v901 = vsub.s32 2147483647, %v899
    %v902 = vsel %vm900, %v901, %v899
    %903 = vst [vmem:[#allocation12] sm:$0xff] %v902
    %v904 = vld [vmem:[#allocation12] sm:$0xff]
    %905 = vxpose.xlu0.b32.start.end [1/1] (short) %v904, 128
    %v906 = vpop.trf.xlu0
    %v907 = vpop.trf.xlu0
    %v908 = vpop.trf.xlu0
    %v909 = vpop.trf.xlu0
    %v910 = vpop.trf.xlu0
    %v911 = vpop.trf.xlu0
    %v912 = vpop.trf.xlu0
    %v913 = vpop.trf.xlu0
    %v914 = vpop.trf.xlu0
    %v915 = vpop.trf.xlu0
    %v916 = vpop.trf.xlu0
    %v917 = vpop.trf.xlu0
    %v918 = vpop.trf.xlu0
    %v919 = vpop.trf.xlu0
    %v920 = vpop.trf.xlu0
    %v921 = vpop.trf.xlu0
    %922 = vst [vmem:[#allocation7] sm:$0xff] %v906
    %v923 = vld [vmem:[#allocation14] sm:$0xff]
    %924 = vxpose.xlu0.b32.start.end [1/1] (short) %v923, 128
    %v925 = vpop.trf.xlu0
    %v926 = vpop.trf.xlu0
    %v927 = vpop.trf.xlu0
    %v928 = vpop.trf.xlu0
    %v929 = vpop.trf.xlu0
    %v930 = vpop.trf.xlu0
    %v931 = vpop.trf.xlu0
    %v932 = vpop.trf.xlu0
    %v933 = vpop.trf.xlu0
    %v934 = vpop.trf.xlu0
    %v935 = vpop.trf.xlu0
    %v936 = vpop.trf.xlu0
    %v937 = vpop.trf.xlu0
    %v938 = vpop.trf.xlu0
    %v939 = vpop.trf.xlu0
    %v940 = vpop.trf.xlu0
    %941 = vst [vmem:[#allocation10] sm:$0xff] %v925
    %s943 = sshllo.u32 0, 2
    %v945 = vld [vmem:[#allocation7] sm:%s943]
    %s946 = sshllo.u32 0, 2
    %947 = vst [vmem:[#allocation8] sm:%s946] %v945
    %s949 = sshllo.u32 0, 2
    %v951 = vld [vmem:[#allocation10] sm:%s949]
    %s952 = sshllo.u32 0, 2
    %953 = vst [vmem:[#allocation11] sm:%s952] %v951
    %s955 = ssub.s32 32, 32
    %956 = vsyncadd [#allocation9], %s955
    %s958 = sshll.u32 [#allocation8], 4
    %s959 = int_to_ptr.vmem [resolvable:$true] %s958
    %961 = dma.vmem_to_hbm [thread:$0]  %s959, 32, %s1, [#allocation9]
    // Predicated region
    $region40: #{custom-call} parent=1 // pred_check
      _
    $region41: #{custom-call} parent=1 // pred_check_branch
      %963 = sbr.rel (0) target = $region43
    $region42: #{custom-call} parent=1 // pred_region
      // Predicated region
      $region44: #{custom-call} parent=42 // pred_check
        _
      $region45: #{custom-call} parent=42 // pred_check_branch
        %965 = sbr.rel target = $region47
      $region46: #{custom-call} parent=42 // pred_region
        // Predicated region
        $region59: #{custom-call} parent=46 // pred_check
          _
        $region60: #{custom-call} parent=46 // pred_check_branch
          %980 = sbr.rel (0) target = $region62
        $region61: #{custom-call} parent=46 // pred_region
          loop: start=0, step=1, limit=1
          $region63: #{custom-call} parent=61 // loop_pre_header
            _
          $region64: #{custom-call} parent=61 // loop_header
            %s983 = sphi 0, %s987
            %p984 = scmp.ge.s32.totalorder %s983, 1
            %s988 = sphi [#allocation11], [#allocation11]
            %s989 = sphi %s2, %s2
          $region65: #{custom-call} parent=61 // loop_header_branch
            %986 = sbr.rel (%p984) target = $region69
          $region66: #{custom-call} parent=61 // loop_body
            %v990 = vld [vmem:[%s988] sm:$0x3]
            %991 = vst [vmem:[%s989] sm:$0x3] %v990
          $region67: #{custom-call} parent=61 // loop_footer
            %s987 = sadd.s32 1, %s983
          $region68: #{custom-call} parent=61 // loop_footer_branch
            %982 = sbr.rel target = $region64
          $region69: #{custom-call} parent=61 // loop_exit
            _
        $region62: #{custom-call} parent=46 // pred_fallthru
          _
      $region47: #{custom-call} parent=42 // pred_fallthru
        _
      // Predicated region
      $region48: #{custom-call} parent=42 // pred_check
        _
      $region49: #{custom-call} parent=42 // pred_check_branch
        %967 = sbr.rel (0) target = $region51
      $region50: #{custom-call} parent=42 // pred_region
        loop: start=0, step=1, limit=1
        $region52: #{custom-call} parent=50 // loop_pre_header
          _
        $region53: #{custom-call} parent=50 // loop_header
          %s970 = sphi 0, %s974
          %p971 = scmp.ge.s32.totalorder %s970, 1
          %s975 = sphi [#allocation11], [#allocation11]
          %s976 = sphi %s2, %s2
        $region54: #{custom-call} parent=50 // loop_header_branch
          %973 = sbr.rel (%p971) target = $region58
        $region55: #{custom-call} parent=50 // loop_body
          %v977 = vld [vmem:[%s975] sm:$0x3]
          %978 = vst [vmem:[%s976] sm:$0x3] %v977
        $region56: #{custom-call} parent=50 // loop_footer
          %s974 = sadd.s32 1, %s970
        $region57: #{custom-call} parent=50 // loop_footer_branch
          %969 = sbr.rel target = $region53
        $region58: #{custom-call} parent=50 // loop_exit
          _
      $region51: #{custom-call} parent=42 // pred_fallthru
        _
    $region43: #{custom-call} parent=1 // pred_fallthru
      _
    %992 = vnop
    %993 = dma.done [#allocation9], 32
    %994 = vsyncpa [#allocation9], 1

// kernel: faster_rcnn_forward.2
$region0: #{faster_rcnn_forward.2}
  #allocation0 [shape = 'u32[]', space=smem, size = 0x4, offset = 0x4, fixed_abs, tag = 'smem constant byte address 0x4 - core index']
  #allocation1 [shape = 'u32[144,128]{1,0:T(1,128)}', space=vmem, size = 0x12000, scoped, tag = 'internal scratch']
  #allocation2 [shape = 'f32[18,18,16]{2,1,0:T(8,128)}', space=vmem, size = 0x36000, scoped, tag = 'scratch operand']
  %s0 = inlined_call_operand.vmem [shape: f32[2,18,18,3], index: 0, kind: input, shape index: {}]
  %s1 = inlined_call_operand.vmem [shape: bf16[9,3,16], index: 1, kind: input, shape index: {}]
  %s2 = inlined_call_operand.vmem [shape: f32[1,16], index: 2, kind: input, shape index: {}]
  %s3 = inlined_call_operand.vmem [shape: bf16[9,16,16], index: 3, kind: input, shape index: {}]
  %s4 = inlined_call_operand.vmem [shape: f32[1,16], index: 4, kind: input, shape index: {}]
  %s5 = inlined_call_operand.vmem [shape: bf16[16,18], index: 5, kind: input, shape index: {}]
  %s6 = inlined_call_operand.vmem [shape: f32[1,18], index: 6, kind: input, shape index: {}]
  %s7 = inlined_call_operand.vmem [shape: f32[2,256,16], index: 7, kind: output, shape index: {0}]
  %s8 = inlined_call_operand.vmem [shape: f32[2,256,15], index: 8, kind: output, shape index: {1}]
  %9 = xla_tuple %s7, %s8
  %s10 = sld [smem:[#allocation0]]
  $region69: #{faster_rcnn_forward.2} parent=0
    _
  %s12 = ssub.s32 1, %s10
  %s13 = scalar_select 0, %s12, %s10
  loop: start=0, step=1, limit=4
  $region2: #{faster_rcnn_forward.2} parent=0 // loop_pre_header
    _
  $region3: #{faster_rcnn_forward.2} parent=0 // loop_header
    %s15 = sphi 0, %s19
    %p16 = scmp.ge.s32.totalorder %s15, 4
    %s25 = sphi 0, %s27
    %s28 = sphi 0, %s25
    %s29 = sphi 0, %s28
    %s45 = sphi 0, %s29
    %s49 = sphi 0, %s49
    %s51 = sphi 0, %s49
    %s52 = sphi 0, %s51
    %s66 = sphi 0, %s52
    %s70 = sphi 0, %s70
    %s72 = sphi 0, %s70
    %s73 = sphi 0, %s72
    %s87 = sphi 0, %s73
    %s91 = sphi 0, %s91
    %s93 = sphi 0, %s91
    %s94 = sphi 0, %s93
    %s108 = sphi 0, %s94
    %s112 = sphi 0, %s112
    %s114 = sphi 0, %s112
    %s115 = sphi 0, %s114
    %s129 = sphi 0, %s115
    %s133 = sphi 0, %s133
    %s135 = sphi 0, %s133
    %s136 = sphi 0, %s135
    %s150 = sphi 0, %s136
    %s154 = sphi 0, %s154
    %s156 = sphi 0, %s154
    %s157 = sphi 0, %s156
    %s171 = sphi 0, %s157
    %s177 = sphi 0, %s179
    %s180 = sphi 0, %s177
    %s181 = sphi 0, %s180
    %s197 = sphi 0, %s181
    %s203 = sphi 0, %s205
    %s206 = sphi 0, %s203
    %s207 = sphi 0, %s206
    %s223 = sphi 0, %s207
  $region4: #{faster_rcnn_forward.2} parent=0 // loop_header_branch
    %18 = sbr.rel (%p16) target = $region8
  $region5: #{faster_rcnn_forward.2} parent=0 // loop_body
    %s20 = ssub.s32 %s15, 1
    %s21 = ssub.s32 %s15, 2
    %s22 = sadd.s32 %s15, 1
    %s23 = ssub.s32 %s15, %s22
    %p24 = scmp.eq.s32.totalorder %s23, 0
    %s26 = sadd.s32 %s25, 1
    %s27 = scalar_select %p24, %s25, %s26
    %p30 = pneg %p24
    %p31 = scmp.eq.s32.totalorder %s15, 1
    %p32 = por %p30, %p31
    %p33 = scmp.ne.s32.totalorder %s25, %s28
    %p34 = scmp.eq.s32.totalorder %s15, 0
    %p35 = por %p33, %p34
    %p36 = scmp.ne.s32.totalorder %s25, %s28
    %p37 = scmp.eq.s32.totalorder %s20, 1
    %p38 = por %p36, %p37
    %p39 = scmp.ne.s32.totalorder %s28, %s29
    %p40 = scmp.eq.s32.totalorder %s20, 0
    %p41 = por %p39, %p40
    %p42 = scmp.ne.s32.totalorder %s28, %s29
    %p43 = scmp.eq.s32.totalorder %s21, 1
    %p44 = por %p42, %p43
    %p46 = scmp.ne.s32.totalorder %s29, %s45
    %p47 = scmp.eq.s32.totalorder %s21, 0
    %p48 = por %p46, %p47
    %s50 = sadd.s32 %s49, 1
    %p53 = scmp.eq.s32.totalorder %s15, 1
    %p54 = scmp.ne.s32.totalorder %s49, %s51
    %p55 = scmp.eq.s32.totalorder %s15, 0
    %p56 = por %p54, %p55
    %p57 = scmp.ne.s32.totalorder %s49, %s51
    %p58 = scmp.eq.s32.totalorder %s20, 1
    %p59 = por %p57, %p58
    %p60 = scmp.ne.s32.totalorder %s51, %s52
    %p61 = scmp.eq.s32.totalorder %s20, 0
    %p62 = por %p60, %p61
    %p63 = scmp.ne.s32.totalorder %s51, %s52
    %p64 = scmp.eq.s32.totalorder %s21, 1
    %p65 = por %p63, %p64
    %p67 = scmp.ne.s32.totalorder %s52, %s66
    %p68 = scmp.eq.s32.totalorder %s21, 0
    %p69 = por %p67, %p68
    %s71 = sadd.s32 %s70, 1
    %p74 = scmp.eq.s32.totalorder %s15, 1
    %p75 = scmp.ne.s32.totalorder %s70, %s72
    %p76 = scmp.eq.s32.totalorder %s15, 0
    %p77 = por %p75, %p76
    %p78 = scmp.ne.s32.totalorder %s70, %s72
    %p79 = scmp.eq.s32.totalorder %s20, 1
    %p80 = por %p78, %p79
    %p81 = scmp.ne.s32.totalorder %s72, %s73
    %p82 = scmp.eq.s32.totalorder %s20, 0
    %p83 = por %p81, %p82
    %p84 = scmp.ne.s32.totalorder %s72, %s73
    %p85 = scmp.eq.s32.totalorder %s21, 1
    %p86 = por %p84, %p85
    %p88 = scmp.ne.s32.totalorder %s73, %s87
    %p89 = scmp.eq.s32.totalorder %s21, 0
    %p90 = por %p88, %p89
    %s92 = sadd.s32 %s91, 1
    %p95 = scmp.eq.s32.totalorder %s15, 1
    %p96 = scmp.ne.s32.totalorder %s91, %s93
    %p97 = scmp.eq.s32.totalorder %s15, 0
    %p98 = por %p96, %p97
    %p99 = scmp.ne.s32.totalorder %s91, %s93
    %p100 = scmp.eq.s32.totalorder %s20, 1
    %p101 = por %p99, %p100
    %p102 = scmp.ne.s32.totalorder %s93, %s94
    %p103 = scmp.eq.s32.totalorder %s20, 0
    %p104 = por %p102, %p103
    %p105 = scmp.ne.s32.totalorder %s93, %s94
    %p106 = scmp.eq.s32.totalorder %s21, 1
    %p107 = por %p105, %p106
    %p109 = scmp.ne.s32.totalorder %s94, %s108
    %p110 = scmp.eq.s32.totalorder %s21, 0
    %p111 = por %p109, %p110
    %s113 = sadd.s32 %s112, 1
    %p116 = scmp.eq.s32.totalorder %s15, 1
    %p117 = scmp.ne.s32.totalorder %s112, %s114
    %p118 = scmp.eq.s32.totalorder %s15, 0
    %p119 = por %p117, %p118
    %p120 = scmp.ne.s32.totalorder %s112, %s114
    %p121 = scmp.eq.s32.totalorder %s20, 1
    %p122 = por %p120, %p121
    %p123 = scmp.ne.s32.totalorder %s114, %s115
    %p124 = scmp.eq.s32.totalorder %s20, 0
    %p125 = por %p123, %p124
    %p126 = scmp.ne.s32.totalorder %s114, %s115
    %p127 = scmp.eq.s32.totalorder %s21, 1
    %p128 = por %p126, %p127
    %p130 = scmp.ne.s32.totalorder %s115, %s129
    %p131 = scmp.eq.s32.totalorder %s21, 0
    %p132 = por %p130, %p131
    %s134 = sadd.s32 %s133, 1
    %p137 = scmp.eq.s32.totalorder %s15, 1
    %p138 = scmp.ne.s32.totalorder %s133, %s135
    %p139 = scmp.eq.s32.totalorder %s15, 0
    %p140 = por %p138, %p139
    %p141 = scmp.ne.s32.totalorder %s133, %s135
    %p142 = scmp.eq.s32.totalorder %s20, 1
    %p143 = por %p141, %p142
    %p144 = scmp.ne.s32.totalorder %s135, %s136
    %p145 = scmp.eq.s32.totalorder %s20, 0
    %p146 = por %p144, %p145
    %p147 = scmp.ne.s32.totalorder %s135, %s136
    %p148 = scmp.eq.s32.totalorder %s21, 1
    %p149 = por %p147, %p148
    %p151 = scmp.ne.s32.totalorder %s136, %s150
    %p152 = scmp.eq.s32.totalorder %s21, 0
    %p153 = por %p151, %p152
    %s155 = sadd.s32 %s154, 1
    %p158 = scmp.eq.s32.totalorder %s15, 1
    %p159 = scmp.ne.s32.totalorder %s154, %s156
    %p160 = scmp.eq.s32.totalorder %s15, 0
    %p161 = por %p159, %p160
    %p162 = scmp.ne.s32.totalorder %s154, %s156
    %p163 = scmp.eq.s32.totalorder %s20, 1
    %p164 = por %p162, %p163
    %p165 = scmp.ne.s32.totalorder %s156, %s157
    %p166 = scmp.eq.s32.totalorder %s20, 0
    %p167 = por %p165, %p166
    %p168 = scmp.ne.s32.totalorder %s156, %s157
    %p169 = scmp.eq.s32.totalorder %s21, 1
    %p170 = por %p168, %p169
    %p172 = scmp.ne.s32.totalorder %s157, %s171
    %p173 = scmp.eq.s32.totalorder %s21, 0
    %p174 = por %p172, %p173
    %s175 = ssub.s32 %s15, %s22
    %p176 = scmp.eq.s32.totalorder %s175, 0
    %s178 = sadd.s32 %s177, 1
    %s179 = scalar_select %p176, %s177, %s178
    %p182 = pneg %p176
    %p183 = scmp.eq.s32.totalorder %s15, 1
    %p184 = por %p182, %p183
    %p185 = scmp.ne.s32.totalorder %s177, %s180
    %p186 = scmp.eq.s32.totalorder %s15, 0
    %p187 = por %p185, %p186
    %p188 = scmp.ne.s32.totalorder %s177, %s180
    %p189 = scmp.eq.s32.totalorder %s20, 1
    %p190 = por %p188, %p189
    %p191 = scmp.ne.s32.totalorder %s180, %s181
    %p192 = scmp.eq.s32.totalorder %s20, 0
    %p193 = por %p191, %p192
    %p194 = scmp.ne.s32.totalorder %s180, %s181
    %p195 = scmp.eq.s32.totalorder %s21, 1
    %p196 = por %p194, %p195
    %p198 = scmp.ne.s32.totalorder %s181, %s197
    %p199 = scmp.eq.s32.totalorder %s21, 0
    %p200 = por %p198, %p199
    %s201 = ssub.s32 %s15, %s22
    %p202 = scmp.eq.s32.totalorder %s201, 0
    %s204 = sadd.s32 %s203, 1
    %s205 = scalar_select %p202, %s203, %s204
    %p208 = pneg %p202
    %p209 = scmp.eq.s32.totalorder %s15, 1
    %p210 = por %p208, %p209
    %p211 = scmp.ne.s32.totalorder %s203, %s206
    %p212 = scmp.eq.s32.totalorder %s15, 0
    %p213 = por %p211, %p212
    %p214 = scmp.ne.s32.totalorder %s203, %s206
    %p215 = scmp.eq.s32.totalorder %s20, 1
    %p216 = por %p214, %p215
    %p217 = scmp.ne.s32.totalorder %s206, %s207
    %p218 = scmp.eq.s32.totalorder %s20, 0
    %p219 = por %p217, %p218
    %p220 = scmp.ne.s32.totalorder %s206, %s207
    %p221 = scmp.eq.s32.totalorder %s21, 1
    %p222 = por %p220, %p221
    %p224 = scmp.ne.s32.totalorder %s207, %s223
    %p225 = scmp.eq.s32.totalorder %s21, 0
    %p226 = por %p224, %p225
    %p227 = scmp.le.s32.totalorder 1, %s15
    %p228 = scmp.lt.s32.totalorder %s15, 3
    %p229 = pnand %p227, %p228
    %p230 = pneg %p229
    // Predicated region
    $region9: #{faster_rcnn_forward.2} parent=5 // pred_check
      _
    $region10: #{faster_rcnn_forward.2} parent=5 // pred_check_branch
      %232 = sbr.rel (%p229) target = $region12
    $region11: #{faster_rcnn_forward.2} parent=5 // pred_region
      %s233 = ssub.s32 %s15, 1
      // Predicated region
      $region13: #{faster_rcnn_forward.2} parent=11 // pred_check
        %p234 = pneg %p62
      $region14: #{faster_rcnn_forward.2} parent=11 // pred_check_branch
        %236 = sbr.rel (%p234) target = $region16
      $region15: #{faster_rcnn_forward.2} parent=11 // pred_region
        _
      $region16: #{faster_rcnn_forward.2} parent=11 // pred_fallthru
        _
      // Predicated region
      $region17: #{faster_rcnn_forward.2} parent=11 // pred_check
        %p237 = pneg %p83
      $region18: #{faster_rcnn_forward.2} parent=11 // pred_check_branch
        %239 = sbr.rel (%p237) target = $region20
      $region19: #{faster_rcnn_forward.2} parent=11 // pred_region
        _
      $region20: #{faster_rcnn_forward.2} parent=11 // pred_fallthru
        _
      // Predicated region
      $region21: #{faster_rcnn_forward.2} parent=11 // pred_check
        %p240 = pneg %p104
      $region22: #{faster_rcnn_forward.2} parent=11 // pred_check_branch
        %242 = sbr.rel (%p240) target = $region24
      $region23: #{faster_rcnn_forward.2} parent=11 // pred_region
        _
      $region24: #{faster_rcnn_forward.2} parent=11 // pred_fallthru
        _
      // Predicated region
      $region25: #{faster_rcnn_forward.2} parent=11 // pred_check
        %p243 = pneg %p125
      $region26: #{faster_rcnn_forward.2} parent=11 // pred_check_branch
        %245 = sbr.rel (%p243) target = $region28
      $region27: #{faster_rcnn_forward.2} parent=11 // pred_region
        _
      $region28: #{faster_rcnn_forward.2} parent=11 // pred_fallthru
        _
      // Predicated region
      $region29: #{faster_rcnn_forward.2} parent=11 // pred_check
        %p246 = pneg %p146
      $region30: #{faster_rcnn_forward.2} parent=11 // pred_check_branch
        %248 = sbr.rel (%p246) target = $region32
      $region31: #{faster_rcnn_forward.2} parent=11 // pred_region
        _
      $region32: #{faster_rcnn_forward.2} parent=11 // pred_fallthru
        _
      // Predicated region
      $region33: #{faster_rcnn_forward.2} parent=11 // pred_check
        %p249 = pneg %p167
      $region34: #{faster_rcnn_forward.2} parent=11 // pred_check_branch
        %251 = sbr.rel (%p249) target = $region36
      $region35: #{faster_rcnn_forward.2} parent=11 // pred_region
        _
      $region36: #{faster_rcnn_forward.2} parent=11 // pred_fallthru
        _
    $region12: #{faster_rcnn_forward.2} parent=5 // pred_fallthru
      _
    %p252 = scmp.lt.s32.totalorder %s15, 2
    // Predicated region
    $region37: #{faster_rcnn_forward.2} parent=5 // pred_check
      %p253 = pneg %p252
    $region38: #{faster_rcnn_forward.2} parent=5 // pred_check_branch
      %255 = sbr.rel (%p253) target = $region40
    $region39: #{faster_rcnn_forward.2} parent=5 // pred_region
      // Predicated region
      $region41: #{faster_rcnn_forward.2} parent=39 // pred_check
        %p256 = pneg %p35
      $region42: #{faster_rcnn_forward.2} parent=39 // pred_check_branch
        %258 = sbr.rel (%p256) target = $region44
      $region43: #{faster_rcnn_forward.2} parent=39 // pred_region
        %p259 = scmp.lt.s32.totalorder %s15, 1
        %s260 = scalar_select %p259, %s15, 1
        %s261 = smul.addr %s260, 54
        %s262 = smul.addr %s261, 8
        %s263 = scalar_lea.vmem %s0, %s262
      $region44: #{faster_rcnn_forward.2} parent=39 // pred_fallthru
        _
    $region40: #{faster_rcnn_forward.2} parent=5 // pred_fallthru
      _
    %p264 = scmp.le.s32.totalorder 1, %s15
    %p265 = scmp.lt.s32.totalorder %s15, 3
    %p266 = pnand %p264, %p265
    %p267 = pneg %p266
    // Predicated region
    $region45: #{faster_rcnn_forward.2} parent=5 // pred_check
      _
    $region46: #{faster_rcnn_forward.2} parent=5 // pred_check_branch
      %269 = sbr.rel (%p266) target = $region48
    $region47: #{faster_rcnn_forward.2} parent=5 // pred_region
      %s270 = ssub.s32 %s15, 1
      %p271 = scmp.lt.s32.totalorder %s20, 1
      %s272 = scalar_select %p271, %s20, 1
      %s273 = smul.addr %s272, 54
      %s274 = smul.addr %s273, 8
      %s275 = scalar_lea.vmem %s0, %s274
      %p276 = pneg %p41
      %p277 = pneg %p38
      %p278 = pneg %p62
      %p279 = pneg %p59
      %p280 = pneg %p83
      %p281 = pneg %p80
      %p282 = pneg %p104
      %p283 = pneg %p101
      %p284 = pneg %p125
      %p285 = pneg %p122
      %p286 = pneg %p146
      %p287 = pneg %p143
      %p288 = pneg %p167
      %p289 = pneg %p164
      %p290 = pneg %p193
      %p291 = pneg %p190
      %p292 = scmp.lt.s32.totalorder %s20, 1
      %s293 = scalar_select %p292, %s20, 1
      %s294 = smul.addr %s293, 32
      %s295 = smul.addr %s294, 8
      %s296 = scalar_lea.vmem %s7, %s295
      %p297 = pneg %p219
      %p298 = pneg %p216
      %p299 = scmp.lt.s32.totalorder %s20, 1
      %s300 = scalar_select %p299, %s20, 1
      %s301 = smul.addr %s300, 32
      %s302 = smul.addr %s301, 8
      %s303 = scalar_lea.vmem %s8, %s302
      %p304 = scmp.lt.s32.totalorder %s20, 1
      %s305 = scalar_select %p304, %s20, 1
      %s306 = smul.addr %s305, 54
      %s307 = smul.addr %s306, 8
      %s308 = scalar_lea.vmem %s0, %s307
      %p309 = scmp.lt.s32.totalorder %s20, 1
      %s310 = scalar_select %p309, %s20, 1
      %s311 = smul.addr %s310, 32
      %s312 = smul.addr %s311, 8
      %s313 = scalar_lea.vmem %s7, %s312
      %p314 = scmp.lt.s32.totalorder %s20, 1
      %s315 = scalar_select %p314, %s20, 1
      %s316 = smul.addr %s315, 32
      %s317 = smul.addr %s316, 8
      %s318 = scalar_lea.vmem %s8, %s317
      %v320 = vld [vmem:[%s308] sm:$0xff]
      %v321 = vld [vmem:[%s308 + $0x8] sm:$0xff]
      %s322 = scalar_lea.vmem %s308, 24
      %v323 = vld [vmem:[%s322] sm:$0xff]
      %v324 = vld [vmem:[%s322 + $0x8] sm:$0xff]
      %s325 = scalar_lea.vmem %s308, 48
      %v326 = vld [vmem:[%s325] sm:$0xff]
      %v327 = vld [vmem:[%s325 + $0x8] sm:$0xff]
      %s328 = scalar_lea.vmem %s308, 72
      %v329 = vld [vmem:[%s328] sm:$0xff]
      %v330 = vld [vmem:[%s328 + $0x8] sm:$0xff]
      %s331 = scalar_lea.vmem %s308, 96
      %v332 = vld [vmem:[%s331] sm:$0xff]
      %v333 = vld [vmem:[%s331 + $0x8] sm:$0xff]
      %s334 = scalar_lea.vmem %s308, 120
      %v335 = vld [vmem:[%s334] sm:$0xff]
      %v336 = vld [vmem:[%s334 + $0x8] sm:$0xff]
      %s337 = scalar_lea.vmem %s308, 144
      %v338 = vld [vmem:[%s337] sm:$0xff]
      %v339 = vld [vmem:[%s337 + $0x8] sm:$0xff]
      %s340 = scalar_lea.vmem %s308, 168
      %v341 = vld [vmem:[%s340] sm:$0xff]
      %v342 = vld [vmem:[%s340 + $0x8] sm:$0xff]
      %s343 = scalar_lea.vmem %s308, 192
      %v344 = vld [vmem:[%s343] sm:$0xff]
      %v345 = vld [vmem:[%s343 + $0x8] sm:$0xff]
      %s346 = scalar_lea.vmem %s308, 216
      %v347 = vld [vmem:[%s346] sm:$0xff]
      %v348 = vld [vmem:[%s346 + $0x8] sm:$0xff]
      %s349 = scalar_lea.vmem %s308, 240
      %v350 = vld [vmem:[%s349] sm:$0xff]
      %v351 = vld [vmem:[%s349 + $0x8] sm:$0xff]
      %s352 = scalar_lea.vmem %s308, 264
      %v353 = vld [vmem:[%s352] sm:$0xff]
      %v354 = vld [vmem:[%s352 + $0x8] sm:$0xff]
      %s355 = scalar_lea.vmem %s308, 288
      %v356 = vld [vmem:[%s355] sm:$0xff]
      %v357 = vld [vmem:[%s355 + $0x8] sm:$0xff]
      %s358 = scalar_lea.vmem %s308, 312
      %v359 = vld [vmem:[%s358] sm:$0xff]
      %v360 = vld [vmem:[%s358 + $0x8] sm:$0xff]
      %s361 = scalar_lea.vmem %s308, 336
      %v362 = vld [vmem:[%s361] sm:$0xff]
      %v363 = vld [vmem:[%s361 + $0x8] sm:$0xff]
      %s364 = scalar_lea.vmem %s308, 360
      %v365 = vld [vmem:[%s364] sm:$0xff]
      %v366 = vld [vmem:[%s364 + $0x8] sm:$0xff]
      %v367 = vpack.c.bf16 %v321, %v320
      %v368 = vpack.c.bf16 %v324, %v323
      %v369 = vpack.c.bf16 %v327, %v326
      %v370 = vpack.c.bf16 %v330, %v329
      %v371 = vpack.c.bf16 %v333, %v332
      %v372 = vpack.c.bf16 %v336, %v335
      %v373 = vpack.c.bf16 %v339, %v338
      %v374 = vpack.c.bf16 %v342, %v341
      %v375 = vpack.c.bf16 %v345, %v344
      %v376 = vpack.c.bf16 %v348, %v347
      %v377 = vpack.c.bf16 %v351, %v350
      %v378 = vpack.c.bf16 %v354, %v353
      %v379 = vpack.c.bf16 %v357, %v356
      %v380 = vpack.c.bf16 %v360, %v359
      %v381 = vpack.c.bf16 %v363, %v362
      %v382 = vpack.c.bf16 %v366, %v365
      %v383 = vld [vmem:[%s1] sm:$0x3]
      %v384 = vld [vmem:[%s308 + $0x1] sm:$0xff]
      %v385 = vld [vmem:[%s308 + $0x9] sm:$0xff]
      %v386 = vld [vmem:[%s322 + $0x1] sm:$0xff]
      %v387 = vld [vmem:[%s322 + $0x9] sm:$0xff]
      %v388 = vld [vmem:[%s325 + $0x1] sm:$0xff]
      %v389 = vld [vmem:[%s325 + $0x9] sm:$0xff]
      %v390 = vld [vmem:[%s328 + $0x1] sm:$0xff]
      %v391 = vld [vmem:[%s328 + $0x9] sm:$0xff]
      %v392 = vld [vmem:[%s331 + $0x1] sm:$0xff]
      %v393 = vld [vmem:[%s331 + $0x9] sm:$0xff]
      %v394 = vld [vmem:[%s334 + $0x1] sm:$0xff]
      %v395 = vld [vmem:[%s334 + $0x9] sm:$0xff]
      %v396 = vld [vmem:[%s337 + $0x1] sm:$0xff]
      %v397 = vld [vmem:[%s337 + $0x9] sm:$0xff]
      %v398 = vld [vmem:[%s340 + $0x1] sm:$0xff]
      %v399 = vld [vmem:[%s340 + $0x9] sm:$0xff]
      %v400 = vld [vmem:[%s343 + $0x1] sm:$0xff]
      %v401 = vld [vmem:[%s343 + $0x9] sm:$0xff]
      %v402 = vld [vmem:[%s346 + $0x1] sm:$0xff]
      %v403 = vld [vmem:[%s346 + $0x9] sm:$0xff]
      %v404 = vld [vmem:[%s349 + $0x1] sm:$0xff]
      %v405 = vld [vmem:[%s349 + $0x9] sm:$0xff]
      %v406 = vld [vmem:[%s352 + $0x1] sm:$0xff]
      %v407 = vld [vmem:[%s352 + $0x9] sm:$0xff]
      %v408 = vld [vmem:[%s355 + $0x1] sm:$0xff]
      %v409 = vld [vmem:[%s355 + $0x9] sm:$0xff]
      %v410 = vld [vmem:[%s358 + $0x1] sm:$0xff]
      %v411 = vld [vmem:[%s358 + $0x9] sm:$0xff]
      %v412 = vld [vmem:[%s361 + $0x1] sm:$0xff]
      %v413 = vld [vmem:[%s361 + $0x9] sm:$0xff]
      %v414 = vld [vmem:[%s364 + $0x1] sm:$0xff]
      %v415 = vld [vmem:[%s364 + $0x9] sm:$0xff]
      %v416 = vpack.c.bf16 %v385, %v384
      %v417 = vpack.c.bf16 %v387, %v386
      %v418 = vpack.c.bf16 %v389, %v388
      %v419 = vpack.c.bf16 %v391, %v390
      %v420 = vpack.c.bf16 %v393, %v392
      %v421 = vpack.c.bf16 %v395, %v394
      %v422 = vpack.c.bf16 %v397, %v396
      %v423 = vpack.c.bf16 %v399, %v398
      %v424 = vpack.c.bf16 %v401, %v400
      %v425 = vpack.c.bf16 %v403, %v402
      %v426 = vpack.c.bf16 %v405, %v404
      %v427 = vpack.c.bf16 %v407, %v406
      %v428 = vpack.c.bf16 %v409, %v408
      %v429 = vpack.c.bf16 %v411, %v410
      %v430 = vpack.c.bf16 %v413, %v412
      %v431 = vpack.c.bf16 %v415, %v414
      %s432 = scalar_lea.vmem %s1, 2
      %v433 = vld [vmem:[%s432] sm:$0x3]
      %vm434 = vcmask 23552
      %v436 = vsel %vm434, %v416, 0
      %v439 = vsel %vm434, %v417, 0
      %v442 = vsel %vm434, %v418, 0
      %v445 = vsel %vm434, %v419, 0
      %v448 = vsel %vm434, %v420, 0
      %v451 = vsel %vm434, %v421, 0
      %v454 = vsel %vm434, %v422, 0
      %v457 = vsel %vm434, %v423, 0
      %v460 = vsel %vm434, %v424, 0
      %v463 = vsel %vm434, %v425, 0
      %v466 = vsel %vm434, %v426, 0
      %v469 = vsel %vm434, %v427, 0
      %v472 = vsel %vm434, %v428, 0
      %v475 = vsel %vm434, %v429, 0
      %v478 = vsel %vm434, %v430, 0
      %v481 = vsel %vm434, %v431, 0
      %vm483 = vcmask 1040384
      %vm484 = vcmask 1041408
      %v485 = vsel %vm483, 4294967295, 65535
      %v486 = vsel %vm484, %v485, 0
      %v488 = vand.u32 %v433, %v486
      %490 = vmatprep.subr.bf16.mxu0 0
      %491 = vmatpush1.bf16.msra.mxu0 %v488
      %492 = vmatprep.subr.bf16.mxu0 0
      %493 = vmatpush1.bf16.msra.mxu0 0
      %494 = vmatprep.subr.bf16.mxu0 0
      %495 = vmatpush1.bf16.msra.mxu0 0
      %496 = vmatprep.subr.bf16.mxu0 0
      %497 = vmatpush1.bf16.msra.mxu0 0
      %498 = vmatprep.subr.bf16.mxu0 0
      %499 = vmatpush1.bf16.msra.mxu0 0
      %500 = vmatprep.subr.bf16.mxu0 0
      %501 = vmatpush1.bf16.msra.mxu0 0
      %502 = vmatprep.subr.bf16.mxu0 0
      %503 = vmatpush1.bf16.msra.mxu0 0
      %504 = vmatprep.subr.bf16.mxu0 0
      %505 = vmatpush1.bf16.msra.mxu0 0
      %506 = vmatprep.subr.bf16.mxu0 0
      %507 = vmatpush1.bf16.msra.mxu0 0
      %508 = vmatprep.subr.bf16.mxu0 0
      %509 = vmatpush1.bf16.msra.mxu0 0
      %510 = vmatprep.subr.bf16.mxu0 0
      %511 = vmatpush1.bf16.msra.mxu0 0
      %512 = vmatprep.subr.bf16.mxu0 0
      %513 = vmatpush1.bf16.msra.mxu0 0
      %514 = vmatprep.subr.bf16.mxu0 0
      %515 = vmatpush1.bf16.msra.mxu0 0
      %516 = vmatprep.subr.bf16.mxu0 0
      %517 = vmatpush1.bf16.msra.mxu0 0
      %518 = vmatprep.subr.bf16.mxu0 0
      %519 = vmatpush1.bf16.msra.mxu0 0
      %520 = vmatprep.subr.bf16.mxu0 0
      %521 = vmatpush1.bf16.msra.mxu0 0
      %522 = vmatprep.mubr.bf16.mxu0 0
      %523 = vmatmul.mubr.bf16.gmra.mrb[0].mxu0 %v436
      %v524 = vpop.f32.mrb[0].mxu0
      %v525 = vadd.f32 0.0, %v524
      %v526 = vpop.f32.mrb[0].mxu0
      %v527 = vpop.f32.mrb[0].mxu0
      %v528 = vadd.f32 0.0, %v527
      %v529 = vpop.f32.mrb[0].mxu0
      %530 = vmatprep.mubr.bf16.mxu0 0
      %531 = vmatmul.mubr.bf16.gmra.mrb[0].mxu0 %v439
      %v532 = vpop.f32.mrb[0].mxu0
      %v533 = vadd.f32 0.0, %v532
      %v534 = vpop.f32.mrb[0].mxu0
      %v535 = vpop.f32.mrb[0].mxu0
      %v536 = vadd.f32 0.0, %v535
      %v537 = vpop.f32.mrb[0].mxu0
      %538 = vmatprep.mubr.bf16.mxu0 0
      %539 = vmatmul.mubr.bf16.gmra.mrb[0].mxu0 %v442
      %v540 = vpop.f32.mrb[0].mxu0
      %v541 = vadd.f32 0.0, %v540
      %v542 = vpop.f32.mrb[0].mxu0
      %v543 = vpop.f32.mrb[0].mxu0
      %v544 = vadd.f32 0.0, %v543
      %v545 = vpop.f32.mrb[0].mxu0
      %546 = vmatprep.mubr.bf16.mxu0 0
      %547 = vmatmul.mubr.bf16.gmra.mrb[0].mxu0 %v445
      %v548 = vpop.f32.mrb[0].mxu0
      %v549 = vadd.f32 0.0, %v548
      %v550 = vpop.f32.mrb[0].mxu0
      %v551 = vpop.f32.mrb[0].mxu0
      %v552 = vadd.f32 0.0, %v551
      %v553 = vpop.f32.mrb[0].mxu0
      %554 = vmatprep.mubr.bf16.mxu0 0
      %555 = vmatmul.mubr.bf16.gmra.mrb[0].mxu0 %v448
      %v556 = vpop.f32.mrb[0].mxu0
      %v557 = vadd.f32 0.0, %v556
      %v558 = vpop.f32.mrb[0].mxu0
      %v559 = vpop.f32.mrb[0].mxu0
      %v560 = vadd.f32 0.0, %v559
      %v561 = vpop.f32.mrb[0].mxu0
      %562 = vmatprep.mubr.bf16.mxu0 0
      %563 = vmatmul.mubr.bf16.gmra.mrb[0].mxu0 %v451
      %v564 = vpop.f32.mrb[0].mxu0
      %v565 = vadd.f32 0.0, %v564
      %v566 = vpop.f32.mrb[0].mxu0
      %v567 = vpop.f32.mrb[0].mxu0
      %v568 = vadd.f32 0.0, %v567
      %v569 = vpop.f32.mrb[0].mxu0
      %570 = vmatprep.mubr.bf16.mxu0 0
      %571 = vmatmul.mubr.bf16.gmra.mrb[0].mxu0 %v454
      %v572 = vpop.f32.mrb[0].mxu0
      %v573 = vadd.f32 0.0, %v572
      %v574 = vpop.f32.mrb[0].mxu0
      %v575 = vpop.f32.mrb[0].mxu0
      %v576 = vadd.f32 0.0, %v575
      %v577 = vpop.f32.mrb[0].mxu0
      %578 = vmatprep.mubr.bf16.mxu0 0
      %579 = vmatmul.mubr.bf16.gmra.mrb[0].mxu0 %v457
      %v580 = vpop.f32.mrb[0].mxu0
      %v581 = vadd.f32 0.0, %v580
      %v582 = vpop.f32.mrb[0].mxu0
      %v583 = vpop.f32.mrb[0].mxu0
      %v584 = vadd.f32 0.0, %v583
      %v585 = vpop.f32.mrb[0].mxu0
      %586 = vmatprep.mubr.bf16.mxu0 0
      %587 = vmatmul.mubr.bf16.gmra.mrb[0].mxu0 %v460
      %v588 = vpop.f32.mrb[0].mxu0
      %v589 = vadd.f32 0.0, %v588
      %v590 = vpop.f32.mrb[0].mxu0
      %v591 = vpop.f32.mrb[0].mxu0
      %v592 = vadd.f32 0.0, %v591
      %v593 = vpop.f32.mrb[0].mxu0
      %594 = vmatprep.mubr.bf16.mxu0 0
      %595 = vmatmul.mubr.bf16.gmra.mrb[0].mxu0 %v463
      %v596 = vpop.f32.mrb[0].mxu0
      %v597 = vadd.f32 0.0, %v596
      %v598 = vpop.f32.mrb[0].mxu0
      %v599 = vpop.f32.mrb[0].mxu0
      %v600 = vadd.f32 0.0, %v599
      %v601 = vpop.f32.mrb[0].mxu0
      %602 = vmatprep.mubr.bf16.mxu0 0
      %603 = vmatmul.mubr.bf16.gmra.mrb[0].mxu0 %v466
      %v604 = vpop.f32.mrb[0].mxu0
      %v605 = vadd.f32 0.0, %v604
      %v606 = vpop.f32.mrb[0].mxu0
      %v607 = vpop.f32.mrb[0].mxu0
      %v608 = vadd.f32 0.0, %v607
      %v609 = vpop.f32.mrb[0].mxu0
      %610 = vmatprep.mubr.bf16.mxu0 0
      %611 = vmatmul.mubr.bf16.gmra.mrb[0].mxu0 %v469
      %v612 = vpop.f32.mrb[0].mxu0
      %v613 = vadd.f32 0.0, %v612
      %v614 = vpop.f32.mrb[0].mxu0
      %v615 = vpop.f32.mrb[0].mxu0
      %v616 = vadd.f32 0.0, %v615
      %v617 = vpop.f32.mrb[0].mxu0
      %618 = vmatprep.mubr.bf16.mxu0 0
      %619 = vmatmul.mubr.bf16.gmra.mrb[0].mxu0 %v472
      %v620 = vpop.f32.mrb[0].mxu0
      %v621 = vadd.f32 0.0, %v620
      %v622 = vpop.f32.mrb[0].mxu0
      %v623 = vpop.f32.mrb[0].mxu0
      %v624 = vadd.f32 0.0, %v623
      %v625 = vpop.f32.mrb[0].mxu0
      %626 = vmatprep.mubr.bf16.mxu0 0
      %627 = vmatmul.mubr.bf16.gmra.mrb[0].mxu0 %v475
      %v628 = vpop.f32.mrb[0].mxu0
      %v629 = vadd.f32 0.0, %v628
      %v630 = vpop.f32.mrb[0].mxu0
      %v631 = vpop.f32.mrb[0].mxu0
      %v632 = vadd.f32 0.0, %v631
      %v633 = vpop.f32.mrb[0].mxu0
      %634 = vmatprep.mubr.bf16.mxu0 0
      %635 = vmatmul.mubr.bf16.gmra.mrb[0].mxu0 %v478
      %v636 = vpop.f32.mrb[0].mxu0
      %v637 = vadd.f32 0.0, %v636
      %v638 = vpop.f32.mrb[0].mxu0
      %v639 = vpop.f32.mrb[0].mxu0
      %v640 = vadd.f32 0.0, %v639
      %v641 = vpop.f32.mrb[0].mxu0
      %642 = vmatprep.mubr.bf16.mxu0 0
      %643 = vmatmul.mubr.bf16.gmra.mrb[0].mxu0 %v481
      %v644 = vpop.f32.mrb[0].mxu0
      %v645 = vadd.f32 0.0, %v644
      %v646 = vpop.f32.mrb[0].mxu0
      %v647 = vpop.f32.mrb[0].mxu0
      %v648 = vadd.f32 0.0, %v647
      %v649 = vpop.f32.mrb[0].mxu0
      %650 = vdwg.mxu0
      %v652 = vsel %vm434, %v367, 0
      %v655 = vsel %vm434, %v368, 0
      %v658 = vsel %vm434, %v369, 0
      %v661 = vsel %vm434, %v370, 0
      %v664 = vsel %vm434, %v371, 0
      %v667 = vsel %vm434, %v372, 0
      %v670 = vsel %vm434, %v373, 0
      %v673 = vsel %vm434, %v374, 0
      %v676 = vsel %vm434, %v375, 0
      %v679 = vsel %vm434, %v376, 0
      %v682 = vsel %vm434, %v377, 0
      %v685 = vsel %vm434, %v378, 0
      %v688 = vsel %vm434, %v379, 0
      %v691 = vsel %vm434, %v380, 0
      %v694 = vsel %vm434, %v381, 0
      %v697 = vsel %vm434, %v382, 0
      %v700 = vand.u32 %v383, %v486
      %702 = vmatprep.subr.bf16.mxu0 0
      %703 = vmatpush1.bf16.msra.mxu0 %v700
      %704 = vmatprep.subr.bf16.mxu0 0
      %705 = vmatpush1.bf16.msra.mxu0 0
      %706 = vmatprep.subr.bf16.mxu0 0
      %707 = vmatpush1.bf16.msra.mxu0 0
      %708 = vmatprep.subr.bf16.mxu0 0
      %709 = vmatpush1.bf16.msra.mxu0 0
      %710 = vmatprep.subr.bf16.mxu0 0
      %711 = vmatpush1.bf16.msra.mxu0 0
      %712 = vmatprep.subr.bf16.mxu0 0
      %713 = vmatpush1.bf16.msra.mxu0 0
      %714 = vmatprep.subr.bf16.mxu0 0
      %715 = vmatpush1.bf16.msra.mxu0 0
      %716 = vmatprep.subr.bf16.mxu0 0
      %717 = vmatpush1.bf16.msra.mxu0 0
      %718 = vmatprep.subr.bf16.mxu0 0
      %719 = vmatpush1.bf16.msra.mxu0 0
      %720 = vmatprep.subr.bf16.mxu0 0
      %721 = vmatpush1.bf16.msra.mxu0 0
      %722 = vmatprep.subr.bf16.mxu0 0
      %723 = vmatpush1.bf16.msra.mxu0 0
      %724 = vmatprep.subr.bf16.mxu0 0
      %725 = vmatpush1.bf16.msra.mxu0 0
      %726 = vmatprep.subr.bf16.mxu0 0
      %727 = vmatpush1.bf16.msra.mxu0 0
      %728 = vmatprep.subr.bf16.mxu0 0
      %729 = vmatpush1.bf16.msra.mxu0 0
      %730 = vmatprep.subr.bf16.mxu0 0
      %731 = vmatpush1.bf16.msra.mxu0 0
      %732 = vmatprep.subr.bf16.mxu0 0
      %733 = vmatpush1.bf16.msra.mxu0 0
      %734 = vmatprep.mubr.bf16.mxu0 0
      %735 = vmatmul.mubr.bf16.gmra.mrb[0].mxu0 %v652
      %v736 = vpop.f32.mrb[0].mxu0
      %v737 = vadd.f32 %v525, %v736
      %v738 = vpop.f32.mrb[0].mxu0
      %v739 = vpop.f32.mrb[0].mxu0
      %v740 = vadd.f32 %v528, %v739
      %v741 = vpop.f32.mrb[0].mxu0
      %742 = vmatprep.mubr.bf16.mxu0 0
      %743 = vmatmul.mubr.bf16.gmra.mrb[0].mxu0 %v655
      %v744 = vpop.f32.mrb[0].mxu0
      %v745 = vadd.f32 %v533, %v744
      %v746 = vpop.f32.mrb[0].mxu0
      %v747 = vpop.f32.mrb[0].mxu0
      %v748 = vadd.f32 %v536, %v747
      %v749 = vpop.f32.mrb[0].mxu0
      %750 = vmatprep.mubr.bf16.mxu0 0
      %751 = vmatmul.mubr.bf16.gmra.mrb[0].mxu0 %v658
      %v752 = vpop.f32.mrb[0].mxu0
      %v753 = vadd.f32 %v541, %v752
      %v754 = vpop.f32.mrb[0].mxu0
      %v755 = vpop.f32.mrb[0].mxu0
      %v756 = vadd.f32 %v544, %v755
      %v757 = vpop.f32.mrb[0].mxu0
      %758 = vmatprep.mubr.bf16.mxu0 0
      %759 = vmatmul.mubr.bf16.gmra.mrb[0].mxu0 %v661
      %v760 = vpop.f32.mrb[0].mxu0
      %v761 = vadd.f32 %v549, %v760
      %v762 = vpop.f32.mrb[0].mxu0
      %v763 = vpop.f32.mrb[0].mxu0
      %v764 = vadd.f32 %v552, %v763
      %v765 = vpop.f32.mrb[0].mxu0
      %766 = vmatprep.mubr.bf16.mxu0 0
      %767 = vmatmul.mubr.bf16.gmra.mrb[0].mxu0 %v664
      %v768 = vpop.f32.mrb[0].mxu0
      %v769 = vadd.f32 %v557, %v768
      %v770 = vpop.f32.mrb[0].mxu0
      %v771 = vpop.f32.mrb[0].mxu0
      %v772 = vadd.f32 %v560, %v771
      %v773 = vpop.f32.mrb[0].mxu0
      %774 = vmatprep.mubr.bf16.mxu0 0
      %775 = vmatmul.mubr.bf16.gmra.mrb[0].mxu0 %v667
      %v776 = vpop.f32.mrb[0].mxu0
      %v777 = vadd.f32 %v565, %v776
      %v778 = vpop.f32.mrb[0].mxu0
      %v779 = vpop.f32.mrb[0].mxu0
      %v780 = vadd.f32 %v568, %v779
      %v781 = vpop.f32.mrb[0].mxu0
      %782 = vmatprep.mubr.bf16.mxu0 0
      %783 = vmatmul.mubr.bf16.gmra.mrb[0].mxu0 %v670
      %v784 = vpop.f32.mrb[0].mxu0
      %v785 = vadd.f32 %v573, %v784
      %v786 = vpop.f32.mrb[0].mxu0
      %v787 = vpop.f32.mrb[0].mxu0
      %v788 = vadd.f32 %v576, %v787
      %v789 = vpop.f32.mrb[0].mxu0
      %790 = vmatprep.mubr.bf16.mxu0 0
      %791 = vmatmul.mubr.bf16.gmra.mrb[0].mxu0 %v673
      %v792 = vpop.f32.mrb[0].mxu0
      %v793 = vadd.f32 %v581, %v792
      %v794 = vpop.f32.mrb[0].mxu0
      %v795 = vpop.f32.mrb[0].mxu0
      %v796 = vadd.f32 %v584, %v795
      %v797 = vpop.f32.mrb[0].mxu0
      %798 = vmatprep.mubr.bf16.mxu0 0
      %799 = vmatmul.mubr.bf16.gmra.mrb[0].mxu0 %v676
      %v800 = vpop.f32.mrb[0].mxu0
      %v801 = vadd.f32 %v589, %v800
      %v802 = vpop.f32.mrb[0].mxu0
      %v803 = vpop.f32.mrb[0].mxu0
      %v804 = vadd.f32 %v592, %v803
      %v805 = vpop.f32.mrb[0].mxu0
      %806 = vmatprep.mubr.bf16.mxu0 0
      %807 = vmatmul.mubr.bf16.gmra.mrb[0].mxu0 %v679
      %v808 = vpop.f32.mrb[0].mxu0
      %v809 = vadd.f32 %v597, %v808
      %v810 = vpop.f32.mrb[0].mxu0
      %v811 = vpop.f32.mrb[0].mxu0
      %v812 = vadd.f32 %v600, %v811
      %v813 = vpop.f32.mrb[0].mxu0
      %814 = vmatprep.mubr.bf16.mxu0 0
      %815 = vmatmul.mubr.bf16.gmra.mrb[0].mxu0 %v682
      %v816 = vpop.f32.mrb[0].mxu0
      %v817 = vadd.f32 %v605, %v816
      %v818 = vpop.f32.mrb[0].mxu0
      %v819 = vpop.f32.mrb[0].mxu0
      %v820 = vadd.f32 %v608, %v819
      %v821 = vpop.f32.mrb[0].mxu0
      %822 = vmatprep.mubr.bf16.mxu0 0
      %823 = vmatmul.mubr.bf16.gmra.mrb[0].mxu0 %v685
      %v824 = vpop.f32.mrb[0].mxu0
      %v825 = vadd.f32 %v613, %v824
      %v826 = vpop.f32.mrb[0].mxu0
      %v827 = vpop.f32.mrb[0].mxu0
      %v828 = vadd.f32 %v616, %v827
      %v829 = vpop.f32.mrb[0].mxu0
      %830 = vmatprep.mubr.bf16.mxu0 0
      %831 = vmatmul.mubr.bf16.gmra.mrb[0].mxu0 %v688
      %v832 = vpop.f32.mrb[0].mxu0
      %v833 = vadd.f32 %v621, %v832
      %v834 = vpop.f32.mrb[0].mxu0
      %v835 = vpop.f32.mrb[0].mxu0
      %v836 = vadd.f32 %v624, %v835
      %v837 = vpop.f32.mrb[0].mxu0
      %838 = vmatprep.mubr.bf16.mxu0 0
      %839 = vmatmul.mubr.bf16.gmra.mrb[0].mxu0 %v691
      %v840 = vpop.f32.mrb[0].mxu0
      %v841 = vadd.f32 %v629, %v840
      %v842 = vpop.f32.mrb[0].mxu0
      %v843 = vpop.f32.mrb[0].mxu0
      %v844 = vadd.f32 %v632, %v843
      %v845 = vpop.f32.mrb[0].mxu0
      %846 = vmatprep.mubr.bf16.mxu0 0
      %847 = vmatmul.mubr.bf16.gmra.mrb[0].mxu0 %v694
      %v848 = vpop.f32.mrb[0].mxu0
      %v849 = vadd.f32 %v637, %v848
      %v850 = vpop.f32.mrb[0].mxu0
      %v851 = vpop.f32.mrb[0].mxu0
      %v852 = vadd.f32 %v640, %v851
      %v853 = vpop.f32.mrb[0].mxu0
      %854 = vmatprep.mubr.bf16.mxu0 0
      %855 = vmatmul.mubr.bf16.gmra.mrb[0].mxu0 %v697
      %v856 = vpop.f32.mrb[0].mxu0
      %v857 = vadd.f32 %v645, %v856
      %v858 = vpop.f32.mrb[0].mxu0
      %v859 = vpop.f32.mrb[0].mxu0
      %v860 = vadd.f32 %v648, %v859
      %v861 = vpop.f32.mrb[0].mxu0
      %862 = vdwg.mxu0
      %v863 = vld [vmem:[%s308 + $0x2] sm:$0xff]
      %v864 = vld [vmem:[%s308 + $0xa] sm:$0xff]
      %v865 = vld [vmem:[%s322 + $0x2] sm:$0xff]
      %v866 = vld [vmem:[%s322 + $0xa] sm:$0xff]
      %v867 = vld [vmem:[%s325 + $0x2] sm:$0xff]
      %v868 = vld [vmem:[%s325 + $0xa] sm:$0xff]
      %v869 = vld [vmem:[%s328 + $0x2] sm:$0xff]
      %v870 = vld [vmem:[%s328 + $0xa] sm:$0xff]
      %v871 = vld [vmem:[%s331 + $0x2] sm:$0xff]
      %v872 = vld [vmem:[%s331 + $0xa] sm:$0xff]
      %v873 = vld [vmem:[%s334 + $0x2] sm:$0xff]
      %v874 = vld [vmem:[%s334 + $0xa] sm:$0xff]
      %v875 = vld [vmem:[%s337 + $0x2] sm:$0xff]
      %v876 = vld [vmem:[%s337 + $0xa] sm:$0xff]
      %v877 = vld [vmem:[%s340 + $0x2] sm:$0xff]
      %v878 = vld [vmem:[%s340 + $0xa] sm:$0xff]
      %v879 = vld [vmem:[%s343 + $0x2] sm:$0xff]
      %v880 = vld [vmem:[%s343 + $0xa] sm:$0xff]
      %v881 = vld [vmem:[%s346 + $0x2] sm:$0xff]
      %v882 = vld [vmem:[%s346 + $0xa] sm:$0xff]
      %v883 = vld [vmem:[%s349 + $0x2] sm:$0xff]
      %v884 = vld [vmem:[%s349 + $0xa] sm:$0xff]
      %v885 = vld [vmem:[%s352 + $0x2] sm:$0xff]
      %v886 = vld [vmem:[%s352 + $0xa] sm:$0xff]
      %v887 = vld [vmem:[%s355 + $0x2] sm:$0xff]
      %v888 = vld [vmem:[%s355 + $0xa] sm:$0xff]
      %v889 = vld [vmem:[%s358 + $0x2] sm:$0xff]
      %v890 = vld [vmem:[%s358 + $0xa] sm:$0xff]
      %v891 = vld [vmem:[%s361 + $0x2] sm:$0xff]
      %v892 = vld [vmem:[%s361 + $0xa] sm:$0xff]
      %v893 = vld [vmem:[%s364 + $0x2] sm:$0xff]
      %v894 = vld [vmem:[%s364 + $0xa] sm:$0xff]
      %v895 = vpack.c.bf16 %v864, %v863
      %v896 = vpack.c.bf16 %v866, %v865
      %v897 = vpack.c.bf16 %v868, %v867
      %v898 = vpack.c.bf16 %v870, %v869
      %v899 = vpack.c.bf16 %v872, %v871
      %v900 = vpack.c.bf16 %v874, %v873
      %v901 = vpack.c.bf16 %v876, %v875
      %v902 = vpack.c.bf16 %v878, %v877
      %v903 = vpack.c.bf16 %v880, %v879
      %v904 = vpack.c.bf16 %v882, %v881
      %v905 = vpack.c.bf16 %v884, %v883
      %v906 = vpack.c.bf16 %v886, %v885
      %v907 = vpack.c.bf16 %v888, %v887
      %v908 = vpack.c.bf16 %v890, %v889
      %v909 = vpack.c.bf16 %v892, %v891
      %v910 = vpack.c.bf16 %v894, %v893
      %s911 = scalar_lea.vmem %s1, 4
      %v912 = vld [vmem:[%s911] sm:$0x3]
      %v914 = vsel %vm434, %v895, 0
      %v917 = vsel %vm434, %v896, 0
      %v920 = vsel %vm434, %v897, 0
      %v923 = vsel %vm434, %v898, 0
      %v926 = vsel %vm434, %v899, 0
      %v929 = vsel %vm434, %v900, 0
      %v932 = vsel %vm434, %v901, 0
      %v935 = vsel %vm434, %v902, 0
      %v938 = vsel %vm434, %v903, 0
      %v941 = vsel %vm434, %v904, 0
      %v944 = vsel %vm434, %v905, 0
      %v947 = vsel %vm434, %v906, 0
      %v950 = vsel %vm434, %v907, 0
      %v953 = vsel %vm434, %v908, 0
      %v956 = vsel %vm434, %v909, 0
      %v959 = vsel %vm434, %v910, 0
      %v962 = vand.u32 %v912, %v486
      %964 = vmatprep.subr.bf16.mxu0 0
      %965 = vmatpush1.bf16.msra.mxu0 %v962
      %966 = vmatprep.subr.bf16.mxu0 0
      %967 = vmatpush1.bf16.msra.mxu0 0
      %968 = vmatprep.subr.bf16.mxu0 0
      %969 = vmatpush1.bf16.msra.mxu0 0
      %970 = vmatprep.subr.bf16.mxu0 0
      %971 = vmatpush1.bf16.msra.mxu0 0
      %972 = vmatprep.subr.bf16.mxu0 0
      %973 = vmatpush1.bf16.msra.mxu0 0
      %974 = vmatprep.subr.bf16.mxu0 0
      %975 = vmatpush1.bf16.msra.mxu0 0
      %976 = vmatprep.subr.bf16.mxu0 0
      %977 = vmatpush1.bf16.msra.mxu0 0
      %978 = vmatprep.subr.bf16.mxu0 0
      %979 = vmatpush1.bf16.msra.mxu0 0
      %980 = vmatprep.subr.bf16.mxu0 0
      %981 = vmatpush1.bf16.msra.mxu0 0
      %982 = vmatprep.subr.bf16.mxu0 0
      %983 = vmatpush1.bf16.msra.mxu0 0
      %984 = vmatprep.subr.bf16.mxu0 0
      %985 = vmatpush1.bf16.msra.mxu0 0
      %986 = vmatprep.subr.bf16.mxu0 0
      %987 = vmatpush1.bf16.msra.mxu0 0
      %988 = vmatprep.subr.bf16.mxu0 0
      %989 = vmatpush1.bf16.msra.mxu0 0
      %990 = vmatprep.subr.bf16.mxu0 0
      %991 = vmatpush1.bf16.msra.mxu0 0
      %992 = vmatprep.subr.bf16.mxu0 0
      %993 = vmatpush1.bf16.msra.mxu0 0
      %994 = vmatprep.subr.bf16.mxu0 0
      %995 = vmatpush1.bf16.msra.mxu0 0
      %996 = vmatprep.mubr.bf16.mxu0 0
      %997 = vmatmul.mubr.bf16.gmra.mrb[0].mxu0 %v914
      %v998 = vpop.f32.mrb[0].mxu0
      %v999 = vadd.f32 0.0, %v998
      %v1000 = vpop.f32.mrb[0].mxu0
      %v1001 = vpop.f32.mrb[0].mxu0
      %v1002 = vadd.f32 0.0, %v1001
      %v1003 = vpop.f32.mrb[0].mxu0
      %1004 = vmatprep.mubr.bf16.mxu0 0
      %1005 = vmatmul.mubr.bf16.gmra.mrb[0].mxu0 %v917
      %v1006 = vpop.f32.mrb[0].mxu0
      %v1007 = vadd.f32 0.0, %v1006
      %v1008 = vpop.f32.mrb[0].mxu0
      %v1009 = vpop.f32.mrb[0].mxu0
      %v1010 = vadd.f32 0.0, %v1009
      %v1011 = vpop.f32.mrb[0].mxu0
      %1012 = vmatprep.mubr.bf16.mxu0 0
      %1013 = vmatmul.mubr.bf16.gmra.mrb[0].mxu0 %v920
      %v1014 = vpop.f32.mrb[0].mxu0
      %v1015 = vadd.f32 0.0, %v1014
      %v1016 = vpop.f32.mrb[0].mxu0
      %v1017 = vpop.f32.mrb[0].mxu0
      %v1018 = vadd.f32 0.0, %v1017
      %v1019 = vpop.f32.mrb[0].mxu0
      %1020 = vmatprep.mubr.bf16.mxu0 0
      %1021 = vmatmul.mubr.bf16.gmra.mrb[0].mxu0 %v923
      %v1022 = vpop.f32.mrb[0].mxu0
      %v1023 = vadd.f32 0.0, %v1022
      %v1024 = vpop.f32.mrb[0].mxu0
      %v1025 = vpop.f32.mrb[0].mxu0
      %v1026 = vadd.f32 0.0, %v1025
      %v1027 = vpop.f32.mrb[0].mxu0
      %1028 = vmatprep.mubr.bf16.mxu0 0
      %1029 = vmatmul.mubr.bf16.gmra.mrb[0].mxu0 %v926
      %v1030 = vpop.f32.mrb[0].mxu0
      %v1031 = vadd.f32 0.0, %v1030
      %v1032 = vpop.f32.mrb[0].mxu0
      %v1033 = vpop.f32.mrb[0].mxu0
      %v1034 = vadd.f32 0.0, %v1033
      %v1035 = vpop.f32.mrb[0].mxu0
      %1036 = vmatprep.mubr.bf16.mxu0 0
      %1037 = vmatmul.mubr.bf16.gmra.mrb[0].mxu0 %v929
      %v1038 = vpop.f32.mrb[0].mxu0
      %v1039 = vadd.f32 0.0, %v1038
      %v1040 = vpop.f32.mrb[0].mxu0
      %v1041 = vpop.f32.mrb[0].mxu0
      %v1042 = vadd.f32 0.0, %v1041
      %v1043 = vpop.f32.mrb[0].mxu0
      %1044 = vmatprep.mubr.bf16.mxu0 0
      %1045 = vmatmul.mubr.bf16.gmra.mrb[0].mxu0 %v932
      %v1046 = vpop.f32.mrb[0].mxu0
      %v1047 = vadd.f32 0.0, %v1046
      %v1048 = vpop.f32.mrb[0].mxu0
      %v1049 = vpop.f32.mrb[0].mxu0
      %v1050 = vadd.f32 0.0, %v1049
      %v1051 = vpop.f32.mrb[0].mxu0
      %1052 = vmatprep.mubr.bf16.mxu0 0
      %1053 = vmatmul.mubr.bf16.gmra.mrb[0].mxu0 %v935
      %v1054 = vpop.f32.mrb[0].mxu0
      %v1055 = vadd.f32 0.0, %v1054
      %v1056 = vpop.f32.mrb[0].mxu0
      %v1057 = vpop.f32.mrb[0].mxu0
      %v1058 = vadd.f32 0.0, %v1057
      %v1059 = vpop.f32.mrb[0].mxu0
      %1060 = vmatprep.mubr.bf16.mxu0 0
      %1061 = vmatmul.mubr.bf16.gmra.mrb[0].mxu0 %v938
      %v1062 = vpop.f32.mrb[0].mxu0
      %v1063 = vadd.f32 0.0, %v1062
      %v1064 = vpop.f32.mrb[0].mxu0
      %v1065 = vpop.f32.mrb[0].mxu0
      %v1066 = vadd.f32 0.0, %v1065
      %v1067 = vpop.f32.mrb[0].mxu0
      %1068 = vmatprep.mubr.bf16.mxu0 0
      %1069 = vmatmul.mubr.bf16.gmra.mrb[0].mxu0 %v941
      %v1070 = vpop.f32.mrb[0].mxu0
      %v1071 = vadd.f32 0.0, %v1070
      %v1072 = vpop.f32.mrb[0].mxu0
      %v1073 = vpop.f32.mrb[0].mxu0
      %v1074 = vadd.f32 0.0, %v1073
      %v1075 = vpop.f32.mrb[0].mxu0
      %1076 = vmatprep.mubr.bf16.mxu0 0
      %1077 = vmatmul.mubr.bf16.gmra.mrb[0].mxu0 %v944
      %v1078 = vpop.f32.mrb[0].mxu0
      %v1079 = vadd.f32 0.0, %v1078
      %v1080 = vpop.f32.mrb[0].mxu0
      %v1081 = vpop.f32.mrb[0].mxu0
      %v1082 = vadd.f32 0.0, %v1081
      %v1083 = vpop.f32.mrb[0].mxu0
      %1084 = vmatprep.mubr.bf16.mxu0 0
      %1085 = vmatmul.mubr.bf16.gmra.mrb[0].mxu0 %v947
      %v1086 = vpop.f32.mrb[0].mxu0
      %v1087 = vadd.f32 0.0, %v1086
      %v1088 = vpop.f32.mrb[0].mxu0
      %v1089 = vpop.f32.mrb[0].mxu0
      %v1090 = vadd.f32 0.0, %v1089
      %v1091 = vpop.f32.mrb[0].mxu0
      %1092 = vmatprep.mubr.bf16.mxu0 0
      %1093 = vmatmul.mubr.bf16.gmra.mrb[0].mxu0 %v950
      %v1094 = vpop.f32.mrb[0].mxu0
      %v1095 = vadd.f32 0.0, %v1094
      %v1096 = vpop.f32.mrb[0].mxu0
      %v1097 = vpop.f32.mrb[0].mxu0
      %v1098 = vadd.f32 0.0, %v1097
      %v1099 = vpop.f32.mrb[0].mxu0
      %1100 = vmatprep.mubr.bf16.mxu0 0
      %1101 = vmatmul.mubr.bf16.gmra.mrb[0].mxu0 %v953
      %v1102 = vpop.f32.mrb[0].mxu0
      %v1103 = vadd.f32 0.0, %v1102
      %v1104 = vpop.f32.mrb[0].mxu0
      %v1105 = vpop.f32.mrb[0].mxu0
      %v1106 = vadd.f32 0.0, %v1105
      %v1107 = vpop.f32.mrb[0].mxu0
      %1108 = vmatprep.mubr.bf16.mxu0 0
      %1109 = vmatmul.mubr.bf16.gmra.mrb[0].mxu0 %v956
      %v1110 = vpop.f32.mrb[0].mxu0
      %v1111 = vadd.f32 0.0, %v1110
      %v1112 = vpop.f32.mrb[0].mxu0
      %v1113 = vpop.f32.mrb[0].mxu0
      %v1114 = vadd.f32 0.0, %v1113
      %v1115 = vpop.f32.mrb[0].mxu0
      %1116 = vmatprep.mubr.bf16.mxu0 0
      %1117 = vmatmul.mubr.bf16.gmra.mrb[0].mxu0 %v959
      %v1118 = vpop.f32.mrb[0].mxu0
      %v1119 = vadd.f32 0.0, %v1118
      %v1120 = vpop.f32.mrb[0].mxu0
      %v1121 = vpop.f32.mrb[0].mxu0
      %v1122 = vadd.f32 0.0, %v1121
      %v1123 = vpop.f32.mrb[0].mxu0
      %1124 = vdwg.mxu0
      %v1125 = vadd.f32 %v737, %v999
      %v1126 = vadd.f32 %v740, %v1002
      %v1127 = vadd.f32 %v745, %v1007
      %v1128 = vadd.f32 %v748, %v1010
      %v1129 = vadd.f32 %v753, %v1015
      %v1130 = vadd.f32 %v756, %v1018
      %v1131 = vadd.f32 %v761, %v1023
      %v1132 = vadd.f32 %v764, %v1026
      %v1133 = vadd.f32 %v769, %v1031
      %v1134 = vadd.f32 %v772, %v1034
      %v1135 = vadd.f32 %v777, %v1039
      %v1136 = vadd.f32 %v780, %v1042
      %v1137 = vadd.f32 %v785, %v1047
      %v1138 = vadd.f32 %v788, %v1050
      %v1139 = vadd.f32 %v793, %v1055
      %v1140 = vadd.f32 %v796, %v1058
      %v1141 = vadd.f32 %v801, %v1063
      %v1142 = vadd.f32 %v804, %v1066
      %v1143 = vadd.f32 %v809, %v1071
      %v1144 = vadd.f32 %v812, %v1074
      %v1145 = vadd.f32 %v817, %v1079
      %v1146 = vadd.f32 %v820, %v1082
      %v1147 = vadd.f32 %v825, %v1087
      %v1148 = vadd.f32 %v828, %v1090
      %v1149 = vadd.f32 %v833, %v1095
      %v1150 = vadd.f32 %v836, %v1098
      %v1151 = vadd.f32 %v841, %v1103
      %v1152 = vadd.f32 %v844, %v1106
      %v1153 = vadd.f32 %v849, %v1111
      %v1154 = vadd.f32 %v852, %v1114
      %v1155 = vadd.f32 %v857, %v1119
      %v1156 = vadd.f32 %v860, %v1122
      %s1157 = scalar_lea.vmem %s308, 384
      %v1158 = vld [vmem:[%s1157] sm:$0xff]
      %v1159 = vld [vmem:[%s1157 + $0x8] sm:$0xff]
      %v1160 = vpack.c.bf16 %v1159, %v1158
      %s1161 = scalar_lea.vmem %s1, 6
      %v1162 = vld [vmem:[%s1161] sm:$0x3]
      %v1164 = vsel %vm434, %v1160, 0
      %v1167 = vand.u32 %v1162, %v486
      %1169 = vmatprep.subr.bf16.mxu0 0
      %1170 = vmatpush1.bf16.msra.mxu0 %v1167
      %1171 = vmatprep.subr.bf16.mxu0 0
      %1172 = vmatpush1.bf16.msra.mxu0 0
      %1173 = vmatprep.subr.bf16.mxu0 0
      %1174 = vmatpush1.bf16.msra.mxu0 0
      %1175 = vmatprep.subr.bf16.mxu0 0
      %1176 = vmatpush1.bf16.msra.mxu0 0
      %1177 = vmatprep.subr.bf16.mxu0 0
      %1178 = vmatpush1.bf16.msra.mxu0 0
      %1179 = vmatprep.subr.bf16.mxu0 0
      %1180 = vmatpush1.bf16.msra.mxu0 0
      %1181 = vmatprep.subr.bf16.mxu0 0
      %1182 = vmatpush1.bf16.msra.mxu0 0
      %1183 = vmatprep.subr.bf16.mxu0 0
      %1184 = vmatpush1.bf16.msra.mxu0 0
      %1185 = vmatprep.subr.bf16.mxu0 0
      %1186 = vmatpush1.bf16.msra.mxu0 0
      %1187 = vmatprep.subr.bf16.mxu0 0
      %1188 = vmatpush1.bf16.msra.mxu0 0
      %1189 = vmatprep.subr.bf16.mxu0 0
      %1190 = vmatpush1.bf16.msra.mxu0 0
      %1191 = vmatprep.subr.bf16.mxu0 0
      %1192 = vmatpush1.bf16.msra.mxu0 0
      %1193 = vmatprep.subr.bf16.mxu0 0
      %1194 = vmatpush1.bf16.msra.mxu0 0
      %1195 = vmatprep.subr.bf16.mxu0 0
      %1196 = vmatpush1.bf16.msra.mxu0 0
      %1197 = vmatprep.subr.bf16.mxu0 0
      %1198 = vmatpush1.bf16.msra.mxu0 0
      %1199 = vmatprep.subr.bf16.mxu0 0
      %1200 = vmatpush1.bf16.msra.mxu0 0
      %1201 = vmatprep.mubr.bf16.mxu0 0
      %1202 = vmatmul.mubr.bf16.gmra.mrb[0].mxu0 %v655
      %v1203 = vpop.f32.mrb[0].mxu0
      %v1204 = vadd.f32 0.0, %v1203
      %v1205 = vpop.f32.mrb[0].mxu0
      %v1206 = vpop.f32.mrb[0].mxu0
      %v1207 = vadd.f32 0.0, %v1206
      %v1208 = vpop.f32.mrb[0].mxu0
      %1209 = vmatprep.mubr.bf16.mxu0 0
      %1210 = vmatmul.mubr.bf16.gmra.mrb[0].mxu0 %v658
      %v1211 = vpop.f32.mrb[0].mxu0
      %v1212 = vadd.f32 0.0, %v1211
      %v1213 = vpop.f32.mrb[0].mxu0
      %v1214 = vpop.f32.mrb[0].mxu0
      %v1215 = vadd.f32 0.0, %v1214
      %v1216 = vpop.f32.mrb[0].mxu0
      %1217 = vmatprep.mubr.bf16.mxu0 0
      %1218 = vmatmul.mubr.bf16.gmra.mrb[0].mxu0 %v661
      %v1219 = vpop.f32.mrb[0].mxu0
      %v1220 = vadd.f32 0.0, %v1219
      %v1221 = vpop.f32.mrb[0].mxu0
      %v1222 = vpop.f32.mrb[0].mxu0
      %v1223 = vadd.f32 0.0, %v1222
      %v1224 = vpop.f32.mrb[0].mxu0
      %1225 = vmatprep.mubr.bf16.mxu0 0
      %1226 = vmatmul.mubr.bf16.gmra.mrb[0].mxu0 %v664
      %v1227 = vpop.f32.mrb[0].mxu0
      %v1228 = vadd.f32 0.0, %v1227
      %v1229 = vpop.f32.mrb[0].mxu0
      %v1230 = vpop.f32.mrb[0].mxu0
      %v1231 = vadd.f32 0.0, %v1230
      %v1232 = vpop.f32.mrb[0].mxu0
      %1233 = vmatprep.mubr.bf16.mxu0 0
      %1234 = vmatmul.mubr.bf16.gmra.mrb[0].mxu0 %v667
      %v1235 = vpop.f32.mrb[0].mxu0
      %v1236 = vadd.f32 0.0, %v1235
      %v1237 = vpop.f32.mrb[0].mxu0
      %v1238 = vpop.f32.mrb[0].mxu0
      %v1239 = vadd.f32 0.0, %v1238
      %v1240 = vpop.f32.mrb[0].mxu0
      %1241 = vmatprep.mubr.bf16.mxu0 0
      %1242 = vmatmul.mubr.bf16.gmra.mrb[0].mxu0 %v670
      %v1243 = vpop.f32.mrb[0].mxu0
      %v1244 = vadd.f32 0.0, %v1243
      %v1245 = vpop.f32.mrb[0].mxu0
      %v1246 = vpop.f32.mrb[0].mxu0
      %v1247 = vadd.f32 0.0, %v1246
      %v1248 = vpop.f32.mrb[0].mxu0
      %1249 = vmatprep.mubr.bf16.mxu0 0
      %1250 = vmatmul.mubr.bf16.gmra.mrb[0].mxu0 %v673
      %v1251 = vpop.f32.mrb[0].mxu0
      %v1252 = vadd.f32 0.0, %v1251
      %v1253 = vpop.f32.mrb[0].mxu0
      %v1254 = vpop.f32.mrb[0].mxu0
      %v1255 = vadd.f32 0.0, %v1254
      %v1256 = vpop.f32.mrb[0].mxu0
      %1257 = vmatprep.mubr.bf16.mxu0 0
      %1258 = vmatmul.mubr.bf16.gmra.mrb[0].mxu0 %v676
      %v1259 = vpop.f32.mrb[0].mxu0
      %v1260 = vadd.f32 0.0, %v1259
      %v1261 = vpop.f32.mrb[0].mxu0
      %v1262 = vpop.f32.mrb[0].mxu0
      %v1263 = vadd.f32 0.0, %v1262
      %v1264 = vpop.f32.mrb[0].mxu0
      %1265 = vmatprep.mubr.bf16.mxu0 0
      %1266 = vmatmul.mubr.bf16.gmra.mrb[0].mxu0 %v679
      %v1267 = vpop.f32.mrb[0].mxu0
      %v1268 = vadd.f32 0.0, %v1267
      %v1269 = vpop.f32.mrb[0].mxu0
      %v1270 = vpop.f32.mrb[0].mxu0
      %v1271 = vadd.f32 0.0, %v1270
      %v1272 = vpop.f32.mrb[0].mxu0
      %1273 = vmatprep.mubr.bf16.mxu0 0
      %1274 = vmatmul.mubr.bf16.gmra.mrb[0].mxu0 %v682
      %v1275 = vpop.f32.mrb[0].mxu0
      %v1276 = vadd.f32 0.0, %v1275
      %v1277 = vpop.f32.mrb[0].mxu0
      %v1278 = vpop.f32.mrb[0].mxu0
      %v1279 = vadd.f32 0.0, %v1278
      %v1280 = vpop.f32.mrb[0].mxu0
      %1281 = vmatprep.mubr.bf16.mxu0 0
      %1282 = vmatmul.mubr.bf16.gmra.mrb[0].mxu0 %v685
      %v1283 = vpop.f32.mrb[0].mxu0
      %v1284 = vadd.f32 0.0, %v1283
      %v1285 = vpop.f32.mrb[0].mxu0
      %v1286 = vpop.f32.mrb[0].mxu0
      %v1287 = vadd.f32 0.0, %v1286
      %v1288 = vpop.f32.mrb[0].mxu0
      %1289 = vmatprep.mubr.bf16.mxu0 0
      %1290 = vmatmul.mubr.bf16.gmra.mrb[0].mxu0 %v688
      %v1291 = vpop.f32.mrb[0].mxu0
      %v1292 = vadd.f32 0.0, %v1291
      %v1293 = vpop.f32.mrb[0].mxu0
      %v1294 = vpop.f32.mrb[0].mxu0
      %v1295 = vadd.f32 0.0, %v1294
      %v1296 = vpop.f32.mrb[0].mxu0
      %1297 = vmatprep.mubr.bf16.mxu0 0
      %1298 = vmatmul.mubr.bf16.gmra.mrb[0].mxu0 %v691
      %v1299 = vpop.f32.mrb[0].mxu0
      %v1300 = vadd.f32 0.0, %v1299
      %v1301 = vpop.f32.mrb[0].mxu0
      %v1302 = vpop.f32.mrb[0].mxu0
      %v1303 = vadd.f32 0.0, %v1302
      %v1304 = vpop.f32.mrb[0].mxu0
      %1305 = vmatprep.mubr.bf16.mxu0 0
      %1306 = vmatmul.mubr.bf16.gmra.mrb[0].mxu0 %v694
      %v1307 = vpop.f32.mrb[0].mxu0
      %v1308 = vadd.f32 0.0, %v1307
      %v1309 = vpop.f32.mrb[0].mxu0
      %v1310 = vpop.f32.mrb[0].mxu0
      %v1311 = vadd.f32 0.0, %v1310
      %v1312 = vpop.f32.mrb[0].mxu0
      %1313 = vmatprep.mubr.bf16.mxu0 0
      %1314 = vmatmul.mubr.bf16.gmra.mrb[0].mxu0 %v697
      %v1315 = vpop.f32.mrb[0].mxu0
      %v1316 = vadd.f32 0.0, %v1315
      %v1317 = vpop.f32.mrb[0].mxu0
      %v1318 = vpop.f32.mrb[0].mxu0
      %v1319 = vadd.f32 0.0, %v1318
      %v1320 = vpop.f32.mrb[0].mxu0
      %1321 = vmatprep.mubr.bf16.mxu0 0
      %1322 = vmatmul.mubr.bf16.gmra.mrb[0].mxu0 %v1164
      %v1323 = vpop.f32.mrb[0].mxu0
      %v1324 = vadd.f32 0.0, %v1323
      %v1325 = vpop.f32.mrb[0].mxu0
      %v1326 = vpop.f32.mrb[0].mxu0
      %v1327 = vadd.f32 0.0, %v1326
      %v1328 = vpop.f32.mrb[0].mxu0
      %1329 = vdwg.mxu0
      %v1330 = vadd.f32 %v1125, %v1204
      %v1331 = vadd.f32 %v1126, %v1207
      %v1332 = vadd.f32 %v1127, %v1212
      %v1333 = vadd.f32 %v1128, %v1215
      %v1334 = vadd.f32 %v1129, %v1220
      %v1335 = vadd.f32 %v1130, %v1223
      %v1336 = vadd.f32 %v1131, %v1228
      %v1337 = vadd.f32 %v1132, %v1231
      %v1338 = vadd.f32 %v1133, %v1236
      %v1339 = vadd.f32 %v1134, %v1239
      %v1340 = vadd.f32 %v1135, %v1244
      %v1341 = vadd.f32 %v1136, %v1247
      %v1342 = vadd.f32 %v1137, %v1252
      %v1343 = vadd.f32 %v1138, %v1255
      %v1344 = vadd.f32 %v1139, %v1260
      %v1345 = vadd.f32 %v1140, %v1263
      %v1346 = vadd.f32 %v1141, %v1268
      %v1347 = vadd.f32 %v1142, %v1271
      %v1348 = vadd.f32 %v1143, %v1276
      %v1349 = vadd.f32 %v1144, %v1279
      %v1350 = vadd.f32 %v1145, %v1284
      %v1351 = vadd.f32 %v1146, %v1287
      %v1352 = vadd.f32 %v1147, %v1292
      %v1353 = vadd.f32 %v1148, %v1295
      %v1354 = vadd.f32 %v1149, %v1300
      %v1355 = vadd.f32 %v1150, %v1303
      %v1356 = vadd.f32 %v1151, %v1308
      %v1357 = vadd.f32 %v1152, %v1311
      %v1358 = vadd.f32 %v1153, %v1316
      %v1359 = vadd.f32 %v1154, %v1319
      %v1360 = vadd.f32 %v1155, %v1324
      %v1361 = vadd.f32 %v1156, %v1327
      %v1362 = vld [vmem:[%s1157 + $0x1] sm:$0xff]
      %v1363 = vld [vmem:[%s1157 + $0x9] sm:$0xff]
      %v1364 = vpack.c.bf16 %v1363, %v1362
      %s1365 = scalar_lea.vmem %s1, 8
      %v1366 = vld [vmem:[%s1365] sm:$0x3]
      %v1368 = vsel %vm434, %v1364, 0
      %v1371 = vand.u32 %v1366, %v486
      %1373 = vmatprep.subr.bf16.mxu0 0
      %1374 = vmatpush1.bf16.msra.mxu0 %v1371
      %1375 = vmatprep.subr.bf16.mxu0 0
      %1376 = vmatpush1.bf16.msra.mxu0 0
      %1377 = vmatprep.subr.bf16.mxu0 0
      %1378 = vmatpush1.bf16.msra.mxu0 0
      %1379 = vmatprep.subr.bf16.mxu0 0
      %1380 = vmatpush1.bf16.msra.mxu0 0
      %1381 = vmatprep.subr.bf16.mxu0 0
      %1382 = vmatpush1.bf16.msra.mxu0 0
      %1383 = vmatprep.subr.bf16.mxu0 0
      %1384 = vmatpush1.bf16.msra.mxu0 0
      %1385 = vmatprep.subr.bf16.mxu0 0
      %1386 = vmatpush1.bf16.msra.mxu0 0
      %1387 = vmatprep.subr.bf16.mxu0 0
      %1388 = vmatpush1.bf16.msra.mxu0 0
      %1389 = vmatprep.subr.bf16.mxu0 0
      %1390 = vmatpush1.bf16.msra.mxu0 0
      %1391 = vmatprep.subr.bf16.mxu0 0
      %1392 = vmatpush1.bf16.msra.mxu0 0
      %1393 = vmatprep.subr.bf16.mxu0 0
      %1394 = vmatpush1.bf16.msra.mxu0 0
      %1395 = vmatprep.subr.bf16.mxu0 0
      %1396 = vmatpush1.bf16.msra.mxu0 0
      %1397 = vmatprep.subr.bf16.mxu0 0
      %1398 = vmatpush1.bf16.msra.mxu0 0
      %1399 = vmatprep.subr.bf16.mxu0 0
      %1400 = vmatpush1.bf16.msra.mxu0 0
      %1401 = vmatprep.subr.bf16.mxu0 0
      %1402 = vmatpush1.bf16.msra.mxu0 0
      %1403 = vmatprep.subr.bf16.mxu0 0
      %1404 = vmatpush1.bf16.msra.mxu0 0
      %1405 = vmatprep.mubr.bf16.mxu0 0
      %1406 = vmatmul.mubr.bf16.gmra.mrb[0].mxu0 %v439
      %v1407 = vpop.f32.mrb[0].mxu0
      %v1408 = vadd.f32 0.0, %v1407
      %v1409 = vpop.f32.mrb[0].mxu0
      %v1410 = vpop.f32.mrb[0].mxu0
      %v1411 = vadd.f32 0.0, %v1410
      %v1412 = vpop.f32.mrb[0].mxu0
      %1413 = vmatprep.mubr.bf16.mxu0 0
      %1414 = vmatmul.mubr.bf16.gmra.mrb[0].mxu0 %v442
      %v1415 = vpop.f32.mrb[0].mxu0
      %v1416 = vadd.f32 0.0, %v1415
      %v1417 = vpop.f32.mrb[0].mxu0
      %v1418 = vpop.f32.mrb[0].mxu0
      %v1419 = vadd.f32 0.0, %v1418
      %v1420 = vpop.f32.mrb[0].mxu0
      %1421 = vmatprep.mubr.bf16.mxu0 0
      %1422 = vmatmul.mubr.bf16.gmra.mrb[0].mxu0 %v445
      %v1423 = vpop.f32.mrb[0].mxu0
      %v1424 = vadd.f32 0.0, %v1423
      %v1425 = vpop.f32.mrb[0].mxu0
      %v1426 = vpop.f32.mrb[0].mxu0
      %v1427 = vadd.f32 0.0, %v1426
      %v1428 = vpop.f32.mrb[0].mxu0
      %1429 = vmatprep.mubr.bf16.mxu0 0
      %1430 = vmatmul.mubr.bf16.gmra.mrb[0].mxu0 %v448
      %v1431 = vpop.f32.mrb[0].mxu0
      %v1432 = vadd.f32 0.0, %v1431
      %v1433 = vpop.f32.mrb[0].mxu0
      %v1434 = vpop.f32.mrb[0].mxu0
      %v1435 = vadd.f32 0.0, %v1434
      %v1436 = vpop.f32.mrb[0].mxu0
      %1437 = vmatprep.mubr.bf16.mxu0 0
      %1438 = vmatmul.mubr.bf16.gmra.mrb[0].mxu0 %v451
      %v1439 = vpop.f32.mrb[0].mxu0
      %v1440 = vadd.f32 0.0, %v1439
      %v1441 = vpop.f32.mrb[0].mxu0
      %v1442 = vpop.f32.mrb[0].mxu0
      %v1443 = vadd.f32 0.0, %v1442
      %v1444 = vpop.f32.mrb[0].mxu0
      %1445 = vmatprep.mubr.bf16.mxu0 0
      %1446 = vmatmul.mubr.bf16.gmra.mrb[0].mxu0 %v454
      %v1447 = vpop.f32.mrb[0].mxu0
      %v1448 = vadd.f32 0.0, %v1447
      %v1449 = vpop.f32.mrb[0].mxu0
      %v1450 = vpop.f32.mrb[0].mxu0
      %v1451 = vadd.f32 0.0, %v1450
      %v1452 = vpop.f32.mrb[0].mxu0
      %1453 = vmatprep.mubr.bf16.mxu0 0
      %1454 = vmatmul.mubr.bf16.gmra.mrb[0].mxu0 %v457
      %v1455 = vpop.f32.mrb[0].mxu0
      %v1456 = vadd.f32 0.0, %v1455
      %v1457 = vpop.f32.mrb[0].mxu0
      %v1458 = vpop.f32.mrb[0].mxu0
      %v1459 = vadd.f32 0.0, %v1458
      %v1460 = vpop.f32.mrb[0].mxu0
      %1461 = vmatprep.mubr.bf16.mxu0 0
      %1462 = vmatmul.mubr.bf16.gmra.mrb[0].mxu0 %v460
      %v1463 = vpop.f32.mrb[0].mxu0
      %v1464 = vadd.f32 0.0, %v1463
      %v1465 = vpop.f32.mrb[0].mxu0
      %v1466 = vpop.f32.mrb[0].mxu0
      %v1467 = vadd.f32 0.0, %v1466
      %v1468 = vpop.f32.mrb[0].mxu0
      %1469 = vmatprep.mubr.bf16.mxu0 0
      %1470 = vmatmul.mubr.bf16.gmra.mrb[0].mxu0 %v463
      %v1471 = vpop.f32.mrb[0].mxu0
      %v1472 = vadd.f32 0.0, %v1471
      %v1473 = vpop.f32.mrb[0].mxu0
      %v1474 = vpop.f32.mrb[0].mxu0
      %v1475 = vadd.f32 0.0, %v1474
      %v1476 = vpop.f32.mrb[0].mxu0
      %1477 = vmatprep.mubr.bf16.mxu0 0
      %1478 = vmatmul.mubr.bf16.gmra.mrb[0].mxu0 %v466
      %v1479 = vpop.f32.mrb[0].mxu0
      %v1480 = vadd.f32 0.0, %v1479
      %v1481 = vpop.f32.mrb[0].mxu0
      %v1482 = vpop.f32.mrb[0].mxu0
      %v1483 = vadd.f32 0.0, %v1482
      %v1484 = vpop.f32.mrb[0].mxu0
      %1485 = vmatprep.mubr.bf16.mxu0 0
      %1486 = vmatmul.mubr.bf16.gmra.mrb[0].mxu0 %v469
      %v1487 = vpop.f32.mrb[0].mxu0
      %v1488 = vadd.f32 0.0, %v1487
      %v1489 = vpop.f32.mrb[0].mxu0
      %v1490 = vpop.f32.mrb[0].mxu0
      %v1491 = vadd.f32 0.0, %v1490
      %v1492 = vpop.f32.mrb[0].mxu0
      %1493 = vmatprep.mubr.bf16.mxu0 0
      %1494 = vmatmul.mubr.bf16.gmra.mrb[0].mxu0 %v472
      %v1495 = vpop.f32.mrb[0].mxu0
      %v1496 = vadd.f32 0.0, %v1495
      %v1497 = vpop.f32.mrb[0].mxu0
      %v1498 = vpop.f32.mrb[0].mxu0
      %v1499 = vadd.f32 0.0, %v1498
      %v1500 = vpop.f32.mrb[0].mxu0
      %1501 = vmatprep.mubr.bf16.mxu0 0
      %1502 = vmatmul.mubr.bf16.gmra.mrb[0].mxu0 %v475
      %v1503 = vpop.f32.mrb[0].mxu0
      %v1504 = vadd.f32 0.0, %v1503
      %v1505 = vpop.f32.mrb[0].mxu0
      %v1506 = vpop.f32.mrb[0].mxu0
      %v1507 = vadd.f32 0.0, %v1506
      %v1508 = vpop.f32.mrb[0].mxu0
      %1509 = vmatprep.mubr.bf16.mxu0 0
      %1510 = vmatmul.mubr.bf16.gmra.mrb[0].mxu0 %v478
      %v1511 = vpop.f32.mrb[0].mxu0
      %v1512 = vadd.f32 0.0, %v1511
      %v1513 = vpop.f32.mrb[0].mxu0
      %v1514 = vpop.f32.mrb[0].mxu0
      %v1515 = vadd.f32 0.0, %v1514
      %v1516 = vpop.f32.mrb[0].mxu0
      %1517 = vmatprep.mubr.bf16.mxu0 0
      %1518 = vmatmul.mubr.bf16.gmra.mrb[0].mxu0 %v481
      %v1519 = vpop.f32.mrb[0].mxu0
      %v1520 = vadd.f32 0.0, %v1519
      %v1521 = vpop.f32.mrb[0].mxu0
      %v1522 = vpop.f32.mrb[0].mxu0
      %v1523 = vadd.f32 0.0, %v1522
      %v1524 = vpop.f32.mrb[0].mxu0
      %1525 = vmatprep.mubr.bf16.mxu0 0
      %1526 = vmatmul.mubr.bf16.gmra.mrb[0].mxu0 %v1368
      %v1527 = vpop.f32.mrb[0].mxu0
      %v1528 = vadd.f32 0.0, %v1527
      %v1529 = vpop.f32.mrb[0].mxu0
      %v1530 = vpop.f32.mrb[0].mxu0
      %v1531 = vadd.f32 0.0, %v1530
      %v1532 = vpop.f32.mrb[0].mxu0
      %1533 = vdwg.mxu0
      %v1534 = vadd.f32 %v1330, %v1408
      %v1535 = vadd.f32 %v1331, %v1411
      %v1536 = vadd.f32 %v1332, %v1416
      %v1537 = vadd.f32 %v1333, %v1419
      %v1538 = vadd.f32 %v1334, %v1424
      %v1539 = vadd.f32 %v1335, %v1427
      %v1540 = vadd.f32 %v1336, %v1432
      %v1541 = vadd.f32 %v1337, %v1435
      %v1542 = vadd.f32 %v1338, %v1440
      %v1543 = vadd.f32 %v1339, %v1443
      %v1544 = vadd.f32 %v1340, %v1448
      %v1545 = vadd.f32 %v1341, %v1451
      %v1546 = vadd.f32 %v1342, %v1456
      %v1547 = vadd.f32 %v1343, %v1459
      %v1548 = vadd.f32 %v1344, %v1464
      %v1549 = vadd.f32 %v1345, %v1467
      %v1550 = vadd.f32 %v1346, %v1472
      %v1551 = vadd.f32 %v1347, %v1475
      %v1552 = vadd.f32 %v1348, %v1480
      %v1553 = vadd.f32 %v1349, %v1483
      %v1554 = vadd.f32 %v1350, %v1488
      %v1555 = vadd.f32 %v1351, %v1491
      %v1556 = vadd.f32 %v1352, %v1496
      %v1557 = vadd.f32 %v1353, %v1499
      %v1558 = vadd.f32 %v1354, %v1504
      %v1559 = vadd.f32 %v1355, %v1507
      %v1560 = vadd.f32 %v1356, %v1512
      %v1561 = vadd.f32 %v1357, %v1515
      %v1562 = vadd.f32 %v1358, %v1520
      %v1563 = vadd.f32 %v1359, %v1523
      %v1564 = vadd.f32 %v1360, %v1528
      %v1565 = vadd.f32 %v1361, %v1531
      %v1566 = vld [vmem:[%s1157 + $0x2] sm:$0xff]
      %v1567 = vld [vmem:[%s1157 + $0xa] sm:$0xff]
      %v1568 = vpack.c.bf16 %v1567, %v1566
      %s1569 = scalar_lea.vmem %s1, 10
      %v1570 = vld [vmem:[%s1569] sm:$0x3]
      %v1572 = vsel %vm434, %v1568, 0
      %v1575 = vand.u32 %v1570, %v486
      %1577 = vmatprep.subr.bf16.mxu0 0
      %1578 = vmatpush1.bf16.msra.mxu0 %v1575
      %1579 = vmatprep.subr.bf16.mxu0 0
      %1580 = vmatpush1.bf16.msra.mxu0 0
      %1581 = vmatprep.subr.bf16.mxu0 0
      %1582 = vmatpush1.bf16.msra.mxu0 0
      %1583 = vmatprep.subr.bf16.mxu0 0
      %1584 = vmatpush1.bf16.msra.mxu0 0
      %1585 = vmatprep.subr.bf16.mxu0 0
      %1586 = vmatpush1.bf16.msra.mxu0 0
      %1587 = vmatprep.subr.bf16.mxu0 0
      %1588 = vmatpush1.bf16.msra.mxu0 0
      %1589 = vmatprep.subr.bf16.mxu0 0
      %1590 = vmatpush1.bf16.msra.mxu0 0
      %1591 = vmatprep.subr.bf16.mxu0 0
      %1592 = vmatpush1.bf16.msra.mxu0 0
      %1593 = vmatprep.subr.bf16.mxu0 0
      %1594 = vmatpush1.bf16.msra.mxu0 0
      %1595 = vmatprep.subr.bf16.mxu0 0
      %1596 = vmatpush1.bf16.msra.mxu0 0
      %1597 = vmatprep.subr.bf16.mxu0 0
      %1598 = vmatpush1.bf16.msra.mxu0 0
      %1599 = vmatprep.subr.bf16.mxu0 0
      %1600 = vmatpush1.bf16.msra.mxu0 0
      %1601 = vmatprep.subr.bf16.mxu0 0
      %1602 = vmatpush1.bf16.msra.mxu0 0
      %1603 = vmatprep.subr.bf16.mxu0 0
      %1604 = vmatpush1.bf16.msra.mxu0 0
      %1605 = vmatprep.subr.bf16.mxu0 0
      %1606 = vmatpush1.bf16.msra.mxu0 0
      %1607 = vmatprep.subr.bf16.mxu0 0
      %1608 = vmatpush1.bf16.msra.mxu0 0
      %1609 = vmatprep.mubr.bf16.mxu0 0
      %1610 = vmatmul.mubr.bf16.gmra.mrb[0].mxu0 %v917
      %v1611 = vpop.f32.mrb[0].mxu0
      %v1612 = vadd.f32 0.0, %v1611
      %v1613 = vpop.f32.mrb[0].mxu0
      %v1614 = vpop.f32.mrb[0].mxu0
      %v1615 = vadd.f32 0.0, %v1614
      %v1616 = vpop.f32.mrb[0].mxu0
      %1617 = vmatprep.mubr.bf16.mxu0 0
      %1618 = vmatmul.mubr.bf16.gmra.mrb[0].mxu0 %v920
      %v1619 = vpop.f32.mrb[0].mxu0
      %v1620 = vadd.f32 0.0, %v1619
      %v1621 = vpop.f32.mrb[0].mxu0
      %v1622 = vpop.f32.mrb[0].mxu0
      %v1623 = vadd.f32 0.0, %v1622
      %v1624 = vpop.f32.mrb[0].mxu0
      %1625 = vmatprep.mubr.bf16.mxu0 0
      %1626 = vmatmul.mubr.bf16.gmra.mrb[0].mxu0 %v923
      %v1627 = vpop.f32.mrb[0].mxu0
      %v1628 = vadd.f32 0.0, %v1627
      %v1629 = vpop.f32.mrb[0].mxu0
      %v1630 = vpop.f32.mrb[0].mxu0
      %v1631 = vadd.f32 0.0, %v1630
      %v1632 = vpop.f32.mrb[0].mxu0
      %1633 = vmatprep.mubr.bf16.mxu0 0
      %1634 = vmatmul.mubr.bf16.gmra.mrb[0].mxu0 %v926
      %v1635 = vpop.f32.mrb[0].mxu0
      %v1636 = vadd.f32 0.0, %v1635
      %v1637 = vpop.f32.mrb[0].mxu0
      %v1638 = vpop.f32.mrb[0].mxu0
      %v1639 = vadd.f32 0.0, %v1638
      %v1640 = vpop.f32.mrb[0].mxu0
      %1641 = vmatprep.mubr.bf16.mxu0 0
      %1642 = vmatmul.mubr.bf16.gmra.mrb[0].mxu0 %v929
      %v1643 = vpop.f32.mrb[0].mxu0
      %v1644 = vadd.f32 0.0, %v1643
      %v1645 = vpop.f32.mrb[0].mxu0
      %v1646 = vpop.f32.mrb[0].mxu0
      %v1647 = vadd.f32 0.0, %v1646
      %v1648 = vpop.f32.mrb[0].mxu0
      %1649 = vmatprep.mubr.bf16.mxu0 0
      %1650 = vmatmul.mubr.bf16.gmra.mrb[0].mxu0 %v932
      %v1651 = vpop.f32.mrb[0].mxu0
      %v1652 = vadd.f32 0.0, %v1651
      %v1653 = vpop.f32.mrb[0].mxu0
      %v1654 = vpop.f32.mrb[0].mxu0
      %v1655 = vadd.f32 0.0, %v1654
      %v1656 = vpop.f32.mrb[0].mxu0
      %1657 = vmatprep.mubr.bf16.mxu0 0
      %1658 = vmatmul.mubr.bf16.gmra.mrb[0].mxu0 %v935
      %v1659 = vpop.f32.mrb[0].mxu0
      %v1660 = vadd.f32 0.0, %v1659
      %v1661 = vpop.f32.mrb[0].mxu0
      %v1662 = vpop.f32.mrb[0].mxu0
      %v1663 = vadd.f32 0.0, %v1662
      %v1664 = vpop.f32.mrb[0].mxu0
      %1665 = vmatprep.mubr.bf16.mxu0 0
      %1666 = vmatmul.mubr.bf16.gmra.mrb[0].mxu0 %v938
      %v1667 = vpop.f32.mrb[0].mxu0
      %v1668 = vadd.f32 0.0, %v1667
      %v1669 = vpop.f32.mrb[0].mxu0
      %v1670 = vpop.f32.mrb[0].mxu0
      %v1671 = vadd.f32 0.0, %v1670
      %v1672 = vpop.f32.mrb[0].mxu0
      %1673 = vmatprep.mubr.bf16.mxu0 0
      %1674 = vmatmul.mubr.bf16.gmra.mrb[0].mxu0 %v941
      %v1675 = vpop.f32.mrb[0].mxu0
      %v1676 = vadd.f32 0.0, %v1675
      %v1677 = vpop.f32.mrb[0].mxu0
      %v1678 = vpop.f32.mrb[0].mxu0
      %v1679 = vadd.f32 0.0, %v1678
      %v1680 = vpop.f32.mrb[0].mxu0
      %1681 = vmatprep.mubr.bf16.mxu0 0
      %1682 = vmatmul.mubr.bf16.gmra.mrb[0].mxu0 %v944
      %v1683 = vpop.f32.mrb[0].mxu0
      %v1684 = vadd.f32 0.0, %v1683
      %v1685 = vpop.f32.mrb[0].mxu0
      %v1686 = vpop.f32.mrb[0].mxu0
      %v1687 = vadd.f32 0.0, %v1686
      %v1688 = vpop.f32.mrb[0].mxu0
      %1689 = vmatprep.mubr.bf16.mxu0 0
      %1690 = vmatmul.mubr.bf16.gmra.mrb[0].mxu0 %v947
      %v1691 = vpop.f32.mrb[0].mxu0
      %v1692 = vadd.f32 0.0, %v1691
      %v1693 = vpop.f32.mrb[0].mxu0
      %v1694 = vpop.f32.mrb[0].mxu0
      %v1695 = vadd.f32 0.0, %v1694
      %v1696 = vpop.f32.mrb[0].mxu0
      %1697 = vmatprep.mubr.bf16.mxu0 0
      %1698 = vmatmul.mubr.bf16.gmra.mrb[0].mxu0 %v950
      %v1699 = vpop.f32.mrb[0].mxu0
      %v1700 = vadd.f32 0.0, %v1699
      %v1701 = vpop.f32.mrb[0].mxu0
      %v1702 = vpop.f32.mrb[0].mxu0
      %v1703 = vadd.f32 0.0, %v1702
      %v1704 = vpop.f32.mrb[0].mxu0
      %1705 = vmatprep.mubr.bf16.mxu0 0
      %1706 = vmatmul.mubr.bf16.gmra.mrb[0].mxu0 %v953
      %v1707 = vpop.f32.mrb[0].mxu0
      %v1708 = vadd.f32 0.0, %v1707
      %v1709 = vpop.f32.mrb[0].mxu0
      %v1710 = vpop.f32.mrb[0].mxu0
      %v1711 = vadd.f32 0.0, %v1710
      %v1712 = vpop.f32.mrb[0].mxu0
      %1713 = vmatprep.mubr.bf16.mxu0 0
      %1714 = vmatmul.mubr.bf16.gmra.mrb[0].mxu0 %v956
      %v1715 = vpop.f32.mrb[0].mxu0
      %v1716 = vadd.f32 0.0, %v1715
      %v1717 = vpop.f32.mrb[0].mxu0
      %v1718 = vpop.f32.mrb[0].mxu0
      %v1719 = vadd.f32 0.0, %v1718
      %v1720 = vpop.f32.mrb[0].mxu0
      %1721 = vmatprep.mubr.bf16.mxu0 0
      %1722 = vmatmul.mubr.bf16.gmra.mrb[0].mxu0 %v959
      %v1723 = vpop.f32.mrb[0].mxu0
      %v1724 = vadd.f32 0.0, %v1723
      %v1725 = vpop.f32.mrb[0].mxu0
      %v1726 = vpop.f32.mrb[0].mxu0
      %v1727 = vadd.f32 0.0, %v1726
      %v1728 = vpop.f32.mrb[0].mxu0
      %1729 = vmatprep.mubr.bf16.mxu0 0
      %1730 = vmatmul.mubr.bf16.gmra.mrb[0].mxu0 %v1572
      %v1731 = vpop.f32.mrb[0].mxu0
      %v1732 = vadd.f32 0.0, %v1731
      %v1733 = vpop.f32.mrb[0].mxu0
      %v1734 = vpop.f32.mrb[0].mxu0
      %v1735 = vadd.f32 0.0, %v1734
      %v1736 = vpop.f32.mrb[0].mxu0
      %1737 = vdwg.mxu0
      %v1738 = vadd.f32 %v1534, %v1612
      %v1739 = vadd.f32 %v1535, %v1615
      %v1740 = vadd.f32 %v1536, %v1620
      %v1741 = vadd.f32 %v1537, %v1623
      %v1742 = vadd.f32 %v1538, %v1628
      %v1743 = vadd.f32 %v1539, %v1631
      %v1744 = vadd.f32 %v1540, %v1636
      %v1745 = vadd.f32 %v1541, %v1639
      %v1746 = vadd.f32 %v1542, %v1644
      %v1747 = vadd.f32 %v1543, %v1647
      %v1748 = vadd.f32 %v1544, %v1652
      %v1749 = vadd.f32 %v1545, %v1655
      %v1750 = vadd.f32 %v1546, %v1660
      %v1751 = vadd.f32 %v1547, %v1663
      %v1752 = vadd.f32 %v1548, %v1668
      %v1753 = vadd.f32 %v1549, %v1671
      %v1754 = vadd.f32 %v1550, %v1676
      %v1755 = vadd.f32 %v1551, %v1679
      %v1756 = vadd.f32 %v1552, %v1684
      %v1757 = vadd.f32 %v1553, %v1687
      %v1758 = vadd.f32 %v1554, %v1692
      %v1759 = vadd.f32 %v1555, %v1695
      %v1760 = vadd.f32 %v1556, %v1700
      %v1761 = vadd.f32 %v1557, %v1703
      %v1762 = vadd.f32 %v1558, %v1708
      %v1763 = vadd.f32 %v1559, %v1711
      %v1764 = vadd.f32 %v1560, %v1716
      %v1765 = vadd.f32 %v1561, %v1719
      %v1766 = vadd.f32 %v1562, %v1724
      %v1767 = vadd.f32 %v1563, %v1727
      %v1768 = vadd.f32 %v1564, %v1732
      %v1769 = vadd.f32 %v1565, %v1735
      %s1770 = scalar_lea.vmem %s308, 408
      %v1771 = vld [vmem:[%s1770] sm:$0xff]
      %v1772 = vld [vmem:[%s1770 + $0x8] sm:$0xff]
      %v1773 = vpack.c.bf16 %v1772, %v1771
      %s1774 = scalar_lea.vmem %s1, 12
      %v1775 = vld [vmem:[%s1774] sm:$0x3]
      %v1777 = vsel %vm434, %v1773, 0
      %v1780 = vand.u32 %v1775, %v486
      %1782 = vmatprep.subr.bf16.mxu0 0
      %1783 = vmatpush1.bf16.msra.mxu0 %v1780
      %1784 = vmatprep.subr.bf16.mxu0 0
      %1785 = vmatpush1.bf16.msra.mxu0 0
      %1786 = vmatprep.subr.bf16.mxu0 0
      %1787 = vmatpush1.bf16.msra.mxu0 0
      %1788 = vmatprep.subr.bf16.mxu0 0
      %1789 = vmatpush1.bf16.msra.mxu0 0
      %1790 = vmatprep.subr.bf16.mxu0 0
      %1791 = vmatpush1.bf16.msra.mxu0 0
      %1792 = vmatprep.subr.bf16.mxu0 0
      %1793 = vmatpush1.bf16.msra.mxu0 0
      %1794 = vmatprep.subr.bf16.mxu0 0
      %1795 = vmatpush1.bf16.msra.mxu0 0
      %1796 = vmatprep.subr.bf16.mxu0 0
      %1797 = vmatpush1.bf16.msra.mxu0 0
      %1798 = vmatprep.subr.bf16.mxu0 0
      %1799 = vmatpush1.bf16.msra.mxu0 0
      %1800 = vmatprep.subr.bf16.mxu0 0
      %1801 = vmatpush1.bf16.msra.mxu0 0
      %1802 = vmatprep.subr.bf16.mxu0 0
      %1803 = vmatpush1.bf16.msra.mxu0 0
      %1804 = vmatprep.subr.bf16.mxu0 0
      %1805 = vmatpush1.bf16.msra.mxu0 0
      %1806 = vmatprep.subr.bf16.mxu0 0
      %1807 = vmatpush1.bf16.msra.mxu0 0
      %1808 = vmatprep.subr.bf16.mxu0 0
      %1809 = vmatpush1.bf16.msra.mxu0 0
      %1810 = vmatprep.subr.bf16.mxu0 0
      %1811 = vmatpush1.bf16.msra.mxu0 0
      %1812 = vmatprep.subr.bf16.mxu0 0
      %1813 = vmatpush1.bf16.msra.mxu0 0
      %1814 = vmatprep.mubr.bf16.mxu0 0
      %1815 = vmatmul.mubr.bf16.gmra.mrb[0].mxu0 %v658
      %v1816 = vpop.f32.mrb[0].mxu0
      %v1817 = vadd.f32 0.0, %v1816
      %v1818 = vpop.f32.mrb[0].mxu0
      %v1819 = vpop.f32.mrb[0].mxu0
      %v1820 = vadd.f32 0.0, %v1819
      %v1821 = vpop.f32.mrb[0].mxu0
      %1822 = vmatprep.mubr.bf16.mxu0 0
      %1823 = vmatmul.mubr.bf16.gmra.mrb[0].mxu0 %v661
      %v1824 = vpop.f32.mrb[0].mxu0
      %v1825 = vadd.f32 0.0, %v1824
      %v1826 = vpop.f32.mrb[0].mxu0
      %v1827 = vpop.f32.mrb[0].mxu0
      %v1828 = vadd.f32 0.0, %v1827
      %v1829 = vpop.f32.mrb[0].mxu0
      %1830 = vmatprep.mubr.bf16.mxu0 0
      %1831 = vmatmul.mubr.bf16.gmra.mrb[0].mxu0 %v664
      %v1832 = vpop.f32.mrb[0].mxu0
      %v1833 = vadd.f32 0.0, %v1832
      %v1834 = vpop.f32.mrb[0].mxu0
      %v1835 = vpop.f32.mrb[0].mxu0
      %v1836 = vadd.f32 0.0, %v1835
      %v1837 = vpop.f32.mrb[0].mxu0
      %1838 = vmatprep.mubr.bf16.mxu0 0
      %1839 = vmatmul.mubr.bf16.gmra.mrb[0].mxu0 %v667
      %v1840 = vpop.f32.mrb[0].mxu0
      %v1841 = vadd.f32 0.0, %v1840
      %v1842 = vpop.f32.mrb[0].mxu0
      %v1843 = vpop.f32.mrb[0].mxu0
      %v1844 = vadd.f32 0.0, %v1843
      %v1845 = vpop.f32.mrb[0].mxu0
      %1846 = vmatprep.mubr.bf16.mxu0 0
      %1847 = vmatmul.mubr.bf16.gmra.mrb[0].mxu0 %v670
      %v1848 = vpop.f32.mrb[0].mxu0
      %v1849 = vadd.f32 0.0, %v1848
      %v1850 = vpop.f32.mrb[0].mxu0
      %v1851 = vpop.f32.mrb[0].mxu0
      %v1852 = vadd.f32 0.0, %v1851
      %v1853 = vpop.f32.mrb[0].mxu0
      %1854 = vmatprep.mubr.bf16.mxu0 0
      %1855 = vmatmul.mubr.bf16.gmra.mrb[0].mxu0 %v673
      %v1856 = vpop.f32.mrb[0].mxu0
      %v1857 = vadd.f32 0.0, %v1856
      %v1858 = vpop.f32.mrb[0].mxu0
      %v1859 = vpop.f32.mrb[0].mxu0
      %v1860 = vadd.f32 0.0, %v1859
      %v1861 = vpop.f32.mrb[0].mxu0
      %1862 = vmatprep.mubr.bf16.mxu0 0
      %1863 = vmatmul.mubr.bf16.gmra.mrb[0].mxu0 %v676
      %v1864 = vpop.f32.mrb[0].mxu0
      %v1865 = vadd.f32 0.0, %v1864
      %v1866 = vpop.f32.mrb[0].mxu0
      %v1867 = vpop.f32.mrb[0].mxu0
      %v1868 = vadd.f32 0.0, %v1867
      %v1869 = vpop.f32.mrb[0].mxu0
      %1870 = vmatprep.mubr.bf16.mxu0 0
      %1871 = vmatmul.mubr.bf16.gmra.mrb[0].mxu0 %v679
      %v1872 = vpop.f32.mrb[0].mxu0
      %v1873 = vadd.f32 0.0, %v1872
      %v1874 = vpop.f32.mrb[0].mxu0
      %v1875 = vpop.f32.mrb[0].mxu0
      %v1876 = vadd.f32 0.0, %v1875
      %v1877 = vpop.f32.mrb[0].mxu0
      %1878 = vmatprep.mubr.bf16.mxu0 0
      %1879 = vmatmul.mubr.bf16.gmra.mrb[0].mxu0 %v682
      %v1880 = vpop.f32.mrb[0].mxu0
      %v1881 = vadd.f32 0.0, %v1880
      %v1882 = vpop.f32.mrb[0].mxu0
      %v1883 = vpop.f32.mrb[0].mxu0
      %v1884 = vadd.f32 0.0, %v1883
      %v1885 = vpop.f32.mrb[0].mxu0
      %1886 = vmatprep.mubr.bf16.mxu0 0
      %1887 = vmatmul.mubr.bf16.gmra.mrb[0].mxu0 %v685
      %v1888 = vpop.f32.mrb[0].mxu0
      %v1889 = vadd.f32 0.0, %v1888
      %v1890 = vpop.f32.mrb[0].mxu0
      %v1891 = vpop.f32.mrb[0].mxu0
      %v1892 = vadd.f32 0.0, %v1891
      %v1893 = vpop.f32.mrb[0].mxu0
      %1894 = vmatprep.mubr.bf16.mxu0 0
      %1895 = vmatmul.mubr.bf16.gmra.mrb[0].mxu0 %v688
      %v1896 = vpop.f32.mrb[0].mxu0
      %v1897 = vadd.f32 0.0, %v1896
      %v1898 = vpop.f32.mrb[0].mxu0
      %v1899 = vpop.f32.mrb[0].mxu0
      %v1900 = vadd.f32 0.0, %v1899
      %v1901 = vpop.f32.mrb[0].mxu0
      %1902 = vmatprep.mubr.bf16.mxu0 0
      %1903 = vmatmul.mubr.bf16.gmra.mrb[0].mxu0 %v691
      %v1904 = vpop.f32.mrb[0].mxu0
      %v1905 = vadd.f32 0.0, %v1904
      %v1906 = vpop.f32.mrb[0].mxu0
      %v1907 = vpop.f32.mrb[0].mxu0
      %v1908 = vadd.f32 0.0, %v1907
      %v1909 = vpop.f32.mrb[0].mxu0
      %1910 = vmatprep.mubr.bf16.mxu0 0
      %1911 = vmatmul.mubr.bf16.gmra.mrb[0].mxu0 %v694
      %v1912 = vpop.f32.mrb[0].mxu0
      %v1913 = vadd.f32 0.0, %v1912
      %v1914 = vpop.f32.mrb[0].mxu0
      %v1915 = vpop.f32.mrb[0].mxu0
      %v1916 = vadd.f32 0.0, %v1915
      %v1917 = vpop.f32.mrb[0].mxu0
      %1918 = vmatprep.mubr.bf16.mxu0 0
      %1919 = vmatmul.mubr.bf16.gmra.mrb[0].mxu0 %v697
      %v1920 = vpop.f32.mrb[0].mxu0
      %v1921 = vadd.f32 0.0, %v1920
      %v1922 = vpop.f32.mrb[0].mxu0
      %v1923 = vpop.f32.mrb[0].mxu0
      %v1924 = vadd.f32 0.0, %v1923
      %v1925 = vpop.f32.mrb[0].mxu0
      %1926 = vmatprep.mubr.bf16.mxu0 0
      %1927 = vmatmul.mubr.bf16.gmra.mrb[0].mxu0 %v1164
      %v1928 = vpop.f32.mrb[0].mxu0
      %v1929 = vadd.f32 0.0, %v1928
      %v1930 = vpop.f32.mrb[0].mxu0
      %v1931 = vpop.f32.mrb[0].mxu0
      %v1932 = vadd.f32 0.0, %v1931
      %v1933 = vpop.f32.mrb[0].mxu0
      %1934 = vmatprep.mubr.bf16.mxu0 0
      %1935 = vmatmul.mubr.bf16.gmra.mrb[0].mxu0 %v1777
      %v1936 = vpop.f32.mrb[0].mxu0
      %v1937 = vadd.f32 0.0, %v1936
      %v1938 = vpop.f32.mrb[0].mxu0
      %v1939 = vpop.f32.mrb[0].mxu0
      %v1940 = vadd.f32 0.0, %v1939
      %v1941 = vpop.f32.mrb[0].mxu0
      %1942 = vdwg.mxu0
      %v1943 = vadd.f32 %v1738, %v1817
      %v1944 = vadd.f32 %v1739, %v1820
      %v1945 = vadd.f32 %v1740, %v1825
      %v1946 = vadd.f32 %v1741, %v1828
      %v1947 = vadd.f32 %v1742, %v1833
      %v1948 = vadd.f32 %v1743, %v1836
      %v1949 = vadd.f32 %v1744, %v1841
      %v1950 = vadd.f32 %v1745, %v1844
      %v1951 = vadd.f32 %v1746, %v1849
      %v1952 = vadd.f32 %v1747, %v1852
      %v1953 = vadd.f32 %v1748, %v1857
      %v1954 = vadd.f32 %v1749, %v1860
      %v1955 = vadd.f32 %v1750, %v1865
      %v1956 = vadd.f32 %v1751, %v1868
      %v1957 = vadd.f32 %v1752, %v1873
      %v1958 = vadd.f32 %v1753, %v1876
      %v1959 = vadd.f32 %v1754, %v1881
      %v1960 = vadd.f32 %v1755, %v1884
      %v1961 = vadd.f32 %v1756, %v1889
      %v1962 = vadd.f32 %v1757, %v1892
      %v1963 = vadd.f32 %v1758, %v1897
      %v1964 = vadd.f32 %v1759, %v1900
      %v1965 = vadd.f32 %v1760, %v1905
      %v1966 = vadd.f32 %v1761, %v1908
      %v1967 = vadd.f32 %v1762, %v1913
      %v1968 = vadd.f32 %v1763, %v1916
      %v1969 = vadd.f32 %v1764, %v1921
      %v1970 = vadd.f32 %v1765, %v1924
      %v1971 = vadd.f32 %v1766, %v1929
      %v1972 = vadd.f32 %v1767, %v1932
      %v1973 = vadd.f32 %v1768, %v1937
      %v1974 = vadd.f32 %v1769, %v1940
      %v1975 = vld [vmem:[%s1770 + $0x1] sm:$0xff]
      %v1976 = vld [vmem:[%s1770 + $0x9] sm:$0xff]
      %v1977 = vpack.c.bf16 %v1976, %v1975
      %s1978 = scalar_lea.vmem %s1, 14
      %v1979 = vld [vmem:[%s1978] sm:$0x3]
      %v1981 = vsel %vm434, %v1977, 0
      %v1984 = vand.u32 %v1979, %v486
      %1986 = vmatprep.subr.bf16.mxu0 0
      %1987 = vmatpush1.bf16.msra.mxu0 %v1984
      %1988 = vmatprep.subr.bf16.mxu0 0
      %1989 = vmatpush1.bf16.msra.mxu0 0
      %1990 = vmatprep.subr.bf16.mxu0 0
      %1991 = vmatpush1.bf16.msra.mxu0 0
      %1992 = vmatprep.subr.bf16.mxu0 0
      %1993 = vmatpush1.bf16.msra.mxu0 0
      %1994 = vmatprep.subr.bf16.mxu0 0
      %1995 = vmatpush1.bf16.msra.mxu0 0
      %1996 = vmatprep.subr.bf16.mxu0 0
      %1997 = vmatpush1.bf16.msra.mxu0 0
      %1998 = vmatprep.subr.bf16.mxu0 0
      %1999 = vmatpush1.bf16.msra.mxu0 0
      %2000 = vmatprep.subr.bf16.mxu0 0
      %2001 = vmatpush1.bf16.msra.mxu0 0
      %2002 = vmatprep.subr.bf16.mxu0 0
      %2003 = vmatpush1.bf16.msra.mxu0 0
      %2004 = vmatprep.subr.bf16.mxu0 0
      %2005 = vmatpush1.bf16.msra.mxu0 0
      %2006 = vmatprep.subr.bf16.mxu0 0
      %2007 = vmatpush1.bf16.msra.mxu0 0
      %2008 = vmatprep.subr.bf16.mxu0 0
      %2009 = vmatpush1.bf16.msra.mxu0 0
      %2010 = vmatprep.subr.bf16.mxu0 0
      %2011 = vmatpush1.bf16.msra.mxu0 0
      %2012 = vmatprep.subr.bf16.mxu0 0
      %2013 = vmatpush1.bf16.msra.mxu0 0
      %2014 = vmatprep.subr.bf16.mxu0 0
      %2015 = vmatpush1.bf16.msra.mxu0 0
      %2016 = vmatprep.subr.bf16.mxu0 0
      %2017 = vmatpush1.bf16.msra.mxu0 0
      %2018 = vmatprep.mubr.bf16.mxu0 0
      %2019 = vmatmul.mubr.bf16.gmra.mrb[0].mxu0 %v442
      %v2020 = vpop.f32.mrb[0].mxu0
      %v2021 = vadd.f32 0.0, %v2020
      %v2022 = vpop.f32.mrb[0].mxu0
      %v2023 = vpop.f32.mrb[0].mxu0
      %v2024 = vadd.f32 0.0, %v2023
      %v2025 = vpop.f32.mrb[0].mxu0
      %2026 = vmatprep.mubr.bf16.mxu0 0
      %2027 = vmatmul.mubr.bf16.gmra.mrb[0].mxu0 %v445
      %v2028 = vpop.f32.mrb[0].mxu0
      %v2029 = vadd.f32 0.0, %v2028
      %v2030 = vpop.f32.mrb[0].mxu0
      %v2031 = vpop.f32.mrb[0].mxu0
      %v2032 = vadd.f32 0.0, %v2031
      %v2033 = vpop.f32.mrb[0].mxu0
      %2034 = vmatprep.mubr.bf16.mxu0 0
      %2035 = vmatmul.mubr.bf16.gmra.mrb[0].mxu0 %v448
      %v2036 = vpop.f32.mrb[0].mxu0
      %v2037 = vadd.f32 0.0, %v2036
      %v2038 = vpop.f32.mrb[0].mxu0
      %v2039 = vpop.f32.mrb[0].mxu0
      %v2040 = vadd.f32 0.0, %v2039
      %v2041 = vpop.f32.mrb[0].mxu0
      %2042 = vmatprep.mubr.bf16.mxu0 0
      %2043 = vmatmul.mubr.bf16.gmra.mrb[0].mxu0 %v451
      %v2044 = vpop.f32.mrb[0].mxu0
      %v2045 = vadd.f32 0.0, %v2044
      %v2046 = vpop.f32.mrb[0].mxu0
      %v2047 = vpop.f32.mrb[0].mxu0
      %v2048 = vadd.f32 0.0, %v2047
      %v2049 = vpop.f32.mrb[0].mxu0
      %2050 = vmatprep.mubr.bf16.mxu0 0
      %2051 = vmatmul.mubr.bf16.gmra.mrb[0].mxu0 %v454
      %v2052 = vpop.f32.mrb[0].mxu0
      %v2053 = vadd.f32 0.0, %v2052
      %v2054 = vpop.f32.mrb[0].mxu0
      %v2055 = vpop.f32.mrb[0].mxu0
      %v2056 = vadd.f32 0.0, %v2055
      %v2057 = vpop.f32.mrb[0].mxu0
      %2058 = vmatprep.mubr.bf16.mxu0 0
      %2059 = vmatmul.mubr.bf16.gmra.mrb[0].mxu0 %v457
      %v2060 = vpop.f32.mrb[0].mxu0
      %v2061 = vadd.f32 0.0, %v2060
      %v2062 = vpop.f32.mrb[0].mxu0
      %v2063 = vpop.f32.mrb[0].mxu0
      %v2064 = vadd.f32 0.0, %v2063
      %v2065 = vpop.f32.mrb[0].mxu0
      %2066 = vmatprep.mubr.bf16.mxu0 0
      %2067 = vmatmul.mubr.bf16.gmra.mrb[0].mxu0 %v460
      %v2068 = vpop.f32.mrb[0].mxu0
      %v2069 = vadd.f32 0.0, %v2068
      %v2070 = vpop.f32.mrb[0].mxu0
      %v2071 = vpop.f32.mrb[0].mxu0
      %v2072 = vadd.f32 0.0, %v2071
      %v2073 = vpop.f32.mrb[0].mxu0
      %2074 = vmatprep.mubr.bf16.mxu0 0
      %2075 = vmatmul.mubr.bf16.gmra.mrb[0].mxu0 %v463
      %v2076 = vpop.f32.mrb[0].mxu0
      %v2077 = vadd.f32 0.0, %v2076
      %v2078 = vpop.f32.mrb[0].mxu0
      %v2079 = vpop.f32.mrb[0].mxu0
      %v2080 = vadd.f32 0.0, %v2079
      %v2081 = vpop.f32.mrb[0].mxu0
      %2082 = vmatprep.mubr.bf16.mxu0 0
      %2083 = vmatmul.mubr.bf16.gmra.mrb[0].mxu0 %v466
      %v2084 = vpop.f32.mrb[0].mxu0
      %v2085 = vadd.f32 0.0, %v2084
      %v2086 = vpop.f32.mrb[0].mxu0
      %v2087 = vpop.f32.mrb[0].mxu0
      %v2088 = vadd.f32 0.0, %v2087
      %v2089 = vpop.f32.mrb[0].mxu0
      %2090 = vmatprep.mubr.bf16.mxu0 0
      %2091 = vmatmul.mubr.bf16.gmra.mrb[0].mxu0 %v469
      %v2092 = vpop.f32.mrb[0].mxu0
      %v2093 = vadd.f32 0.0, %v2092
      %v2094 = vpop.f32.mrb[0].mxu0
      %v2095 = vpop.f32.mrb[0].mxu0
      %v2096 = vadd.f32 0.0, %v2095
      %v2097 = vpop.f32.mrb[0].mxu0
      %2098 = vmatprep.mubr.bf16.mxu0 0
      %2099 = vmatmul.mubr.bf16.gmra.mrb[0].mxu0 %v472
      %v2100 = vpop.f32.mrb[0].mxu0
      %v2101 = vadd.f32 0.0, %v2100
      %v2102 = vpop.f32.mrb[0].mxu0
      %v2103 = vpop.f32.mrb[0].mxu0
      %v2104 = vadd.f32 0.0, %v2103
      %v2105 = vpop.f32.mrb[0].mxu0
      %2106 = vmatprep.mubr.bf16.mxu0 0
      %2107 = vmatmul.mubr.bf16.gmra.mrb[0].mxu0 %v475
      %v2108 = vpop.f32.mrb[0].mxu0
      %v2109 = vadd.f32 0.0, %v2108
      %v2110 = vpop.f32.mrb[0].mxu0
      %v2111 = vpop.f32.mrb[0].mxu0
      %v2112 = vadd.f32 0.0, %v2111
      %v2113 = vpop.f32.mrb[0].mxu0
      %2114 = vmatprep.mubr.bf16.mxu0 0
      %2115 = vmatmul.mubr.bf16.gmra.mrb[0].mxu0 %v478
      %v2116 = vpop.f32.mrb[0].mxu0
      %v2117 = vadd.f32 0.0, %v2116
      %v2118 = vpop.f32.mrb[0].mxu0
      %v2119 = vpop.f32.mrb[0].mxu0
      %v2120 = vadd.f32 0.0, %v2119
      %v2121 = vpop.f32.mrb[0].mxu0
      %2122 = vmatprep.mubr.bf16.mxu0 0
      %2123 = vmatmul.mubr.bf16.gmra.mrb[0].mxu0 %v481
      %v2124 = vpop.f32.mrb[0].mxu0
      %v2125 = vadd.f32 0.0, %v2124
      %v2126 = vpop.f32.mrb[0].mxu0
      %v2127 = vpop.f32.mrb[0].mxu0
      %v2128 = vadd.f32 0.0, %v2127
      %v2129 = vpop.f32.mrb[0].mxu0
      %2130 = vmatprep.mubr.bf16.mxu0 0
      %2131 = vmatmul.mubr.bf16.gmra.mrb[0].mxu0 %v1368
      %v2132 = vpop.f32.mrb[0].mxu0
      %v2133 = vadd.f32 0.0, %v2132
      %v2134 = vpop.f32.mrb[0].mxu0
      %v2135 = vpop.f32.mrb[0].mxu0
      %v2136 = vadd.f32 0.0, %v2135
      %v2137 = vpop.f32.mrb[0].mxu0
      %2138 = vmatprep.mubr.bf16.mxu0 0
      %2139 = vmatmul.mubr.bf16.gmra.mrb[0].mxu0 %v1981
      %v2140 = vpop.f32.mrb[0].mxu0
      %v2141 = vadd.f32 0.0, %v2140
      %v2142 = vpop.f32.mrb[0].mxu0
      %v2143 = vpop.f32.mrb[0].mxu0
      %v2144 = vadd.f32 0.0, %v2143
      %v2145 = vpop.f32.mrb[0].mxu0
      %2146 = vdwg.mxu0
      %v2147 = vadd.f32 %v1943, %v2021
      %v2148 = vadd.f32 %v1944, %v2024
      %v2149 = vadd.f32 %v1945, %v2029
      %v2150 = vadd.f32 %v1946, %v2032
      %v2151 = vadd.f32 %v1947, %v2037
      %v2152 = vadd.f32 %v1948, %v2040
      %v2153 = vadd.f32 %v1949, %v2045
      %v2154 = vadd.f32 %v1950, %v2048
      %v2155 = vadd.f32 %v1951, %v2053
      %v2156 = vadd.f32 %v1952, %v2056
      %v2157 = vadd.f32 %v1953, %v2061
      %v2158 = vadd.f32 %v1954, %v2064
      %v2159 = vadd.f32 %v1955, %v2069
      %v2160 = vadd.f32 %v1956, %v2072
      %v2161 = vadd.f32 %v1957, %v2077
      %v2162 = vadd.f32 %v1958, %v2080
      %v2163 = vadd.f32 %v1959, %v2085
      %v2164 = vadd.f32 %v1960, %v2088
      %v2165 = vadd.f32 %v1961, %v2093
      %v2166 = vadd.f32 %v1962, %v2096
      %v2167 = vadd.f32 %v1963, %v2101
      %v2168 = vadd.f32 %v1964, %v2104
      %v2169 = vadd.f32 %v1965, %v2109
      %v2170 = vadd.f32 %v1966, %v2112
      %v2171 = vadd.f32 %v1967, %v2117
      %v2172 = vadd.f32 %v1968, %v2120
      %v2173 = vadd.f32 %v1969, %v2125
      %v2174 = vadd.f32 %v1970, %v2128
      %v2175 = vadd.f32 %v1971, %v2133
      %v2176 = vadd.f32 %v1972, %v2136
      %v2177 = vadd.f32 %v1973, %v2141
      %v2178 = vadd.f32 %v1974, %v2144
      %v2179 = vld [vmem:[%s1770 + $0x2] sm:$0xff]
      %v2180 = vld [vmem:[%s1770 + $0xa] sm:$0xff]
      %v2181 = vpack.c.bf16 %v2180, %v2179
      %s2182 = scalar_lea.vmem %s1, 16
      %v2183 = vld [vmem:[%s2182] sm:$0x3]
      %v2185 = vsel %vm434, %v2181, 0
      %v2188 = vand.u32 %v2183, %v486
      %2190 = vmatprep.subr.bf16.mxu0 0
      %2191 = vmatpush1.bf16.msra.mxu0 %v2188
      %2192 = vmatprep.subr.bf16.mxu0 0
      %2193 = vmatpush1.bf16.msra.mxu0 0
      %2194 = vmatprep.subr.bf16.mxu0 0
      %2195 = vmatpush1.bf16.msra.mxu0 0
      %2196 = vmatprep.subr.bf16.mxu0 0
      %2197 = vmatpush1.bf16.msra.mxu0 0
      %2198 = vmatprep.subr.bf16.mxu0 0
      %2199 = vmatpush1.bf16.msra.mxu0 0
      %2200 = vmatprep.subr.bf16.mxu0 0
      %2201 = vmatpush1.bf16.msra.mxu0 0
      %2202 = vmatprep.subr.bf16.mxu0 0
      %2203 = vmatpush1.bf16.msra.mxu0 0
      %2204 = vmatprep.subr.bf16.mxu0 0
      %2205 = vmatpush1.bf16.msra.mxu0 0
      %2206 = vmatprep.subr.bf16.mxu0 0
      %2207 = vmatpush1.bf16.msra.mxu0 0
      %2208 = vmatprep.subr.bf16.mxu0 0
      %2209 = vmatpush1.bf16.msra.mxu0 0
      %2210 = vmatprep.subr.bf16.mxu0 0
      %2211 = vmatpush1.bf16.msra.mxu0 0
      %2212 = vmatprep.subr.bf16.mxu0 0
      %2213 = vmatpush1.bf16.msra.mxu0 0
      %2214 = vmatprep.subr.bf16.mxu0 0
      %2215 = vmatpush1.bf16.msra.mxu0 0
      %2216 = vmatprep.subr.bf16.mxu0 0
      %2217 = vmatpush1.bf16.msra.mxu0 0
      %2218 = vmatprep.subr.bf16.mxu0 0
      %2219 = vmatpush1.bf16.msra.mxu0 0
      %2220 = vmatprep.subr.bf16.mxu0 0
      %2221 = vmatpush1.bf16.msra.mxu0 0
      %2222 = vmatprep.mubr.bf16.mxu0 0
      %2223 = vmatmul.mubr.bf16.gmra.mrb[0].mxu0 %v920
      %v2224 = vpop.f32.mrb[0].mxu0
      %v2225 = vadd.f32 0.0, %v2224
      %v2226 = vpop.f32.mrb[0].mxu0
      %v2227 = vpop.f32.mrb[0].mxu0
      %v2228 = vadd.f32 0.0, %v2227
      %v2229 = vpop.f32.mrb[0].mxu0
      %2230 = vmatprep.mubr.bf16.mxu0 0
      %2231 = vmatmul.mubr.bf16.gmra.mrb[0].mxu0 %v923
      %v2232 = vpop.f32.mrb[0].mxu0
      %v2233 = vadd.f32 0.0, %v2232
      %v2234 = vpop.f32.mrb[0].mxu0
      %v2235 = vpop.f32.mrb[0].mxu0
      %v2236 = vadd.f32 0.0, %v2235
      %v2237 = vpop.f32.mrb[0].mxu0
      %2238 = vmatprep.mubr.bf16.mxu0 0
      %2239 = vmatmul.mubr.bf16.gmra.mrb[0].mxu0 %v926
      %v2240 = vpop.f32.mrb[0].mxu0
      %v2241 = vadd.f32 0.0, %v2240
      %v2242 = vpop.f32.mrb[0].mxu0
      %v2243 = vpop.f32.mrb[0].mxu0
      %v2244 = vadd.f32 0.0, %v2243
      %v2245 = vpop.f32.mrb[0].mxu0
      %2246 = vmatprep.mubr.bf16.mxu0 0
      %2247 = vmatmul.mubr.bf16.gmra.mrb[0].mxu0 %v929
      %v2248 = vpop.f32.mrb[0].mxu0
      %v2249 = vadd.f32 0.0, %v2248
      %v2250 = vpop.f32.mrb[0].mxu0
      %v2251 = vpop.f32.mrb[0].mxu0
      %v2252 = vadd.f32 0.0, %v2251
      %v2253 = vpop.f32.mrb[0].mxu0
      %2254 = vmatprep.mubr.bf16.mxu0 0
      %2255 = vmatmul.mubr.bf16.gmra.mrb[0].mxu0 %v932
      %v2256 = vpop.f32.mrb[0].mxu0
      %v2257 = vadd.f32 0.0, %v2256
      %v2258 = vpop.f32.mrb[0].mxu0
      %v2259 = vpop.f32.mrb[0].mxu0
      %v2260 = vadd.f32 0.0, %v2259
      %v2261 = vpop.f32.mrb[0].mxu0
      %2262 = vmatprep.mubr.bf16.mxu0 0
      %2263 = vmatmul.mubr.bf16.gmra.mrb[0].mxu0 %v935
      %v2264 = vpop.f32.mrb[0].mxu0
      %v2265 = vadd.f32 0.0, %v2264
      %v2266 = vpop.f32.mrb[0].mxu0
      %v2267 = vpop.f32.mrb[0].mxu0
      %v2268 = vadd.f32 0.0, %v2267
      %v2269 = vpop.f32.mrb[0].mxu0
      %2270 = vmatprep.mubr.bf16.mxu0 0
      %2271 = vmatmul.mubr.bf16.gmra.mrb[0].mxu0 %v938
      %v2272 = vpop.f32.mrb[0].mxu0
      %v2273 = vadd.f32 0.0, %v2272
      %v2274 = vpop.f32.mrb[0].mxu0
      %v2275 = vpop.f32.mrb[0].mxu0
      %v2276 = vadd.f32 0.0, %v2275
      %v2277 = vpop.f32.mrb[0].mxu0
      %2278 = vmatprep.mubr.bf16.mxu0 0
      %2279 = vmatmul.mubr.bf16.gmra.mrb[0].mxu0 %v941
      %v2280 = vpop.f32.mrb[0].mxu0
      %v2281 = vadd.f32 0.0, %v2280
      %v2282 = vpop.f32.mrb[0].mxu0
      %v2283 = vpop.f32.mrb[0].mxu0
      %v2284 = vadd.f32 0.0, %v2283
      %v2285 = vpop.f32.mrb[0].mxu0
      %2286 = vmatprep.mubr.bf16.mxu0 0
      %2287 = vmatmul.mubr.bf16.gmra.mrb[0].mxu0 %v944
      %v2288 = vpop.f32.mrb[0].mxu0
      %v2289 = vadd.f32 0.0, %v2288
      %v2290 = vpop.f32.mrb[0].mxu0
      %v2291 = vpop.f32.mrb[0].mxu0
      %v2292 = vadd.f32 0.0, %v2291
      %v2293 = vpop.f32.mrb[0].mxu0
      %2294 = vmatprep.mubr.bf16.mxu0 0
      %2295 = vmatmul.mubr.bf16.gmra.mrb[0].mxu0 %v947
      %v2296 = vpop.f32.mrb[0].mxu0
      %v2297 = vadd.f32 0.0, %v2296
      %v2298 = vpop.f32.mrb[0].mxu0
      %v2299 = vpop.f32.mrb[0].mxu0
      %v2300 = vadd.f32 0.0, %v2299
      %v2301 = vpop.f32.mrb[0].mxu0
      %2302 = vmatprep.mubr.bf16.mxu0 0
      %2303 = vmatmul.mubr.bf16.gmra.mrb[0].mxu0 %v950
      %v2304 = vpop.f32.mrb[0].mxu0
      %v2305 = vadd.f32 0.0, %v2304
      %v2306 = vpop.f32.mrb[0].mxu0
      %v2307 = vpop.f32.mrb[0].mxu0
      %v2308 = vadd.f32 0.0, %v2307
      %v2309 = vpop.f32.mrb[0].mxu0
      %2310 = vmatprep.mubr.bf16.mxu0 0
      %2311 = vmatmul.mubr.bf16.gmra.mrb[0].mxu0 %v953
      %v2312 = vpop.f32.mrb[0].mxu0
      %v2313 = vadd.f32 0.0, %v2312
      %v2314 = vpop.f32.mrb[0].mxu0
      %v2315 = vpop.f32.mrb[0].mxu0
      %v2316 = vadd.f32 0.0, %v2315
      %v2317 = vpop.f32.mrb[0].mxu0
      %2318 = vmatprep.mubr.bf16.mxu0 0
      %2319 = vmatmul.mubr.bf16.gmra.mrb[0].mxu0 %v956
      %v2320 = vpop.f32.mrb[0].mxu0
      %v2321 = vadd.f32 0.0, %v2320
      %v2322 = vpop.f32.mrb[0].mxu0
      %v2323 = vpop.f32.mrb[0].mxu0
      %v2324 = vadd.f32 0.0, %v2323
      %v2325 = vpop.f32.mrb[0].mxu0
      %2326 = vmatprep.mubr.bf16.mxu0 0
      %2327 = vmatmul.mubr.bf16.gmra.mrb[0].mxu0 %v959
      %v2328 = vpop.f32.mrb[0].mxu0
      %v2329 = vadd.f32 0.0, %v2328
      %v2330 = vpop.f32.mrb[0].mxu0
      %v2331 = vpop.f32.mrb[0].mxu0
      %v2332 = vadd.f32 0.0, %v2331
      %v2333 = vpop.f32.mrb[0].mxu0
      %2334 = vmatprep.mubr.bf16.mxu0 0
      %2335 = vmatmul.mubr.bf16.gmra.mrb[0].mxu0 %v1572
      %v2336 = vpop.f32.mrb[0].mxu0
      %v2337 = vadd.f32 0.0, %v2336
      %v2338 = vpop.f32.mrb[0].mxu0
      %v2339 = vpop.f32.mrb[0].mxu0
      %v2340 = vadd.f32 0.0, %v2339
      %v2341 = vpop.f32.mrb[0].mxu0
      %2342 = vmatprep.mubr.bf16.mxu0 0
      %2343 = vmatmul.mubr.bf16.gmra.mrb[0].mxu0 %v2185
      %v2344 = vpop.f32.mrb[0].mxu0
      %v2345 = vadd.f32 0.0, %v2344
      %v2346 = vpop.f32.mrb[0].mxu0
      %v2347 = vpop.f32.mrb[0].mxu0
      %v2348 = vadd.f32 0.0, %v2347
      %v2349 = vpop.f32.mrb[0].mxu0
      %2350 = vdwg.mxu0
      %v2351 = vadd.f32 %v2147, %v2225
      %v2352 = vadd.f32 %v2148, %v2228
      %v2353 = vadd.f32 %v2149, %v2233
      %v2354 = vadd.f32 %v2150, %v2236
      %v2355 = vadd.f32 %v2151, %v2241
      %v2356 = vadd.f32 %v2152, %v2244
      %v2357 = vadd.f32 %v2153, %v2249
      %v2358 = vadd.f32 %v2154, %v2252
      %v2359 = vadd.f32 %v2155, %v2257
      %v2360 = vadd.f32 %v2156, %v2260
      %v2361 = vadd.f32 %v2157, %v2265
      %v2362 = vadd.f32 %v2158, %v2268
      %v2363 = vadd.f32 %v2159, %v2273
      %v2364 = vadd.f32 %v2160, %v2276
      %v2365 = vadd.f32 %v2161, %v2281
      %v2366 = vadd.f32 %v2162, %v2284
      %v2367 = vadd.f32 %v2163, %v2289
      %v2368 = vadd.f32 %v2164, %v2292
      %v2369 = vadd.f32 %v2165, %v2297
      %v2370 = vadd.f32 %v2166, %v2300
      %v2371 = vadd.f32 %v2167, %v2305
      %v2372 = vadd.f32 %v2168, %v2308
      %v2373 = vadd.f32 %v2169, %v2313
      %v2374 = vadd.f32 %v2170, %v2316
      %v2375 = vadd.f32 %v2171, %v2321
      %v2376 = vadd.f32 %v2172, %v2324
      %v2377 = vadd.f32 %v2173, %v2329
      %v2378 = vadd.f32 %v2174, %v2332
      %v2379 = vadd.f32 %v2175, %v2337
      %v2380 = vadd.f32 %v2176, %v2340
      %v2381 = vadd.f32 %v2177, %v2345
      %v2382 = vadd.f32 %v2178, %v2348
      %v2383 = vld [vmem:[%s2] sm:$0x1]
      %v2385 = vlaneseq
      %v2386 = vshrl.u32 %v2385, 7
      %v2387 = vsub.s32 0, %v2386
      %v2388 = vrot.slane %v2383, %v2387
      %v2390 = vadd.f32 %v2351, %v2388
      %v2391 = vadd.f32 %v2352, %v2388
      %v2392 = vadd.f32 %v2353, %v2388
      %v2393 = vadd.f32 %v2354, %v2388
      %v2394 = vadd.f32 %v2355, %v2388
      %v2395 = vadd.f32 %v2356, %v2388
      %v2396 = vadd.f32 %v2357, %v2388
      %v2397 = vadd.f32 %v2358, %v2388
      %v2398 = vadd.f32 %v2359, %v2388
      %v2399 = vadd.f32 %v2360, %v2388
      %v2400 = vadd.f32 %v2361, %v2388
      %v2401 = vadd.f32 %v2362, %v2388
      %v2402 = vadd.f32 %v2363, %v2388
      %v2403 = vadd.f32 %v2364, %v2388
      %v2404 = vadd.f32 %v2365, %v2388
      %v2405 = vadd.f32 %v2366, %v2388
      %v2406 = vadd.f32 %v2367, %v2388
      %v2407 = vadd.f32 %v2368, %v2388
      %v2408 = vadd.f32 %v2369, %v2388
      %v2409 = vadd.f32 %v2370, %v2388
      %v2410 = vadd.f32 %v2371, %v2388
      %v2411 = vadd.f32 %v2372, %v2388
      %v2412 = vadd.f32 %v2373, %v2388
      %v2413 = vadd.f32 %v2374, %v2388
      %v2414 = vadd.f32 %v2375, %v2388
      %v2415 = vadd.f32 %v2376, %v2388
      %v2416 = vadd.f32 %v2377, %v2388
      %v2417 = vadd.f32 %v2378, %v2388
      %v2418 = vadd.f32 %v2379, %v2388
      %v2419 = vadd.f32 %v2380, %v2388
      %v2420 = vadd.f32 %v2381, %v2388
      %v2421 = vadd.f32 %v2382, %v2388
      %v2422 = vmax.f32 %v2390, 0.0
      %v2423 = vmax.f32 %v2391, 0.0
      %v2424 = vmax.f32 %v2392, 0.0
      %v2425 = vmax.f32 %v2393, 0.0
      %v2426 = vmax.f32 %v2394, 0.0
      %v2427 = vmax.f32 %v2395, 0.0
      %v2428 = vmax.f32 %v2396, 0.0
      %v2429 = vmax.f32 %v2397, 0.0
      %v2430 = vmax.f32 %v2398, 0.0
      %v2431 = vmax.f32 %v2399, 0.0
      %v2432 = vmax.f32 %v2400, 0.0
      %v2433 = vmax.f32 %v2401, 0.0
      %v2434 = vmax.f32 %v2402, 0.0
      %v2435 = vmax.f32 %v2403, 0.0
      %v2436 = vmax.f32 %v2404, 0.0
      %v2437 = vmax.f32 %v2405, 0.0
      %v2438 = vmax.f32 %v2406, 0.0
      %v2439 = vmax.f32 %v2407, 0.0
      %v2440 = vmax.f32 %v2408, 0.0
      %v2441 = vmax.f32 %v2409, 0.0
      %v2442 = vmax.f32 %v2410, 0.0
      %v2443 = vmax.f32 %v2411, 0.0
      %v2444 = vmax.f32 %v2412, 0.0
      %v2445 = vmax.f32 %v2413, 0.0
      %v2446 = vmax.f32 %v2414, 0.0
      %v2447 = vmax.f32 %v2415, 0.0
      %v2448 = vmax.f32 %v2416, 0.0
      %v2449 = vmax.f32 %v2417, 0.0
      %v2450 = vmax.f32 %v2418, 0.0
      %v2451 = vmax.f32 %v2419, 0.0
      %v2452 = vmax.f32 %v2420, 0.0
      %v2453 = vmax.f32 %v2421, 0.0
      %vm2454 = vcmask 130048
      %2455 = vst.msk [vmem:[%s313] sm:$0xff] %vm2454, %v2422
      %2456 = vst.msk [vmem:[%s313 + $0x8] sm:$0xff] %vm2454, %v2423
      %2457 = vst.msk [vmem:[%s313 + $0x10] sm:$0xff] %vm2454, %v2424
      %2458 = vst.msk [vmem:[%s313 + $0x18] sm:$0xff] %vm2454, %v2425
      %2459 = vst.msk [vmem:[%s313 + $0x20] sm:$0xff] %vm2454, %v2426
      %2460 = vst.msk [vmem:[%s313 + $0x28] sm:$0xff] %vm2454, %v2427
      %2461 = vst.msk [vmem:[%s313 + $0x30] sm:$0xff] %vm2454, %v2428
      %2462 = vst.msk [vmem:[%s313 + $0x38] sm:$0xff] %vm2454, %v2429
      %2463 = vst.msk [vmem:[%s313 + $0x40] sm:$0xff] %vm2454, %v2430
      %2464 = vst.msk [vmem:[%s313 + $0x48] sm:$0xff] %vm2454, %v2431
      %2465 = vst.msk [vmem:[%s313 + $0x50] sm:$0xff] %vm2454, %v2432
      %2466 = vst.msk [vmem:[%s313 + $0x58] sm:$0xff] %vm2454, %v2433
      %2467 = vst.msk [vmem:[%s313 + $0x60] sm:$0xff] %vm2454, %v2434
      %2468 = vst.msk [vmem:[%s313 + $0x68] sm:$0xff] %vm2454, %v2435
      %2469 = vst.msk [vmem:[%s313 + $0x70] sm:$0xff] %vm2454, %v2436
      %2470 = vst.msk [vmem:[%s313 + $0x78] sm:$0xff] %vm2454, %v2437
      %2471 = vst.msk [vmem:[%s313 + $0x80] sm:$0xff] %vm2454, %v2438
      %2472 = vst.msk [vmem:[%s313 + $0x88] sm:$0xff] %vm2454, %v2439
      %2473 = vst.msk [vmem:[%s313 + $0x90] sm:$0xff] %vm2454, %v2440
      %2474 = vst.msk [vmem:[%s313 + $0x98] sm:$0xff] %vm2454, %v2441
      %2475 = vst.msk [vmem:[%s313 + $0xa0] sm:$0xff] %vm2454, %v2442
      %2476 = vst.msk [vmem:[%s313 + $0xa8] sm:$0xff] %vm2454, %v2443
      %2477 = vst.msk [vmem:[%s313 + $0xb0] sm:$0xff] %vm2454, %v2444
      %2478 = vst.msk [vmem:[%s313 + $0xb8] sm:$0xff] %vm2454, %v2445
      %2479 = vst.msk [vmem:[%s313 + $0xc0] sm:$0xff] %vm2454, %v2446
      %2480 = vst.msk [vmem:[%s313 + $0xc8] sm:$0xff] %vm2454, %v2447
      %2481 = vst.msk [vmem:[%s313 + $0xd0] sm:$0xff] %vm2454, %v2448
      %2482 = vst.msk [vmem:[%s313 + $0xd8] sm:$0xff] %vm2454, %v2449
      %2483 = vst.msk [vmem:[%s313 + $0xe0] sm:$0xff] %vm2454, %v2450
      %2484 = vst.msk [vmem:[%s313 + $0xe8] sm:$0xff] %vm2454, %v2451
      %2485 = vst.msk [vmem:[%s313 + $0xf0] sm:$0xff] %vm2454, %v2452
      %2486 = vst.msk [vmem:[%s313 + $0xf8] sm:$0xff] %vm2454, %v2453
      %2487 = vst.msk [vmem:[#allocation2] sm:$0xff] %vm2454, 0.0
      %2488 = vst.msk [vmem:[#allocation2 + $0x8] sm:$0xff] %vm2454, 0.0
      %vm2489 = vcmask 123904
      %2490 = vst.msk [vmem:[#allocation2 + $0x10] sm:$0x3] %vm2489, 0.0
      %2491 = vst.msk [vmem:[#allocation2 + $0x18] sm:$0xff] %vm2454, 0.0
      %2492 = vst.msk [vmem:[#allocation2 + $0x20] sm:$0xff] %vm2454, 0.0
      %2493 = vst.msk [vmem:[#allocation2 + $0x28] sm:$0x3] %vm2489, 0.0
      %2494 = vst.msk [vmem:[#allocation2 + $0x30] sm:$0xff] %vm2454, 0.0
      %2495 = vst.msk [vmem:[#allocation2 + $0x38] sm:$0xff] %vm2454, 0.0
      %2496 = vst.msk [vmem:[#allocation2 + $0x40] sm:$0x3] %vm2489, 0.0
      %2497 = vst.msk [vmem:[#allocation2 + $0x48] sm:$0xff] %vm2454, 0.0
      %2498 = vst.msk [vmem:[#allocation2 + $0x50] sm:$0xff] %vm2454, 0.0
      %2499 = vst.msk [vmem:[#allocation2 + $0x58] sm:$0x3] %vm2489, 0.0
      %2500 = vst.msk [vmem:[#allocation2 + $0x60] sm:$0xff] %vm2454, 0.0
      %2501 = vst.msk [vmem:[#allocation2 + $0x68] sm:$0xff] %vm2454, 0.0
      %2502 = vst.msk [vmem:[#allocation2 + $0x70] sm:$0x3] %vm2489, 0.0
      %2503 = vst.msk [vmem:[#allocation2 + $0x78] sm:$0xff] %vm2454, 0.0
      %2504 = vst.msk [vmem:[#allocation2 + $0x80] sm:$0xff] %vm2454, 0.0
      %2505 = vst.msk [vmem:[#allocation2 + $0x88] sm:$0x3] %vm2489, 0.0
      %2506 = vst.msk [vmem:[#allocation2 + $0x90] sm:$0xff] %vm2454, 0.0
      %2507 = vst.msk [vmem:[#allocation2 + $0x98] sm:$0xff] %vm2454, 0.0
      %2508 = vst.msk [vmem:[#allocation2 + $0xa0] sm:$0x3] %vm2489, 0.0
      %2509 = vst.msk [vmem:[#allocation2 + $0xa8] sm:$0xff] %vm2454, 0.0
      %2510 = vst.msk [vmem:[#allocation2 + $0xb0] sm:$0xff] %vm2454, 0.0
      %2511 = vst.msk [vmem:[#allocation2 + $0xb8] sm:$0x3] %vm2489, 0.0
      %2512 = vst.msk [vmem:[#allocation2 + $0xc0] sm:$0xff] %vm2454, 0.0
      %2513 = vst.msk [vmem:[#allocation2 + $0xc8] sm:$0xff] %vm2454, 0.0
      %2514 = vst.msk [vmem:[#allocation2 + $0xd0] sm:$0x3] %vm2489, 0.0
      %2515 = vst.msk [vmem:[#allocation2 + $0xd8] sm:$0xff] %vm2454, 0.0
      %2516 = vst.msk [vmem:[#allocation2 + $0xe0] sm:$0xff] %vm2454, 0.0
      %2517 = vst.msk [vmem:[#allocation2 + $0xe8] sm:$0x3] %vm2489, 0.0
      %2518 = vst.msk [vmem:[#allocation2 + $0xf0] sm:$0xff] %vm2454, 0.0
      %2519 = vst.msk [vmem:[#allocation2 + $0xf8] sm:$0xff] %vm2454, 0.0
      %2520 = vst.msk [vmem:[#allocation2 + $0x100] sm:$0x3] %vm2489, 0.0
      %2521 = vst.msk [vmem:[#allocation2 + $0x108] sm:$0xff] %vm2454, 0.0
      %2522 = vst.msk [vmem:[#allocation2 + $0x110] sm:$0xff] %vm2454, 0.0
      %2523 = vst.msk [vmem:[#allocation2 + $0x118] sm:$0x3] %vm2489, 0.0
      %2524 = vst.msk [vmem:[#allocation2 + $0x120] sm:$0xff] %vm2454, 0.0
      %2525 = vst.msk [vmem:[#allocation2 + $0x128] sm:$0xff] %vm2454, 0.0
      %2526 = vst.msk [vmem:[#allocation2 + $0x130] sm:$0x3] %vm2489, 0.0
      %2527 = vst.msk [vmem:[#allocation2 + $0x138] sm:$0xff] %vm2454, 0.0
      %2528 = vst.msk [vmem:[#allocation2 + $0x140] sm:$0xff] %vm2454, 0.0
      %2529 = vst.msk [vmem:[#allocation2 + $0x148] sm:$0x3] %vm2489, 0.0
      %2530 = vst.msk [vmem:[#allocation2 + $0x150] sm:$0xff] %vm2454, 0.0
      %2531 = vst.msk [vmem:[#allocation2 + $0x158] sm:$0xff] %vm2454, 0.0
      %2532 = vst.msk [vmem:[#allocation2 + $0x160] sm:$0x3] %vm2489, 0.0
      %2533 = vst.msk [vmem:[#allocation2 + $0x168] sm:$0xff] %vm2454, 0.0
      %2534 = vst.msk [vmem:[#allocation2 + $0x170] sm:$0xff] %vm2454, 0.0
      %2535 = vst.msk [vmem:[#allocation2 + $0x178] sm:$0x3] %vm2489, 0.0
      %2536 = vst.msk [vmem:[#allocation2 + $0x180] sm:$0xff] %vm2454, 0.0
      %2537 = vst.msk [vmem:[#allocation2 + $0x188] sm:$0xff] %vm2454, 0.0
      %2538 = vst.msk [vmem:[#allocation2 + $0x190] sm:$0x3] %vm2489, 0.0
      %2539 = vst.msk [vmem:[#allocation2 + $0x198] sm:$0xff] %vm2454, 0.0
      %2540 = vst.msk [vmem:[#allocation2 + $0x1a0] sm:$0xff] %vm2454, 0.0
      %2541 = vst.msk [vmem:[#allocation2 + $0x1a8] sm:$0x3] %vm2489, 0.0
      %s2542 = scalar_lea.vmem [#allocation2], 24
      %2543 = vst.msk [vmem:[%s2542 + $0x1] sm:$0xff] %vm2454, %v2422
      %2544 = vst.msk [vmem:[%s2542 + $0x9] sm:$0xff] %vm2454, %v2423
      %s2545 = scalar_lea.vmem [#allocation2], 48
      %2546 = vst.msk [vmem:[%s2545 + $0x1] sm:$0xff] %vm2454, %v2424
      %2547 = vst.msk [vmem:[%s2545 + $0x9] sm:$0xff] %vm2454, %v2425
      %s2548 = scalar_lea.vmem [#allocation2], 72
      %2549 = vst.msk [vmem:[%s2548 + $0x1] sm:$0xff] %vm2454, %v2426
      %2550 = vst.msk [vmem:[%s2548 + $0x9] sm:$0xff] %vm2454, %v2427
      %s2551 = scalar_lea.vmem [#allocation2], 96
      %2552 = vst.msk [vmem:[%s2551 + $0x1] sm:$0xff] %vm2454, %v2428
      %2553 = vst.msk [vmem:[%s2551 + $0x9] sm:$0xff] %vm2454, %v2429
      %s2554 = scalar_lea.vmem [#allocation2], 120
      %2555 = vst.msk [vmem:[%s2554 + $0x1] sm:$0xff] %vm2454, %v2430
      %2556 = vst.msk [vmem:[%s2554 + $0x9] sm:$0xff] %vm2454, %v2431
      %s2557 = scalar_lea.vmem [#allocation2], 144
      %2558 = vst.msk [vmem:[%s2557 + $0x1] sm:$0xff] %vm2454, %v2432
      %2559 = vst.msk [vmem:[%s2557 + $0x9] sm:$0xff] %vm2454, %v2433
      %s2560 = scalar_lea.vmem [#allocation2], 168
      %2561 = vst.msk [vmem:[%s2560 + $0x1] sm:$0xff] %vm2454, %v2434
      %2562 = vst.msk [vmem:[%s2560 + $0x9] sm:$0xff] %vm2454, %v2435
      %s2563 = scalar_lea.vmem [#allocation2], 192
      %2564 = vst.msk [vmem:[%s2563 + $0x1] sm:$0xff] %vm2454, %v2436
      %2565 = vst.msk [vmem:[%s2563 + $0x9] sm:$0xff] %vm2454, %v2437
      %s2566 = scalar_lea.vmem [#allocation2], 216
      %2567 = vst.msk [vmem:[%s2566 + $0x1] sm:$0xff] %vm2454, %v2438
      %2568 = vst.msk [vmem:[%s2566 + $0x9] sm:$0xff] %vm2454, %v2439
      %s2569 = scalar_lea.vmem [#allocation2], 240
      %2570 = vst.msk [vmem:[%s2569 + $0x1] sm:$0xff] %vm2454, %v2440
      %2571 = vst.msk [vmem:[%s2569 + $0x9] sm:$0xff] %vm2454, %v2441
      %s2572 = scalar_lea.vmem [#allocation2], 264
      %2573 = vst.msk [vmem:[%s2572 + $0x1] sm:$0xff] %vm2454, %v2442
      %2574 = vst.msk [vmem:[%s2572 + $0x9] sm:$0xff] %vm2454, %v2443
      %s2575 = scalar_lea.vmem [#allocation2], 288
      %2576 = vst.msk [vmem:[%s2575 + $0x1] sm:$0xff] %vm2454, %v2444
      %2577 = vst.msk [vmem:[%s2575 + $0x9] sm:$0xff] %vm2454, %v2445
      %s2578 = scalar_lea.vmem [#allocation2], 312
      %2579 = vst.msk [vmem:[%s2578 + $0x1] sm:$0xff] %vm2454, %v2446
      %2580 = vst.msk [vmem:[%s2578 + $0x9] sm:$0xff] %vm2454, %v2447
      %s2581 = scalar_lea.vmem [#allocation2], 336
      %2582 = vst.msk [vmem:[%s2581 + $0x1] sm:$0xff] %vm2454, %v2448
      %2583 = vst.msk [vmem:[%s2581 + $0x9] sm:$0xff] %vm2454, %v2449
      %s2584 = scalar_lea.vmem [#allocation2], 360
      %2585 = vst.msk [vmem:[%s2584 + $0x1] sm:$0xff] %vm2454, %v2450
      %2586 = vst.msk [vmem:[%s2584 + $0x9] sm:$0xff] %vm2454, %v2451
      %s2587 = scalar_lea.vmem [#allocation2], 384
      %2588 = vst.msk [vmem:[%s2587 + $0x1] sm:$0xff] %vm2454, %v2452
      %2589 = vst.msk [vmem:[%s2587 + $0x9] sm:$0xff] %vm2454, %v2453
      %v2590 = vld [vmem:[#allocation2] sm:$0xff]
      %v2591 = vld [vmem:[#allocation2 + $0x8] sm:$0xff]
      %v2592 = vld [vmem:[%s2542] sm:$0xff]
      %v2593 = vld [vmem:[%s2542 + $0x8] sm:$0xff]
      %v2594 = vld [vmem:[%s2545] sm:$0xff]
      %v2595 = vld [vmem:[%s2545 + $0x8] sm:$0xff]
      %v2596 = vld [vmem:[%s2548] sm:$0xff]
      %v2597 = vld [vmem:[%s2548 + $0x8] sm:$0xff]
      %v2598 = vld [vmem:[%s2551] sm:$0xff]
      %v2599 = vld [vmem:[%s2551 + $0x8] sm:$0xff]
      %v2600 = vld [vmem:[%s2554] sm:$0xff]
      %v2601 = vld [vmem:[%s2554 + $0x8] sm:$0xff]
      %v2602 = vld [vmem:[%s2557] sm:$0xff]
      %v2603 = vld [vmem:[%s2557 + $0x8] sm:$0xff]
      %v2604 = vld [vmem:[%s2560] sm:$0xff]
      %v2605 = vld [vmem:[%s2560 + $0x8] sm:$0xff]
      %v2606 = vld [vmem:[%s2563] sm:$0xff]
      %v2607 = vld [vmem:[%s2563 + $0x8] sm:$0xff]
      %v2608 = vld [vmem:[%s2566] sm:$0xff]
      %v2609 = vld [vmem:[%s2566 + $0x8] sm:$0xff]
      %v2610 = vld [vmem:[%s2569] sm:$0xff]
      %v2611 = vld [vmem:[%s2569 + $0x8] sm:$0xff]
      %v2612 = vld [vmem:[%s2572] sm:$0xff]
      %v2613 = vld [vmem:[%s2572 + $0x8] sm:$0xff]
      %v2614 = vld [vmem:[%s2575] sm:$0xff]
      %v2615 = vld [vmem:[%s2575 + $0x8] sm:$0xff]
      %v2616 = vld [vmem:[%s2578] sm:$0xff]
      %v2617 = vld [vmem:[%s2578 + $0x8] sm:$0xff]
      %v2618 = vld [vmem:[%s2581] sm:$0xff]
      %v2619 = vld [vmem:[%s2581 + $0x8] sm:$0xff]
      %v2620 = vld [vmem:[%s2584] sm:$0xff]
      %v2621 = vld [vmem:[%s2584 + $0x8] sm:$0xff]
      %v2622 = vpack.c.bf16 %v2591, %v2590
      %v2623 = vpack.c.bf16 %v2593, %v2592
      %v2624 = vpack.c.bf16 %v2595, %v2594
      %v2625 = vpack.c.bf16 %v2597, %v2596
      %v2626 = vpack.c.bf16 %v2599, %v2598
      %v2627 = vpack.c.bf16 %v2601, %v2600
      %v2628 = vpack.c.bf16 %v2603, %v2602
      %v2629 = vpack.c.bf16 %v2605, %v2604
      %v2630 = vpack.c.bf16 %v2607, %v2606
      %v2631 = vpack.c.bf16 %v2609, %v2608
      %v2632 = vpack.c.bf16 %v2611, %v2610
      %v2633 = vpack.c.bf16 %v2613, %v2612
      %v2634 = vpack.c.bf16 %v2615, %v2614
      %v2635 = vpack.c.bf16 %v2617, %v2616
      %v2636 = vpack.c.bf16 %v2619, %v2618
      %v2637 = vpack.c.bf16 %v2621, %v2620
      %v2638 = vld [vmem:[%s3] sm:$0xf]
      %v2639 = vld [vmem:[%s3 + $0x4] sm:$0xf]
      %v2640 = vld [vmem:[#allocation2 + $0x1] sm:$0xff]
      %v2641 = vld [vmem:[#allocation2 + $0x9] sm:$0xff]
      %v2642 = vld [vmem:[%s2542 + $0x1] sm:$0xff]
      %v2643 = vld [vmem:[%s2542 + $0x9] sm:$0xff]
      %v2644 = vld [vmem:[%s2545 + $0x1] sm:$0xff]
      %v2645 = vld [vmem:[%s2545 + $0x9] sm:$0xff]
      %v2646 = vld [vmem:[%s2548 + $0x1] sm:$0xff]
      %v2647 = vld [vmem:[%s2548 + $0x9] sm:$0xff]
      %v2648 = vld [vmem:[%s2551 + $0x1] sm:$0xff]
      %v2649 = vld [vmem:[%s2551 + $0x9] sm:$0xff]
      %v2650 = vld [vmem:[%s2554 + $0x1] sm:$0xff]
      %v2651 = vld [vmem:[%s2554 + $0x9] sm:$0xff]
      %v2652 = vld [vmem:[%s2557 + $0x1] sm:$0xff]
      %v2653 = vld [vmem:[%s2557 + $0x9] sm:$0xff]
      %v2654 = vld [vmem:[%s2560 + $0x1] sm:$0xff]
      %v2655 = vld [vmem:[%s2560 + $0x9] sm:$0xff]
      %v2656 = vld [vmem:[%s2563 + $0x1] sm:$0xff]
      %v2657 = vld [vmem:[%s2563 + $0x9] sm:$0xff]
      %v2658 = vld [vmem:[%s2566 + $0x1] sm:$0xff]
      %v2659 = vld [vmem:[%s2566 + $0x9] sm:$0xff]
      %v2660 = vld [vmem:[%s2569 + $0x1] sm:$0xff]
      %v2661 = vld [vmem:[%s2569 + $0x9] sm:$0xff]
      %v2662 = vld [vmem:[%s2572 + $0x1] sm:$0xff]
      %v2663 = vld [vmem:[%s2572 + $0x9] sm:$0xff]
      %v2664 = vld [vmem:[%s2575 + $0x1] sm:$0xff]
      %v2665 = vld [vmem:[%s2575 + $0x9] sm:$0xff]
      %v2666 = vld [vmem:[%s2578 + $0x1] sm:$0xff]
      %v2667 = vld [vmem:[%s2578 + $0x9] sm:$0xff]
      %v2668 = vld [vmem:[%s2581 + $0x1] sm:$0xff]
      %v2669 = vld [vmem:[%s2581 + $0x9] sm:$0xff]
      %v2670 = vld [vmem:[%s2584 + $0x1] sm:$0xff]
      %v2671 = vld [vmem:[%s2584 + $0x9] sm:$0xff]
      %v2672 = vpack.c.bf16 %v2641, %v2640
      %v2673 = vpack.c.bf16 %v2643, %v2642
      %v2674 = vpack.c.bf16 %v2645, %v2644
      %v2675 = vpack.c.bf16 %v2647, %v2646
      %v2676 = vpack.c.bf16 %v2649, %v2648
      %v2677 = vpack.c.bf16 %v2651, %v2650
      %v2678 = vpack.c.bf16 %v2653, %v2652
      %v2679 = vpack.c.bf16 %v2655, %v2654
      %v2680 = vpack.c.bf16 %v2657, %v2656
      %v2681 = vpack.c.bf16 %v2659, %v2658
      %v2682 = vpack.c.bf16 %v2661, %v2660
      %v2683 = vpack.c.bf16 %v2663, %v2662
      %v2684 = vpack.c.bf16 %v2665, %v2664
      %v2685 = vpack.c.bf16 %v2667, %v2666
      %v2686 = vpack.c.bf16 %v2669, %v2668
      %v2687 = vpack.c.bf16 %v2671, %v2670
      %s2688 = scalar_lea.vmem %s3, 8
      %v2689 = vld [vmem:[%s2688] sm:$0xf]
      %v2690 = vld [vmem:[%s2688 + $0x4] sm:$0xf]
      %v2693 = vunpack.c.l.b16 %v2689
      %v2694 = vunpack.c.l.b16 %v2690
      %v2695 = vpack.c.b16 %v2694, %v2693
      %v2698 = vsel %vm2454, %v2672, 0
      %v2701 = vsel %vm2454, %v2673, 0
      %v2704 = vsel %vm2454, %v2674, 0
      %v2707 = vsel %vm2454, %v2675, 0
      %v2710 = vsel %vm2454, %v2676, 0
      %v2713 = vsel %vm2454, %v2677, 0
      %v2716 = vsel %vm2454, %v2678, 0
      %v2719 = vsel %vm2454, %v2679, 0
      %v2722 = vsel %vm2454, %v2680, 0
      %v2725 = vsel %vm2454, %v2681, 0
      %v2728 = vsel %vm2454, %v2682, 0
      %v2731 = vsel %vm2454, %v2683, 0
      %v2734 = vsel %vm2454, %v2684, 0
      %v2737 = vsel %vm2454, %v2685, 0
      %v2740 = vsel %vm2454, %v2686, 0
      %v2743 = vsel %vm2454, %v2687, 0
      %2745 = vmatprep.subr.bf16.mxu0 0
      %2746 = vmatpush1.bf16.msra.mxu0 %v2695
      %2747 = vmatprep.subr.bf16.mxu0 0
      %2748 = vmatpush1.bf16.msra.mxu0 0
      %2749 = vmatprep.subr.bf16.mxu0 0
      %2750 = vmatpush1.bf16.msra.mxu0 0
      %2751 = vmatprep.subr.bf16.mxu0 0
      %2752 = vmatpush1.bf16.msra.mxu0 0
      %2753 = vmatprep.subr.bf16.mxu0 0
      %2754 = vmatpush1.bf16.msra.mxu0 0
      %2755 = vmatprep.subr.bf16.mxu0 0
      %2756 = vmatpush1.bf16.msra.mxu0 0
      %2757 = vmatprep.subr.bf16.mxu0 0
      %2758 = vmatpush1.bf16.msra.mxu0 0
      %2759 = vmatprep.subr.bf16.mxu0 0
      %2760 = vmatpush1.bf16.msra.mxu0 0
      %2761 = vmatprep.subr.bf16.mxu0 0
      %2762 = vmatpush1.bf16.msra.mxu0 0
      %2763 = vmatprep.subr.bf16.mxu0 0
      %2764 = vmatpush1.bf16.msra.mxu0 0
      %2765 = vmatprep.subr.bf16.mxu0 0
      %2766 = vmatpush1.bf16.msra.mxu0 0
      %2767 = vmatprep.subr.bf16.mxu0 0
      %2768 = vmatpush1.bf16.msra.mxu0 0
      %2769 = vmatprep.subr.bf16.mxu0 0
      %2770 = vmatpush1.bf16.msra.mxu0 0
      %2771 = vmatprep.subr.bf16.mxu0 0
      %2772 = vmatpush1.bf16.msra.mxu0 0
      %2773 = vmatprep.subr.bf16.mxu0 0
      %2774 = vmatpush1.bf16.msra.mxu0 0
      %2775 = vmatprep.subr.bf16.mxu0 0
      %2776 = vmatpush1.bf16.msra.mxu0 0
      %2777 = vmatprep.mubr.bf16.mxu0 0
      %2778 = vmatmul.mubr.bf16.gmra.mrb[0].mxu0 %v2698
      %v2779 = vpop.f32.mrb[0].mxu0
      %v2780 = vadd.f32 0.0, %v2779
      %v2781 = vpop.f32.mrb[0].mxu0
      %v2782 = vpop.f32.mrb[0].mxu0
      %v2783 = vadd.f32 0.0, %v2782
      %v2784 = vpop.f32.mrb[0].mxu0
      %2785 = vmatprep.mubr.bf16.mxu0 0
      %2786 = vmatmul.mubr.bf16.gmra.mrb[0].mxu0 %v2701
      %v2787 = vpop.f32.mrb[0].mxu0
      %v2788 = vadd.f32 0.0, %v2787
      %v2789 = vpop.f32.mrb[0].mxu0
      %v2790 = vpop.f32.mrb[0].mxu0
      %v2791 = vadd.f32 0.0, %v2790
      %v2792 = vpop.f32.mrb[0].mxu0
      %2793 = vmatprep.mubr.bf16.mxu0 0
      %2794 = vmatmul.mubr.bf16.gmra.mrb[0].mxu0 %v2704
      %v2795 = vpop.f32.mrb[0].mxu0
      %v2796 = vadd.f32 0.0, %v2795
      %v2797 = vpop.f32.mrb[0].mxu0
      %v2798 = vpop.f32.mrb[0].mxu0
      %v2799 = vadd.f32 0.0, %v2798
      %v2800 = vpop.f32.mrb[0].mxu0
      %2801 = vmatprep.mubr.bf16.mxu0 0
      %2802 = vmatmul.mubr.bf16.gmra.mrb[0].mxu0 %v2707
      %v2803 = vpop.f32.mrb[0].mxu0
      %v2804 = vadd.f32 0.0, %v2803
      %v2805 = vpop.f32.mrb[0].mxu0
      %v2806 = vpop.f32.mrb[0].mxu0
      %v2807 = vadd.f32 0.0, %v2806
      %v2808 = vpop.f32.mrb[0].mxu0
      %2809 = vmatprep.mubr.bf16.mxu0 0
      %2810 = vmatmul.mubr.bf16.gmra.mrb[0].mxu0 %v2710
      %v2811 = vpop.f32.mrb[0].mxu0
      %v2812 = vadd.f32 0.0, %v2811
      %v2813 = vpop.f32.mrb[0].mxu0
      %v2814 = vpop.f32.mrb[0].mxu0
      %v2815 = vadd.f32 0.0, %v2814
      %v2816 = vpop.f32.mrb[0].mxu0
      %2817 = vmatprep.mubr.bf16.mxu0 0
      %2818 = vmatmul.mubr.bf16.gmra.mrb[0].mxu0 %v2713
      %v2819 = vpop.f32.mrb[0].mxu0
      %v2820 = vadd.f32 0.0, %v2819
      %v2821 = vpop.f32.mrb[0].mxu0
      %v2822 = vpop.f32.mrb[0].mxu0
      %v2823 = vadd.f32 0.0, %v2822
      %v2824 = vpop.f32.mrb[0].mxu0
      %2825 = vmatprep.mubr.bf16.mxu0 0
      %2826 = vmatmul.mubr.bf16.gmra.mrb[0].mxu0 %v2716
      %v2827 = vpop.f32.mrb[0].mxu0
      %v2828 = vadd.f32 0.0, %v2827
      %v2829 = vpop.f32.mrb[0].mxu0
      %v2830 = vpop.f32.mrb[0].mxu0
      %v2831 = vadd.f32 0.0, %v2830
      %v2832 = vpop.f32.mrb[0].mxu0
      %2833 = vmatprep.mubr.bf16.mxu0 0
      %2834 = vmatmul.mubr.bf16.gmra.mrb[0].mxu0 %v2719
      %v2835 = vpop.f32.mrb[0].mxu0
      %v2836 = vadd.f32 0.0, %v2835
      %v2837 = vpop.f32.mrb[0].mxu0
      %v2838 = vpop.f32.mrb[0].mxu0
      %v2839 = vadd.f32 0.0, %v2838
      %v2840 = vpop.f32.mrb[0].mxu0
      %2841 = vmatprep.mubr.bf16.mxu0 0
      %2842 = vmatmul.mubr.bf16.gmra.mrb[0].mxu0 %v2722
      %v2843 = vpop.f32.mrb[0].mxu0
      %v2844 = vadd.f32 0.0, %v2843
      %v2845 = vpop.f32.mrb[0].mxu0
      %v2846 = vpop.f32.mrb[0].mxu0
      %v2847 = vadd.f32 0.0, %v2846
      %v2848 = vpop.f32.mrb[0].mxu0
      %2849 = vmatprep.mubr.bf16.mxu0 0
      %2850 = vmatmul.mubr.bf16.gmra.mrb[0].mxu0 %v2725
      %v2851 = vpop.f32.mrb[0].mxu0
      %v2852 = vadd.f32 0.0, %v2851
      %v2853 = vpop.f32.mrb[0].mxu0
      %v2854 = vpop.f32.mrb[0].mxu0
      %v2855 = vadd.f32 0.0, %v2854
      %v2856 = vpop.f32.mrb[0].mxu0
      %2857 = vmatprep.mubr.bf16.mxu0 0
      %2858 = vmatmul.mubr.bf16.gmra.mrb[0].mxu0 %v2728
      %v2859 = vpop.f32.mrb[0].mxu0
      %v2860 = vadd.f32 0.0, %v2859
      %v2861 = vpop.f32.mrb[0].mxu0
      %v2862 = vpop.f32.mrb[0].mxu0
      %v2863 = vadd.f32 0.0, %v2862
      %v2864 = vpop.f32.mrb[0].mxu0
      %2865 = vmatprep.mubr.bf16.mxu0 0
      %2866 = vmatmul.mubr.bf16.gmra.mrb[0].mxu0 %v2731
      %v2867 = vpop.f32.mrb[0].mxu0
      %v2868 = vadd.f32 0.0, %v2867
      %v2869 = vpop.f32.mrb[0].mxu0
      %v2870 = vpop.f32.mrb[0].mxu0
      %v2871 = vadd.f32 0.0, %v2870
      %v2872 = vpop.f32.mrb[0].mxu0
      %2873 = vmatprep.mubr.bf16.mxu0 0
      %2874 = vmatmul.mubr.bf16.gmra.mrb[0].mxu0 %v2734
      %v2875 = vpop.f32.mrb[0].mxu0
      %v2876 = vadd.f32 0.0, %v2875
      %v2877 = vpop.f32.mrb[0].mxu0
      %v2878 = vpop.f32.mrb[0].mxu0
      %v2879 = vadd.f32 0.0, %v2878
      %v2880 = vpop.f32.mrb[0].mxu0
      %2881 = vmatprep.mubr.bf16.mxu0 0
      %2882 = vmatmul.mubr.bf16.gmra.mrb[0].mxu0 %v2737
      %v2883 = vpop.f32.mrb[0].mxu0
      %v2884 = vadd.f32 0.0, %v2883
      %v2885 = vpop.f32.mrb[0].mxu0
      %v2886 = vpop.f32.mrb[0].mxu0
      %v2887 = vadd.f32 0.0, %v2886
      %v2888 = vpop.f32.mrb[0].mxu0
      %2889 = vmatprep.mubr.bf16.mxu0 0
      %2890 = vmatmul.mubr.bf16.gmra.mrb[0].mxu0 %v2740
      %v2891 = vpop.f32.mrb[0].mxu0
      %v2892 = vadd.f32 0.0, %v2891
      %v2893 = vpop.f32.mrb[0].mxu0
      %v2894 = vpop.f32.mrb[0].mxu0
      %v2895 = vadd.f32 0.0, %v2894
      %v2896 = vpop.f32.mrb[0].mxu0
      %2897 = vmatprep.mubr.bf16.mxu0 0
      %2898 = vmatmul.mubr.bf16.gmra.mrb[0].mxu0 %v2743
      %v2899 = vpop.f32.mrb[0].mxu0
      %v2900 = vadd.f32 0.0, %v2899
      %v2901 = vpop.f32.mrb[0].mxu0
      %v2902 = vpop.f32.mrb[0].mxu0
      %v2903 = vadd.f32 0.0, %v2902
      %v2904 = vpop.f32.mrb[0].mxu0
      %2905 = vdwg.mxu0
      %v2908 = vunpack.c.l.b16 %v2638
      %v2909 = vunpack.c.l.b16 %v2639
      %v2910 = vpack.c.b16 %v2909, %v2908
      %v2913 = vsel %vm2454, %v2622, 0
      %v2916 = vsel %vm2454, %v2623, 0
      %v2919 = vsel %vm2454, %v2624, 0
      %v2922 = vsel %vm2454, %v2625, 0
      %v2925 = vsel %vm2454, %v2626, 0
      %v2928 = vsel %vm2454, %v2627, 0
      %v2931 = vsel %vm2454, %v2628, 0
      %v2934 = vsel %vm2454, %v2629, 0
      %v2937 = vsel %vm2454, %v2630, 0
      %v2940 = vsel %vm2454, %v2631, 0
      %v2943 = vsel %vm2454, %v2632, 0
      %v2946 = vsel %vm2454, %v2633, 0
      %v2949 = vsel %vm2454, %v2634, 0
      %v2952 = vsel %vm2454, %v2635, 0
      %v2955 = vsel %vm2454, %v2636, 0
      %v2958 = vsel %vm2454, %v2637, 0
      %2960 = vmatprep.subr.bf16.mxu0 0
      %2961 = vmatpush1.bf16.msra.mxu0 %v2910
      %2962 = vmatprep.subr.bf16.mxu0 0
      %2963 = vmatpush1.bf16.msra.mxu0 0
      %2964 = vmatprep.subr.bf16.mxu0 0
      %2965 = vmatpush1.bf16.msra.mxu0 0
      %2966 = vmatprep.subr.bf16.mxu0 0
      %2967 = vmatpush1.bf16.msra.mxu0 0
      %2968 = vmatprep.subr.bf16.mxu0 0
      %2969 = vmatpush1.bf16.msra.mxu0 0
      %2970 = vmatprep.subr.bf16.mxu0 0
      %2971 = vmatpush1.bf16.msra.mxu0 0
      %2972 = vmatprep.subr.bf16.mxu0 0
      %2973 = vmatpush1.bf16.msra.mxu0 0
      %2974 = vmatprep.subr.bf16.mxu0 0
      %2975 = vmatpush1.bf16.msra.mxu0 0
      %2976 = vmatprep.subr.bf16.mxu0 0
      %2977 = vmatpush1.bf16.msra.mxu0 0
      %2978 = vmatprep.subr.bf16.mxu0 0
      %2979 = vmatpush1.bf16.msra.mxu0 0
      %2980 = vmatprep.subr.bf16.mxu0 0
      %2981 = vmatpush1.bf16.msra.mxu0 0
      %2982 = vmatprep.subr.bf16.mxu0 0
      %2983 = vmatpush1.bf16.msra.mxu0 0
      %2984 = vmatprep.subr.bf16.mxu0 0
      %2985 = vmatpush1.bf16.msra.mxu0 0
      %2986 = vmatprep.subr.bf16.mxu0 0
      %2987 = vmatpush1.bf16.msra.mxu0 0
      %2988 = vmatprep.subr.bf16.mxu0 0
      %2989 = vmatpush1.bf16.msra.mxu0 0
      %2990 = vmatprep.subr.bf16.mxu0 0
      %2991 = vmatpush1.bf16.msra.mxu0 0
      %2992 = vmatprep.mubr.bf16.mxu0 0
      %2993 = vmatmul.mubr.bf16.gmra.mrb[0].mxu0 %v2913
      %v2994 = vpop.f32.mrb[0].mxu0
      %v2995 = vadd.f32 %v2780, %v2994
      %v2996 = vpop.f32.mrb[0].mxu0
      %v2997 = vpop.f32.mrb[0].mxu0
      %v2998 = vadd.f32 %v2783, %v2997
      %v2999 = vpop.f32.mrb[0].mxu0
      %3000 = vmatprep.mubr.bf16.mxu0 0
      %3001 = vmatmul.mubr.bf16.gmra.mrb[0].mxu0 %v2916
      %v3002 = vpop.f32.mrb[0].mxu0
      %v3003 = vadd.f32 %v2788, %v3002
      %v3004 = vpop.f32.mrb[0].mxu0
      %v3005 = vpop.f32.mrb[0].mxu0
      %v3006 = vadd.f32 %v2791, %v3005
      %v3007 = vpop.f32.mrb[0].mxu0
      %3008 = vmatprep.mubr.bf16.mxu0 0
      %3009 = vmatmul.mubr.bf16.gmra.mrb[0].mxu0 %v2919
      %v3010 = vpop.f32.mrb[0].mxu0
      %v3011 = vadd.f32 %v2796, %v3010
      %v3012 = vpop.f32.mrb[0].mxu0
      %v3013 = vpop.f32.mrb[0].mxu0
      %v3014 = vadd.f32 %v2799, %v3013
      %v3015 = vpop.f32.mrb[0].mxu0
      %3016 = vmatprep.mubr.bf16.mxu0 0
      %3017 = vmatmul.mubr.bf16.gmra.mrb[0].mxu0 %v2922
      %v3018 = vpop.f32.mrb[0].mxu0
      %v3019 = vadd.f32 %v2804, %v3018
      %v3020 = vpop.f32.mrb[0].mxu0
      %v3021 = vpop.f32.mrb[0].mxu0
      %v3022 = vadd.f32 %v2807, %v3021
      %v3023 = vpop.f32.mrb[0].mxu0
      %3024 = vmatprep.mubr.bf16.mxu0 0
      %3025 = vmatmul.mubr.bf16.gmra.mrb[0].mxu0 %v2925
      %v3026 = vpop.f32.mrb[0].mxu0
      %v3027 = vadd.f32 %v2812, %v3026
      %v3028 = vpop.f32.mrb[0].mxu0
      %v3029 = vpop.f32.mrb[0].mxu0
      %v3030 = vadd.f32 %v2815, %v3029
      %v3031 = vpop.f32.mrb[0].mxu0
      %3032 = vmatprep.mubr.bf16.mxu0 0
      %3033 = vmatmul.mubr.bf16.gmra.mrb[0].mxu0 %v2928
      %v3034 = vpop.f32.mrb[0].mxu0
      %v3035 = vadd.f32 %v2820, %v3034
      %v3036 = vpop.f32.mrb[0].mxu0
      %v3037 = vpop.f32.mrb[0].mxu0
      %v3038 = vadd.f32 %v2823, %v3037
      %v3039 = vpop.f32.mrb[0].mxu0
      %3040 = vmatprep.mubr.bf16.mxu0 0
      %3041 = vmatmul.mubr.bf16.gmra.mrb[0].mxu0 %v2931
      %v3042 = vpop.f32.mrb[0].mxu0
      %v3043 = vadd.f32 %v2828, %v3042
      %v3044 = vpop.f32.mrb[0].mxu0
      %v3045 = vpop.f32.mrb[0].mxu0
      %v3046 = vadd.f32 %v2831, %v3045
      %v3047 = vpop.f32.mrb[0].mxu0
      %3048 = vmatprep.mubr.bf16.mxu0 0
      %3049 = vmatmul.mubr.bf16.gmra.mrb[0].mxu0 %v2934
      %v3050 = vpop.f32.mrb[0].mxu0
      %v3051 = vadd.f32 %v2836, %v3050
      %v3052 = vpop.f32.mrb[0].mxu0
      %v3053 = vpop.f32.mrb[0].mxu0
      %v3054 = vadd.f32 %v2839, %v3053
      %v3055 = vpop.f32.mrb[0].mxu0
      %3056 = vmatprep.mubr.bf16.mxu0 0
      %3057 = vmatmul.mubr.bf16.gmra.mrb[0].mxu0 %v2937
      %v3058 = vpop.f32.mrb[0].mxu0
      %v3059 = vadd.f32 %v2844, %v3058
      %v3060 = vpop.f32.mrb[0].mxu0
      %v3061 = vpop.f32.mrb[0].mxu0
      %v3062 = vadd.f32 %v2847, %v3061
      %v3063 = vpop.f32.mrb[0].mxu0
      %3064 = vmatprep.mubr.bf16.mxu0 0
      %3065 = vmatmul.mubr.bf16.gmra.mrb[0].mxu0 %v2940
      %v3066 = vpop.f32.mrb[0].mxu0
      %v3067 = vadd.f32 %v2852, %v3066
      %v3068 = vpop.f32.mrb[0].mxu0
      %v3069 = vpop.f32.mrb[0].mxu0
      %v3070 = vadd.f32 %v2855, %v3069
      %v3071 = vpop.f32.mrb[0].mxu0
      %3072 = vmatprep.mubr.bf16.mxu0 0
      %3073 = vmatmul.mubr.bf16.gmra.mrb[0].mxu0 %v2943
      %v3074 = vpop.f32.mrb[0].mxu0
      %v3075 = vadd.f32 %v2860, %v3074
      %v3076 = vpop.f32.mrb[0].mxu0
      %v3077 = vpop.f32.mrb[0].mxu0
      %v3078 = vadd.f32 %v2863, %v3077
      %v3079 = vpop.f32.mrb[0].mxu0
      %3080 = vmatprep.mubr.bf16.mxu0 0
      %3081 = vmatmul.mubr.bf16.gmra.mrb[0].mxu0 %v2946
      %v3082 = vpop.f32.mrb[0].mxu0
      %v3083 = vadd.f32 %v2868, %v3082
      %v3084 = vpop.f32.mrb[0].mxu0
      %v3085 = vpop.f32.mrb[0].mxu0
      %v3086 = vadd.f32 %v2871, %v3085
      %v3087 = vpop.f32.mrb[0].mxu0
      %3088 = vmatprep.mubr.bf16.mxu0 0
      %3089 = vmatmul.mubr.bf16.gmra.mrb[0].mxu0 %v2949
      %v3090 = vpop.f32.mrb[0].mxu0
      %v3091 = vadd.f32 %v2876, %v3090
      %v3092 = vpop.f32.mrb[0].mxu0
      %v3093 = vpop.f32.mrb[0].mxu0
      %v3094 = vadd.f32 %v2879, %v3093
      %v3095 = vpop.f32.mrb[0].mxu0
      %3096 = vmatprep.mubr.bf16.mxu0 0
      %3097 = vmatmul.mubr.bf16.gmra.mrb[0].mxu0 %v2952
      %v3098 = vpop.f32.mrb[0].mxu0
      %v3099 = vadd.f32 %v2884, %v3098
      %v3100 = vpop.f32.mrb[0].mxu0
      %v3101 = vpop.f32.mrb[0].mxu0
      %v3102 = vadd.f32 %v2887, %v3101
      %v3103 = vpop.f32.mrb[0].mxu0
      %3104 = vmatprep.mubr.bf16.mxu0 0
      %3105 = vmatmul.mubr.bf16.gmra.mrb[0].mxu0 %v2955
      %v3106 = vpop.f32.mrb[0].mxu0
      %v3107 = vadd.f32 %v2892, %v3106
      %v3108 = vpop.f32.mrb[0].mxu0
      %v3109 = vpop.f32.mrb[0].mxu0
      %v3110 = vadd.f32 %v2895, %v3109
      %v3111 = vpop.f32.mrb[0].mxu0
      %3112 = vmatprep.mubr.bf16.mxu0 0
      %3113 = vmatmul.mubr.bf16.gmra.mrb[0].mxu0 %v2958
      %v3114 = vpop.f32.mrb[0].mxu0
      %v3115 = vadd.f32 %v2900, %v3114
      %v3116 = vpop.f32.mrb[0].mxu0
      %v3117 = vpop.f32.mrb[0].mxu0
      %v3118 = vadd.f32 %v2903, %v3117
      %v3119 = vpop.f32.mrb[0].mxu0
      %3120 = vdwg.mxu0
      %v3121 = vld [vmem:[#allocation2 + $0x2] sm:$0xff]
      %v3122 = vld [vmem:[#allocation2 + $0xa] sm:$0xff]
      %v3123 = vld [vmem:[%s2542 + $0x2] sm:$0xff]
      %v3124 = vld [vmem:[%s2542 + $0xa] sm:$0xff]
      %v3125 = vld [vmem:[%s2545 + $0x2] sm:$0xff]
      %v3126 = vld [vmem:[%s2545 + $0xa] sm:$0xff]
      %v3127 = vld [vmem:[%s2548 + $0x2] sm:$0xff]
      %v3128 = vld [vmem:[%s2548 + $0xa] sm:$0xff]
      %v3129 = vld [vmem:[%s2551 + $0x2] sm:$0xff]
      %v3130 = vld [vmem:[%s2551 + $0xa] sm:$0xff]
      %v3131 = vld [vmem:[%s2554 + $0x2] sm:$0xff]
      %v3132 = vld [vmem:[%s2554 + $0xa] sm:$0xff]
      %v3133 = vld [vmem:[%s2557 + $0x2] sm:$0xff]
      %v3134 = vld [vmem:[%s2557 + $0xa] sm:$0xff]
      %v3135 = vld [vmem:[%s2560 + $0x2] sm:$0xff]
      %v3136 = vld [vmem:[%s2560 + $0xa] sm:$0xff]
      %v3137 = vld [vmem:[%s2563 + $0x2] sm:$0xff]
      %v3138 = vld [vmem:[%s2563 + $0xa] sm:$0xff]
      %v3139 = vld [vmem:[%s2566 + $0x2] sm:$0xff]
      %v3140 = vld [vmem:[%s2566 + $0xa] sm:$0xff]
      %v3141 = vld [vmem:[%s2569 + $0x2] sm:$0xff]
      %v3142 = vld [vmem:[%s2569 + $0xa] sm:$0xff]
      %v3143 = vld [vmem:[%s2572 + $0x2] sm:$0xff]
      %v3144 = vld [vmem:[%s2572 + $0xa] sm:$0xff]
      %v3145 = vld [vmem:[%s2575 + $0x2] sm:$0xff]
      %v3146 = vld [vmem:[%s2575 + $0xa] sm:$0xff]
      %v3147 = vld [vmem:[%s2578 + $0x2] sm:$0xff]
      %v3148 = vld [vmem:[%s2578 + $0xa] sm:$0xff]
      %v3149 = vld [vmem:[%s2581 + $0x2] sm:$0xff]
      %v3150 = vld [vmem:[%s2581 + $0xa] sm:$0xff]
      %v3151 = vld [vmem:[%s2584 + $0x2] sm:$0xff]
      %v3152 = vld [vmem:[%s2584 + $0xa] sm:$0xff]
      %v3153 = vpack.c.bf16 %v3122, %v3121
      %v3154 = vpack.c.bf16 %v3124, %v3123
      %v3155 = vpack.c.bf16 %v3126, %v3125
      %v3156 = vpack.c.bf16 %v3128, %v3127
      %v3157 = vpack.c.bf16 %v3130, %v3129
      %v3158 = vpack.c.bf16 %v3132, %v3131
      %v3159 = vpack.c.bf16 %v3134, %v3133
      %v3160 = vpack.c.bf16 %v3136, %v3135
      %v3161 = vpack.c.bf16 %v3138, %v3137
      %v3162 = vpack.c.bf16 %v3140, %v3139
      %v3163 = vpack.c.bf16 %v3142, %v3141
      %v3164 = vpack.c.bf16 %v3144, %v3143
      %v3165 = vpack.c.bf16 %v3146, %v3145
      %v3166 = vpack.c.bf16 %v3148, %v3147
      %v3167 = vpack.c.bf16 %v3150, %v3149
      %v3168 = vpack.c.bf16 %v3152, %v3151
      %s3169 = scalar_lea.vmem %s3, 16
      %v3170 = vld [vmem:[%s3169] sm:$0xf]
      %v3171 = vld [vmem:[%s3169 + $0x4] sm:$0xf]
      %v3174 = vunpack.c.l.b16 %v3170
      %v3175 = vunpack.c.l.b16 %v3171
      %v3176 = vpack.c.b16 %v3175, %v3174
      %v3179 = vsel %vm2454, %v3153, 0
      %v3182 = vsel %vm2454, %v3154, 0
      %v3185 = vsel %vm2454, %v3155, 0
      %v3188 = vsel %vm2454, %v3156, 0
      %v3191 = vsel %vm2454, %v3157, 0
      %v3194 = vsel %vm2454, %v3158, 0
      %v3197 = vsel %vm2454, %v3159, 0
      %v3200 = vsel %vm2454, %v3160, 0
      %v3203 = vsel %vm2454, %v3161, 0
      %v3206 = vsel %vm2454, %v3162, 0
      %v3209 = vsel %vm2454, %v3163, 0
      %v3212 = vsel %vm2454, %v3164, 0
      %v3215 = vsel %vm2454, %v3165, 0
      %v3218 = vsel %vm2454, %v3166, 0
      %v3221 = vsel %vm2454, %v3167, 0
      %v3224 = vsel %vm2454, %v3168, 0
      %3226 = vmatprep.subr.bf16.mxu0 0
      %3227 = vmatpush1.bf16.msra.mxu0 %v3176
      %3228 = vmatprep.subr.bf16.mxu0 0
      %3229 = vmatpush1.bf16.msra.mxu0 0
      %3230 = vmatprep.subr.bf16.mxu0 0
      %3231 = vmatpush1.bf16.msra.mxu0 0
      %3232 = vmatprep.subr.bf16.mxu0 0
      %3233 = vmatpush1.bf16.msra.mxu0 0
      %3234 = vmatprep.subr.bf16.mxu0 0
      %3235 = vmatpush1.bf16.msra.mxu0 0
      %3236 = vmatprep.subr.bf16.mxu0 0
      %3237 = vmatpush1.bf16.msra.mxu0 0
      %3238 = vmatprep.subr.bf16.mxu0 0
      %3239 = vmatpush1.bf16.msra.mxu0 0
      %3240 = vmatprep.subr.bf16.mxu0 0
      %3241 = vmatpush1.bf16.msra.mxu0 0
      %3242 = vmatprep.subr.bf16.mxu0 0
      %3243 = vmatpush1.bf16.msra.mxu0 0
      %3244 = vmatprep.subr.bf16.mxu0 0
      %3245 = vmatpush1.bf16.msra.mxu0 0
      %3246 = vmatprep.subr.bf16.mxu0 0
      %3247 = vmatpush1.bf16.msra.mxu0 0
      %3248 = vmatprep.subr.bf16.mxu0 0
      %3249 = vmatpush1.bf16.msra.mxu0 0
      %3250 = vmatprep.subr.bf16.mxu0 0
      %3251 = vmatpush1.bf16.msra.mxu0 0
      %3252 = vmatprep.subr.bf16.mxu0 0
      %3253 = vmatpush1.bf16.msra.mxu0 0
      %3254 = vmatprep.subr.bf16.mxu0 0
      %3255 = vmatpush1.bf16.msra.mxu0 0
      %3256 = vmatprep.subr.bf16.mxu0 0
      %3257 = vmatpush1.bf16.msra.mxu0 0
      %3258 = vmatprep.mubr.bf16.mxu0 0
      %3259 = vmatmul.mubr.bf16.gmra.mrb[0].mxu0 %v3179
      %v3260 = vpop.f32.mrb[0].mxu0
      %v3261 = vadd.f32 0.0, %v3260
      %v3262 = vpop.f32.mrb[0].mxu0
      %v3263 = vpop.f32.mrb[0].mxu0
      %v3264 = vadd.f32 0.0, %v3263
      %v3265 = vpop.f32.mrb[0].mxu0
      %3266 = vmatprep.mubr.bf16.mxu0 0
      %3267 = vmatmul.mubr.bf16.gmra.mrb[0].mxu0 %v3182
      %v3268 = vpop.f32.mrb[0].mxu0
      %v3269 = vadd.f32 0.0, %v3268
      %v3270 = vpop.f32.mrb[0].mxu0
      %v3271 = vpop.f32.mrb[0].mxu0
      %v3272 = vadd.f32 0.0, %v3271
      %v3273 = vpop.f32.mrb[0].mxu0
      %3274 = vmatprep.mubr.bf16.mxu0 0
      %3275 = vmatmul.mubr.bf16.gmra.mrb[0].mxu0 %v3185
      %v3276 = vpop.f32.mrb[0].mxu0
      %v3277 = vadd.f32 0.0, %v3276
      %v3278 = vpop.f32.mrb[0].mxu0
      %v3279 = vpop.f32.mrb[0].mxu0
      %v3280 = vadd.f32 0.0, %v3279
      %v3281 = vpop.f32.mrb[0].mxu0
      %3282 = vmatprep.mubr.bf16.mxu0 0
      %3283 = vmatmul.mubr.bf16.gmra.mrb[0].mxu0 %v3188
      %v3284 = vpop.f32.mrb[0].mxu0
      %v3285 = vadd.f32 0.0, %v3284
      %v3286 = vpop.f32.mrb[0].mxu0
      %v3287 = vpop.f32.mrb[0].mxu0
      %v3288 = vadd.f32 0.0, %v3287
      %v3289 = vpop.f32.mrb[0].mxu0
      %3290 = vmatprep.mubr.bf16.mxu0 0
      %3291 = vmatmul.mubr.bf16.gmra.mrb[0].mxu0 %v3191
      %v3292 = vpop.f32.mrb[0].mxu0
      %v3293 = vadd.f32 0.0, %v3292
      %v3294 = vpop.f32.mrb[0].mxu0
      %v3295 = vpop.f32.mrb[0].mxu0
      %v3296 = vadd.f32 0.0, %v3295
      %v3297 = vpop.f32.mrb[0].mxu0
      %3298 = vmatprep.mubr.bf16.mxu0 0
      %3299 = vmatmul.mubr.bf16.gmra.mrb[0].mxu0 %v3194
      %v3300 = vpop.f32.mrb[0].mxu0
      %v3301 = vadd.f32 0.0, %v3300
      %v3302 = vpop.f32.mrb[0].mxu0
      %v3303 = vpop.f32.mrb[0].mxu0
      %v3304 = vadd.f32 0.0, %v3303
      %v3305 = vpop.f32.mrb[0].mxu0
      %3306 = vmatprep.mubr.bf16.mxu0 0
      %3307 = vmatmul.mubr.bf16.gmra.mrb[0].mxu0 %v3197
      %v3308 = vpop.f32.mrb[0].mxu0
      %v3309 = vadd.f32 0.0, %v3308
      %v3310 = vpop.f32.mrb[0].mxu0
      %v3311 = vpop.f32.mrb[0].mxu0
      %v3312 = vadd.f32 0.0, %v3311
      %v3313 = vpop.f32.mrb[0].mxu0
      %3314 = vmatprep.mubr.bf16.mxu0 0
      %3315 = vmatmul.mubr.bf16.gmra.mrb[0].mxu0 %v3200
      %v3316 = vpop.f32.mrb[0].mxu0
      %v3317 = vadd.f32 0.0, %v3316
      %v3318 = vpop.f32.mrb[0].mxu0
      %v3319 = vpop.f32.mrb[0].mxu0
      %v3320 = vadd.f32 0.0, %v3319
      %v3321 = vpop.f32.mrb[0].mxu0
      %3322 = vmatprep.mubr.bf16.mxu0 0
      %3323 = vmatmul.mubr.bf16.gmra.mrb[0].mxu0 %v3203
      %v3324 = vpop.f32.mrb[0].mxu0
      %v3325 = vadd.f32 0.0, %v3324
      %v3326 = vpop.f32.mrb[0].mxu0
      %v3327 = vpop.f32.mrb[0].mxu0
      %v3328 = vadd.f32 0.0, %v3327
      %v3329 = vpop.f32.mrb[0].mxu0
      %3330 = vmatprep.mubr.bf16.mxu0 0
      %3331 = vmatmul.mubr.bf16.gmra.mrb[0].mxu0 %v3206
      %v3332 = vpop.f32.mrb[0].mxu0
      %v3333 = vadd.f32 0.0, %v3332
      %v3334 = vpop.f32.mrb[0].mxu0
      %v3335 = vpop.f32.mrb[0].mxu0
      %v3336 = vadd.f32 0.0, %v3335
      %v3337 = vpop.f32.mrb[0].mxu0
      %3338 = vmatprep.mubr.bf16.mxu0 0
      %3339 = vmatmul.mubr.bf16.gmra.mrb[0].mxu0 %v3209
      %v3340 = vpop.f32.mrb[0].mxu0
      %v3341 = vadd.f32 0.0, %v3340
      %v3342 = vpop.f32.mrb[0].mxu0
      %v3343 = vpop.f32.mrb[0].mxu0
      %v3344 = vadd.f32 0.0, %v3343
      %v3345 = vpop.f32.mrb[0].mxu0
      %3346 = vmatprep.mubr.bf16.mxu0 0
      %3347 = vmatmul.mubr.bf16.gmra.mrb[0].mxu0 %v3212
      %v3348 = vpop.f32.mrb[0].mxu0
      %v3349 = vadd.f32 0.0, %v3348
      %v3350 = vpop.f32.mrb[0].mxu0
      %v3351 = vpop.f32.mrb[0].mxu0
      %v3352 = vadd.f32 0.0, %v3351
      %v3353 = vpop.f32.mrb[0].mxu0
      %3354 = vmatprep.mubr.bf16.mxu0 0
      %3355 = vmatmul.mubr.bf16.gmra.mrb[0].mxu0 %v3215
      %v3356 = vpop.f32.mrb[0].mxu0
      %v3357 = vadd.f32 0.0, %v3356
      %v3358 = vpop.f32.mrb[0].mxu0
      %v3359 = vpop.f32.mrb[0].mxu0
      %v3360 = vadd.f32 0.0, %v3359
      %v3361 = vpop.f32.mrb[0].mxu0
      %3362 = vmatprep.mubr.bf16.mxu0 0
      %3363 = vmatmul.mubr.bf16.gmra.mrb[0].mxu0 %v3218
      %v3364 = vpop.f32.mrb[0].mxu0
      %v3365 = vadd.f32 0.0, %v3364
      %v3366 = vpop.f32.mrb[0].mxu0
      %v3367 = vpop.f32.mrb[0].mxu0
      %v3368 = vadd.f32 0.0, %v3367
      %v3369 = vpop.f32.mrb[0].mxu0
      %3370 = vmatprep.mubr.bf16.mxu0 0
      %3371 = vmatmul.mubr.bf16.gmra.mrb[0].mxu0 %v3221
      %v3372 = vpop.f32.mrb[0].mxu0
      %v3373 = vadd.f32 0.0, %v3372
      %v3374 = vpop.f32.mrb[0].mxu0
      %v3375 = vpop.f32.mrb[0].mxu0
      %v3376 = vadd.f32 0.0, %v3375
      %v3377 = vpop.f32.mrb[0].mxu0
      %3378 = vmatprep.mubr.bf16.mxu0 0
      %3379 = vmatmul.mubr.bf16.gmra.mrb[0].mxu0 %v3224
      %v3380 = vpop.f32.mrb[0].mxu0
      %v3381 = vadd.f32 0.0, %v3380
      %v3382 = vpop.f32.mrb[0].mxu0
      %v3383 = vpop.f32.mrb[0].mxu0
      %v3384 = vadd.f32 0.0, %v3383
      %v3385 = vpop.f32.mrb[0].mxu0
      %3386 = vdwg.mxu0
      %v3387 = vadd.f32 %v2995, %v3261
      %v3388 = vadd.f32 %v2998, %v3264
      %v3389 = vadd.f32 %v3003, %v3269
      %v3390 = vadd.f32 %v3006, %v3272
      %v3391 = vadd.f32 %v3011, %v3277
      %v3392 = vadd.f32 %v3014, %v3280
      %v3393 = vadd.f32 %v3019, %v3285
      %v3394 = vadd.f32 %v3022, %v3288
      %v3395 = vadd.f32 %v3027, %v3293
      %v3396 = vadd.f32 %v3030, %v3296
      %v3397 = vadd.f32 %v3035, %v3301
      %v3398 = vadd.f32 %v3038, %v3304
      %v3399 = vadd.f32 %v3043, %v3309
      %v3400 = vadd.f32 %v3046, %v3312
      %v3401 = vadd.f32 %v3051, %v3317
      %v3402 = vadd.f32 %v3054, %v3320
      %v3403 = vadd.f32 %v3059, %v3325
      %v3404 = vadd.f32 %v3062, %v3328
      %v3405 = vadd.f32 %v3067, %v3333
      %v3406 = vadd.f32 %v3070, %v3336
      %v3407 = vadd.f32 %v3075, %v3341
      %v3408 = vadd.f32 %v3078, %v3344
      %v3409 = vadd.f32 %v3083, %v3349
      %v3410 = vadd.f32 %v3086, %v3352
      %v3411 = vadd.f32 %v3091, %v3357
      %v3412 = vadd.f32 %v3094, %v3360
      %v3413 = vadd.f32 %v3099, %v3365
      %v3414 = vadd.f32 %v3102, %v3368
      %v3415 = vadd.f32 %v3107, %v3373
      %v3416 = vadd.f32 %v3110, %v3376
      %v3417 = vadd.f32 %v3115, %v3381
      %v3418 = vadd.f32 %v3118, %v3384
      %v3419 = vld [vmem:[%s2587] sm:$0xff]
      %v3420 = vld [vmem:[%s2587 + $0x8] sm:$0xff]
      %v3421 = vpack.c.bf16 %v3420, %v3419
      %s3422 = scalar_lea.vmem %s3, 24
      %v3423 = vld [vmem:[%s3422] sm:$0xf]
      %v3424 = vld [vmem:[%s3422 + $0x4] sm:$0xf]
      %v3427 = vunpack.c.l.b16 %v3423
      %v3428 = vunpack.c.l.b16 %v3424
      %v3429 = vpack.c.b16 %v3428, %v3427
      %v3432 = vsel %vm2454, %v3421, 0
      %3434 = vmatprep.subr.bf16.mxu0 0
      %3435 = vmatpush1.bf16.msra.mxu0 %v3429
      %3436 = vmatprep.subr.bf16.mxu0 0
      %3437 = vmatpush1.bf16.msra.mxu0 0
      %3438 = vmatprep.subr.bf16.mxu0 0
      %3439 = vmatpush1.bf16.msra.mxu0 0
      %3440 = vmatprep.subr.bf16.mxu0 0
      %3441 = vmatpush1.bf16.msra.mxu0 0
      %3442 = vmatprep.subr.bf16.mxu0 0
      %3443 = vmatpush1.bf16.msra.mxu0 0
      %3444 = vmatprep.subr.bf16.mxu0 0
      %3445 = vmatpush1.bf16.msra.mxu0 0
      %3446 = vmatprep.subr.bf16.mxu0 0
      %3447 = vmatpush1.bf16.msra.mxu0 0
      %3448 = vmatprep.subr.bf16.mxu0 0
      %3449 = vmatpush1.bf16.msra.mxu0 0
      %3450 = vmatprep.subr.bf16.mxu0 0
      %3451 = vmatpush1.bf16.msra.mxu0 0
      %3452 = vmatprep.subr.bf16.mxu0 0
      %3453 = vmatpush1.bf16.msra.mxu0 0
      %3454 = vmatprep.subr.bf16.mxu0 0
      %3455 = vmatpush1.bf16.msra.mxu0 0
      %3456 = vmatprep.subr.bf16.mxu0 0
      %3457 = vmatpush1.bf16.msra.mxu0 0
      %3458 = vmatprep.subr.bf16.mxu0 0
      %3459 = vmatpush1.bf16.msra.mxu0 0
      %3460 = vmatprep.subr.bf16.mxu0 0
      %3461 = vmatpush1.bf16.msra.mxu0 0
      %3462 = vmatprep.subr.bf16.mxu0 0
      %3463 = vmatpush1.bf16.msra.mxu0 0
      %3464 = vmatprep.subr.bf16.mxu0 0
      %3465 = vmatpush1.bf16.msra.mxu0 0
      %3466 = vmatprep.mubr.bf16.mxu0 0
      %3467 = vmatmul.mubr.bf16.gmra.mrb[0].mxu0 %v2916
      %v3468 = vpop.f32.mrb[0].mxu0
      %v3469 = vadd.f32 0.0, %v3468
      %v3470 = vpop.f32.mrb[0].mxu0
      %v3471 = vpop.f32.mrb[0].mxu0
      %v3472 = vadd.f32 0.0, %v3471
      %v3473 = vpop.f32.mrb[0].mxu0
      %3474 = vmatprep.mubr.bf16.mxu0 0
      %3475 = vmatmul.mubr.bf16.gmra.mrb[0].mxu0 %v2919
      %v3476 = vpop.f32.mrb[0].mxu0
      %v3477 = vadd.f32 0.0, %v3476
      %v3478 = vpop.f32.mrb[0].mxu0
      %v3479 = vpop.f32.mrb[0].mxu0
      %v3480 = vadd.f32 0.0, %v3479
      %v3481 = vpop.f32.mrb[0].mxu0
      %3482 = vmatprep.mubr.bf16.mxu0 0
      %3483 = vmatmul.mubr.bf16.gmra.mrb[0].mxu0 %v2922
      %v3484 = vpop.f32.mrb[0].mxu0
      %v3485 = vadd.f32 0.0, %v3484
      %v3486 = vpop.f32.mrb[0].mxu0
      %v3487 = vpop.f32.mrb[0].mxu0
      %v3488 = vadd.f32 0.0, %v3487
      %v3489 = vpop.f32.mrb[0].mxu0
      %3490 = vmatprep.mubr.bf16.mxu0 0
      %3491 = vmatmul.mubr.bf16.gmra.mrb[0].mxu0 %v2925
      %v3492 = vpop.f32.mrb[0].mxu0
      %v3493 = vadd.f32 0.0, %v3492
      %v3494 = vpop.f32.mrb[0].mxu0
      %v3495 = vpop.f32.mrb[0].mxu0
      %v3496 = vadd.f32 0.0, %v3495
      %v3497 = vpop.f32.mrb[0].mxu0
      %3498 = vmatprep.mubr.bf16.mxu0 0
      %3499 = vmatmul.mubr.bf16.gmra.mrb[0].mxu0 %v2928
      %v3500 = vpop.f32.mrb[0].mxu0
      %v3501 = vadd.f32 0.0, %v3500
      %v3502 = vpop.f32.mrb[0].mxu0
      %v3503 = vpop.f32.mrb[0].mxu0
      %v3504 = vadd.f32 0.0, %v3503
      %v3505 = vpop.f32.mrb[0].mxu0
      %3506 = vmatprep.mubr.bf16.mxu0 0
      %3507 = vmatmul.mubr.bf16.gmra.mrb[0].mxu0 %v2931
      %v3508 = vpop.f32.mrb[0].mxu0
      %v3509 = vadd.f32 0.0, %v3508
      %v3510 = vpop.f32.mrb[0].mxu0
      %v3511 = vpop.f32.mrb[0].mxu0
      %v3512 = vadd.f32 0.0, %v3511
      %v3513 = vpop.f32.mrb[0].mxu0
      %3514 = vmatprep.mubr.bf16.mxu0 0
      %3515 = vmatmul.mubr.bf16.gmra.mrb[0].mxu0 %v2934
      %v3516 = vpop.f32.mrb[0].mxu0
      %v3517 = vadd.f32 0.0, %v3516
      %v3518 = vpop.f32.mrb[0].mxu0
      %v3519 = vpop.f32.mrb[0].mxu0
      %v3520 = vadd.f32 0.0, %v3519
      %v3521 = vpop.f32.mrb[0].mxu0
      %3522 = vmatprep.mubr.bf16.mxu0 0
      %3523 = vmatmul.mubr.bf16.gmra.mrb[0].mxu0 %v2937
      %v3524 = vpop.f32.mrb[0].mxu0
      %v3525 = vadd.f32 0.0, %v3524
      %v3526 = vpop.f32.mrb[0].mxu0
      %v3527 = vpop.f32.mrb[0].mxu0
      %v3528 = vadd.f32 0.0, %v3527
      %v3529 = vpop.f32.mrb[0].mxu0
      %3530 = vmatprep.mubr.bf16.mxu0 0
      %3531 = vmatmul.mubr.bf16.gmra.mrb[0].mxu0 %v2940
      %v3532 = vpop.f32.mrb[0].mxu0
      %v3533 = vadd.f32 0.0, %v3532
      %v3534 = vpop.f32.mrb[0].mxu0
      %v3535 = vpop.f32.mrb[0].mxu0
      %v3536 = vadd.f32 0.0, %v3535
      %v3537 = vpop.f32.mrb[0].mxu0
      %3538 = vmatprep.mubr.bf16.mxu0 0
      %3539 = vmatmul.mubr.bf16.gmra.mrb[0].mxu0 %v2943
      %v3540 = vpop.f32.mrb[0].mxu0
      %v3541 = vadd.f32 0.0, %v3540
      %v3542 = vpop.f32.mrb[0].mxu0
      %v3543 = vpop.f32.mrb[0].mxu0
      %v3544 = vadd.f32 0.0, %v3543
      %v3545 = vpop.f32.mrb[0].mxu0
      %3546 = vmatprep.mubr.bf16.mxu0 0
      %3547 = vmatmul.mubr.bf16.gmra.mrb[0].mxu0 %v2946
      %v3548 = vpop.f32.mrb[0].mxu0
      %v3549 = vadd.f32 0.0, %v3548
      %v3550 = vpop.f32.mrb[0].mxu0
      %v3551 = vpop.f32.mrb[0].mxu0
      %v3552 = vadd.f32 0.0, %v3551
      %v3553 = vpop.f32.mrb[0].mxu0
      %3554 = vmatprep.mubr.bf16.mxu0 0
      %3555 = vmatmul.mubr.bf16.gmra.mrb[0].mxu0 %v2949
      %v3556 = vpop.f32.mrb[0].mxu0
      %v3557 = vadd.f32 0.0, %v3556
      %v3558 = vpop.f32.mrb[0].mxu0
      %v3559 = vpop.f32.mrb[0].mxu0
      %v3560 = vadd.f32 0.0, %v3559
      %v3561 = vpop.f32.mrb[0].mxu0
      %3562 = vmatprep.mubr.bf16.mxu0 0
      %3563 = vmatmul.mubr.bf16.gmra.mrb[0].mxu0 %v2952
      %v3564 = vpop.f32.mrb[0].mxu0
      %v3565 = vadd.f32 0.0, %v3564
      %v3566 = vpop.f32.mrb[0].mxu0
      %v3567 = vpop.f32.mrb[0].mxu0
      %v3568 = vadd.f32 0.0, %v3567
      %v3569 = vpop.f32.mrb[0].mxu0
      %3570 = vmatprep.mubr.bf16.mxu0 0
      %3571 = vmatmul.mubr.bf16.gmra.mrb[0].mxu0 %v2955
      %v3572 = vpop.f32.mrb[0].mxu0
      %v3573 = vadd.f32 0.0, %v3572
      %v3574 = vpop.f32.mrb[0].mxu0
      %v3575 = vpop.f32.mrb[0].mxu0
      %v3576 = vadd.f32 0.0, %v3575
      %v3577 = vpop.f32.mrb[0].mxu0
      %3578 = vmatprep.mubr.bf16.mxu0 0
      %3579 = vmatmul.mubr.bf16.gmra.mrb[0].mxu0 %v2958
      %v3580 = vpop.f32.mrb[0].mxu0
      %v3581 = vadd.f32 0.0, %v3580
      %v3582 = vpop.f32.mrb[0].mxu0
      %v3583 = vpop.f32.mrb[0].mxu0
      %v3584 = vadd.f32 0.0, %v3583
      %v3585 = vpop.f32.mrb[0].mxu0
      %3586 = vmatprep.mubr.bf16.mxu0 0
      %3587 = vmatmul.mubr.bf16.gmra.mrb[0].mxu0 %v3432
      %v3588 = vpop.f32.mrb[0].mxu0
      %v3589 = vadd.f32 0.0, %v3588
      %v3590 = vpop.f32.mrb[0].mxu0
      %v3591 = vpop.f32.mrb[0].mxu0
      %v3592 = vadd.f32 0.0, %v3591
      %v3593 = vpop.f32.mrb[0].mxu0
      %3594 = vdwg.mxu0
      %v3595 = vadd.f32 %v3387, %v3469
      %v3596 = vadd.f32 %v3388, %v3472
      %v3597 = vadd.f32 %v3389, %v3477
      %v3598 = vadd.f32 %v3390, %v3480
      %v3599 = vadd.f32 %v3391, %v3485
      %v3600 = vadd.f32 %v3392, %v3488
      %v3601 = vadd.f32 %v3393, %v3493
      %v3602 = vadd.f32 %v3394, %v3496
      %v3603 = vadd.f32 %v3395, %v3501
      %v3604 = vadd.f32 %v3396, %v3504
      %v3605 = vadd.f32 %v3397, %v3509
      %v3606 = vadd.f32 %v3398, %v3512
      %v3607 = vadd.f32 %v3399, %v3517
      %v3608 = vadd.f32 %v3400, %v3520
      %v3609 = vadd.f32 %v3401, %v3525
      %v3610 = vadd.f32 %v3402, %v3528
      %v3611 = vadd.f32 %v3403, %v3533
      %v3612 = vadd.f32 %v3404, %v3536
      %v3613 = vadd.f32 %v3405, %v3541
      %v3614 = vadd.f32 %v3406, %v3544
      %v3615 = vadd.f32 %v3407, %v3549
      %v3616 = vadd.f32 %v3408, %v3552
      %v3617 = vadd.f32 %v3409, %v3557
      %v3618 = vadd.f32 %v3410, %v3560
      %v3619 = vadd.f32 %v3411, %v3565
      %v3620 = vadd.f32 %v3412, %v3568
      %v3621 = vadd.f32 %v3413, %v3573
      %v3622 = vadd.f32 %v3414, %v3576
      %v3623 = vadd.f32 %v3415, %v3581
      %v3624 = vadd.f32 %v3416, %v3584
      %v3625 = vadd.f32 %v3417, %v3589
      %v3626 = vadd.f32 %v3418, %v3592
      %v3627 = vld [vmem:[%s2587 + $0x1] sm:$0xff]
      %v3628 = vld [vmem:[%s2587 + $0x9] sm:$0xff]
      %v3629 = vpack.c.bf16 %v3628, %v3627
      %s3630 = scalar_lea.vmem %s3, 32
      %v3631 = vld [vmem:[%s3630] sm:$0xf]
      %v3632 = vld [vmem:[%s3630 + $0x4] sm:$0xf]
      %v3635 = vunpack.c.l.b16 %v3631
      %v3636 = vunpack.c.l.b16 %v3632
      %v3637 = vpack.c.b16 %v3636, %v3635
      %v3640 = vsel %vm2454, %v3629, 0
      %3642 = vmatprep.subr.bf16.mxu0 0
      %3643 = vmatpush1.bf16.msra.mxu0 %v3637
      %3644 = vmatprep.subr.bf16.mxu0 0
      %3645 = vmatpush1.bf16.msra.mxu0 0
      %3646 = vmatprep.subr.bf16.mxu0 0
      %3647 = vmatpush1.bf16.msra.mxu0 0
      %3648 = vmatprep.subr.bf16.mxu0 0
      %3649 = vmatpush1.bf16.msra.mxu0 0
      %3650 = vmatprep.subr.bf16.mxu0 0
      %3651 = vmatpush1.bf16.msra.mxu0 0
      %3652 = vmatprep.subr.bf16.mxu0 0
      %3653 = vmatpush1.bf16.msra.mxu0 0
      %3654 = vmatprep.subr.bf16.mxu0 0
      %3655 = vmatpush1.bf16.msra.mxu0 0
      %3656 = vmatprep.subr.bf16.mxu0 0
      %3657 = vmatpush1.bf16.msra.mxu0 0
      %3658 = vmatprep.subr.bf16.mxu0 0
      %3659 = vmatpush1.bf16.msra.mxu0 0
      %3660 = vmatprep.subr.bf16.mxu0 0
      %3661 = vmatpush1.bf16.msra.mxu0 0
      %3662 = vmatprep.subr.bf16.mxu0 0
      %3663 = vmatpush1.bf16.msra.mxu0 0
      %3664 = vmatprep.subr.bf16.mxu0 0
      %3665 = vmatpush1.bf16.msra.mxu0 0
      %3666 = vmatprep.subr.bf16.mxu0 0
      %3667 = vmatpush1.bf16.msra.mxu0 0
      %3668 = vmatprep.subr.bf16.mxu0 0
      %3669 = vmatpush1.bf16.msra.mxu0 0
      %3670 = vmatprep.subr.bf16.mxu0 0
      %3671 = vmatpush1.bf16.msra.mxu0 0
      %3672 = vmatprep.subr.bf16.mxu0 0
      %3673 = vmatpush1.bf16.msra.mxu0 0
      %3674 = vmatprep.mubr.bf16.mxu0 0
      %3675 = vmatmul.mubr.bf16.gmra.mrb[0].mxu0 %v2701
      %v3676 = vpop.f32.mrb[0].mxu0
      %v3677 = vadd.f32 0.0, %v3676
      %v3678 = vpop.f32.mrb[0].mxu0
      %v3679 = vpop.f32.mrb[0].mxu0
      %v3680 = vadd.f32 0.0, %v3679
      %v3681 = vpop.f32.mrb[0].mxu0
      %3682 = vmatprep.mubr.bf16.mxu0 0
      %3683 = vmatmul.mubr.bf16.gmra.mrb[0].mxu0 %v2704
      %v3684 = vpop.f32.mrb[0].mxu0
      %v3685 = vadd.f32 0.0, %v3684
      %v3686 = vpop.f32.mrb[0].mxu0
      %v3687 = vpop.f32.mrb[0].mxu0
      %v3688 = vadd.f32 0.0, %v3687
      %v3689 = vpop.f32.mrb[0].mxu0
      %3690 = vmatprep.mubr.bf16.mxu0 0
      %3691 = vmatmul.mubr.bf16.gmra.mrb[0].mxu0 %v2707
      %v3692 = vpop.f32.mrb[0].mxu0
      %v3693 = vadd.f32 0.0, %v3692
      %v3694 = vpop.f32.mrb[0].mxu0
      %v3695 = vpop.f32.mrb[0].mxu0
      %v3696 = vadd.f32 0.0, %v3695
      %v3697 = vpop.f32.mrb[0].mxu0
      %3698 = vmatprep.mubr.bf16.mxu0 0
      %3699 = vmatmul.mubr.bf16.gmra.mrb[0].mxu0 %v2710
      %v3700 = vpop.f32.mrb[0].mxu0
      %v3701 = vadd.f32 0.0, %v3700
      %v3702 = vpop.f32.mrb[0].mxu0
      %v3703 = vpop.f32.mrb[0].mxu0
      %v3704 = vadd.f32 0.0, %v3703
      %v3705 = vpop.f32.mrb[0].mxu0
      %3706 = vmatprep.mubr.bf16.mxu0 0
      %3707 = vmatmul.mubr.bf16.gmra.mrb[0].mxu0 %v2713
      %v3708 = vpop.f32.mrb[0].mxu0
      %v3709 = vadd.f32 0.0, %v3708
      %v3710 = vpop.f32.mrb[0].mxu0
      %v3711 = vpop.f32.mrb[0].mxu0
      %v3712 = vadd.f32 0.0, %v3711
      %v3713 = vpop.f32.mrb[0].mxu0
      %3714 = vmatprep.mubr.bf16.mxu0 0
      %3715 = vmatmul.mubr.bf16.gmra.mrb[0].mxu0 %v2716
      %v3716 = vpop.f32.mrb[0].mxu0
      %v3717 = vadd.f32 0.0, %v3716
      %v3718 = vpop.f32.mrb[0].mxu0
      %v3719 = vpop.f32.mrb[0].mxu0
      %v3720 = vadd.f32 0.0, %v3719
      %v3721 = vpop.f32.mrb[0].mxu0
      %3722 = vmatprep.mubr.bf16.mxu0 0
      %3723 = vmatmul.mubr.bf16.gmra.mrb[0].mxu0 %v2719
      %v3724 = vpop.f32.mrb[0].mxu0
      %v3725 = vadd.f32 0.0, %v3724
      %v3726 = vpop.f32.mrb[0].mxu0
      %v3727 = vpop.f32.mrb[0].mxu0
      %v3728 = vadd.f32 0.0, %v3727
      %v3729 = vpop.f32.mrb[0].mxu0
      %3730 = vmatprep.mubr.bf16.mxu0 0
      %3731 = vmatmul.mubr.bf16.gmra.mrb[0].mxu0 %v2722
      %v3732 = vpop.f32.mrb[0].mxu0
      %v3733 = vadd.f32 0.0, %v3732
      %v3734 = vpop.f32.mrb[0].mxu0
      %v3735 = vpop.f32.mrb[0].mxu0
      %v3736 = vadd.f32 0.0, %v3735
      %v3737 = vpop.f32.mrb[0].mxu0
      %3738 = vmatprep.mubr.bf16.mxu0 0
      %3739 = vmatmul.mubr.bf16.gmra.mrb[0].mxu0 %v2725
      %v3740 = vpop.f32.mrb[0].mxu0
      %v3741 = vadd.f32 0.0, %v3740
      %v3742 = vpop.f32.mrb[0].mxu0
      %v3743 = vpop.f32.mrb[0].mxu0
      %v3744 = vadd.f32 0.0, %v3743
      %v3745 = vpop.f32.mrb[0].mxu0
      %3746 = vmatprep.mubr.bf16.mxu0 0
      %3747 = vmatmul.mubr.bf16.gmra.mrb[0].mxu0 %v2728
      %v3748 = vpop.f32.mrb[0].mxu0
      %v3749 = vadd.f32 0.0, %v3748
      %v3750 = vpop.f32.mrb[0].mxu0
      %v3751 = vpop.f32.mrb[0].mxu0
      %v3752 = vadd.f32 0.0, %v3751
      %v3753 = vpop.f32.mrb[0].mxu0
      %3754 = vmatprep.mubr.bf16.mxu0 0
      %3755 = vmatmul.mubr.bf16.gmra.mrb[0].mxu0 %v2731
      %v3756 = vpop.f32.mrb[0].mxu0
      %v3757 = vadd.f32 0.0, %v3756
      %v3758 = vpop.f32.mrb[0].mxu0
      %v3759 = vpop.f32.mrb[0].mxu0
      %v3760 = vadd.f32 0.0, %v3759
      %v3761 = vpop.f32.mrb[0].mxu0
      %3762 = vmatprep.mubr.bf16.mxu0 0
      %3763 = vmatmul.mubr.bf16.gmra.mrb[0].mxu0 %v2734
      %v3764 = vpop.f32.mrb[0].mxu0
      %v3765 = vadd.f32 0.0, %v3764
      %v3766 = vpop.f32.mrb[0].mxu0
      %v3767 = vpop.f32.mrb[0].mxu0
      %v3768 = vadd.f32 0.0, %v3767
      %v3769 = vpop.f32.mrb[0].mxu0
      %3770 = vmatprep.mubr.bf16.mxu0 0
      %3771 = vmatmul.mubr.bf16.gmra.mrb[0].mxu0 %v2737
      %v3772 = vpop.f32.mrb[0].mxu0
      %v3773 = vadd.f32 0.0, %v3772
      %v3774 = vpop.f32.mrb[0].mxu0
      %v3775 = vpop.f32.mrb[0].mxu0
      %v3776 = vadd.f32 0.0, %v3775
      %v3777 = vpop.f32.mrb[0].mxu0
      %3778 = vmatprep.mubr.bf16.mxu0 0
      %3779 = vmatmul.mubr.bf16.gmra.mrb[0].mxu0 %v2740
      %v3780 = vpop.f32.mrb[0].mxu0
      %v3781 = vadd.f32 0.0, %v3780
      %v3782 = vpop.f32.mrb[0].mxu0
      %v3783 = vpop.f32.mrb[0].mxu0
      %v3784 = vadd.f32 0.0, %v3783
      %v3785 = vpop.f32.mrb[0].mxu0
      %3786 = vmatprep.mubr.bf16.mxu0 0
      %3787 = vmatmul.mubr.bf16.gmra.mrb[0].mxu0 %v2743
      %v3788 = vpop.f32.mrb[0].mxu0
      %v3789 = vadd.f32 0.0, %v3788
      %v3790 = vpop.f32.mrb[0].mxu0
      %v3791 = vpop.f32.mrb[0].mxu0
      %v3792 = vadd.f32 0.0, %v3791
      %v3793 = vpop.f32.mrb[0].mxu0
      %3794 = vmatprep.mubr.bf16.mxu0 0
      %3795 = vmatmul.mubr.bf16.gmra.mrb[0].mxu0 %v3640
      %v3796 = vpop.f32.mrb[0].mxu0
      %v3797 = vadd.f32 0.0, %v3796
      %v3798 = vpop.f32.mrb[0].mxu0
      %v3799 = vpop.f32.mrb[0].mxu0
      %v3800 = vadd.f32 0.0, %v3799
      %v3801 = vpop.f32.mrb[0].mxu0
      %3802 = vdwg.mxu0
      %v3803 = vadd.f32 %v3595, %v3677
      %v3804 = vadd.f32 %v3596, %v3680
      %v3805 = vadd.f32 %v3597, %v3685
      %v3806 = vadd.f32 %v3598, %v3688
      %v3807 = vadd.f32 %v3599, %v3693
      %v3808 = vadd.f32 %v3600, %v3696
      %v3809 = vadd.f32 %v3601, %v3701
      %v3810 = vadd.f32 %v3602, %v3704
      %v3811 = vadd.f32 %v3603, %v3709
      %v3812 = vadd.f32 %v3604, %v3712
      %v3813 = vadd.f32 %v3605, %v3717
      %v3814 = vadd.f32 %v3606, %v3720
      %v3815 = vadd.f32 %v3607, %v3725
      %v3816 = vadd.f32 %v3608, %v3728
      %v3817 = vadd.f32 %v3609, %v3733
      %v3818 = vadd.f32 %v3610, %v3736
      %v3819 = vadd.f32 %v3611, %v3741
      %v3820 = vadd.f32 %v3612, %v3744
      %v3821 = vadd.f32 %v3613, %v3749
      %v3822 = vadd.f32 %v3614, %v3752
      %v3823 = vadd.f32 %v3615, %v3757
      %v3824 = vadd.f32 %v3616, %v3760
      %v3825 = vadd.f32 %v3617, %v3765
      %v3826 = vadd.f32 %v3618, %v3768
      %v3827 = vadd.f32 %v3619, %v3773
      %v3828 = vadd.f32 %v3620, %v3776
      %v3829 = vadd.f32 %v3621, %v3781
      %v3830 = vadd.f32 %v3622, %v3784
      %v3831 = vadd.f32 %v3623, %v3789
      %v3832 = vadd.f32 %v3624, %v3792
      %v3833 = vadd.f32 %v3625, %v3797
      %v3834 = vadd.f32 %v3626, %v3800
      %v3835 = vld [vmem:[%s2587 + $0x2] sm:$0xff]
      %v3836 = vld [vmem:[%s2587 + $0xa] sm:$0xff]
      %v3837 = vpack.c.bf16 %v3836, %v3835
      %s3838 = scalar_lea.vmem %s3, 40
      %v3839 = vld [vmem:[%s3838] sm:$0xf]
      %v3840 = vld [vmem:[%s3838 + $0x4] sm:$0xf]
      %v3843 = vunpack.c.l.b16 %v3839
      %v3844 = vunpack.c.l.b16 %v3840
      %v3845 = vpack.c.b16 %v3844, %v3843
      %v3848 = vsel %vm2454, %v3837, 0
      %3850 = vmatprep.subr.bf16.mxu0 0
      %3851 = vmatpush1.bf16.msra.mxu0 %v3845
      %3852 = vmatprep.subr.bf16.mxu0 0
      %3853 = vmatpush1.bf16.msra.mxu0 0
      %3854 = vmatprep.subr.bf16.mxu0 0
      %3855 = vmatpush1.bf16.msra.mxu0 0
      %3856 = vmatprep.subr.bf16.mxu0 0
      %3857 = vmatpush1.bf16.msra.mxu0 0
      %3858 = vmatprep.subr.bf16.mxu0 0
      %3859 = vmatpush1.bf16.msra.mxu0 0
      %3860 = vmatprep.subr.bf16.mxu0 0
      %3861 = vmatpush1.bf16.msra.mxu0 0
      %3862 = vmatprep.subr.bf16.mxu0 0
      %3863 = vmatpush1.bf16.msra.mxu0 0
      %3864 = vmatprep.subr.bf16.mxu0 0
      %3865 = vmatpush1.bf16.msra.mxu0 0
      %3866 = vmatprep.subr.bf16.mxu0 0
      %3867 = vmatpush1.bf16.msra.mxu0 0
      %3868 = vmatprep.subr.bf16.mxu0 0
      %3869 = vmatpush1.bf16.msra.mxu0 0
      %3870 = vmatprep.subr.bf16.mxu0 0
      %3871 = vmatpush1.bf16.msra.mxu0 0
      %3872 = vmatprep.subr.bf16.mxu0 0
      %3873 = vmatpush1.bf16.msra.mxu0 0
      %3874 = vmatprep.subr.bf16.mxu0 0
      %3875 = vmatpush1.bf16.msra.mxu0 0
      %3876 = vmatprep.subr.bf16.mxu0 0
      %3877 = vmatpush1.bf16.msra.mxu0 0
      %3878 = vmatprep.subr.bf16.mxu0 0
      %3879 = vmatpush1.bf16.msra.mxu0 0
      %3880 = vmatprep.subr.bf16.mxu0 0
      %3881 = vmatpush1.bf16.msra.mxu0 0
      %3882 = vmatprep.mubr.bf16.mxu0 0
      %3883 = vmatmul.mubr.bf16.gmra.mrb[0].mxu0 %v3182
      %v3884 = vpop.f32.mrb[0].mxu0
      %v3885 = vadd.f32 0.0, %v3884
      %v3886 = vpop.f32.mrb[0].mxu0
      %v3887 = vpop.f32.mrb[0].mxu0
      %v3888 = vadd.f32 0.0, %v3887
      %v3889 = vpop.f32.mrb[0].mxu0
      %3890 = vmatprep.mubr.bf16.mxu0 0
      %3891 = vmatmul.mubr.bf16.gmra.mrb[0].mxu0 %v3185
      %v3892 = vpop.f32.mrb[0].mxu0
      %v3893 = vadd.f32 0.0, %v3892
      %v3894 = vpop.f32.mrb[0].mxu0
      %v3895 = vpop.f32.mrb[0].mxu0
      %v3896 = vadd.f32 0.0, %v3895
      %v3897 = vpop.f32.mrb[0].mxu0
      %3898 = vmatprep.mubr.bf16.mxu0 0
      %3899 = vmatmul.mubr.bf16.gmra.mrb[0].mxu0 %v3188
      %v3900 = vpop.f32.mrb[0].mxu0
      %v3901 = vadd.f32 0.0, %v3900
      %v3902 = vpop.f32.mrb[0].mxu0
      %v3903 = vpop.f32.mrb[0].mxu0
      %v3904 = vadd.f32 0.0, %v3903
      %v3905 = vpop.f32.mrb[0].mxu0
      %3906 = vmatprep.mubr.bf16.mxu0 0
      %3907 = vmatmul.mubr.bf16.gmra.mrb[0].mxu0 %v3191
      %v3908 = vpop.f32.mrb[0].mxu0
      %v3909 = vadd.f32 0.0, %v3908
      %v3910 = vpop.f32.mrb[0].mxu0
      %v3911 = vpop.f32.mrb[0].mxu0
      %v3912 = vadd.f32 0.0, %v3911
      %v3913 = vpop.f32.mrb[0].mxu0
      %3914 = vmatprep.mubr.bf16.mxu0 0
      %3915 = vmatmul.mubr.bf16.gmra.mrb[0].mxu0 %v3194
      %v3916 = vpop.f32.mrb[0].mxu0
      %v3917 = vadd.f32 0.0, %v3916
      %v3918 = vpop.f32.mrb[0].mxu0
      %v3919 = vpop.f32.mrb[0].mxu0
      %v3920 = vadd.f32 0.0, %v3919
      %v3921 = vpop.f32.mrb[0].mxu0
      %3922 = vmatprep.mubr.bf16.mxu0 0
      %3923 = vmatmul.mubr.bf16.gmra.mrb[0].mxu0 %v3197
      %v3924 = vpop.f32.mrb[0].mxu0
      %v3925 = vadd.f32 0.0, %v3924
      %v3926 = vpop.f32.mrb[0].mxu0
      %v3927 = vpop.f32.mrb[0].mxu0
      %v3928 = vadd.f32 0.0, %v3927
      %v3929 = vpop.f32.mrb[0].mxu0
      %3930 = vmatprep.mubr.bf16.mxu0 0
      %3931 = vmatmul.mubr.bf16.gmra.mrb[0].mxu0 %v3200
      %v3932 = vpop.f32.mrb[0].mxu0
      %v3933 = vadd.f32 0.0, %v3932
      %v3934 = vpop.f32.mrb[0].mxu0
      %v3935 = vpop.f32.mrb[0].mxu0
      %v3936 = vadd.f32 0.0, %v3935
      %v3937 = vpop.f32.mrb[0].mxu0
      %3938 = vmatprep.mubr.bf16.mxu0 0
      %3939 = vmatmul.mubr.bf16.gmra.mrb[0].mxu0 %v3203
      %v3940 = vpop.f32.mrb[0].mxu0
      %v3941 = vadd.f32 0.0, %v3940
      %v3942 = vpop.f32.mrb[0].mxu0
      %v3943 = vpop.f32.mrb[0].mxu0
      %v3944 = vadd.f32 0.0, %v3943
      %v3945 = vpop.f32.mrb[0].mxu0
      %3946 = vmatprep.mubr.bf16.mxu0 0
      %3947 = vmatmul.mubr.bf16.gmra.mrb[0].mxu0 %v3206
      %v3948 = vpop.f32.mrb[0].mxu0
      %v3949 = vadd.f32 0.0, %v3948
      %v3950 = vpop.f32.mrb[0].mxu0
      %v3951 = vpop.f32.mrb[0].mxu0
      %v3952 = vadd.f32 0.0, %v3951
      %v3953 = vpop.f32.mrb[0].mxu0
      %3954 = vmatprep.mubr.bf16.mxu0 0
      %3955 = vmatmul.mubr.bf16.gmra.mrb[0].mxu0 %v3209
      %v3956 = vpop.f32.mrb[0].mxu0
      %v3957 = vadd.f32 0.0, %v3956
      %v3958 = vpop.f32.mrb[0].mxu0
      %v3959 = vpop.f32.mrb[0].mxu0
      %v3960 = vadd.f32 0.0, %v3959
      %v3961 = vpop.f32.mrb[0].mxu0
      %3962 = vmatprep.mubr.bf16.mxu0 0
      %3963 = vmatmul.mubr.bf16.gmra.mrb[0].mxu0 %v3212
      %v3964 = vpop.f32.mrb[0].mxu0
      %v3965 = vadd.f32 0.0, %v3964
      %v3966 = vpop.f32.mrb[0].mxu0
      %v3967 = vpop.f32.mrb[0].mxu0
      %v3968 = vadd.f32 0.0, %v3967
      %v3969 = vpop.f32.mrb[0].mxu0
      %3970 = vmatprep.mubr.bf16.mxu0 0
      %3971 = vmatmul.mubr.bf16.gmra.mrb[0].mxu0 %v3215
      %v3972 = vpop.f32.mrb[0].mxu0
      %v3973 = vadd.f32 0.0, %v3972
      %v3974 = vpop.f32.mrb[0].mxu0
      %v3975 = vpop.f32.mrb[0].mxu0
      %v3976 = vadd.f32 0.0, %v3975
      %v3977 = vpop.f32.mrb[0].mxu0
      %3978 = vmatprep.mubr.bf16.mxu0 0
      %3979 = vmatmul.mubr.bf16.gmra.mrb[0].mxu0 %v3218
      %v3980 = vpop.f32.mrb[0].mxu0
      %v3981 = vadd.f32 0.0, %v3980
      %v3982 = vpop.f32.mrb[0].mxu0
      %v3983 = vpop.f32.mrb[0].mxu0
      %v3984 = vadd.f32 0.0, %v3983
      %v3985 = vpop.f32.mrb[0].mxu0
      %3986 = vmatprep.mubr.bf16.mxu0 0
      %3987 = vmatmul.mubr.bf16.gmra.mrb[0].mxu0 %v3221
      %v3988 = vpop.f32.mrb[0].mxu0
      %v3989 = vadd.f32 0.0, %v3988
      %v3990 = vpop.f32.mrb[0].mxu0
      %v3991 = vpop.f32.mrb[0].mxu0
      %v3992 = vadd.f32 0.0, %v3991
      %v3993 = vpop.f32.mrb[0].mxu0
      %3994 = vmatprep.mubr.bf16.mxu0 0
      %3995 = vmatmul.mubr.bf16.gmra.mrb[0].mxu0 %v3224
      %v3996 = vpop.f32.mrb[0].mxu0
      %v3997 = vadd.f32 0.0, %v3996
      %v3998 = vpop.f32.mrb[0].mxu0
      %v3999 = vpop.f32.mrb[0].mxu0
      %v4000 = vadd.f32 0.0, %v3999
      %v4001 = vpop.f32.mrb[0].mxu0
      %4002 = vmatprep.mubr.bf16.mxu0 0
      %4003 = vmatmul.mubr.bf16.gmra.mrb[0].mxu0 %v3848
      %v4004 = vpop.f32.mrb[0].mxu0
      %v4005 = vadd.f32 0.0, %v4004
      %v4006 = vpop.f32.mrb[0].mxu0
      %v4007 = vpop.f32.mrb[0].mxu0
      %v4008 = vadd.f32 0.0, %v4007
      %v4009 = vpop.f32.mrb[0].mxu0
      %4010 = vdwg.mxu0
      %v4011 = vadd.f32 %v3803, %v3885
      %v4012 = vadd.f32 %v3804, %v3888
      %v4013 = vadd.f32 %v3805, %v3893
      %v4014 = vadd.f32 %v3806, %v3896
      %v4015 = vadd.f32 %v3807, %v3901
      %v4016 = vadd.f32 %v3808, %v3904
      %v4017 = vadd.f32 %v3809, %v3909
      %v4018 = vadd.f32 %v3810, %v3912
      %v4019 = vadd.f32 %v3811, %v3917
      %v4020 = vadd.f32 %v3812, %v3920
      %v4021 = vadd.f32 %v3813, %v3925
      %v4022 = vadd.f32 %v3814, %v3928
      %v4023 = vadd.f32 %v3815, %v3933
      %v4024 = vadd.f32 %v3816, %v3936
      %v4025 = vadd.f32 %v3817, %v3941
      %v4026 = vadd.f32 %v3818, %v3944
      %v4027 = vadd.f32 %v3819, %v3949
      %v4028 = vadd.f32 %v3820, %v3952
      %v4029 = vadd.f32 %v3821, %v3957
      %v4030 = vadd.f32 %v3822, %v3960
      %v4031 = vadd.f32 %v3823, %v3965
      %v4032 = vadd.f32 %v3824, %v3968
      %v4033 = vadd.f32 %v3825, %v3973
      %v4034 = vadd.f32 %v3826, %v3976
      %v4035 = vadd.f32 %v3827, %v3981
      %v4036 = vadd.f32 %v3828, %v3984
      %v4037 = vadd.f32 %v3829, %v3989
      %v4038 = vadd.f32 %v3830, %v3992
      %v4039 = vadd.f32 %v3831, %v3997
      %v4040 = vadd.f32 %v3832, %v4000
      %v4041 = vadd.f32 %v3833, %v4005
      %v4042 = vadd.f32 %v3834, %v4008
      %s4043 = scalar_lea.vmem [#allocation2], 408
      %v4044 = vld [vmem:[%s4043] sm:$0xff]
      %v4045 = vld [vmem:[%s4043 + $0x8] sm:$0xff]
      %v4046 = vpack.c.bf16 %v4045, %v4044
      %s4047 = scalar_lea.vmem %s3, 48
      %v4048 = vld [vmem:[%s4047] sm:$0xf]
      %v4049 = vld [vmem:[%s4047 + $0x4] sm:$0xf]
      %v4052 = vunpack.c.l.b16 %v4048
      %v4053 = vunpack.c.l.b16 %v4049
      %v4054 = vpack.c.b16 %v4053, %v4052
      %v4057 = vsel %vm2454, %v4046, 0
      %4059 = vmatprep.subr.bf16.mxu0 0
      %4060 = vmatpush1.bf16.msra.mxu0 %v4054
      %4061 = vmatprep.subr.bf16.mxu0 0
      %4062 = vmatpush1.bf16.msra.mxu0 0
      %4063 = vmatprep.subr.bf16.mxu0 0
      %4064 = vmatpush1.bf16.msra.mxu0 0
      %4065 = vmatprep.subr.bf16.mxu0 0
      %4066 = vmatpush1.bf16.msra.mxu0 0
      %4067 = vmatprep.subr.bf16.mxu0 0
      %4068 = vmatpush1.bf16.msra.mxu0 0
      %4069 = vmatprep.subr.bf16.mxu0 0
      %4070 = vmatpush1.bf16.msra.mxu0 0
      %4071 = vmatprep.subr.bf16.mxu0 0
      %4072 = vmatpush1.bf16.msra.mxu0 0
      %4073 = vmatprep.subr.bf16.mxu0 0
      %4074 = vmatpush1.bf16.msra.mxu0 0
      %4075 = vmatprep.subr.bf16.mxu0 0
      %4076 = vmatpush1.bf16.msra.mxu0 0
      %4077 = vmatprep.subr.bf16.mxu0 0
      %4078 = vmatpush1.bf16.msra.mxu0 0
      %4079 = vmatprep.subr.bf16.mxu0 0
      %4080 = vmatpush1.bf16.msra.mxu0 0
      %4081 = vmatprep.subr.bf16.mxu0 0
      %4082 = vmatpush1.bf16.msra.mxu0 0
      %4083 = vmatprep.subr.bf16.mxu0 0
      %4084 = vmatpush1.bf16.msra.mxu0 0
      %4085 = vmatprep.subr.bf16.mxu0 0
      %4086 = vmatpush1.bf16.msra.mxu0 0
      %4087 = vmatprep.subr.bf16.mxu0 0
      %4088 = vmatpush1.bf16.msra.mxu0 0
      %4089 = vmatprep.subr.bf16.mxu0 0
      %4090 = vmatpush1.bf16.msra.mxu0 0
      %4091 = vmatprep.mubr.bf16.mxu0 0
      %4092 = vmatmul.mubr.bf16.gmra.mrb[0].mxu0 %v2919
      %v4093 = vpop.f32.mrb[0].mxu0
      %v4094 = vadd.f32 0.0, %v4093
      %v4095 = vpop.f32.mrb[0].mxu0
      %v4096 = vpop.f32.mrb[0].mxu0
      %v4097 = vadd.f32 0.0, %v4096
      %v4098 = vpop.f32.mrb[0].mxu0
      %4099 = vmatprep.mubr.bf16.mxu0 0
      %4100 = vmatmul.mubr.bf16.gmra.mrb[0].mxu0 %v2922
      %v4101 = vpop.f32.mrb[0].mxu0
      %v4102 = vadd.f32 0.0, %v4101
      %v4103 = vpop.f32.mrb[0].mxu0
      %v4104 = vpop.f32.mrb[0].mxu0
      %v4105 = vadd.f32 0.0, %v4104
      %v4106 = vpop.f32.mrb[0].mxu0
      %4107 = vmatprep.mubr.bf16.mxu0 0
      %4108 = vmatmul.mubr.bf16.gmra.mrb[0].mxu0 %v2925
      %v4109 = vpop.f32.mrb[0].mxu0
      %v4110 = vadd.f32 0.0, %v4109
      %v4111 = vpop.f32.mrb[0].mxu0
      %v4112 = vpop.f32.mrb[0].mxu0
      %v4113 = vadd.f32 0.0, %v4112
      %v4114 = vpop.f32.mrb[0].mxu0
      %4115 = vmatprep.mubr.bf16.mxu0 0
      %4116 = vmatmul.mubr.bf16.gmra.mrb[0].mxu0 %v2928
      %v4117 = vpop.f32.mrb[0].mxu0
      %v4118 = vadd.f32 0.0, %v4117
      %v4119 = vpop.f32.mrb[0].mxu0
      %v4120 = vpop.f32.mrb[0].mxu0
      %v4121 = vadd.f32 0.0, %v4120
      %v4122 = vpop.f32.mrb[0].mxu0
      %4123 = vmatprep.mubr.bf16.mxu0 0
      %4124 = vmatmul.mubr.bf16.gmra.mrb[0].mxu0 %v2931
      %v4125 = vpop.f32.mrb[0].mxu0
      %v4126 = vadd.f32 0.0, %v4125
      %v4127 = vpop.f32.mrb[0].mxu0
      %v4128 = vpop.f32.mrb[0].mxu0
      %v4129 = vadd.f32 0.0, %v4128
      %v4130 = vpop.f32.mrb[0].mxu0
      %4131 = vmatprep.mubr.bf16.mxu0 0
      %4132 = vmatmul.mubr.bf16.gmra.mrb[0].mxu0 %v2934
      %v4133 = vpop.f32.mrb[0].mxu0
      %v4134 = vadd.f32 0.0, %v4133
      %v4135 = vpop.f32.mrb[0].mxu0
      %v4136 = vpop.f32.mrb[0].mxu0
      %v4137 = vadd.f32 0.0, %v4136
      %v4138 = vpop.f32.mrb[0].mxu0
      %4139 = vmatprep.mubr.bf16.mxu0 0
      %4140 = vmatmul.mubr.bf16.gmra.mrb[0].mxu0 %v2937
      %v4141 = vpop.f32.mrb[0].mxu0
      %v4142 = vadd.f32 0.0, %v4141
      %v4143 = vpop.f32.mrb[0].mxu0
      %v4144 = vpop.f32.mrb[0].mxu0
      %v4145 = vadd.f32 0.0, %v4144
      %v4146 = vpop.f32.mrb[0].mxu0
      %4147 = vmatprep.mubr.bf16.mxu0 0
      %4148 = vmatmul.mubr.bf16.gmra.mrb[0].mxu0 %v2940
      %v4149 = vpop.f32.mrb[0].mxu0
      %v4150 = vadd.f32 0.0, %v4149
      %v4151 = vpop.f32.mrb[0].mxu0
      %v4152 = vpop.f32.mrb[0].mxu0
      %v4153 = vadd.f32 0.0, %v4152
      %v4154 = vpop.f32.mrb[0].mxu0
      %4155 = vmatprep.mubr.bf16.mxu0 0
      %4156 = vmatmul.mubr.bf16.gmra.mrb[0].mxu0 %v2943
      %v4157 = vpop.f32.mrb[0].mxu0
      %v4158 = vadd.f32 0.0, %v4157
      %v4159 = vpop.f32.mrb[0].mxu0
      %v4160 = vpop.f32.mrb[0].mxu0
      %v4161 = vadd.f32 0.0, %v4160
      %v4162 = vpop.f32.mrb[0].mxu0
      %4163 = vmatprep.mubr.bf16.mxu0 0
      %4164 = vmatmul.mubr.bf16.gmra.mrb[0].mxu0 %v2946
      %v4165 = vpop.f32.mrb[0].mxu0
      %v4166 = vadd.f32 0.0, %v4165
      %v4167 = vpop.f32.mrb[0].mxu0
      %v4168 = vpop.f32.mrb[0].mxu0
      %v4169 = vadd.f32 0.0, %v4168
      %v4170 = vpop.f32.mrb[0].mxu0
      %4171 = vmatprep.mubr.bf16.mxu0 0
      %4172 = vmatmul.mubr.bf16.gmra.mrb[0].mxu0 %v2949
      %v4173 = vpop.f32.mrb[0].mxu0
      %v4174 = vadd.f32 0.0, %v4173
      %v4175 = vpop.f32.mrb[0].mxu0
      %v4176 = vpop.f32.mrb[0].mxu0
      %v4177 = vadd.f32 0.0, %v4176
      %v4178 = vpop.f32.mrb[0].mxu0
      %4179 = vmatprep.mubr.bf16.mxu0 0
      %4180 = vmatmul.mubr.bf16.gmra.mrb[0].mxu0 %v2952
      %v4181 = vpop.f32.mrb[0].mxu0
      %v4182 = vadd.f32 0.0, %v4181
      %v4183 = vpop.f32.mrb[0].mxu0
      %v4184 = vpop.f32.mrb[0].mxu0
      %v4185 = vadd.f32 0.0, %v4184
      %v4186 = vpop.f32.mrb[0].mxu0
      %4187 = vmatprep.mubr.bf16.mxu0 0
      %4188 = vmatmul.mubr.bf16.gmra.mrb[0].mxu0 %v2955
      %v4189 = vpop.f32.mrb[0].mxu0
      %v4190 = vadd.f32 0.0, %v4189
      %v4191 = vpop.f32.mrb[0].mxu0
      %v4192 = vpop.f32.mrb[0].mxu0
      %v4193 = vadd.f32 0.0, %v4192
      %v4194 = vpop.f32.mrb[0].mxu0
      %4195 = vmatprep.mubr.bf16.mxu0 0
      %4196 = vmatmul.mubr.bf16.gmra.mrb[0].mxu0 %v2958
      %v4197 = vpop.f32.mrb[0].mxu0
      %v4198 = vadd.f32 0.0, %v4197
      %v4199 = vpop.f32.mrb[0].mxu0
      %v4200 = vpop.f32.mrb[0].mxu0
      %v4201 = vadd.f32 0.0, %v4200
      %v4202 = vpop.f32.mrb[0].mxu0
      %4203 = vmatprep.mubr.bf16.mxu0 0
      %4204 = vmatmul.mubr.bf16.gmra.mrb[0].mxu0 %v3432
      %v4205 = vpop.f32.mrb[0].mxu0
      %v4206 = vadd.f32 0.0, %v4205
      %v4207 = vpop.f32.mrb[0].mxu0
      %v4208 = vpop.f32.mrb[0].mxu0
      %v4209 = vadd.f32 0.0, %v4208
      %v4210 = vpop.f32.mrb[0].mxu0
      %4211 = vmatprep.mubr.bf16.mxu0 0
      %4212 = vmatmul.mubr.bf16.gmra.mrb[0].mxu0 %v4057
      %v4213 = vpop.f32.mrb[0].mxu0
      %v4214 = vadd.f32 0.0, %v4213
      %v4215 = vpop.f32.mrb[0].mxu0
      %v4216 = vpop.f32.mrb[0].mxu0
      %v4217 = vadd.f32 0.0, %v4216
      %v4218 = vpop.f32.mrb[0].mxu0
      %4219 = vdwg.mxu0
      %v4220 = vadd.f32 %v4011, %v4094
      %v4221 = vadd.f32 %v4012, %v4097
      %v4222 = vadd.f32 %v4013, %v4102
      %v4223 = vadd.f32 %v4014, %v4105
      %v4224 = vadd.f32 %v4015, %v4110
      %v4225 = vadd.f32 %v4016, %v4113
      %v4226 = vadd.f32 %v4017, %v4118
      %v4227 = vadd.f32 %v4018, %v4121
      %v4228 = vadd.f32 %v4019, %v4126
      %v4229 = vadd.f32 %v4020, %v4129
      %v4230 = vadd.f32 %v4021, %v4134
      %v4231 = vadd.f32 %v4022, %v4137
      %v4232 = vadd.f32 %v4023, %v4142
      %v4233 = vadd.f32 %v4024, %v4145
      %v4234 = vadd.f32 %v4025, %v4150
      %v4235 = vadd.f32 %v4026, %v4153
      %v4236 = vadd.f32 %v4027, %v4158
      %v4237 = vadd.f32 %v4028, %v4161
      %v4238 = vadd.f32 %v4029, %v4166
      %v4239 = vadd.f32 %v4030, %v4169
      %v4240 = vadd.f32 %v4031, %v4174
      %v4241 = vadd.f32 %v4032, %v4177
      %v4242 = vadd.f32 %v4033, %v4182
      %v4243 = vadd.f32 %v4034, %v4185
      %v4244 = vadd.f32 %v4035, %v4190
      %v4245 = vadd.f32 %v4036, %v4193
      %v4246 = vadd.f32 %v4037, %v4198
      %v4247 = vadd.f32 %v4038, %v4201
      %v4248 = vadd.f32 %v4039, %v4206
      %v4249 = vadd.f32 %v4040, %v4209
      %v4250 = vadd.f32 %v4041, %v4214
      %v4251 = vadd.f32 %v4042, %v4217
      %v4252 = vld [vmem:[%s4043 + $0x1] sm:$0xff]
      %v4253 = vld [vmem:[%s4043 + $0x9] sm:$0xff]
      %v4254 = vpack.c.bf16 %v4253, %v4252
      %s4255 = scalar_lea.vmem %s3, 56
      %v4256 = vld [vmem:[%s4255] sm:$0xf]
      %v4257 = vld [vmem:[%s4255 + $0x4] sm:$0xf]
      %v4260 = vunpack.c.l.b16 %v4256
      %v4261 = vunpack.c.l.b16 %v4257
      %v4262 = vpack.c.b16 %v4261, %v4260
      %v4265 = vsel %vm2454, %v4254, 0
      %4267 = vmatprep.subr.bf16.mxu0 0
      %4268 = vmatpush1.bf16.msra.mxu0 %v4262
      %4269 = vmatprep.subr.bf16.mxu0 0
      %4270 = vmatpush1.bf16.msra.mxu0 0
      %4271 = vmatprep.subr.bf16.mxu0 0
      %4272 = vmatpush1.bf16.msra.mxu0 0
      %4273 = vmatprep.subr.bf16.mxu0 0
      %4274 = vmatpush1.bf16.msra.mxu0 0
      %4275 = vmatprep.subr.bf16.mxu0 0
      %4276 = vmatpush1.bf16.msra.mxu0 0
      %4277 = vmatprep.subr.bf16.mxu0 0
      %4278 = vmatpush1.bf16.msra.mxu0 0
      %4279 = vmatprep.subr.bf16.mxu0 0
      %4280 = vmatpush1.bf16.msra.mxu0 0
      %4281 = vmatprep.subr.bf16.mxu0 0
      %4282 = vmatpush1.bf16.msra.mxu0 0
      %4283 = vmatprep.subr.bf16.mxu0 0
      %4284 = vmatpush1.bf16.msra.mxu0 0
      %4285 = vmatprep.subr.bf16.mxu0 0
      %4286 = vmatpush1.bf16.msra.mxu0 0
      %4287 = vmatprep.subr.bf16.mxu0 0
      %4288 = vmatpush1.bf16.msra.mxu0 0
      %4289 = vmatprep.subr.bf16.mxu0 0
      %4290 = vmatpush1.bf16.msra.mxu0 0
      %4291 = vmatprep.subr.bf16.mxu0 0
      %4292 = vmatpush1.bf16.msra.mxu0 0
      %4293 = vmatprep.subr.bf16.mxu0 0
      %4294 = vmatpush1.bf16.msra.mxu0 0
      %4295 = vmatprep.subr.bf16.mxu0 0
      %4296 = vmatpush1.bf16.msra.mxu0 0
      %4297 = vmatprep.subr.bf16.mxu0 0
      %4298 = vmatpush1.bf16.msra.mxu0 0
      %4299 = vmatprep.mubr.bf16.mxu0 0
      %4300 = vmatmul.mubr.bf16.gmra.mrb[0].mxu0 %v2704
      %v4301 = vpop.f32.mrb[0].mxu0
      %v4302 = vadd.f32 0.0, %v4301
      %v4303 = vpop.f32.mrb[0].mxu0
      %v4304 = vpop.f32.mrb[0].mxu0
      %v4305 = vadd.f32 0.0, %v4304
      %v4306 = vpop.f32.mrb[0].mxu0
      %4307 = vmatprep.mubr.bf16.mxu0 0
      %4308 = vmatmul.mubr.bf16.gmra.mrb[0].mxu0 %v2707
      %v4309 = vpop.f32.mrb[0].mxu0
      %v4310 = vadd.f32 0.0, %v4309
      %v4311 = vpop.f32.mrb[0].mxu0
      %v4312 = vpop.f32.mrb[0].mxu0
      %v4313 = vadd.f32 0.0, %v4312
      %v4314 = vpop.f32.mrb[0].mxu0
      %4315 = vmatprep.mubr.bf16.mxu0 0
      %4316 = vmatmul.mubr.bf16.gmra.mrb[0].mxu0 %v2710
      %v4317 = vpop.f32.mrb[0].mxu0
      %v4318 = vadd.f32 0.0, %v4317
      %v4319 = vpop.f32.mrb[0].mxu0
      %v4320 = vpop.f32.mrb[0].mxu0
      %v4321 = vadd.f32 0.0, %v4320
      %v4322 = vpop.f32.mrb[0].mxu0
      %4323 = vmatprep.mubr.bf16.mxu0 0
      %4324 = vmatmul.mubr.bf16.gmra.mrb[0].mxu0 %v2713
      %v4325 = vpop.f32.mrb[0].mxu0
      %v4326 = vadd.f32 0.0, %v4325
      %v4327 = vpop.f32.mrb[0].mxu0
      %v4328 = vpop.f32.mrb[0].mxu0
      %v4329 = vadd.f32 0.0, %v4328
      %v4330 = vpop.f32.mrb[0].mxu0
      %4331 = vmatprep.mubr.bf16.mxu0 0
      %4332 = vmatmul.mubr.bf16.gmra.mrb[0].mxu0 %v2716
      %v4333 = vpop.f32.mrb[0].mxu0
      %v4334 = vadd.f32 0.0, %v4333
      %v4335 = vpop.f32.mrb[0].mxu0
      %v4336 = vpop.f32.mrb[0].mxu0
      %v4337 = vadd.f32 0.0, %v4336
      %v4338 = vpop.f32.mrb[0].mxu0
      %4339 = vmatprep.mubr.bf16.mxu0 0
      %4340 = vmatmul.mubr.bf16.gmra.mrb[0].mxu0 %v2719
      %v4341 = vpop.f32.mrb[0].mxu0
      %v4342 = vadd.f32 0.0, %v4341
      %v4343 = vpop.f32.mrb[0].mxu0
      %v4344 = vpop.f32.mrb[0].mxu0
      %v4345 = vadd.f32 0.0, %v4344
      %v4346 = vpop.f32.mrb[0].mxu0
      %4347 = vmatprep.mubr.bf16.mxu0 0
      %4348 = vmatmul.mubr.bf16.gmra.mrb[0].mxu0 %v2722
      %v4349 = vpop.f32.mrb[0].mxu0
      %v4350 = vadd.f32 0.0, %v4349
      %v4351 = vpop.f32.mrb[0].mxu0
      %v4352 = vpop.f32.mrb[0].mxu0
      %v4353 = vadd.f32 0.0, %v4352
      %v4354 = vpop.f32.mrb[0].mxu0
      %4355 = vmatprep.mubr.bf16.mxu0 0
      %4356 = vmatmul.mubr.bf16.gmra.mrb[0].mxu0 %v2725
      %v4357 = vpop.f32.mrb[0].mxu0
      %v4358 = vadd.f32 0.0, %v4357
      %v4359 = vpop.f32.mrb[0].mxu0
      %v4360 = vpop.f32.mrb[0].mxu0
      %v4361 = vadd.f32 0.0, %v4360
      %v4362 = vpop.f32.mrb[0].mxu0
      %4363 = vmatprep.mubr.bf16.mxu0 0
      %4364 = vmatmul.mubr.bf16.gmra.mrb[0].mxu0 %v2728
      %v4365 = vpop.f32.mrb[0].mxu0
      %v4366 = vadd.f32 0.0, %v4365
      %v4367 = vpop.f32.mrb[0].mxu0
      %v4368 = vpop.f32.mrb[0].mxu0
      %v4369 = vadd.f32 0.0, %v4368
      %v4370 = vpop.f32.mrb[0].mxu0
      %4371 = vmatprep.mubr.bf16.mxu0 0
      %4372 = vmatmul.mubr.bf16.gmra.mrb[0].mxu0 %v2731
      %v4373 = vpop.f32.mrb[0].mxu0
      %v4374 = vadd.f32 0.0, %v4373
      %v4375 = vpop.f32.mrb[0].mxu0
      %v4376 = vpop.f32.mrb[0].mxu0
      %v4377 = vadd.f32 0.0, %v4376
      %v4378 = vpop.f32.mrb[0].mxu0
      %4379 = vmatprep.mubr.bf16.mxu0 0
      %4380 = vmatmul.mubr.bf16.gmra.mrb[0].mxu0 %v2734
      %v4381 = vpop.f32.mrb[0].mxu0
      %v4382 = vadd.f32 0.0, %v4381
      %v4383 = vpop.f32.mrb[0].mxu0
      %v4384 = vpop.f32.mrb[0].mxu0
      %v4385 = vadd.f32 0.0, %v4384
      %v4386 = vpop.f32.mrb[0].mxu0
      %4387 = vmatprep.mubr.bf16.mxu0 0
      %4388 = vmatmul.mubr.bf16.gmra.mrb[0].mxu0 %v2737
      %v4389 = vpop.f32.mrb[0].mxu0
      %v4390 = vadd.f32 0.0, %v4389
      %v4391 = vpop.f32.mrb[0].mxu0
      %v4392 = vpop.f32.mrb[0].mxu0
      %v4393 = vadd.f32 0.0, %v4392
      %v4394 = vpop.f32.mrb[0].mxu0
      %4395 = vmatprep.mubr.bf16.mxu0 0
      %4396 = vmatmul.mubr.bf16.gmra.mrb[0].mxu0 %v2740
      %v4397 = vpop.f32.mrb[0].mxu0
      %v4398 = vadd.f32 0.0, %v4397
      %v4399 = vpop.f32.mrb[0].mxu0
      %v4400 = vpop.f32.mrb[0].mxu0
      %v4401 = vadd.f32 0.0, %v4400
      %v4402 = vpop.f32.mrb[0].mxu0
      %4403 = vmatprep.mubr.bf16.mxu0 0
      %4404 = vmatmul.mubr.bf16.gmra.mrb[0].mxu0 %v2743
      %v4405 = vpop.f32.mrb[0].mxu0
      %v4406 = vadd.f32 0.0, %v4405
      %v4407 = vpop.f32.mrb[0].mxu0
      %v4408 = vpop.f32.mrb[0].mxu0
      %v4409 = vadd.f32 0.0, %v4408
      %v4410 = vpop.f32.mrb[0].mxu0
      %4411 = vmatprep.mubr.bf16.mxu0 0
      %4412 = vmatmul.mubr.bf16.gmra.mrb[0].mxu0 %v3640
      %v4413 = vpop.f32.mrb[0].mxu0
      %v4414 = vadd.f32 0.0, %v4413
      %v4415 = vpop.f32.mrb[0].mxu0
      %v4416 = vpop.f32.mrb[0].mxu0
      %v4417 = vadd.f32 0.0, %v4416
      %v4418 = vpop.f32.mrb[0].mxu0
      %4419 = vmatprep.mubr.bf16.mxu0 0
      %4420 = vmatmul.mubr.bf16.gmra.mrb[0].mxu0 %v4265
      %v4421 = vpop.f32.mrb[0].mxu0
      %v4422 = vadd.f32 0.0, %v4421
      %v4423 = vpop.f32.mrb[0].mxu0
      %v4424 = vpop.f32.mrb[0].mxu0
      %v4425 = vadd.f32 0.0, %v4424
      %v4426 = vpop.f32.mrb[0].mxu0
      %4427 = vdwg.mxu0
      %v4428 = vadd.f32 %v4220, %v4302
      %v4429 = vadd.f32 %v4221, %v4305
      %v4430 = vadd.f32 %v4222, %v4310
      %v4431 = vadd.f32 %v4223, %v4313
      %v4432 = vadd.f32 %v4224, %v4318
      %v4433 = vadd.f32 %v4225, %v4321
      %v4434 = vadd.f32 %v4226, %v4326
      %v4435 = vadd.f32 %v4227, %v4329
      %v4436 = vadd.f32 %v4228, %v4334
      %v4437 = vadd.f32 %v4229, %v4337
      %v4438 = vadd.f32 %v4230, %v4342
      %v4439 = vadd.f32 %v4231, %v4345
      %v4440 = vadd.f32 %v4232, %v4350
      %v4441 = vadd.f32 %v4233, %v4353
      %v4442 = vadd.f32 %v4234, %v4358
      %v4443 = vadd.f32 %v4235, %v4361
      %v4444 = vadd.f32 %v4236, %v4366
      %v4445 = vadd.f32 %v4237, %v4369
      %v4446 = vadd.f32 %v4238, %v4374
      %v4447 = vadd.f32 %v4239, %v4377
      %v4448 = vadd.f32 %v4240, %v4382
      %v4449 = vadd.f32 %v4241, %v4385
      %v4450 = vadd.f32 %v4242, %v4390
      %v4451 = vadd.f32 %v4243, %v4393
      %v4452 = vadd.f32 %v4244, %v4398
      %v4453 = vadd.f32 %v4245, %v4401
      %v4454 = vadd.f32 %v4246, %v4406
      %v4455 = vadd.f32 %v4247, %v4409
      %v4456 = vadd.f32 %v4248, %v4414
      %v4457 = vadd.f32 %v4249, %v4417
      %v4458 = vadd.f32 %v4250, %v4422
      %v4459 = vadd.f32 %v4251, %v4425
      %v4460 = vld [vmem:[%s4043 + $0x2] sm:$0xff]
      %v4461 = vld [vmem:[%s4043 + $0xa] sm:$0xff]
      %v4462 = vpack.c.bf16 %v4461, %v4460
      %s4463 = scalar_lea.vmem %s3, 64
      %v4464 = vld [vmem:[%s4463] sm:$0xf]
      %v4465 = vld [vmem:[%s4463 + $0x4] sm:$0xf]
      %v4468 = vunpack.c.l.b16 %v4464
      %v4469 = vunpack.c.l.b16 %v4465
      %v4470 = vpack.c.b16 %v4469, %v4468
      %v4473 = vsel %vm2454, %v4462, 0
      %4475 = vmatprep.subr.bf16.mxu0 0
      %4476 = vmatpush1.bf16.msra.mxu0 %v4470
      %4477 = vmatprep.subr.bf16.mxu0 0
      %4478 = vmatpush1.bf16.msra.mxu0 0
      %4479 = vmatprep.subr.bf16.mxu0 0
      %4480 = vmatpush1.bf16.msra.mxu0 0
      %4481 = vmatprep.subr.bf16.mxu0 0
      %4482 = vmatpush1.bf16.msra.mxu0 0
      %4483 = vmatprep.subr.bf16.mxu0 0
      %4484 = vmatpush1.bf16.msra.mxu0 0
      %4485 = vmatprep.subr.bf16.mxu0 0
      %4486 = vmatpush1.bf16.msra.mxu0 0
      %4487 = vmatprep.subr.bf16.mxu0 0
      %4488 = vmatpush1.bf16.msra.mxu0 0
      %4489 = vmatprep.subr.bf16.mxu0 0
      %4490 = vmatpush1.bf16.msra.mxu0 0
      %4491 = vmatprep.subr.bf16.mxu0 0
      %4492 = vmatpush1.bf16.msra.mxu0 0
      %4493 = vmatprep.subr.bf16.mxu0 0
      %4494 = vmatpush1.bf16.msra.mxu0 0
      %4495 = vmatprep.subr.bf16.mxu0 0
      %4496 = vmatpush1.bf16.msra.mxu0 0
      %4497 = vmatprep.subr.bf16.mxu0 0
      %4498 = vmatpush1.bf16.msra.mxu0 0
      %4499 = vmatprep.subr.bf16.mxu0 0
      %4500 = vmatpush1.bf16.msra.mxu0 0
      %4501 = vmatprep.subr.bf16.mxu0 0
      %4502 = vmatpush1.bf16.msra.mxu0 0
      %4503 = vmatprep.subr.bf16.mxu0 0
      %4504 = vmatpush1.bf16.msra.mxu0 0
      %4505 = vmatprep.subr.bf16.mxu0 0
      %4506 = vmatpush1.bf16.msra.mxu0 0
      %4507 = vmatprep.mubr.bf16.mxu0 0
      %4508 = vmatmul.mubr.bf16.gmra.mrb[0].mxu0 %v3185
      %v4509 = vpop.f32.mrb[0].mxu0
      %v4510 = vadd.f32 0.0, %v4509
      %v4511 = vpop.f32.mrb[0].mxu0
      %v4512 = vpop.f32.mrb[0].mxu0
      %v4513 = vadd.f32 0.0, %v4512
      %v4514 = vpop.f32.mrb[0].mxu0
      %4515 = vmatprep.mubr.bf16.mxu0 0
      %4516 = vmatmul.mubr.bf16.gmra.mrb[0].mxu0 %v3188
      %v4517 = vpop.f32.mrb[0].mxu0
      %v4518 = vadd.f32 0.0, %v4517
      %v4519 = vpop.f32.mrb[0].mxu0
      %v4520 = vpop.f32.mrb[0].mxu0
      %v4521 = vadd.f32 0.0, %v4520
      %v4522 = vpop.f32.mrb[0].mxu0
      %4523 = vmatprep.mubr.bf16.mxu0 0
      %4524 = vmatmul.mubr.bf16.gmra.mrb[0].mxu0 %v3191
      %v4525 = vpop.f32.mrb[0].mxu0
      %v4526 = vadd.f32 0.0, %v4525
      %v4527 = vpop.f32.mrb[0].mxu0
      %v4528 = vpop.f32.mrb[0].mxu0
      %v4529 = vadd.f32 0.0, %v4528
      %v4530 = vpop.f32.mrb[0].mxu0
      %4531 = vmatprep.mubr.bf16.mxu0 0
      %4532 = vmatmul.mubr.bf16.gmra.mrb[0].mxu0 %v3194
      %v4533 = vpop.f32.mrb[0].mxu0
      %v4534 = vadd.f32 0.0, %v4533
      %v4535 = vpop.f32.mrb[0].mxu0
      %v4536 = vpop.f32.mrb[0].mxu0
      %v4537 = vadd.f32 0.0, %v4536
      %v4538 = vpop.f32.mrb[0].mxu0
      %4539 = vmatprep.mubr.bf16.mxu0 0
      %4540 = vmatmul.mubr.bf16.gmra.mrb[0].mxu0 %v3197
      %v4541 = vpop.f32.mrb[0].mxu0
      %v4542 = vadd.f32 0.0, %v4541
      %v4543 = vpop.f32.mrb[0].mxu0
      %v4544 = vpop.f32.mrb[0].mxu0
      %v4545 = vadd.f32 0.0, %v4544
      %v4546 = vpop.f32.mrb[0].mxu0
      %4547 = vmatprep.mubr.bf16.mxu0 0
      %4548 = vmatmul.mubr.bf16.gmra.mrb[0].mxu0 %v3200
      %v4549 = vpop.f32.mrb[0].mxu0
      %v4550 = vadd.f32 0.0, %v4549
      %v4551 = vpop.f32.mrb[0].mxu0
      %v4552 = vpop.f32.mrb[0].mxu0
      %v4553 = vadd.f32 0.0, %v4552
      %v4554 = vpop.f32.mrb[0].mxu0
      %4555 = vmatprep.mubr.bf16.mxu0 0
      %4556 = vmatmul.mubr.bf16.gmra.mrb[0].mxu0 %v3203
      %v4557 = vpop.f32.mrb[0].mxu0
      %v4558 = vadd.f32 0.0, %v4557
      %v4559 = vpop.f32.mrb[0].mxu0
      %v4560 = vpop.f32.mrb[0].mxu0
      %v4561 = vadd.f32 0.0, %v4560
      %v4562 = vpop.f32.mrb[0].mxu0
      %4563 = vmatprep.mubr.bf16.mxu0 0
      %4564 = vmatmul.mubr.bf16.gmra.mrb[0].mxu0 %v3206
      %v4565 = vpop.f32.mrb[0].mxu0
      %v4566 = vadd.f32 0.0, %v4565
      %v4567 = vpop.f32.mrb[0].mxu0
      %v4568 = vpop.f32.mrb[0].mxu0
      %v4569 = vadd.f32 0.0, %v4568
      %v4570 = vpop.f32.mrb[0].mxu0
      %4571 = vmatprep.mubr.bf16.mxu0 0
      %4572 = vmatmul.mubr.bf16.gmra.mrb[0].mxu0 %v3209
      %v4573 = vpop.f32.mrb[0].mxu0
      %v4574 = vadd.f32 0.0, %v4573
      %v4575 = vpop.f32.mrb[0].mxu0
      %v4576 = vpop.f32.mrb[0].mxu0
      %v4577 = vadd.f32 0.0, %v4576
      %v4578 = vpop.f32.mrb[0].mxu0
      %4579 = vmatprep.mubr.bf16.mxu0 0
      %4580 = vmatmul.mubr.bf16.gmra.mrb[0].mxu0 %v3212
      %v4581 = vpop.f32.mrb[0].mxu0
      %v4582 = vadd.f32 0.0, %v4581
      %v4583 = vpop.f32.mrb[0].mxu0
      %v4584 = vpop.f32.mrb[0].mxu0
      %v4585 = vadd.f32 0.0, %v4584
      %v4586 = vpop.f32.mrb[0].mxu0
      %4587 = vmatprep.mubr.bf16.mxu0 0
      %4588 = vmatmul.mubr.bf16.gmra.mrb[0].mxu0 %v3215
      %v4589 = vpop.f32.mrb[0].mxu0
      %v4590 = vadd.f32 0.0, %v4589
      %v4591 = vpop.f32.mrb[0].mxu0
      %v4592 = vpop.f32.mrb[0].mxu0
      %v4593 = vadd.f32 0.0, %v4592
      %v4594 = vpop.f32.mrb[0].mxu0
      %4595 = vmatprep.mubr.bf16.mxu0 0
      %4596 = vmatmul.mubr.bf16.gmra.mrb[0].mxu0 %v3218
      %v4597 = vpop.f32.mrb[0].mxu0
      %v4598 = vadd.f32 0.0, %v4597
      %v4599 = vpop.f32.mrb[0].mxu0
      %v4600 = vpop.f32.mrb[0].mxu0
      %v4601 = vadd.f32 0.0, %v4600
      %v4602 = vpop.f32.mrb[0].mxu0
      %4603 = vmatprep.mubr.bf16.mxu0 0
      %4604 = vmatmul.mubr.bf16.gmra.mrb[0].mxu0 %v3221
      %v4605 = vpop.f32.mrb[0].mxu0
      %v4606 = vadd.f32 0.0, %v4605
      %v4607 = vpop.f32.mrb[0].mxu0
      %v4608 = vpop.f32.mrb[0].mxu0
      %v4609 = vadd.f32 0.0, %v4608
      %v4610 = vpop.f32.mrb[0].mxu0
      %4611 = vmatprep.mubr.bf16.mxu0 0
      %4612 = vmatmul.mubr.bf16.gmra.mrb[0].mxu0 %v3224
      %v4613 = vpop.f32.mrb[0].mxu0
      %v4614 = vadd.f32 0.0, %v4613
      %v4615 = vpop.f32.mrb[0].mxu0
      %v4616 = vpop.f32.mrb[0].mxu0
      %v4617 = vadd.f32 0.0, %v4616
      %v4618 = vpop.f32.mrb[0].mxu0
      %4619 = vmatprep.mubr.bf16.mxu0 0
      %4620 = vmatmul.mubr.bf16.gmra.mrb[0].mxu0 %v3848
      %v4621 = vpop.f32.mrb[0].mxu0
      %v4622 = vadd.f32 0.0, %v4621
      %v4623 = vpop.f32.mrb[0].mxu0
      %v4624 = vpop.f32.mrb[0].mxu0
      %v4625 = vadd.f32 0.0, %v4624
      %v4626 = vpop.f32.mrb[0].mxu0
      %4627 = vmatprep.mubr.bf16.mxu0 0
      %4628 = vmatmul.mubr.bf16.gmra.mrb[0].mxu0 %v4473
      %v4629 = vpop.f32.mrb[0].mxu0
      %v4630 = vadd.f32 0.0, %v4629
      %v4631 = vpop.f32.mrb[0].mxu0
      %v4632 = vpop.f32.mrb[0].mxu0
      %v4633 = vadd.f32 0.0, %v4632
      %v4634 = vpop.f32.mrb[0].mxu0
      %4635 = vdwg.mxu0
      %v4636 = vadd.f32 %v4428, %v4510
      %v4637 = vadd.f32 %v4429, %v4513
      %v4638 = vadd.f32 %v4430, %v4518
      %v4639 = vadd.f32 %v4431, %v4521
      %v4640 = vadd.f32 %v4432, %v4526
      %v4641 = vadd.f32 %v4433, %v4529
      %v4642 = vadd.f32 %v4434, %v4534
      %v4643 = vadd.f32 %v4435, %v4537
      %v4644 = vadd.f32 %v4436, %v4542
      %v4645 = vadd.f32 %v4437, %v4545
      %v4646 = vadd.f32 %v4438, %v4550
      %v4647 = vadd.f32 %v4439, %v4553
      %v4648 = vadd.f32 %v4440, %v4558
      %v4649 = vadd.f32 %v4441, %v4561
      %v4650 = vadd.f32 %v4442, %v4566
      %v4651 = vadd.f32 %v4443, %v4569
      %v4652 = vadd.f32 %v4444, %v4574
      %v4653 = vadd.f32 %v4445, %v4577
      %v4654 = vadd.f32 %v4446, %v4582
      %v4655 = vadd.f32 %v4447, %v4585
      %v4656 = vadd.f32 %v4448, %v4590
      %v4657 = vadd.f32 %v4449, %v4593
      %v4658 = vadd.f32 %v4450, %v4598
      %v4659 = vadd.f32 %v4451, %v4601
      %v4660 = vadd.f32 %v4452, %v4606
      %v4661 = vadd.f32 %v4453, %v4609
      %v4662 = vadd.f32 %v4454, %v4614
      %v4663 = vadd.f32 %v4455, %v4617
      %v4664 = vadd.f32 %v4456, %v4622
      %v4665 = vadd.f32 %v4457, %v4625
      %v4666 = vadd.f32 %v4458, %v4630
      %v4667 = vadd.f32 %v4459, %v4633
      %v4668 = vld [vmem:[%s4] sm:$0x1]
      %v4670 = vlaneseq
      %v4671 = vshrl.u32 %v4670, 7
      %v4672 = vsub.s32 0, %v4671
      %v4673 = vrot.slane %v4668, %v4672
      %v4675 = vadd.f32 %v4636, %v4673
      %v4676 = vadd.f32 %v4637, %v4673
      %v4677 = vadd.f32 %v4638, %v4673
      %v4678 = vadd.f32 %v4639, %v4673
      %v4679 = vadd.f32 %v4640, %v4673
      %v4680 = vadd.f32 %v4641, %v4673
      %v4681 = vadd.f32 %v4642, %v4673
      %v4682 = vadd.f32 %v4643, %v4673
      %v4683 = vadd.f32 %v4644, %v4673
      %v4684 = vadd.f32 %v4645, %v4673
      %v4685 = vadd.f32 %v4646, %v4673
      %v4686 = vadd.f32 %v4647, %v4673
      %v4687 = vadd.f32 %v4648, %v4673
      %v4688 = vadd.f32 %v4649, %v4673
      %v4689 = vadd.f32 %v4650, %v4673
      %v4690 = vadd.f32 %v4651, %v4673
      %v4691 = vadd.f32 %v4652, %v4673
      %v4692 = vadd.f32 %v4653, %v4673
      %v4693 = vadd.f32 %v4654, %v4673
      %v4694 = vadd.f32 %v4655, %v4673
      %v4695 = vadd.f32 %v4656, %v4673
      %v4696 = vadd.f32 %v4657, %v4673
      %v4697 = vadd.f32 %v4658, %v4673
      %v4698 = vadd.f32 %v4659, %v4673
      %v4699 = vadd.f32 %v4660, %v4673
      %v4700 = vadd.f32 %v4661, %v4673
      %v4701 = vadd.f32 %v4662, %v4673
      %v4702 = vadd.f32 %v4663, %v4673
      %v4703 = vadd.f32 %v4664, %v4673
      %v4704 = vadd.f32 %v4665, %v4673
      %v4705 = vadd.f32 %v4666, %v4673
      %v4706 = vadd.f32 %v4667, %v4673
      %v4707 = vmax.f32 %v4675, 0.0
      %v4708 = vmax.f32 %v4676, 0.0
      %v4709 = vmax.f32 %v4677, 0.0
      %v4710 = vmax.f32 %v4678, 0.0
      %v4711 = vmax.f32 %v4679, 0.0
      %v4712 = vmax.f32 %v4680, 0.0
      %v4713 = vmax.f32 %v4681, 0.0
      %v4714 = vmax.f32 %v4682, 0.0
      %v4715 = vmax.f32 %v4683, 0.0
      %v4716 = vmax.f32 %v4684, 0.0
      %v4717 = vmax.f32 %v4685, 0.0
      %v4718 = vmax.f32 %v4686, 0.0
      %v4719 = vmax.f32 %v4687, 0.0
      %v4720 = vmax.f32 %v4688, 0.0
      %v4721 = vmax.f32 %v4689, 0.0
      %v4722 = vmax.f32 %v4690, 0.0
      %v4723 = vmax.f32 %v4691, 0.0
      %v4724 = vmax.f32 %v4692, 0.0
      %v4725 = vmax.f32 %v4693, 0.0
      %v4726 = vmax.f32 %v4694, 0.0
      %v4727 = vmax.f32 %v4695, 0.0
      %v4728 = vmax.f32 %v4696, 0.0
      %v4729 = vmax.f32 %v4697, 0.0
      %v4730 = vmax.f32 %v4698, 0.0
      %v4731 = vmax.f32 %v4699, 0.0
      %v4732 = vmax.f32 %v4700, 0.0
      %v4733 = vmax.f32 %v4701, 0.0
      %v4734 = vmax.f32 %v4702, 0.0
      %v4735 = vmax.f32 %v4703, 0.0
      %v4736 = vmax.f32 %v4704, 0.0
      %v4737 = vmax.f32 %v4705, 0.0
      %v4738 = vmax.f32 %v4706, 0.0
      %v4739 = vpack.c.bf16 %v4708, %v4707
      %v4740 = vpack.c.bf16 %v4710, %v4709
      %v4741 = vpack.c.bf16 %v4712, %v4711
      %v4742 = vpack.c.bf16 %v4714, %v4713
      %v4743 = vpack.c.bf16 %v4716, %v4715
      %v4744 = vpack.c.bf16 %v4718, %v4717
      %v4745 = vpack.c.bf16 %v4720, %v4719
      %v4746 = vpack.c.bf16 %v4722, %v4721
      %v4747 = vpack.c.bf16 %v4724, %v4723
      %v4748 = vpack.c.bf16 %v4726, %v4725
      %v4749 = vpack.c.bf16 %v4728, %v4727
      %v4750 = vpack.c.bf16 %v4730, %v4729
      %v4751 = vpack.c.bf16 %v4732, %v4731
      %v4752 = vpack.c.bf16 %v4734, %v4733
      %v4753 = vpack.c.bf16 %v4736, %v4735
      %v4754 = vpack.c.bf16 %v4738, %v4737
      %v4755 = vld [vmem:[%s5] sm:$0xf]
      %v4756 = vld [vmem:[%s5 + $0x4] sm:$0xf]
      %v4757 = vld [vmem:[%s6] sm:$0x1]
      %v4759 = vlaneseq
      %v4760 = vshrl.u32 %v4759, 7
      %v4761 = vsub.s32 0, %v4760
      %v4762 = vrot.slane %v4757, %v4761
      %v4766 = vunpack.c.l.b16 %v4755
      %v4767 = vunpack.c.l.b16 %v4756
      %v4768 = vpack.c.b16 %v4767, %v4766
      %v4771 = vsel %vm2454, %v4739, 0
      %v4774 = vsel %vm2454, %v4740, 0
      %v4777 = vsel %vm2454, %v4741, 0
      %v4780 = vsel %vm2454, %v4742, 0
      %v4783 = vsel %vm2454, %v4743, 0
      %v4786 = vsel %vm2454, %v4744, 0
      %v4789 = vsel %vm2454, %v4745, 0
      %v4792 = vsel %vm2454, %v4746, 0
      %v4795 = vsel %vm2454, %v4747, 0
      %v4798 = vsel %vm2454, %v4748, 0
      %v4801 = vsel %vm2454, %v4749, 0
      %v4804 = vsel %vm2454, %v4750, 0
      %v4807 = vsel %vm2454, %v4751, 0
      %v4810 = vsel %vm2454, %v4752, 0
      %v4813 = vsel %vm2454, %v4753, 0
      %v4816 = vsel %vm2454, %v4754, 0
      %4818 = vmatprep.subr.bf16.mxu0 0
      %4819 = vmatpush1.bf16.msra.mxu0 %v4768
      %4820 = vmatprep.subr.bf16.mxu0 0
      %4821 = vmatpush1.bf16.msra.mxu0 0
      %4822 = vmatprep.subr.bf16.mxu0 0
      %4823 = vmatpush1.bf16.msra.mxu0 0
      %4824 = vmatprep.subr.bf16.mxu0 0
      %4825 = vmatpush1.bf16.msra.mxu0 0
      %4826 = vmatprep.subr.bf16.mxu0 0
      %4827 = vmatpush1.bf16.msra.mxu0 0
      %4828 = vmatprep.subr.bf16.mxu0 0
      %4829 = vmatpush1.bf16.msra.mxu0 0
      %4830 = vmatprep.subr.bf16.mxu0 0
      %4831 = vmatpush1.bf16.msra.mxu0 0
      %4832 = vmatprep.subr.bf16.mxu0 0
      %4833 = vmatpush1.bf16.msra.mxu0 0
      %4834 = vmatprep.subr.bf16.mxu0 0
      %4835 = vmatpush1.bf16.msra.mxu0 0
      %4836 = vmatprep.subr.bf16.mxu0 0
      %4837 = vmatpush1.bf16.msra.mxu0 0
      %4838 = vmatprep.subr.bf16.mxu0 0
      %4839 = vmatpush1.bf16.msra.mxu0 0
      %4840 = vmatprep.subr.bf16.mxu0 0
      %4841 = vmatpush1.bf16.msra.mxu0 0
      %4842 = vmatprep.subr.bf16.mxu0 0
      %4843 = vmatpush1.bf16.msra.mxu0 0
      %4844 = vmatprep.subr.bf16.mxu0 0
      %4845 = vmatpush1.bf16.msra.mxu0 0
      %4846 = vmatprep.subr.bf16.mxu0 0
      %4847 = vmatpush1.bf16.msra.mxu0 0
      %4848 = vmatprep.subr.bf16.mxu0 0
      %4849 = vmatpush1.bf16.msra.mxu0 0
      %4850 = vmatprep.mubr.bf16.mxu0 0
      %4851 = vmatmul.mubr.bf16.gmra.mrb[0].mxu0 %v4771
      %v4852 = vpop.f32.mrb[0].mxu0
      %v4853 = vadd.f32 %v4762, %v4852
      %v4854 = vpop.f32.mrb[0].mxu0
      %v4855 = vpop.f32.mrb[0].mxu0
      %v4856 = vadd.f32 %v4762, %v4855
      %v4857 = vpop.f32.mrb[0].mxu0
      %4858 = vmatprep.mubr.bf16.mxu0 0
      %4859 = vmatmul.mubr.bf16.gmra.mrb[0].mxu0 %v4774
      %v4860 = vpop.f32.mrb[0].mxu0
      %v4861 = vadd.f32 %v4762, %v4860
      %v4862 = vpop.f32.mrb[0].mxu0
      %v4863 = vpop.f32.mrb[0].mxu0
      %v4864 = vadd.f32 %v4762, %v4863
      %v4865 = vpop.f32.mrb[0].mxu0
      %4866 = vmatprep.mubr.bf16.mxu0 0
      %4867 = vmatmul.mubr.bf16.gmra.mrb[0].mxu0 %v4777
      %v4868 = vpop.f32.mrb[0].mxu0
      %v4869 = vadd.f32 %v4762, %v4868
      %v4870 = vpop.f32.mrb[0].mxu0
      %v4871 = vpop.f32.mrb[0].mxu0
      %v4872 = vadd.f32 %v4762, %v4871
      %v4873 = vpop.f32.mrb[0].mxu0
      %4874 = vmatprep.mubr.bf16.mxu0 0
      %4875 = vmatmul.mubr.bf16.gmra.mrb[0].mxu0 %v4780
      %v4876 = vpop.f32.mrb[0].mxu0
      %v4877 = vadd.f32 %v4762, %v4876
      %v4878 = vpop.f32.mrb[0].mxu0
      %v4879 = vpop.f32.mrb[0].mxu0
      %v4880 = vadd.f32 %v4762, %v4879
      %v4881 = vpop.f32.mrb[0].mxu0
      %4882 = vmatprep.mubr.bf16.mxu0 0
      %4883 = vmatmul.mubr.bf16.gmra.mrb[0].mxu0 %v4783
      %v4884 = vpop.f32.mrb[0].mxu0
      %v4885 = vadd.f32 %v4762, %v4884
      %v4886 = vpop.f32.mrb[0].mxu0
      %v4887 = vpop.f32.mrb[0].mxu0
      %v4888 = vadd.f32 %v4762, %v4887
      %v4889 = vpop.f32.mrb[0].mxu0
      %4890 = vmatprep.mubr.bf16.mxu0 0
      %4891 = vmatmul.mubr.bf16.gmra.mrb[0].mxu0 %v4786
      %v4892 = vpop.f32.mrb[0].mxu0
      %v4893 = vadd.f32 %v4762, %v4892
      %v4894 = vpop.f32.mrb[0].mxu0
      %v4895 = vpop.f32.mrb[0].mxu0
      %v4896 = vadd.f32 %v4762, %v4895
      %v4897 = vpop.f32.mrb[0].mxu0
      %4898 = vmatprep.mubr.bf16.mxu0 0
      %4899 = vmatmul.mubr.bf16.gmra.mrb[0].mxu0 %v4789
      %v4900 = vpop.f32.mrb[0].mxu0
      %v4901 = vadd.f32 %v4762, %v4900
      %v4902 = vpop.f32.mrb[0].mxu0
      %v4903 = vpop.f32.mrb[0].mxu0
      %v4904 = vadd.f32 %v4762, %v4903
      %v4905 = vpop.f32.mrb[0].mxu0
      %4906 = vmatprep.mubr.bf16.mxu0 0
      %4907 = vmatmul.mubr.bf16.gmra.mrb[0].mxu0 %v4792
      %v4908 = vpop.f32.mrb[0].mxu0
      %v4909 = vadd.f32 %v4762, %v4908
      %v4910 = vpop.f32.mrb[0].mxu0
      %v4911 = vpop.f32.mrb[0].mxu0
      %v4912 = vadd.f32 %v4762, %v4911
      %v4913 = vpop.f32.mrb[0].mxu0
      %4914 = vmatprep.mubr.bf16.mxu0 0
      %4915 = vmatmul.mubr.bf16.gmra.mrb[0].mxu0 %v4795
      %v4916 = vpop.f32.mrb[0].mxu0
      %v4917 = vadd.f32 %v4762, %v4916
      %v4918 = vpop.f32.mrb[0].mxu0
      %v4919 = vpop.f32.mrb[0].mxu0
      %v4920 = vadd.f32 %v4762, %v4919
      %v4921 = vpop.f32.mrb[0].mxu0
      %4922 = vmatprep.mubr.bf16.mxu0 0
      %4923 = vmatmul.mubr.bf16.gmra.mrb[0].mxu0 %v4798
      %v4924 = vpop.f32.mrb[0].mxu0
      %v4925 = vadd.f32 %v4762, %v4924
      %v4926 = vpop.f32.mrb[0].mxu0
      %v4927 = vpop.f32.mrb[0].mxu0
      %v4928 = vadd.f32 %v4762, %v4927
      %v4929 = vpop.f32.mrb[0].mxu0
      %4930 = vmatprep.mubr.bf16.mxu0 0
      %4931 = vmatmul.mubr.bf16.gmra.mrb[0].mxu0 %v4801
      %v4932 = vpop.f32.mrb[0].mxu0
      %v4933 = vadd.f32 %v4762, %v4932
      %v4934 = vpop.f32.mrb[0].mxu0
      %v4935 = vpop.f32.mrb[0].mxu0
      %v4936 = vadd.f32 %v4762, %v4935
      %v4937 = vpop.f32.mrb[0].mxu0
      %4938 = vmatprep.mubr.bf16.mxu0 0
      %4939 = vmatmul.mubr.bf16.gmra.mrb[0].mxu0 %v4804
      %v4940 = vpop.f32.mrb[0].mxu0
      %v4941 = vadd.f32 %v4762, %v4940
      %v4942 = vpop.f32.mrb[0].mxu0
      %v4943 = vpop.f32.mrb[0].mxu0
      %v4944 = vadd.f32 %v4762, %v4943
      %v4945 = vpop.f32.mrb[0].mxu0
      %4946 = vmatprep.mubr.bf16.mxu0 0
      %4947 = vmatmul.mubr.bf16.gmra.mrb[0].mxu0 %v4807
      %v4948 = vpop.f32.mrb[0].mxu0
      %v4949 = vadd.f32 %v4762, %v4948
      %v4950 = vpop.f32.mrb[0].mxu0
      %v4951 = vpop.f32.mrb[0].mxu0
      %v4952 = vadd.f32 %v4762, %v4951
      %v4953 = vpop.f32.mrb[0].mxu0
      %4954 = vmatprep.mubr.bf16.mxu0 0
      %4955 = vmatmul.mubr.bf16.gmra.mrb[0].mxu0 %v4810
      %v4956 = vpop.f32.mrb[0].mxu0
      %v4957 = vadd.f32 %v4762, %v4956
      %v4958 = vpop.f32.mrb[0].mxu0
      %v4959 = vpop.f32.mrb[0].mxu0
      %v4960 = vadd.f32 %v4762, %v4959
      %v4961 = vpop.f32.mrb[0].mxu0
      %4962 = vmatprep.mubr.bf16.mxu0 0
      %4963 = vmatmul.mubr.bf16.gmra.mrb[0].mxu0 %v4813
      %v4964 = vpop.f32.mrb[0].mxu0
      %v4965 = vadd.f32 %v4762, %v4964
      %v4966 = vpop.f32.mrb[0].mxu0
      %v4967 = vpop.f32.mrb[0].mxu0
      %v4968 = vadd.f32 %v4762, %v4967
      %v4969 = vpop.f32.mrb[0].mxu0
      %4970 = vmatprep.mubr.bf16.mxu0 0
      %4971 = vmatmul.mubr.bf16.gmra.mrb[0].mxu0 %v4816
      %v4972 = vpop.f32.mrb[0].mxu0
      %v4973 = vadd.f32 %v4762, %v4972
      %v4974 = vpop.f32.mrb[0].mxu0
      %v4975 = vpop.f32.mrb[0].mxu0
      %v4976 = vadd.f32 %v4762, %v4975
      %v4977 = vpop.f32.mrb[0].mxu0
      %4978 = vdwg.mxu0
      %5011 = vrot.lane.b32.xlu0 %v4853, 125
      %v5012 = vpop.permute.xlu0 %5011
      %5013 = vrot.lane.b32.xlu0 %v4856, 125
      %v5014 = vpop.permute.xlu0 %5013
      %5015 = vrot.lane.b32.xlu0 %v4861, 125
      %v5016 = vpop.permute.xlu0 %5015
      %5017 = vrot.lane.b32.xlu0 %v4864, 125
      %v5018 = vpop.permute.xlu0 %5017
      %5019 = vrot.lane.b32.xlu0 %v4869, 125
      %v5020 = vpop.permute.xlu0 %5019
      %5021 = vrot.lane.b32.xlu0 %v4872, 125
      %v5022 = vpop.permute.xlu0 %5021
      %5023 = vrot.lane.b32.xlu0 %v4877, 125
      %v5024 = vpop.permute.xlu0 %5023
      %5025 = vrot.lane.b32.xlu0 %v4880, 125
      %v5026 = vpop.permute.xlu0 %5025
      %5027 = vrot.lane.b32.xlu0 %v4885, 125
      %v5028 = vpop.permute.xlu0 %5027
      %5029 = vrot.lane.b32.xlu0 %v4888, 125
      %v5030 = vpop.permute.xlu0 %5029
      %5031 = vrot.lane.b32.xlu0 %v4893, 125
      %v5032 = vpop.permute.xlu0 %5031
      %5033 = vrot.lane.b32.xlu0 %v4896, 125
      %v5034 = vpop.permute.xlu0 %5033
      %5035 = vrot.lane.b32.xlu0 %v4901, 125
      %v5036 = vpop.permute.xlu0 %5035
      %5037 = vrot.lane.b32.xlu0 %v4904, 125
      %v5038 = vpop.permute.xlu0 %5037
      %5039 = vrot.lane.b32.xlu0 %v4909, 125
      %v5040 = vpop.permute.xlu0 %5039
      %5041 = vrot.lane.b32.xlu0 %v4912, 125
      %v5042 = vpop.permute.xlu0 %5041
      %5043 = vrot.lane.b32.xlu0 %v4917, 125
      %v5044 = vpop.permute.xlu0 %5043
      %5045 = vrot.lane.b32.xlu0 %v4920, 125
      %v5046 = vpop.permute.xlu0 %5045
      %5047 = vrot.lane.b32.xlu0 %v4925, 125
      %v5048 = vpop.permute.xlu0 %5047
      %5049 = vrot.lane.b32.xlu0 %v4928, 125
      %v5050 = vpop.permute.xlu0 %5049
      %5051 = vrot.lane.b32.xlu0 %v4933, 125
      %v5052 = vpop.permute.xlu0 %5051
      %5053 = vrot.lane.b32.xlu0 %v4936, 125
      %v5054 = vpop.permute.xlu0 %5053
      %5055 = vrot.lane.b32.xlu0 %v4941, 125
      %v5056 = vpop.permute.xlu0 %5055
      %5057 = vrot.lane.b32.xlu0 %v4944, 125
      %v5058 = vpop.permute.xlu0 %5057
      %5059 = vrot.lane.b32.xlu0 %v4949, 125
      %v5060 = vpop.permute.xlu0 %5059
      %5061 = vrot.lane.b32.xlu0 %v4952, 125
      %v5062 = vpop.permute.xlu0 %5061
      %5063 = vrot.lane.b32.xlu0 %v4957, 125
      %v5064 = vpop.permute.xlu0 %5063
      %5065 = vrot.lane.b32.xlu0 %v4960, 125
      %v5066 = vpop.permute.xlu0 %5065
      %5067 = vrot.lane.b32.xlu0 %v4965, 125
      %v5068 = vpop.permute.xlu0 %5067
      %5069 = vrot.lane.b32.xlu0 %v4968, 125
      %v5070 = vpop.permute.xlu0 %5069
      %5071 = vrot.lane.b32.xlu0 %v4973, 125
      %v5072 = vpop.permute.xlu0 %5071
      %5073 = vrot.lane.b32.xlu0 %v4976, 125
      %v5074 = vpop.permute.xlu0 %5073
      %v5107 = vsub.f32 %v4853, %v5012
      %v5108 = vsub.f32 %v4856, %v5014
      %v5109 = vsub.f32 %v4861, %v5016
      %v5110 = vsub.f32 %v4864, %v5018
      %v5111 = vsub.f32 %v4869, %v5020
      %v5112 = vsub.f32 %v4872, %v5022
      %v5113 = vsub.f32 %v4877, %v5024
      %v5114 = vsub.f32 %v4880, %v5026
      %v5115 = vsub.f32 %v4885, %v5028
      %v5116 = vsub.f32 %v4888, %v5030
      %v5117 = vsub.f32 %v4893, %v5032
      %v5118 = vsub.f32 %v4896, %v5034
      %v5119 = vsub.f32 %v4901, %v5036
      %v5120 = vsub.f32 %v4904, %v5038
      %v5121 = vsub.f32 %v4909, %v5040
      %v5122 = vsub.f32 %v4912, %v5042
      %v5123 = vsub.f32 %v4917, %v5044
      %v5124 = vsub.f32 %v4920, %v5046
      %v5125 = vsub.f32 %v4925, %v5048
      %v5126 = vsub.f32 %v4928, %v5050
      %v5127 = vsub.f32 %v4933, %v5052
      %v5128 = vsub.f32 %v4936, %v5054
      %v5129 = vsub.f32 %v4941, %v5056
      %v5130 = vsub.f32 %v4944, %v5058
      %v5131 = vsub.f32 %v4949, %v5060
      %v5132 = vsub.f32 %v4952, %v5062
      %v5133 = vsub.f32 %v4957, %v5064
      %v5134 = vsub.f32 %v4960, %v5066
      %v5135 = vsub.f32 %v4965, %v5068
      %v5136 = vsub.f32 %v4968, %v5070
      %v5137 = vsub.f32 %v4973, %v5072
      %v5138 = vsub.f32 %v4976, %v5074
      %v5139 = vmul.f32 %v5107, 1.442695
      %v5140 = vpow.pop %v5139
      %v5141 = vmul.f32 %v5108, 1.442695
      %v5142 = vpow.pop %v5141
      %v5143 = vmul.f32 %v5109, 1.442695
      %v5144 = vpow.pop %v5143
      %v5145 = vmul.f32 %v5110, 1.442695
      %v5146 = vpow.pop %v5145
      %v5147 = vmul.f32 %v5111, 1.442695
      %v5148 = vpow.pop %v5147
      %v5149 = vmul.f32 %v5112, 1.442695
      %v5150 = vpow.pop %v5149
      %v5151 = vmul.f32 %v5113, 1.442695
      %v5152 = vpow.pop %v5151
      %v5153 = vmul.f32 %v5114, 1.442695
      %v5154 = vpow.pop %v5153
      %v5155 = vmul.f32 %v5115, 1.442695
      %v5156 = vpow.pop %v5155
      %v5157 = vmul.f32 %v5116, 1.442695
      %v5158 = vpow.pop %v5157
      %v5159 = vmul.f32 %v5117, 1.442695
      %v5160 = vpow.pop %v5159
      %v5161 = vmul.f32 %v5118, 1.442695
      %v5162 = vpow.pop %v5161
      %v5163 = vmul.f32 %v5119, 1.442695
      %v5164 = vpow.pop %v5163
      %v5165 = vmul.f32 %v5120, 1.442695
      %v5166 = vpow.pop %v5165
      %v5167 = vmul.f32 %v5121, 1.442695
      %v5168 = vpow.pop %v5167
      %v5169 = vmul.f32 %v5122, 1.442695
      %v5170 = vpow.pop %v5169
      %v5171 = vmul.f32 %v5123, 1.442695
      %v5172 = vpow.pop %v5171
      %v5173 = vmul.f32 %v5124, 1.442695
      %v5174 = vpow.pop %v5173
      %v5175 = vmul.f32 %v5125, 1.442695
      %v5176 = vpow.pop %v5175
      %v5177 = vmul.f32 %v5126, 1.442695
      %v5178 = vpow.pop %v5177
      %v5179 = vmul.f32 %v5127, 1.442695
      %v5180 = vpow.pop %v5179
      %v5181 = vmul.f32 %v5128, 1.442695
      %v5182 = vpow.pop %v5181
      %v5183 = vmul.f32 %v5129, 1.442695
      %v5184 = vpow.pop %v5183
      %v5185 = vmul.f32 %v5130, 1.442695
      %v5186 = vpow.pop %v5185
      %v5187 = vmul.f32 %v5131, 1.442695
      %v5188 = vpow.pop %v5187
      %v5189 = vmul.f32 %v5132, 1.442695
      %v5190 = vpow.pop %v5189
      %v5191 = vmul.f32 %v5133, 1.442695
      %v5192 = vpow.pop %v5191
      %v5193 = vmul.f32 %v5134, 1.442695
      %v5194 = vpow.pop %v5193
      %v5195 = vmul.f32 %v5135, 1.442695
      %v5196 = vpow.pop %v5195
      %v5197 = vmul.f32 %v5136, 1.442695
      %v5198 = vpow.pop %v5197
      %v5199 = vmul.f32 %v5137, 1.442695
      %v5200 = vpow.pop %v5199
      %v5201 = vmul.f32 %v5138, 1.442695
      %v5202 = vpow.pop %v5201
      %v5203 = vadd.f32 %v5140, 1.0
      %v5204 = vadd.f32 %v5142, 1.0
      %v5205 = vadd.f32 %v5144, 1.0
      %v5206 = vadd.f32 %v5146, 1.0
      %v5207 = vadd.f32 %v5148, 1.0
      %v5208 = vadd.f32 %v5150, 1.0
      %v5209 = vadd.f32 %v5152, 1.0
      %v5210 = vadd.f32 %v5154, 1.0
      %v5211 = vadd.f32 %v5156, 1.0
      %v5212 = vadd.f32 %v5158, 1.0
      %v5213 = vadd.f32 %v5160, 1.0
      %v5214 = vadd.f32 %v5162, 1.0
      %v5215 = vadd.f32 %v5164, 1.0
      %v5216 = vadd.f32 %v5166, 1.0
      %v5217 = vadd.f32 %v5168, 1.0
      %v5218 = vadd.f32 %v5170, 1.0
      %v5219 = vadd.f32 %v5172, 1.0
      %v5220 = vadd.f32 %v5174, 1.0
      %v5221 = vadd.f32 %v5176, 1.0
      %v5222 = vadd.f32 %v5178, 1.0
      %v5223 = vadd.f32 %v5180, 1.0
      %v5224 = vadd.f32 %v5182, 1.0
      %v5225 = vadd.f32 %v5184, 1.0
      %v5226 = vadd.f32 %v5186, 1.0
      %v5227 = vadd.f32 %v5188, 1.0
      %v5228 = vadd.f32 %v5190, 1.0
      %v5229 = vadd.f32 %v5192, 1.0
      %v5230 = vadd.f32 %v5194, 1.0
      %v5231 = vadd.f32 %v5196, 1.0
      %v5232 = vadd.f32 %v5198, 1.0
      %v5233 = vadd.f32 %v5200, 1.0
      %v5234 = vadd.f32 %v5202, 1.0
      %v5235 = vrcp.pop %v5203
      %v5236 = vmul.f32 1.0, %v5235
      %v5237 = vrcp.pop %v5204
      %v5238 = vmul.f32 1.0, %v5237
      %v5239 = vrcp.pop %v5205
      %v5240 = vmul.f32 1.0, %v5239
      %v5241 = vrcp.pop %v5206
      %v5242 = vmul.f32 1.0, %v5241
      %v5243 = vrcp.pop %v5207
      %v5244 = vmul.f32 1.0, %v5243
      %v5245 = vrcp.pop %v5208
      %v5246 = vmul.f32 1.0, %v5245
      %v5247 = vrcp.pop %v5209
      %v5248 = vmul.f32 1.0, %v5247
      %v5249 = vrcp.pop %v5210
      %v5250 = vmul.f32 1.0, %v5249
      %v5251 = vrcp.pop %v5211
      %v5252 = vmul.f32 1.0, %v5251
      %v5253 = vrcp.pop %v5212
      %v5254 = vmul.f32 1.0, %v5253
      %v5255 = vrcp.pop %v5213
      %v5256 = vmul.f32 1.0, %v5255
      %v5257 = vrcp.pop %v5214
      %v5258 = vmul.f32 1.0, %v5257
      %v5259 = vrcp.pop %v5215
      %v5260 = vmul.f32 1.0, %v5259
      %v5261 = vrcp.pop %v5216
      %v5262 = vmul.f32 1.0, %v5261
      %v5263 = vrcp.pop %v5217
      %v5264 = vmul.f32 1.0, %v5263
      %v5265 = vrcp.pop %v5218
      %v5266 = vmul.f32 1.0, %v5265
      %v5267 = vrcp.pop %v5219
      %v5268 = vmul.f32 1.0, %v5267
      %v5269 = vrcp.pop %v5220
      %v5270 = vmul.f32 1.0, %v5269
      %v5271 = vrcp.pop %v5221
      %v5272 = vmul.f32 1.0, %v5271
      %v5273 = vrcp.pop %v5222
      %v5274 = vmul.f32 1.0, %v5273
      %v5275 = vrcp.pop %v5223
      %v5276 = vmul.f32 1.0, %v5275
      %v5277 = vrcp.pop %v5224
      %v5278 = vmul.f32 1.0, %v5277
      %v5279 = vrcp.pop %v5225
      %v5280 = vmul.f32 1.0, %v5279
      %v5281 = vrcp.pop %v5226
      %v5282 = vmul.f32 1.0, %v5281
      %v5283 = vrcp.pop %v5227
      %v5284 = vmul.f32 1.0, %v5283
      %v5285 = vrcp.pop %v5228
      %v5286 = vmul.f32 1.0, %v5285
      %v5287 = vrcp.pop %v5229
      %v5288 = vmul.f32 1.0, %v5287
      %v5289 = vrcp.pop %v5230
      %v5290 = vmul.f32 1.0, %v5289
      %v5291 = vrcp.pop %v5231
      %v5292 = vmul.f32 1.0, %v5291
      %v5293 = vrcp.pop %v5232
      %v5294 = vmul.f32 1.0, %v5293
      %v5295 = vrcp.pop %v5233
      %v5296 = vmul.f32 1.0, %v5295
      %v5297 = vrcp.pop %v5234
      %v5298 = vmul.f32 1.0, %v5297
      %v5299 = vsel %vm434, %v5236, %v5012
      %v5300 = vsel %vm434, %v5238, %v5014
      %v5301 = vsel %vm434, %v5240, %v5016
      %v5302 = vsel %vm434, %v5242, %v5018
      %v5303 = vsel %vm434, %v5244, %v5020
      %v5304 = vsel %vm434, %v5246, %v5022
      %v5305 = vsel %vm434, %v5248, %v5024
      %v5306 = vsel %vm434, %v5250, %v5026
      %v5307 = vsel %vm434, %v5252, %v5028
      %v5308 = vsel %vm434, %v5254, %v5030
      %v5309 = vsel %vm434, %v5256, %v5032
      %v5310 = vsel %vm434, %v5258, %v5034
      %v5311 = vsel %vm434, %v5260, %v5036
      %v5312 = vsel %vm434, %v5262, %v5038
      %v5313 = vsel %vm434, %v5264, %v5040
      %v5314 = vsel %vm434, %v5266, %v5042
      %v5315 = vsel %vm434, %v5268, %v5044
      %v5316 = vsel %vm434, %v5270, %v5046
      %v5317 = vsel %vm434, %v5272, %v5048
      %v5318 = vsel %vm434, %v5274, %v5050
      %v5319 = vsel %vm434, %v5276, %v5052
      %v5320 = vsel %vm434, %v5278, %v5054
      %v5321 = vsel %vm434, %v5280, %v5056
      %v5322 = vsel %vm434, %v5282, %v5058
      %v5323 = vsel %vm434, %v5284, %v5060
      %v5324 = vsel %vm434, %v5286, %v5062
      %v5325 = vsel %vm434, %v5288, %v5064
      %v5326 = vsel %vm434, %v5290, %v5066
      %v5327 = vsel %vm434, %v5292, %v5068
      %v5328 = vsel %vm434, %v5294, %v5070
      %v5329 = vsel %vm434, %v5296, %v5072
      %v5330 = vsel %vm434, %v5298, %v5074
      %vm5331 = vcmask 121856
      %5332 = vst.msk [vmem:[%s318] sm:$0xff] %vm5331, %v5299
      %5333 = vst.msk [vmem:[%s318 + $0x8] sm:$0xff] %vm5331, %v5300
      %5334 = vst.msk [vmem:[%s318 + $0x10] sm:$0xff] %vm5331, %v5301
      %5335 = vst.msk [vmem:[%s318 + $0x18] sm:$0xff] %vm5331, %v5302
      %5336 = vst.msk [vmem:[%s318 + $0x20] sm:$0xff] %vm5331, %v5303
      %5337 = vst.msk [vmem:[%s318 + $0x28] sm:$0xff] %vm5331, %v5304
      %5338 = vst.msk [vmem:[%s318 + $0x30] sm:$0xff] %vm5331, %v5305
      %5339 = vst.msk [vmem:[%s318 + $0x38] sm:$0xff] %vm5331, %v5306
      %5340 = vst.msk [vmem:[%s318 + $0x40] sm:$0xff] %vm5331, %v5307
      %5341 = vst.msk [vmem:[%s318 + $0x48] sm:$0xff] %vm5331, %v5308
      %5342 = vst.msk [vmem:[%s318 + $0x50] sm:$0xff] %vm5331, %v5309
      %5343 = vst.msk [vmem:[%s318 + $0x58] sm:$0xff] %vm5331, %v5310
      %5344 = vst.msk [vmem:[%s318 + $0x60] sm:$0xff] %vm5331, %v5311
      %5345 = vst.msk [vmem:[%s318 + $0x68] sm:$0xff] %vm5331, %v5312
      %5346 = vst.msk [vmem:[%s318 + $0x70] sm:$0xff] %vm5331, %v5313
      %5347 = vst.msk [vmem:[%s318 + $0x78] sm:$0xff] %vm5331, %v5314
      %5348 = vst.msk [vmem:[%s318 + $0x80] sm:$0xff] %vm5331, %v5315
      %5349 = vst.msk [vmem:[%s318 + $0x88] sm:$0xff] %vm5331, %v5316
      %5350 = vst.msk [vmem:[%s318 + $0x90] sm:$0xff] %vm5331, %v5317
      %5351 = vst.msk [vmem:[%s318 + $0x98] sm:$0xff] %vm5331, %v5318
      %5352 = vst.msk [vmem:[%s318 + $0xa0] sm:$0xff] %vm5331, %v5319
      %5353 = vst.msk [vmem:[%s318 + $0xa8] sm:$0xff] %vm5331, %v5320
      %5354 = vst.msk [vmem:[%s318 + $0xb0] sm:$0xff] %vm5331, %v5321
      %5355 = vst.msk [vmem:[%s318 + $0xb8] sm:$0xff] %vm5331, %v5322
      %5356 = vst.msk [vmem:[%s318 + $0xc0] sm:$0xff] %vm5331, %v5323
      %5357 = vst.msk [vmem:[%s318 + $0xc8] sm:$0xff] %vm5331, %v5324
      %5358 = vst.msk [vmem:[%s318 + $0xd0] sm:$0xff] %vm5331, %v5325
      %5359 = vst.msk [vmem:[%s318 + $0xd8] sm:$0xff] %vm5331, %v5326
      %5360 = vst.msk [vmem:[%s318 + $0xe0] sm:$0xff] %vm5331, %v5327
      %5361 = vst.msk [vmem:[%s318 + $0xe8] sm:$0xff] %vm5331, %v5328
      %5362 = vst.msk [vmem:[%s318 + $0xf0] sm:$0xff] %vm5331, %v5329
      %5363 = vst.msk [vmem:[%s318 + $0xf8] sm:$0xff] %vm5331, %v5330
      %p5364 = scmp.lt.s32.totalorder %s20, 1
      %s5365 = scalar_select %p5364, %s20, 1
      %s5366 = smul.addr %s5365, 32
      %s5367 = smul.addr %s5366, 8
      %s5368 = scalar_lea.vmem %s7, %s5367
      %p5369 = scmp.lt.s32.totalorder %s20, 1
      %s5370 = scalar_select %p5369, %s20, 1
      %s5371 = smul.addr %s5370, 32
      %s5372 = smul.addr %s5371, 8
      %s5373 = scalar_lea.vmem %s8, %s5372
      // Predicated region
      $region49: #{faster_rcnn_forward.2} parent=47 // pred_check
        %p5374 = pneg %p190
      $region50: #{faster_rcnn_forward.2} parent=47 // pred_check_branch
        %5376 = sbr.rel (%p5374) target = $region52
      $region51: #{faster_rcnn_forward.2} parent=47 // pred_region
        _
      $region52: #{faster_rcnn_forward.2} parent=47 // pred_fallthru
        _
      // Predicated region
      $region53: #{faster_rcnn_forward.2} parent=47 // pred_check
        %p5377 = pneg %p216
      $region54: #{faster_rcnn_forward.2} parent=47 // pred_check_branch
        %5379 = sbr.rel (%p5377) target = $region56
      $region55: #{faster_rcnn_forward.2} parent=47 // pred_region
        _
      $region56: #{faster_rcnn_forward.2} parent=47 // pred_fallthru
        _
    $region48: #{faster_rcnn_forward.2} parent=5 // pred_fallthru
      _
    %p5380 = scmp.le.s32.totalorder 2, %s15
    // Predicated region
    $region57: #{faster_rcnn_forward.2} parent=5 // pred_check
      %p5381 = pneg %p5380
    $region58: #{faster_rcnn_forward.2} parent=5 // pred_check_branch
      %5383 = sbr.rel (%p5381) target = $region60
    $region59: #{faster_rcnn_forward.2} parent=5 // pred_region
      %s5384 = ssub.s32 %s15, 2
      // Predicated region
      $region61: #{faster_rcnn_forward.2} parent=59 // pred_check
        %p5385 = pneg %p196
      $region62: #{faster_rcnn_forward.2} parent=59 // pred_check_branch
        %5387 = sbr.rel (%p5385) target = $region64
      $region63: #{faster_rcnn_forward.2} parent=59 // pred_region
        %p5388 = scmp.lt.s32.totalorder %s21, 1
        %s5389 = scalar_select %p5388, %s21, 1
        %s5390 = smul.addr %s5389, 32
        %s5391 = smul.addr %s5390, 8
        %s5392 = scalar_lea.vmem %s7, %s5391
      $region64: #{faster_rcnn_forward.2} parent=59 // pred_fallthru
        _
      // Predicated region
      $region65: #{faster_rcnn_forward.2} parent=59 // pred_check
        %p5393 = pneg %p222
      $region66: #{faster_rcnn_forward.2} parent=59 // pred_check_branch
        %5395 = sbr.rel (%p5393) target = $region68
      $region67: #{faster_rcnn_forward.2} parent=59 // pred_region
        %p5396 = scmp.lt.s32.totalorder %s21, 1
        %s5397 = scalar_select %p5396, %s21, 1
        %s5398 = smul.addr %s5397, 32
        %s5399 = smul.addr %s5398, 8
        %s5400 = scalar_lea.vmem %s8, %s5399
      $region68: #{faster_rcnn_forward.2} parent=59 // pred_fallthru
        _
    $region60: #{faster_rcnn_forward.2} parent=5 // pred_fallthru
      _
  $region6: #{faster_rcnn_forward.2} parent=0 // loop_footer
    %s19 = sadd.s32 1, %s15
  $region7: #{faster_rcnn_forward.2} parent=0 // loop_footer_branch
    %14 = sbr.rel target = $region3
  $region8: #{faster_rcnn_forward.2} parent=0 // loop_exit
    _

// kernel: faster_rcnn_forward.3
$region0: #{faster_rcnn_forward.3}
  #allocation0 [shape = 'u32[]', space=smem, size = 0x4, offset = 0x4, fixed_abs, tag = 'smem constant byte address 0x4 - core index']
  #allocation1 [shape = 'u32[144,128]{1,0:T(1,128)}', space=vmem, size = 0x12000, scoped, tag = 'internal scratch']
  %s0 = inlined_call_operand.vmem [shape: bf16[16,256], index: 0, kind: input, shape index: {}]
  %s1 = inlined_call_operand.vmem [shape: bf16[256,32], index: 1, kind: input, shape index: {}]
  %s2 = inlined_call_operand.vmem [shape: f32[1,32], index: 2, kind: input, shape index: {}]
  %s3 = inlined_call_operand.vmem [shape: bf16[32,32], index: 3, kind: input, shape index: {}]
  %s4 = inlined_call_operand.vmem [shape: f32[1,32], index: 4, kind: input, shape index: {}]
  %s5 = inlined_call_operand.vmem [shape: bf16[32,15], index: 5, kind: input, shape index: {}]
  %s6 = inlined_call_operand.vmem [shape: f32[1,15], index: 6, kind: input, shape index: {}]
  %s7 = inlined_call_operand.vmem [shape: f32[16,15], index: 7, kind: output, shape index: {}]
  %s8 = sld [smem:[#allocation0]]
  $region38: #{faster_rcnn_forward.3} parent=0
    _
  %s10 = ssub.s32 1, %s8
  %s11 = scalar_select 0, %s10, %s8
  // Predicated region
  $region2: #{faster_rcnn_forward.3} parent=0 // pred_check
    _
  $region3: #{faster_rcnn_forward.3} parent=0 // pred_check_branch
    %13 = sbr.rel (0) target = $region5
  $region4: #{faster_rcnn_forward.3} parent=0 // pred_region
    _
  $region5: #{faster_rcnn_forward.3} parent=0 // pred_fallthru
    _
  // Predicated region
  $region6: #{faster_rcnn_forward.3} parent=0 // pred_check
    _
  $region7: #{faster_rcnn_forward.3} parent=0 // pred_check_branch
    %15 = sbr.rel (0) target = $region9
  $region8: #{faster_rcnn_forward.3} parent=0 // pred_region
    _
  $region9: #{faster_rcnn_forward.3} parent=0 // pred_fallthru
    _
  // Predicated region
  $region10: #{faster_rcnn_forward.3} parent=0 // pred_check
    _
  $region11: #{faster_rcnn_forward.3} parent=0 // pred_check_branch
    %17 = sbr.rel (0) target = $region13
  $region12: #{faster_rcnn_forward.3} parent=0 // pred_region
    _
  $region13: #{faster_rcnn_forward.3} parent=0 // pred_fallthru
    _
  // Predicated region
  $region14: #{faster_rcnn_forward.3} parent=0 // pred_check
    _
  $region15: #{faster_rcnn_forward.3} parent=0 // pred_check_branch
    %19 = sbr.rel (0) target = $region17
  $region16: #{faster_rcnn_forward.3} parent=0 // pred_region
    _
  $region17: #{faster_rcnn_forward.3} parent=0 // pred_fallthru
    _
  // Predicated region
  $region18: #{faster_rcnn_forward.3} parent=0 // pred_check
    _
  $region19: #{faster_rcnn_forward.3} parent=0 // pred_check_branch
    %21 = sbr.rel (0) target = $region21
  $region20: #{faster_rcnn_forward.3} parent=0 // pred_region
    _
  $region21: #{faster_rcnn_forward.3} parent=0 // pred_fallthru
    _
  // Predicated region
  $region22: #{faster_rcnn_forward.3} parent=0 // pred_check
    _
  $region23: #{faster_rcnn_forward.3} parent=0 // pred_check_branch
    %23 = sbr.rel (0) target = $region25
  $region24: #{faster_rcnn_forward.3} parent=0 // pred_region
    _
  $region25: #{faster_rcnn_forward.3} parent=0 // pred_fallthru
    _
  // Predicated region
  $region26: #{faster_rcnn_forward.3} parent=0 // pred_check
    _
  $region27: #{faster_rcnn_forward.3} parent=0 // pred_check_branch
    %25 = sbr.rel (0) target = $region29
  $region28: #{faster_rcnn_forward.3} parent=0 // pred_region
    _
  $region29: #{faster_rcnn_forward.3} parent=0 // pred_fallthru
    _
  %v27 = vld [vmem:[%s0] sm:$0xff]
  %v28 = vld [vmem:[%s0 + $0x8] sm:$0xff]
  %v29 = vld [vmem:[%s1] sm:$0xf]
  %v30 = vld [vmem:[%s1 + $0x4] sm:$0xf]
  %v31 = vld [vmem:[%s1 + $0x8] sm:$0xf]
  %v32 = vld [vmem:[%s1 + $0xc] sm:$0xf]
  %v33 = vld [vmem:[%s1 + $0x10] sm:$0xf]
  %v34 = vld [vmem:[%s1 + $0x14] sm:$0xf]
  %v35 = vld [vmem:[%s1 + $0x18] sm:$0xf]
  %v36 = vld [vmem:[%s1 + $0x1c] sm:$0xf]
  %v37 = vld [vmem:[%s1 + $0x20] sm:$0xf]
  %v38 = vld [vmem:[%s1 + $0x24] sm:$0xf]
  %v39 = vld [vmem:[%s1 + $0x28] sm:$0xf]
  %v40 = vld [vmem:[%s1 + $0x2c] sm:$0xf]
  %v41 = vld [vmem:[%s1 + $0x30] sm:$0xf]
  %v42 = vld [vmem:[%s1 + $0x34] sm:$0xf]
  %v43 = vld [vmem:[%s1 + $0x38] sm:$0xf]
  %v44 = vld [vmem:[%s1 + $0x3c] sm:$0xf]
  %v45 = vld [vmem:[%s1 + $0x40] sm:$0xf]
  %v46 = vld [vmem:[%s1 + $0x44] sm:$0xf]
  %v47 = vld [vmem:[%s1 + $0x48] sm:$0xf]
  %v48 = vld [vmem:[%s1 + $0x4c] sm:$0xf]
  %v49 = vld [vmem:[%s1 + $0x50] sm:$0xf]
  %v50 = vld [vmem:[%s1 + $0x54] sm:$0xf]
  %v51 = vld [vmem:[%s1 + $0x58] sm:$0xf]
  %v52 = vld [vmem:[%s1 + $0x5c] sm:$0xf]
  %v53 = vld [vmem:[%s1 + $0x60] sm:$0xf]
  %v54 = vld [vmem:[%s1 + $0x64] sm:$0xf]
  %v55 = vld [vmem:[%s1 + $0x68] sm:$0xf]
  %v56 = vld [vmem:[%s1 + $0x6c] sm:$0xf]
  %v57 = vld [vmem:[%s1 + $0x70] sm:$0xf]
  %v58 = vld [vmem:[%s1 + $0x74] sm:$0xf]
  %v59 = vld [vmem:[%s1 + $0x78] sm:$0xf]
  %v60 = vld [vmem:[%s1 + $0x7c] sm:$0xf]
  %v61 = vld [vmem:[%s2] sm:$0x1]
  %v63 = vlaneseq
  %v64 = vshrl.u32 %v63, 7
  %v65 = vsub.s32 0, %v64
  %v66 = vrot.slane %v61, %v65
  %v70 = vunpack.c.l.b16 %v27
  %v71 = vunpack.c.h.b16 %v27
  %v72 = vunpack.c.l.b16 %v28
  %v73 = vunpack.c.h.b16 %v28
  %v74 = vpack.c.b16 %v72, %v70
  %v75 = vpack.c.b16 %v73, %v71
  %v110 = vunpack.c.l.b16 %v29
  %v111 = vunpack.c.l.b16 %v30
  %v112 = vunpack.c.l.b16 %v31
  %v113 = vunpack.c.l.b16 %v32
  %v114 = vunpack.c.l.b16 %v33
  %v115 = vunpack.c.l.b16 %v34
  %v116 = vunpack.c.l.b16 %v35
  %v117 = vunpack.c.l.b16 %v36
  %v118 = vunpack.c.l.b16 %v37
  %v119 = vunpack.c.l.b16 %v38
  %v120 = vunpack.c.l.b16 %v39
  %v121 = vunpack.c.l.b16 %v40
  %v122 = vunpack.c.l.b16 %v41
  %v123 = vunpack.c.l.b16 %v42
  %v124 = vunpack.c.l.b16 %v43
  %v125 = vunpack.c.l.b16 %v44
  %v126 = vunpack.c.l.b16 %v45
  %v127 = vunpack.c.l.b16 %v46
  %v128 = vunpack.c.l.b16 %v47
  %v129 = vunpack.c.l.b16 %v48
  %v130 = vunpack.c.l.b16 %v49
  %v131 = vunpack.c.l.b16 %v50
  %v132 = vunpack.c.l.b16 %v51
  %v133 = vunpack.c.l.b16 %v52
  %v134 = vunpack.c.l.b16 %v53
  %v135 = vunpack.c.l.b16 %v54
  %v136 = vunpack.c.l.b16 %v55
  %v137 = vunpack.c.l.b16 %v56
  %v138 = vunpack.c.l.b16 %v57
  %v139 = vunpack.c.l.b16 %v58
  %v140 = vunpack.c.l.b16 %v59
  %v141 = vunpack.c.l.b16 %v60
  %v142 = vpack.c.b16 %v111, %v110
  %v143 = vpack.c.b16 %v113, %v112
  %v144 = vpack.c.b16 %v115, %v114
  %v145 = vpack.c.b16 %v117, %v116
  %v146 = vpack.c.b16 %v119, %v118
  %v147 = vpack.c.b16 %v121, %v120
  %v148 = vpack.c.b16 %v123, %v122
  %v149 = vpack.c.b16 %v125, %v124
  %v150 = vpack.c.b16 %v127, %v126
  %v151 = vpack.c.b16 %v129, %v128
  %v152 = vpack.c.b16 %v131, %v130
  %v153 = vpack.c.b16 %v133, %v132
  %v154 = vpack.c.b16 %v135, %v134
  %v155 = vpack.c.b16 %v137, %v136
  %v156 = vpack.c.b16 %v139, %v138
  %v157 = vpack.c.b16 %v141, %v140
  %174 = vmatprep.subr.bf16.mxu0 0
  %175 = vmatpush1.bf16.msra.mxu0 %v142
  %176 = vmatprep.subr.bf16.mxu0 0
  %177 = vmatpush1.bf16.msra.mxu0 %v143
  %178 = vmatprep.subr.bf16.mxu0 0
  %179 = vmatpush1.bf16.msra.mxu0 %v144
  %180 = vmatprep.subr.bf16.mxu0 0
  %181 = vmatpush1.bf16.msra.mxu0 %v145
  %182 = vmatprep.subr.bf16.mxu0 0
  %183 = vmatpush1.bf16.msra.mxu0 %v146
  %184 = vmatprep.subr.bf16.mxu0 0
  %185 = vmatpush1.bf16.msra.mxu0 %v147
  %186 = vmatprep.subr.bf16.mxu0 0
  %187 = vmatpush1.bf16.msra.mxu0 %v148
  %188 = vmatprep.subr.bf16.mxu0 0
  %189 = vmatpush1.bf16.msra.mxu0 %v149
  %190 = vmatprep.subr.bf16.mxu0 0
  %191 = vmatpush1.bf16.msra.mxu0 %v150
  %192 = vmatprep.subr.bf16.mxu0 0
  %193 = vmatpush1.bf16.msra.mxu0 %v151
  %194 = vmatprep.subr.bf16.mxu0 0
  %195 = vmatpush1.bf16.msra.mxu0 %v152
  %196 = vmatprep.subr.bf16.mxu0 0
  %197 = vmatpush1.bf16.msra.mxu0 %v153
  %198 = vmatprep.subr.bf16.mxu0 0
  %199 = vmatpush1.bf16.msra.mxu0 %v154
  %200 = vmatprep.subr.bf16.mxu0 0
  %201 = vmatpush1.bf16.msra.mxu0 %v155
  %202 = vmatprep.subr.bf16.mxu0 0
  %203 = vmatpush1.bf16.msra.mxu0 %v156
  %204 = vmatprep.subr.bf16.mxu0 0
  %205 = vmatpush1.bf16.msra.mxu0 %v157
  %206 = vmatprep.mubr.bf16.mxu0 %v75
  %207 = vmatmul.mubr.bf16.gmra.mrb[0].mxu0 %v74
  %v208 = vpop.f32.mrb[0].mxu0
  %v209 = vadd.f32 %v66, %v208
  %v210 = vpop.f32.mrb[0].mxu0
  %v211 = vpop.f32.mrb[0].mxu0
  %v212 = vadd.f32 %v66, %v211
  %v213 = vpop.f32.mrb[0].mxu0
  %214 = vdwg.mxu0
  %v215 = vmax.f32 %v209, 0.0
  %v216 = vmax.f32 %v212, 0.0
  %v217 = vpack.c.bf16 %v216, %v215
  %v218 = vld [vmem:[%s3] sm:$0xf]
  %v219 = vld [vmem:[%s3 + $0x4] sm:$0xf]
  %v220 = vld [vmem:[%s3 + $0x8] sm:$0xf]
  %v221 = vld [vmem:[%s3 + $0xc] sm:$0xf]
  %v222 = vld [vmem:[%s4] sm:$0x1]
  %v224 = vlaneseq
  %v225 = vshrl.u32 %v224, 7
  %v226 = vsub.s32 0, %v225
  %v227 = vrot.slane %v222, %v226
  %v233 = vunpack.c.l.b16 %v218
  %v234 = vunpack.c.l.b16 %v219
  %v235 = vunpack.c.l.b16 %v220
  %v236 = vunpack.c.l.b16 %v221
  %v237 = vpack.c.b16 %v234, %v233
  %v238 = vpack.c.b16 %v236, %v235
  %vm241 = vcmask 261120
  %v243 = vsel %vm241, %v217, 0
  %245 = vmatprep.subr.bf16.mxu0 0
  %246 = vmatpush1.bf16.msra.mxu0 %v237
  %247 = vmatprep.subr.bf16.mxu0 0
  %248 = vmatpush1.bf16.msra.mxu0 %v238
  %249 = vmatprep.subr.bf16.mxu0 0
  %250 = vmatpush1.bf16.msra.mxu0 0
  %251 = vmatprep.subr.bf16.mxu0 0
  %252 = vmatpush1.bf16.msra.mxu0 0
  %253 = vmatprep.subr.bf16.mxu0 0
  %254 = vmatpush1.bf16.msra.mxu0 0
  %255 = vmatprep.subr.bf16.mxu0 0
  %256 = vmatpush1.bf16.msra.mxu0 0
  %257 = vmatprep.subr.bf16.mxu0 0
  %258 = vmatpush1.bf16.msra.mxu0 0
  %259 = vmatprep.subr.bf16.mxu0 0
  %260 = vmatpush1.bf16.msra.mxu0 0
  %261 = vmatprep.subr.bf16.mxu0 0
  %262 = vmatpush1.bf16.msra.mxu0 0
  %263 = vmatprep.subr.bf16.mxu0 0
  %264 = vmatpush1.bf16.msra.mxu0 0
  %265 = vmatprep.subr.bf16.mxu0 0
  %266 = vmatpush1.bf16.msra.mxu0 0
  %267 = vmatprep.subr.bf16.mxu0 0
  %268 = vmatpush1.bf16.msra.mxu0 0
  %269 = vmatprep.subr.bf16.mxu0 0
  %270 = vmatpush1.bf16.msra.mxu0 0
  %271 = vmatprep.subr.bf16.mxu0 0
  %272 = vmatpush1.bf16.msra.mxu0 0
  %273 = vmatprep.subr.bf16.mxu0 0
  %274 = vmatpush1.bf16.msra.mxu0 0
  %275 = vmatprep.subr.bf16.mxu0 0
  %276 = vmatpush1.bf16.msra.mxu0 0
  %277 = vmatprep.mubr.bf16.mxu0 0
  %278 = vmatmul.mubr.bf16.gmra.mrb[0].mxu0 %v243
  %v279 = vpop.f32.mrb[0].mxu0
  %v280 = vadd.f32 %v227, %v279
  %v281 = vpop.f32.mrb[0].mxu0
  %v282 = vpop.f32.mrb[0].mxu0
  %v283 = vadd.f32 %v227, %v282
  %v284 = vpop.f32.mrb[0].mxu0
  %285 = vdwg.mxu0
  %v286 = vmax.f32 %v280, 0.0
  %v287 = vmax.f32 %v283, 0.0
  %v288 = vpack.c.bf16 %v287, %v286
  %v289 = vld [vmem:[%s5] sm:$0xf]
  %v290 = vld [vmem:[%s5 + $0x4] sm:$0xf]
  %v291 = vld [vmem:[%s5 + $0x8] sm:$0xf]
  %v292 = vld [vmem:[%s5 + $0xc] sm:$0xf]
  %v293 = vld [vmem:[%s6] sm:$0x1]
  %v295 = vlaneseq
  %v296 = vshrl.u32 %v295, 7
  %v297 = vsub.s32 0, %v296
  %v298 = vrot.slane %v293, %v297
  %v304 = vunpack.c.l.b16 %v289
  %v305 = vunpack.c.l.b16 %v290
  %v306 = vunpack.c.l.b16 %v291
  %v307 = vunpack.c.l.b16 %v292
  %v308 = vpack.c.b16 %v305, %v304
  %v309 = vpack.c.b16 %v307, %v306
  %v313 = vsel %vm241, %v288, 0
  %315 = vmatprep.subr.bf16.mxu0 0
  %316 = vmatpush1.bf16.msra.mxu0 %v308
  %317 = vmatprep.subr.bf16.mxu0 0
  %318 = vmatpush1.bf16.msra.mxu0 %v309
  %319 = vmatprep.subr.bf16.mxu0 0
  %320 = vmatpush1.bf16.msra.mxu0 0
  %321 = vmatprep.subr.bf16.mxu0 0
  %322 = vmatpush1.bf16.msra.mxu0 0
  %323 = vmatprep.subr.bf16.mxu0 0
  %324 = vmatpush1.bf16.msra.mxu0 0
  %325 = vmatprep.subr.bf16.mxu0 0
  %326 = vmatpush1.bf16.msra.mxu0 0
  %327 = vmatprep.subr.bf16.mxu0 0
  %328 = vmatpush1.bf16.msra.mxu0 0
  %329 = vmatprep.subr.bf16.mxu0 0
  %330 = vmatpush1.bf16.msra.mxu0 0
  %331 = vmatprep.subr.bf16.mxu0 0
  %332 = vmatpush1.bf16.msra.mxu0 0
  %333 = vmatprep.subr.bf16.mxu0 0
  %334 = vmatpush1.bf16.msra.mxu0 0
  %335 = vmatprep.subr.bf16.mxu0 0
  %336 = vmatpush1.bf16.msra.mxu0 0
  %337 = vmatprep.subr.bf16.mxu0 0
  %338 = vmatpush1.bf16.msra.mxu0 0
  %339 = vmatprep.subr.bf16.mxu0 0
  %340 = vmatpush1.bf16.msra.mxu0 0
  %341 = vmatprep.subr.bf16.mxu0 0
  %342 = vmatpush1.bf16.msra.mxu0 0
  %343 = vmatprep.subr.bf16.mxu0 0
  %344 = vmatpush1.bf16.msra.mxu0 0
  %345 = vmatprep.subr.bf16.mxu0 0
  %346 = vmatpush1.bf16.msra.mxu0 0
  %347 = vmatprep.mubr.bf16.mxu0 0
  %348 = vmatmul.mubr.bf16.gmra.mrb[0].mxu0 %v313
  %v349 = vpop.f32.mrb[0].mxu0
  %v350 = vadd.f32 %v298, %v349
  %v351 = vpop.f32.mrb[0].mxu0
  %v352 = vpop.f32.mrb[0].mxu0
  %v353 = vadd.f32 %v298, %v352
  %v354 = vpop.f32.mrb[0].mxu0
  %355 = vdwg.mxu0
  %vm356 = vcmask 23552
  %v357 = vsel %vm356, %v350, -inf
  %358 = vmax.xlane.f32.xlu0 %v357
  %v359 = vpop.xlane.xlu0 %358
  %v360 = vsel %vm356, %v353, -inf
  %361 = vmax.xlane.f32.xlu0 %v360
  %v362 = vpop.xlane.xlu0 %361
  %v363 = vsub.f32 %v350, %v359
  %v364 = vsub.f32 %v353, %v362
  %v365 = vmul.f32 %v363, 1.442695
  %v366 = vpow.pop %v365
  %v367 = vmul.f32 %v364, 1.442695
  %v368 = vpow.pop %v367
  %v369 = vsel %vm356, %v366, 0.0
  %370 = vadd.xlane.f32.xlu0 %v369
  %v371 = vpop.xlane.xlu0 %370
  %v372 = vsel %vm356, %v368, 0.0
  %373 = vadd.xlane.f32.xlu0 %v372
  %v374 = vpop.xlane.xlu0 %373
  %v375 = vrcp.pop %v371
  %v376 = vmul.f32 %v366, %v375
  %v377 = vrcp.pop %v374
  %v378 = vmul.f32 %v368, %v377
  %v379 = vsel %vm356, %v376, %v350
  %v380 = vsel %vm356, %v378, %v353
  %vm381 = vcmask 121856
  %382 = vst.msk [vmem:[%s7] sm:$0xff] %vm381, %v379
  %383 = vst.msk [vmem:[%s7 + $0x8] sm:$0xff] %vm381, %v380
  // Predicated region
  $region30: #{faster_rcnn_forward.3} parent=0 // pred_check
    _
  $region31: #{faster_rcnn_forward.3} parent=0 // pred_check_branch
    %385 = sbr.rel (0) target = $region33
  $region32: #{faster_rcnn_forward.3} parent=0 // pred_region
    _
  $region33: #{faster_rcnn_forward.3} parent=0 // pred_fallthru
    _
  // Predicated region
  $region34: #{faster_rcnn_forward.3} parent=0 // pred_check
    _
  $region35: #{faster_rcnn_forward.3} parent=0 // pred_check_branch
    %387 = sbr.rel (0) target = $region37
  $region36: #{faster_rcnn_forward.3} parent=0 // pred_region
    _
  $region37: #{faster_rcnn_forward.3} parent=0 // pred_fallthru
    _

</llo_original>
